<compile_context>
chip_gen: v6e
topology: v6e:2x2x1
jax: 0.10.0
libtpu: 0.0.40
codegen_flags: <defaults>
</compile_context>

<pallas_src>
import jax
import jax.numpy as jnp
from jax import lax
from jax.experimental import pallas as pl
from jax.experimental.pallas import tpu as pltpu


# ----------------------------------------------------------------------------
# Fused ResBlock kernel
# ----------------------------------------------------------------------------

def _resblock_kernel(xp_ref, w_ref, scale_ref, shift_ref, alpha_ref, o_ref, yp_ref):
    """One image per grid step.

    xp_ref   : (1, H+2, W+2, C) f32  zero-padded input
    w_ref    : (9, C, C)        bf16 conv taps, index = kh*3 + kw
    scale_ref: (1, C)           f32  folded BatchNorm scale
    shift_ref: (1, C)           f32  folded BatchNorm shift
    alpha_ref: (1, 1)           f32  PReLU slope (single shared parameter)
    o_ref    : (1, H*W, C)      f32  output
    yp_ref   : (1, H+2, W+2, C) f32  VMEM scratch: zero-padded intermediate
    """
    _, Hp, Wp, C = xp_ref.shape
    H, W = Hp - 2, Wp - 2
    M = H * W

    scale = scale_ref[...]            # (1, C)
    shift = shift_ref[...]            # (1, C)
    alpha = alpha_ref[...]            # (1, 1)

    def conv3x3(src_ref):
        # Tap accumulation: 9 small bf16 matmuls accumulated in f32 (no im2col).
        acc = jnp.zeros((M, C), jnp.float32)
        for kh in range(3):
            for kw in range(3):
                tap = src_ref[0, kh:kh + H, kw:kw + W, :]          # (H, W, C)
                tap = tap.reshape(M, C).astype(jnp.bfloat16)
                acc = acc + jnp.dot(tap, w_ref[kh * 3 + kw],
                                    preferred_element_type=jnp.float32)
        return acc

    # conv1 -> bn -> PReLU  (all in-register / VMEM, fused)
    y = conv3x3(xp_ref) * scale + shift
    y = jnp.maximum(y, 0.0) + alpha * jnp.minimum(y, 0.0)

    # Zero-pad the intermediate into the VMEM scratch for the second conv.
    yp_ref[...] = jnp.zeros_like(yp_ref)
    yp_ref[0, 1:1 + H, 1:1 + W, :] = y.reshape(H, W, C)

    # conv2 -> bn -> residual add (residual = centre of the padded input, exact f32)
    z = conv3x3(yp_ref) * scale + shift
    res = xp_ref[0, 1:1 + H, 1:1 + W, :].reshape(M, C)
    o_ref[0] = (z + res).astype(o_ref.dtype)


def resblock_forward(x_nhwc, w9_bf16, scale, shift, alpha):
    """x_nhwc: (N, H, W, C) f32, w9_bf16: (9, C, C) bf16 -> (N, H, W, C) f32."""
    N, H, W, C = x_nhwc.shape
    Hp, Wp = H + 2, W + 2
    M = H * W

    xp = jnp.pad(x_nhwc, ((0, 0), (1, 1), (1, 1), (0, 0)))  # 'same' zero padding

    flops = N * 2 * (2 * M * (9 * C) * C)                    # two 3x3 convs
    bytes_accessed = (xp.size * 4 + w9_bf16.size * 2 + N * M * C * 4
                      + 2 * C * 4 + 4)

    out = pl.pallas_call(
        _resblock_kernel,
        out_shape=jax.ShapeDtypeStruct((N, M, C), jnp.float32),
        grid=(N,),
        in_specs=[
            pl.BlockSpec((1, Hp, Wp, C), lambda n: (n, 0, 0, 0)),
            pl.BlockSpec((9, C, C), lambda n: (0, 0, 0)),
            pl.BlockSpec((1, C), lambda n: (0, 0)),
            pl.BlockSpec((1, C), lambda n: (0, 0)),
            pl.BlockSpec((1, 1), lambda n: (0, 0)),
        ],
        out_specs=pl.BlockSpec((1, M, C), lambda n: (n, 0, 0)),
        scratch_shapes=[pltpu.VMEM((1, Hp, Wp, C), jnp.float32)],
        compiler_params=pltpu.CompilerParams(
            dimension_semantics=("parallel",),
        ),
        cost_estimate=pl.CostEstimate(flops=flops, transcendentals=0,
                                      bytes_accessed=bytes_accessed),
    )(xp, w9_bf16,
      scale.reshape(1, C), shift.reshape(1, C),
      jnp.asarray(alpha, jnp.float32).reshape(1, 1))

    return out.reshape(N, H, W, C)


# ----------------------------------------------------------------------------
# Deterministic parameter construction (PyTorch layouts, then reparameterized)
# ----------------------------------------------------------------------------

def make_params(key, C=128):
    k1, k2, k3, k4, k5 = jax.random.split(key, 5)
    # nn.Conv2d(128, 128, 3, bias=False): weight layout (Cout, Cin, kH, kW)
    fan_in = C * 9
    w_oihw = jax.random.normal(k1, (C, C, 3, 3), jnp.float32) / jnp.sqrt(float(fan_in))
    # nn.BatchNorm2d(128) folded to per-channel scale/shift (inference mode)
    gamma = 1.0 + 0.1 * jax.random.normal(k2, (C,), jnp.float32)
    beta = 0.1 * jax.random.normal(k3, (C,), jnp.float32)
    mean = 0.1 * jax.random.normal(k4, (C,), jnp.float32)
    var = jnp.abs(1.0 + 0.1 * jax.random.normal(k5, (C,), jnp.float32))
    eps = 1e-5
    scale = gamma / jnp.sqrt(var + eps)
    shift = beta - mean * scale
    alpha = jnp.float32(0.25)                         # nn.PReLU() default slope
    # Tap matrices (kh*3+kw, Cin, Cout), bf16 for the MXU.
    w9 = jnp.transpose(w_oihw, (2, 3, 1, 0)).reshape(9, C, C).astype(jnp.bfloat16)
    return w_oihw, w9, scale, shift, alpha


# ----------------------------------------------------------------------------
# Pure-JAX reference (f32) for a numerical sanity check
# ----------------------------------------------------------------------------

def resblock_reference(x_nhwc, w_oihw, scale, shift, alpha):
    w_hwio = jnp.transpose(w_oihw, (2, 3, 1, 0))      # (kH, kW, Cin, Cout)

    def conv(v):
        return lax.conv_general_dilated(
            v, w_hwio, window_strides=(1, 1), padding="SAME",
            dimension_numbers=("NHWC", "HWIO", "NHWC"))

    y = conv(x_nhwc) * scale + shift
    y = jnp.where(y > 0, y, alpha * y)                # PReLU
    z = conv(y) * scale + shift
    return z + x_nhwc


# ----------------------------------------------------------------------------
# Main
# ----------------------------------------------------------------------------

if __name__ == "__main__":
    key = jax.random.PRNGKey(0)
    kx, kp = jax.random.split(key)

    # ResBlock fixes C=128; keep spatial/batch small: NHWC (2, 16, 16, 128)
    # (PyTorch NCHW equivalent: (2, 128, 16, 16)).
    N, H, W, C = 2, 16, 16, 128
    x = jax.random.normal(kx, (N, H, W, C), jnp.float32)
    w_oihw, w9, scale, shift, alpha = make_params(kp, C)

    fwd = jax.jit(resblock_forward)
    out = jax.block_until_ready(fwd(x, w9, scale, shift, alpha))

    assert out.shape == (N, H, W, C), out.shape
    assert bool(jnp.all(jnp.isfinite(out)))

    ref = resblock_reference(x, w_oihw, scale, shift, alpha)
    max_err = float(jnp.max(jnp.abs(out - ref)))
    assert max_err < 2e-1, f"max abs err {max_err}"   # bf16-MXU vs f32 reference

    print("KERNEL_OK")
</pallas_src>

<mosaic_0001>
module attributes {stable_mosaic.version = 11 : i64} {
  func.func @_resblock_kernel(%arg0: i32, %arg1: memref<1x18x18x128xf32, #tpu.memory_space<vmem>>, %arg2: memref<9x128x128xbf16, #tpu.memory_space<vmem>>, %arg3: memref<1x128xf32, #tpu.memory_space<vmem>>, %arg4: memref<1x128xf32, #tpu.memory_space<vmem>>, %arg5: memref<1x1xf32, #tpu.memory_space<vmem>>, %arg6: memref<1x256x128xf32, #tpu.memory_space<vmem>>, %arg7: memref<1x18x18x128xf32, #tpu.memory_space<vmem>>) attributes {dimension_semantics = [#tpu.dimension_semantics<parallel>], iteration_bounds = array<i64: 2>, scalar_prefetch = 0 : i64, scratch_operands = 1 : i64, tpu.core_type = #tpu.core_type<tc>, window_params = [{transform_indices = @transform_0, window_bounds = array<i64: 1, 18, 18, 128>}, {pipeline_mode = #tpu.pipeline_mode<synchronous>, transform_indices = @transform_1, window_bounds = array<i64: 9, 128, 128>}, {pipeline_mode = #tpu.pipeline_mode<synchronous>, transform_indices = @transform_2, window_bounds = array<i64: 1, 128>}, {pipeline_mode = #tpu.pipeline_mode<synchronous>, transform_indices = @transform_3, window_bounds = array<i64: 1, 128>}, {pipeline_mode = #tpu.pipeline_mode<synchronous>, transform_indices = @transform_4, window_bounds = array<i64: 1, 1>}, {transform_indices = @transform_5, window_bounds = array<i64: 1, 256, 128>}]} {
    %c0 = arith.constant 0 : index
    %c0_0 = arith.constant 0 : index
    %0 = vector.load %arg3[%c0, %c0_0] : memref<1x128xf32, #tpu.memory_space<vmem>>, vector<1x128xf32>
    %c0_1 = arith.constant 0 : index
    %c0_2 = arith.constant 0 : index
    %1 = vector.load %arg4[%c0_1, %c0_2] : memref<1x128xf32, #tpu.memory_space<vmem>>, vector<1x128xf32>
    %c0_3 = arith.constant 0 : index
    %c0_4 = arith.constant 0 : index
    %2 = vector.load %arg5[%c0_3, %c0_4] : memref<1x1xf32, #tpu.memory_space<vmem>>, vector<1x1xf32>
    %cst = arith.constant 0.000000e+00 : f32
    %3 = vector.broadcast %cst : f32 to vector<256x128xf32>
    %c0_5 = arith.constant 0 : index
    %c0_6 = arith.constant 0 : index
    %c0_7 = arith.constant 0 : index
    %c0_8 = arith.constant 0 : index
    %4 = vector.load %arg1[%c0_5, %c0_6, %c0_7, %c0_8] : memref<1x18x18x128xf32, #tpu.memory_space<vmem>>, vector<1x16x16x128xf32>
    %5 = vector.shape_cast %4 : vector<1x16x16x128xf32> to vector<16x16x128xf32>
    %6 = vector.shape_cast %5 : vector<16x16x128xf32> to vector<256x128xf32>
    %7 = arith.truncf %6 : vector<256x128xf32> to vector<256x128xbf16>
    %c0_9 = arith.constant 0 : index
    %c0_10 = arith.constant 0 : index
    %c0_11 = arith.constant 0 : index
    %8 = vector.load %arg2[%c0_9, %c0_10, %c0_11] : memref<9x128x128xbf16, #tpu.memory_space<vmem>>, vector<1x128x128xbf16>
    %9 = vector.shape_cast %8 : vector<1x128x128xbf16> to vector<128x128xbf16>
    %cst_12 = arith.constant dense<0.000000e+00> : vector<256x128xf32>
    %10 = tpu.matmul %7, %9, %cst_12 {dimension_numbers = #tpu.dot_dimension_numbers<[1], [0], [0], [1], [0, 0, 1, 1], [], []>} : vector<256x128xbf16>, vector<128x128xbf16>, vector<256x128xf32> -> vector<256x128xf32>
    %11 = arith.addf %3, %10 : vector<256x128xf32>
    %c0_13 = arith.constant 0 : index
    %c0_14 = arith.constant 0 : index
    %c1 = arith.constant 1 : index
    %c0_15 = arith.constant 0 : index
    %12 = vector.load %arg1[%c0_13, %c0_14, %c1, %c0_15] : memref<1x18x18x128xf32, #tpu.memory_space<vmem>>, vector<1x16x16x128xf32>
    %13 = vector.shape_cast %12 : vector<1x16x16x128xf32> to vector<16x16x128xf32>
    %14 = vector.shape_cast %13 : vector<16x16x128xf32> to vector<256x128xf32>
    %15 = arith.truncf %14 : vector<256x128xf32> to vector<256x128xbf16>
    %c1_16 = arith.constant 1 : index
    %c0_17 = arith.constant 0 : index
    %c0_18 = arith.constant 0 : index
    %16 = vector.load %arg2[%c1_16, %c0_17, %c0_18] : memref<9x128x128xbf16, #tpu.memory_space<vmem>>, vector<1x128x128xbf16>
    %17 = vector.shape_cast %16 : vector<1x128x128xbf16> to vector<128x128xbf16>
    %cst_19 = arith.constant dense<0.000000e+00> : vector<256x128xf32>
    %18 = tpu.matmul %15, %17, %cst_19 {dimension_numbers = #tpu.dot_dimension_numbers<[1], [0], [0], [1], [0, 0, 1, 1], [], []>} : vector<256x128xbf16>, vector<128x128xbf16>, vector<256x128xf32> -> vector<256x128xf32>
    %19 = arith.addf %11, %18 : vector<256x128xf32>
    %c0_20 = arith.constant 0 : index
    %c0_21 = arith.constant 0 : index
    %c2 = arith.constant 2 : index
    %c0_22 = arith.constant 0 : index
    %20 = vector.load %arg1[%c0_20, %c0_21, %c2, %c0_22] : memref<1x18x18x128xf32, #tpu.memory_space<vmem>>, vector<1x16x16x128xf32>
    %21 = vector.shape_cast %20 : vector<1x16x16x128xf32> to vector<16x16x128xf32>
    %22 = vector.shape_cast %21 : vector<16x16x128xf32> to vector<256x128xf32>
    %23 = arith.truncf %22 : vector<256x128xf32> to vector<256x128xbf16>
    %c2_23 = arith.constant 2 : index
    %c0_24 = arith.constant 0 : index
    %c0_25 = arith.constant 0 : index
    %24 = vector.load %arg2[%c2_23, %c0_24, %c0_25] : memref<9x128x128xbf16, #tpu.memory_space<vmem>>, vector<1x128x128xbf16>
    %25 = vector.shape_cast %24 : vector<1x128x128xbf16> to vector<128x128xbf16>
    %cst_26 = arith.constant dense<0.000000e+00> : vector<256x128xf32>
    %26 = tpu.matmul %23, %25, %cst_26 {dimension_numbers = #tpu.dot_dimension_numbers<[1], [0], [0], [1], [0, 0, 1, 1], [], []>} : vector<256x128xbf16>, vector<128x128xbf16>, vector<256x128xf32> -> vector<256x128xf32>
    %27 = arith.addf %19, %26 : vector<256x128xf32>
    %c0_27 = arith.constant 0 : index
    %c1_28 = arith.constant 1 : index
    %c0_29 = arith.constant 0 : index
    %c0_30 = arith.constant 0 : index
    %28 = vector.load %arg1[%c0_27, %c1_28, %c0_29, %c0_30] : memref<1x18x18x128xf32, #tpu.memory_space<vmem>>, vector<1x16x16x128xf32>
    %29 = vector.shape_cast %28 : vector<1x16x16x128xf32> to vector<16x16x128xf32>
    %30 = vector.shape_cast %29 : vector<16x16x128xf32> to vector<256x128xf32>
    %31 = arith.truncf %30 : vector<256x128xf32> to vector<256x128xbf16>
    %c3 = arith.constant 3 : index
    %c0_31 = arith.constant 0 : index
    %c0_32 = arith.constant 0 : index
    %32 = vector.load %arg2[%c3, %c0_31, %c0_32] : memref<9x128x128xbf16, #tpu.memory_space<vmem>>, vector<1x128x128xbf16>
    %33 = vector.shape_cast %32 : vector<1x128x128xbf16> to vector<128x128xbf16>
    %cst_33 = arith.constant dense<0.000000e+00> : vector<256x128xf32>
    %34 = tpu.matmul %31, %33, %cst_33 {dimension_numbers = #tpu.dot_dimension_numbers<[1], [0], [0], [1], [0, 0, 1, 1], [], []>} : vector<256x128xbf16>, vector<128x128xbf16>, vector<256x128xf32> -> vector<256x128xf32>
    %35 = arith.addf %27, %34 : vector<256x128xf32>
    %c0_34 = arith.constant 0 : index
    %c1_35 = arith.constant 1 : index
    %c1_36 = arith.constant 1 : index
    %c0_37 = arith.constant 0 : index
    %36 = vector.load %arg1[%c0_34, %c1_35, %c1_36, %c0_37] : memref<1x18x18x128xf32, #tpu.memory_space<vmem>>, vector<1x16x16x128xf32>
    %37 = vector.shape_cast %36 : vector<1x16x16x128xf32> to vector<16x16x128xf32>
    %38 = vector.shape_cast %37 : vector<16x16x128xf32> to vector<256x128xf32>
    %39 = arith.truncf %38 : vector<256x128xf32> to vector<256x128xbf16>
    %c4 = arith.constant 4 : index
    %c0_38 = arith.constant 0 : index
    %c0_39 = arith.constant 0 : index
    %40 = vector.load %arg2[%c4, %c0_38, %c0_39] : memref<9x128x128xbf16, #tpu.memory_space<vmem>>, vector<1x128x128xbf16>
    %41 = vector.shape_cast %40 : vector<1x128x128xbf16> to vector<128x128xbf16>
    %cst_40 = arith.constant dense<0.000000e+00> : vector<256x128xf32>
    %42 = tpu.matmul %39, %41, %cst_40 {dimension_numbers = #tpu.dot_dimension_numbers<[1], [0], [0], [1], [0, 0, 1, 1], [], []>} : vector<256x128xbf16>, vector<128x128xbf16>, vector<256x128xf32> -> vector<256x128xf32>
    %43 = arith.addf %35, %42 : vector<256x128xf32>
    %c0_41 = arith.constant 0 : index
    %c1_42 = arith.constant 1 : index
    %c2_43 = arith.constant 2 : index
    %c0_44 = arith.constant 0 : index
    %44 = vector.load %arg1[%c0_41, %c1_42, %c2_43, %c0_44] : memref<1x18x18x128xf32, #tpu.memory_space<vmem>>, vector<1x16x16x128xf32>
    %45 = vector.shape_cast %44 : vector<1x16x16x128xf32> to vector<16x16x128xf32>
    %46 = vector.shape_cast %45 : vector<16x16x128xf32> to vector<256x128xf32>
    %47 = arith.truncf %46 : vector<256x128xf32> to vector<256x128xbf16>
    %c5 = arith.constant 5 : index
    %c0_45 = arith.constant 0 : index
    %c0_46 = arith.constant 0 : index
    %48 = vector.load %arg2[%c5, %c0_45, %c0_46] : memref<9x128x128xbf16, #tpu.memory_space<vmem>>, vector<1x128x128xbf16>
    %49 = vector.shape_cast %48 : vector<1x128x128xbf16> to vector<128x128xbf16>
    %cst_47 = arith.constant dense<0.000000e+00> : vector<256x128xf32>
    %50 = tpu.matmul %47, %49, %cst_47 {dimension_numbers = #tpu.dot_dimension_numbers<[1], [0], [0], [1], [0, 0, 1, 1], [], []>} : vector<256x128xbf16>, vector<128x128xbf16>, vector<256x128xf32> -> vector<256x128xf32>
    %51 = arith.addf %43, %50 : vector<256x128xf32>
    %c0_48 = arith.constant 0 : index
    %c2_49 = arith.constant 2 : index
    %c0_50 = arith.constant 0 : index
    %c0_51 = arith.constant 0 : index
    %52 = vector.load %arg1[%c0_48, %c2_49, %c0_50, %c0_51] : memref<1x18x18x128xf32, #tpu.memory_space<vmem>>, vector<1x16x16x128xf32>
    %53 = vector.shape_cast %52 : vector<1x16x16x128xf32> to vector<16x16x128xf32>
    %54 = vector.shape_cast %53 : vector<16x16x128xf32> to vector<256x128xf32>
    %55 = arith.truncf %54 : vector<256x128xf32> to vector<256x128xbf16>
    %c6 = arith.constant 6 : index
    %c0_52 = arith.constant 0 : index
    %c0_53 = arith.constant 0 : index
    %56 = vector.load %arg2[%c6, %c0_52, %c0_53] : memref<9x128x128xbf16, #tpu.memory_space<vmem>>, vector<1x128x128xbf16>
    %57 = vector.shape_cast %56 : vector<1x128x128xbf16> to vector<128x128xbf16>
    %cst_54 = arith.constant dense<0.000000e+00> : vector<256x128xf32>
    %58 = tpu.matmul %55, %57, %cst_54 {dimension_numbers = #tpu.dot_dimension_numbers<[1], [0], [0], [1], [0, 0, 1, 1], [], []>} : vector<256x128xbf16>, vector<128x128xbf16>, vector<256x128xf32> -> vector<256x128xf32>
    %59 = arith.addf %51, %58 : vector<256x128xf32>
    %c0_55 = arith.constant 0 : index
    %c2_56 = arith.constant 2 : index
    %c1_57 = arith.constant 1 : index
    %c0_58 = arith.constant 0 : index
    %60 = vector.load %arg1[%c0_55, %c2_56, %c1_57, %c0_58] : memref<1x18x18x128xf32, #tpu.memory_space<vmem>>, vector<1x16x16x128xf32>
    %61 = vector.shape_cast %60 : vector<1x16x16x128xf32> to vector<16x16x128xf32>
    %62 = vector.shape_cast %61 : vector<16x16x128xf32> to vector<256x128xf32>
    %63 = arith.truncf %62 : vector<256x128xf32> to vector<256x128xbf16>
    %c7 = arith.constant 7 : index
    %c0_59 = arith.constant 0 : index
    %c0_60 = arith.constant 0 : index
    %64 = vector.load %arg2[%c7, %c0_59, %c0_60] : memref<9x128x128xbf16, #tpu.memory_space<vmem>>, vector<1x128x128xbf16>
    %65 = vector.shape_cast %64 : vector<1x128x128xbf16> to vector<128x128xbf16>
    %cst_61 = arith.constant dense<0.000000e+00> : vector<256x128xf32>
    %66 = tpu.matmul %63, %65, %cst_61 {dimension_numbers = #tpu.dot_dimension_numbers<[1], [0], [0], [1], [0, 0, 1, 1], [], []>} : vector<256x128xbf16>, vector<128x128xbf16>, vector<256x128xf32> -> vector<256x128xf32>
    %67 = arith.addf %59, %66 : vector<256x128xf32>
    %c0_62 = arith.constant 0 : index
    %c2_63 = arith.constant 2 : index
    %c2_64 = arith.constant 2 : index
    %c0_65 = arith.constant 0 : index
    %68 = vector.load %arg1[%c0_62, %c2_63, %c2_64, %c0_65] : memref<1x18x18x128xf32, #tpu.memory_space<vmem>>, vector<1x16x16x128xf32>
    %69 = vector.shape_cast %68 : vector<1x16x16x128xf32> to vector<16x16x128xf32>
    %70 = vector.shape_cast %69 : vector<16x16x128xf32> to vector<256x128xf32>
    %71 = arith.truncf %70 : vector<256x128xf32> to vector<256x128xbf16>
    %c8 = arith.constant 8 : index
    %c0_66 = arith.constant 0 : index
    %c0_67 = arith.constant 0 : index
    %72 = vector.load %arg2[%c8, %c0_66, %c0_67] : memref<9x128x128xbf16, #tpu.memory_space<vmem>>, vector<1x128x128xbf16>
    %73 = vector.shape_cast %72 : vector<1x128x128xbf16> to vector<128x128xbf16>
    %cst_68 = arith.constant dense<0.000000e+00> : vector<256x128xf32>
    %74 = tpu.matmul %71, %73, %cst_68 {dimension_numbers = #tpu.dot_dimension_numbers<[1], [0], [0], [1], [0, 0, 1, 1], [], []>} : vector<256x128xbf16>, vector<128x128xbf16>, vector<256x128xf32> -> vector<256x128xf32>
    %75 = arith.addf %67, %74 : vector<256x128xf32>
    %76 = vector.broadcast %0 : vector<1x128xf32> to vector<256x128xf32>
    %77 = arith.mulf %75, %76 : vector<256x128xf32>
    %78 = vector.broadcast %1 : vector<1x128xf32> to vector<256x128xf32>
    %79 = arith.addf %77, %78 : vector<256x128xf32>
    %cst_69 = arith.constant 0.000000e+00 : f32
    %80 = vector.broadcast %cst_69 : f32 to vector<256x128xf32>
    %81 = arith.maximumf %79, %80 : vector<256x128xf32>
    %cst_70 = arith.constant 0.000000e+00 : f32
    %82 = vector.broadcast %cst_70 : f32 to vector<256x128xf32>
    %83 = arith.minimumf %79, %82 : vector<256x128xf32>
    %84 = vector.broadcast %2 : vector<1x1xf32> to vector<256x128xf32>
    %85 = arith.mulf %84, %83 : vector<256x128xf32>
    %86 = arith.addf %81, %85 : vector<256x128xf32>
    %cst_71 = arith.constant 0.000000e+00 : f32
    %87 = vector.broadcast %cst_71 : f32 to vector<1x18x18x128xf32>
    %c0_72 = arith.constant 0 : index
    %c0_73 = arith.constant 0 : index
    %c0_74 = arith.constant 0 : index
    %c0_75 = arith.constant 0 : index
    %88 = vector.load %arg7[%c0_72, %c0_73, %c0_74, %c0_75] : memref<1x18x18x128xf32, #tpu.memory_space<vmem>>, vector<1x18x18x128xf32>
    tpu.vector_store %arg7[%c0_72, %c0_73, %c0_74, %c0_75], %87 {strides = array<i32>} : memref<1x18x18x128xf32, #tpu.memory_space<vmem>>, vector<1x18x18x128xf32>,
    %89 = vector.shape_cast %86 : vector<256x128xf32> to vector<16x16x128xf32>
    %c0_76 = arith.constant 0 : index
    %c1_77 = arith.constant 1 : index
    %c1_78 = arith.constant 1 : index
    %c0_79 = arith.constant 0 : index
    %90 = vector.load %arg7[%c0_76, %c1_77, %c1_78, %c0_79] : memref<1x18x18x128xf32, #tpu.memory_space<vmem>>, vector<1x16x16x128xf32>
    %91 = vector.shape_cast %90 : vector<1x16x16x128xf32> to vector<16x16x128xf32>
    %92 = vector.shape_cast %89 : vector<16x16x128xf32> to vector<1x16x16x128xf32>
    tpu.vector_store %arg7[%c0_76, %c1_77, %c1_78, %c0_79], %92 {strides = array<i32>} : memref<1x18x18x128xf32, #tpu.memory_space<vmem>>, vector<1x16x16x128xf32>,
    %cst_80 = arith.constant 0.000000e+00 : f32
    %93 = vector.broadcast %cst_80 : f32 to vector<256x128xf32>
    %c0_81 = arith.constant 0 : index
    %c0_82 = arith.constant 0 : index
    %c0_83 = arith.constant 0 : index
    %c0_84 = arith.constant 0 : index
    %94 = vector.load %arg7[%c0_81, %c0_82, %c0_83, %c0_84] : memref<1x18x18x128xf32, #tpu.memory_space<vmem>>, vector<1x16x16x128xf32>
    %95 = vector.shape_cast %94 : vector<1x16x16x128xf32> to vector<16x16x128xf32>
    %96 = vector.shape_cast %95 : vector<16x16x128xf32> to vector<256x128xf32>
    %97 = arith.truncf %96 : vector<256x128xf32> to vector<256x128xbf16>
    %c0_85 = arith.constant 0 : index
    %c0_86 = arith.constant 0 : index
    %c0_87 = arith.constant 0 : index
    %98 = vector.load %arg2[%c0_85, %c0_86, %c0_87] : memref<9x128x128xbf16, #tpu.memory_space<vmem>>, vector<1x128x128xbf16>
    %99 = vector.shape_cast %98 : vector<1x128x128xbf16> to vector<128x128xbf16>
    %cst_88 = arith.constant dense<0.000000e+00> : vector<256x128xf32>
    %100 = tpu.matmul %97, %99, %cst_88 {dimension_numbers = #tpu.dot_dimension_numbers<[1], [0], [0], [1], [0, 0, 1, 1], [], []>} : vector<256x128xbf16>, vector<128x128xbf16>, vector<256x128xf32> -> vector<256x128xf32>
    %101 = arith.addf %93, %100 : vector<256x128xf32>
    %c0_89 = arith.constant 0 : index
    %c0_90 = arith.constant 0 : index
    %c1_91 = arith.constant 1 : index
    %c0_92 = arith.constant 0 : index
    %102 = vector.load %arg7[%c0_89, %c0_90, %c1_91, %c0_92] : memref<1x18x18x128xf32, #tpu.memory_space<vmem>>, vector<1x16x16x128xf32>
    %103 = vector.shape_cast %102 : vector<1x16x16x128xf32> to vector<16x16x128xf32>
    %104 = vector.shape_cast %103 : vector<16x16x128xf32> to vector<256x128xf32>
    %105 = arith.truncf %104 : vector<256x128xf32> to vector<256x128xbf16>
    %c1_93 = arith.constant 1 : index
    %c0_94 = arith.constant 0 : index
    %c0_95 = arith.constant 0 : index
    %106 = vector.load %arg2[%c1_93, %c0_94, %c0_95] : memref<9x128x128xbf16, #tpu.memory_space<vmem>>, vector<1x128x128xbf16>
    %107 = vector.shape_cast %106 : vector<1x128x128xbf16> to vector<128x128xbf16>
    %cst_96 = arith.constant dense<0.000000e+00> : vector<256x128xf32>
    %108 = tpu.matmul %105, %107, %cst_96 {dimension_numbers = #tpu.dot_dimension_numbers<[1], [0], [0], [1], [0, 0, 1, 1], [], []>} : vector<256x128xbf16>, vector<128x128xbf16>, vector<256x128xf32> -> vector<256x128xf32>
    %109 = arith.addf %101, %108 : vector<256x128xf32>
    %c0_97 = arith.constant 0 : index
    %c0_98 = arith.constant 0 : index
    %c2_99 = arith.constant 2 : index
    %c0_100 = arith.constant 0 : index
    %110 = vector.load %arg7[%c0_97, %c0_98, %c2_99, %c0_100] : memref<1x18x18x128xf32, #tpu.memory_space<vmem>>, vector<1x16x16x128xf32>
    %111 = vector.shape_cast %110 : vector<1x16x16x128xf32> to vector<16x16x128xf32>
    %112 = vector.shape_cast %111 : vector<16x16x128xf32> to vector<256x128xf32>
    %113 = arith.truncf %112 : vector<256x128xf32> to vector<256x128xbf16>
    %c2_101 = arith.constant 2 : index
    %c0_102 = arith.constant 0 : index
    %c0_103 = arith.constant 0 : index
    %114 = vector.load %arg2[%c2_101, %c0_102, %c0_103] : memref<9x128x128xbf16, #tpu.memory_space<vmem>>, vector<1x128x128xbf16>
    %115 = vector.shape_cast %114 : vector<1x128x128xbf16> to vector<128x128xbf16>
    %cst_104 = arith.constant dense<0.000000e+00> : vector<256x128xf32>
    %116 = tpu.matmul %113, %115, %cst_104 {dimension_numbers = #tpu.dot_dimension_numbers<[1], [0], [0], [1], [0, 0, 1, 1], [], []>} : vector<256x128xbf16>, vector<128x128xbf16>, vector<256x128xf32> -> vector<256x128xf32>
    %117 = arith.addf %109, %116 : vector<256x128xf32>
    %c0_105 = arith.constant 0 : index
    %c1_106 = arith.constant 1 : index
    %c0_107 = arith.constant 0 : index
    %c0_108 = arith.constant 0 : index
    %118 = vector.load %arg7[%c0_105, %c1_106, %c0_107, %c0_108] : memref<1x18x18x128xf32, #tpu.memory_space<vmem>>, vector<1x16x16x128xf32>
    %119 = vector.shape_cast %118 : vector<1x16x16x128xf32> to vector<16x16x128xf32>
    %120 = vector.shape_cast %119 : vector<16x16x128xf32> to vector<256x128xf32>
    %121 = arith.truncf %120 : vector<256x128xf32> to vector<256x128xbf16>
    %c3_109 = arith.constant 3 : index
    %c0_110 = arith.constant 0 : index
    %c0_111 = arith.constant 0 : index
    %122 = vector.load %arg2[%c3_109, %c0_110, %c0_111] : memref<9x128x128xbf16, #tpu.memory_space<vmem>>, vector<1x128x128xbf16>
    %123 = vector.shape_cast %122 : vector<1x128x128xbf16> to vector<128x128xbf16>
    %cst_112 = arith.constant dense<0.000000e+00> : vector<256x128xf32>
    %124 = tpu.matmul %121, %123, %cst_112 {dimension_numbers = #tpu.dot_dimension_numbers<[1], [0], [0], [1], [0, 0, 1, 1], [], []>} : vector<256x128xbf16>, vector<128x128xbf16>, vector<256x128xf32> -> vector<256x128xf32>
    %125 = arith.addf %117, %124 : vector<256x128xf32>
    %c0_113 = arith.constant 0 : index
    %c1_114 = arith.constant 1 : index
    %c1_115 = arith.constant 1 : index
    %c0_116 = arith.constant 0 : index
    %126 = vector.load %arg7[%c0_113, %c1_114, %c1_115, %c0_116] : memref<1x18x18x128xf32, #tpu.memory_space<vmem>>, vector<1x16x16x128xf32>
    %127 = vector.shape_cast %126 : vector<1x16x16x128xf32> to vector<16x16x128xf32>
    %128 = vector.shape_cast %127 : vector<16x16x128xf32> to vector<256x128xf32>
    %129 = arith.truncf %128 : vector<256x128xf32> to vector<256x128xbf16>
    %c4_117 = arith.constant 4 : index
    %c0_118 = arith.constant 0 : index
    %c0_119 = arith.constant 0 : index
    %130 = vector.load %arg2[%c4_117, %c0_118, %c0_119] : memref<9x128x128xbf16, #tpu.memory_space<vmem>>, vector<1x128x128xbf16>
    %131 = vector.shape_cast %130 : vector<1x128x128xbf16> to vector<128x128xbf16>
    %cst_120 = arith.constant dense<0.000000e+00> : vector<256x128xf32>
    %132 = tpu.matmul %129, %131, %cst_120 {dimension_numbers = #tpu.dot_dimension_numbers<[1], [0], [0], [1], [0, 0, 1, 1], [], []>} : vector<256x128xbf16>, vector<128x128xbf16>, vector<256x128xf32> -> vector<256x128xf32>
    %133 = arith.addf %125, %132 : vector<256x128xf32>
    %c0_121 = arith.constant 0 : index
    %c1_122 = arith.constant 1 : index
    %c2_123 = arith.constant 2 : index
    %c0_124 = arith.constant 0 : index
    %134 = vector.load %arg7[%c0_121, %c1_122, %c2_123, %c0_124] : memref<1x18x18x128xf32, #tpu.memory_space<vmem>>, vector<1x16x16x128xf32>
    %135 = vector.shape_cast %134 : vector<1x16x16x128xf32> to vector<16x16x128xf32>
    %136 = vector.shape_cast %135 : vector<16x16x128xf32> to vector<256x128xf32>
    %137 = arith.truncf %136 : vector<256x128xf32> to vector<256x128xbf16>
    %c5_125 = arith.constant 5 : index
    %c0_126 = arith.constant 0 : index
    %c0_127 = arith.constant 0 : index
    %138 = vector.load %arg2[%c5_125, %c0_126, %c0_127] : memref<9x128x128xbf16, #tpu.memory_space<vmem>>, vector<1x128x128xbf16>
    %139 = vector.shape_cast %138 : vector<1x128x128xbf16> to vector<128x128xbf16>
    %cst_128 = arith.constant dense<0.000000e+00> : vector<256x128xf32>
    %140 = tpu.matmul %137, %139, %cst_128 {dimension_numbers = #tpu.dot_dimension_numbers<[1], [0], [0], [1], [0, 0, 1, 1], [], []>} : vector<256x128xbf16>, vector<128x128xbf16>, vector<256x128xf32> -> vector<256x128xf32>
    %141 = arith.addf %133, %140 : vector<256x128xf32>
    %c0_129 = arith.constant 0 : index
    %c2_130 = arith.constant 2 : index
    %c0_131 = arith.constant 0 : index
    %c0_132 = arith.constant 0 : index
    %142 = vector.load %arg7[%c0_129, %c2_130, %c0_131, %c0_132] : memref<1x18x18x128xf32, #tpu.memory_space<vmem>>, vector<1x16x16x128xf32>
    %143 = vector.shape_cast %142 : vector<1x16x16x128xf32> to vector<16x16x128xf32>
    %144 = vector.shape_cast %143 : vector<16x16x128xf32> to vector<256x128xf32>
    %145 = arith.truncf %144 : vector<256x128xf32> to vector<256x128xbf16>
    %c6_133 = arith.constant 6 : index
    %c0_134 = arith.constant 0 : index
    %c0_135 = arith.constant 0 : index
    %146 = vector.load %arg2[%c6_133, %c0_134, %c0_135] : memref<9x128x128xbf16, #tpu.memory_space<vmem>>, vector<1x128x128xbf16>
    %147 = vector.shape_cast %146 : vector<1x128x128xbf16> to vector<128x128xbf16>
    %cst_136 = arith.constant dense<0.000000e+00> : vector<256x128xf32>
    %148 = tpu.matmul %145, %147, %cst_136 {dimension_numbers = #tpu.dot_dimension_numbers<[1], [0], [0], [1], [0, 0, 1, 1], [], []>} : vector<256x128xbf16>, vector<128x128xbf16>, vector<256x128xf32> -> vector<256x128xf32>
    %149 = arith.addf %141, %148 : vector<256x128xf32>
    %c0_137 = arith.constant 0 : index
    %c2_138 = arith.constant 2 : index
    %c1_139 = arith.constant 1 : index
    %c0_140 = arith.constant 0 : index
    %150 = vector.load %arg7[%c0_137, %c2_138, %c1_139, %c0_140] : memref<1x18x18x128xf32, #tpu.memory_space<vmem>>, vector<1x16x16x128xf32>
    %151 = vector.shape_cast %150 : vector<1x16x16x128xf32> to vector<16x16x128xf32>
    %152 = vector.shape_cast %151 : vector<16x16x128xf32> to vector<256x128xf32>
    %153 = arith.truncf %152 : vector<256x128xf32> to vector<256x128xbf16>
    %c7_141 = arith.constant 7 : index
    %c0_142 = arith.constant 0 : index
    %c0_143 = arith.constant 0 : index
    %154 = vector.load %arg2[%c7_141, %c0_142, %c0_143] : memref<9x128x128xbf16, #tpu.memory_space<vmem>>, vector<1x128x128xbf16>
    %155 = vector.shape_cast %154 : vector<1x128x128xbf16> to vector<128x128xbf16>
    %cst_144 = arith.constant dense<0.000000e+00> : vector<256x128xf32>
    %156 = tpu.matmul %153, %155, %cst_144 {dimension_numbers = #tpu.dot_dimension_numbers<[1], [0], [0], [1], [0, 0, 1, 1], [], []>} : vector<256x128xbf16>, vector<128x128xbf16>, vector<256x128xf32> -> vector<256x128xf32>
    %157 = arith.addf %149, %156 : vector<256x128xf32>
    %c0_145 = arith.constant 0 : index
    %c2_146 = arith.constant 2 : index
    %c2_147 = arith.constant 2 : index
    %c0_148 = arith.constant 0 : index
    %158 = vector.load %arg7[%c0_145, %c2_146, %c2_147, %c0_148] : memref<1x18x18x128xf32, #tpu.memory_space<vmem>>, vector<1x16x16x128xf32>
    %159 = vector.shape_cast %158 : vector<1x16x16x128xf32> to vector<16x16x128xf32>
    %160 = vector.shape_cast %159 : vector<16x16x128xf32> to vector<256x128xf32>
    %161 = arith.truncf %160 : vector<256x128xf32> to vector<256x128xbf16>
    %c8_149 = arith.constant 8 : index
    %c0_150 = arith.constant 0 : index
    %c0_151 = arith.constant 0 : index
    %162 = vector.load %arg2[%c8_149, %c0_150, %c0_151] : memref<9x128x128xbf16, #tpu.memory_space<vmem>>, vector<1x128x128xbf16>
    %163 = vector.shape_cast %162 : vector<1x128x128xbf16> to vector<128x128xbf16>
    %cst_152 = arith.constant dense<0.000000e+00> : vector<256x128xf32>
    %164 = tpu.matmul %161, %163, %cst_152 {dimension_numbers = #tpu.dot_dimension_numbers<[1], [0], [0], [1], [0, 0, 1, 1], [], []>} : vector<256x128xbf16>, vector<128x128xbf16>, vector<256x128xf32> -> vector<256x128xf32>
    %165 = arith.addf %157, %164 : vector<256x128xf32>
    %166 = vector.broadcast %0 : vector<1x128xf32> to vector<256x128xf32>
    %167 = arith.mulf %165, %166 : vector<256x128xf32>
    %168 = vector.broadcast %1 : vector<1x128xf32> to vector<256x128xf32>
    %169 = arith.addf %167, %168 : vector<256x128xf32>
    %c0_153 = arith.constant 0 : index
    %c1_154 = arith.constant 1 : index
    %c1_155 = arith.constant 1 : index
    %c0_156 = arith.constant 0 : index
    %170 = vector.load %arg1[%c0_153, %c1_154, %c1_155, %c0_156] : memref<1x18x18x128xf32, #tpu.memory_space<vmem>>, vector<1x16x16x128xf32>
    %171 = vector.shape_cast %170 : vector<1x16x16x128xf32> to vector<16x16x128xf32>
    %172 = vector.shape_cast %171 : vector<16x16x128xf32> to vector<256x128xf32>
    %173 = arith.addf %169, %172 : vector<256x128xf32>
    %c0_157 = arith.constant 0 : index
    %c0_158 = arith.constant 0 : index
    %c0_159 = arith.constant 0 : index
    %174 = vector.load %arg6[%c0_157, %c0_158, %c0_159] : memref<1x256x128xf32, #tpu.memory_space<vmem>>, vector<1x256x128xf32>
    %175 = vector.shape_cast %174 : vector<1x256x128xf32> to vector<256x128xf32>
    %176 = vector.shape_cast %173 : vector<256x128xf32> to vector<1x256x128xf32>
    tpu.vector_store %arg6[%c0_157, %c0_158, %c0_159], %176 {strides = array<i32>} : memref<1x256x128xf32, #tpu.memory_space<vmem>>, vector<1x256x128xf32>,
    return
  }
  func.func @transform_0(%arg0: i32) -> (i32, i32, i32, i32) {
    %c0_i32 = arith.constant 0 : i32
    %c0_i32_0 = arith.constant 0 : i32
    %c0_i32_1 = arith.constant 0 : i32
    %c0_i32_2 = arith.constant 0 : i32
    return %arg0, %c0_i32, %c0_i32_0, %c0_i32_1 : i32, i32, i32, i32
  }
  func.func @transform_1(%arg0: i32) -> (i32, i32, i32) {
    %c0_i32 = arith.constant 0 : i32
    %c0_i32_0 = arith.constant 0 : i32
    %c0_i32_1 = arith.constant 0 : i32
    %c0_i32_2 = arith.constant 0 : i32
    return %c0_i32, %c0_i32_0, %c0_i32_1 : i32, i32, i32
  }
  func.func @transform_2(%arg0: i32) -> (i32, i32) {
    %c0_i32 = arith.constant 0 : i32
    %c0_i32_0 = arith.constant 0 : i32
    %c0_i32_1 = arith.constant 0 : i32
    return %c0_i32, %c0_i32_0 : i32, i32
  }
  func.func @transform_3(%arg0: i32) -> (i32, i32) {
    %c0_i32 = arith.constant 0 : i32
    %c0_i32_0 = arith.constant 0 : i32
    %c0_i32_1 = arith.constant 0 : i32
    return %c0_i32, %c0_i32_0 : i32, i32
  }
  func.func @transform_4(%arg0: i32) -> (i32, i32) {
    %c0_i32 = arith.constant 0 : i32
    %c0_i32_0 = arith.constant 0 : i32
    %c0_i32_1 = arith.constant 0 : i32
    return %c0_i32, %c0_i32_0 : i32, i32
  }
  func.func @transform_5(%arg0: i32) -> (i32, i32, i32) {
    %c0_i32 = arith.constant 0 : i32
    %c0_i32_0 = arith.constant 0 : i32
    %c0_i32_1 = arith.constant 0 : i32
    return %arg0, %c0_i32, %c0_i32_0 : i32, i32, i32
  }
}

</mosaic_0001>

<llo_original>
// kernel: resblock_forward.1
$region0: #{resblock_forward.1}
  #allocation0 [shape = 'u32[]', space=smem, size = 0x4, offset = 0x4, fixed_abs, tag = 'smem constant byte address 0x4 - core index']
  #allocation1 [shape = 'u32[144,128]{1,0:T(1,128)}', space=vmem, size = 0x12000, scoped, tag = 'internal scratch']
  #allocation2 [shape = 'f32[1,18,18,128]{3,2,1,0:T(8,128)}', space=vmem, size = 0x36000, scoped, tag = 'scratch operand']
  #allocation3 [shape = 'f32[1,1]{1,0:T(1,128)S(1)}', space=vmem, size = 0x200, scoped, tag = 'scoped memory for resblock_forward.1']
  %s0 = inlined_call_operand.vmem [shape: f32[2,18,18,128], index: 0, kind: input, shape index: {}]
  %s1 = inlined_call_operand.vmem [shape: bf16[9,128,128], index: 1, kind: input, shape index: {}]
  %s2 = inlined_call_operand.vmem [shape: f32[1,128], index: 2, kind: input, shape index: {}]
  %s3 = inlined_call_operand.vmem [shape: f32[1,128], index: 3, kind: input, shape index: {}]
  %s4 = inlined_call_operand.<no memory space> [shape: f32[1,1], index: 4, kind: input, shape index: {}]
  %s5 = inlined_call_operand.hbm [shape: f32[2,256,128], index: 5, kind: output, shape index: {}]
  %s6 = sld [smem:[#allocation0]]
  $region53: #{resblock_forward.1} parent=0
    _
  %s8 = ssub.s32 1, %s6
  %s9 = scalar_select 0, %s8, %s6
  %v10 = vstv %s4
  %11 = vst [vmem:[#allocation3] sm:$0x1] %v10
  $region1: #{resblock_forward.1} parent=0
    #allocation4 [shape = 'u8[262144]{0}', space=vmem, size = 0x40000, scoped, tag = 'output window, operand 0']
    #allocation5 [shape = 's32[2]{0}', space=sflag, size = 0x8, scoped, tag = 'scoped memory for resblock_forward.1']
    %12 = vsyncpa [#allocation5], 0
    %s13 = scalar_lea.sflag [#allocation5], 1
    %14 = vsyncpa %s13, 0
    loop: start=0, step=1, limit=4
    $region2: #{resblock_forward.1} parent=1 // loop_pre_header
      _
    $region3: #{resblock_forward.1} parent=1 // loop_header
      %s16 = sphi 0, %s20
      %p17 = scmp.ge.s32.totalorder %s16, 4
      %s26 = sphi 0, %s28
      %s29 = sphi 0, %s26
      %s30 = sphi 0, %s29
      %s46 = sphi 0, %s30
      %s50 = sphi 0, %s50
      %s52 = sphi 0, %s50
      %s53 = sphi 0, %s52
      %s67 = sphi 0, %s53
      %s71 = sphi 0, %s71
      %s73 = sphi 0, %s71
      %s74 = sphi 0, %s73
      %s88 = sphi 0, %s74
      %s92 = sphi 0, %s92
      %s94 = sphi 0, %s92
      %s95 = sphi 0, %s94
      %s109 = sphi 0, %s95
      %s113 = sphi 0, %s113
      %s115 = sphi 0, %s113
      %s116 = sphi 0, %s115
      %s130 = sphi 0, %s116
      %s136 = sphi 0, %s138
      %s139 = sphi 0, %s136
      %s140 = sphi 0, %s139
      %s156 = sphi 0, %s140
    $region4: #{resblock_forward.1} parent=1 // loop_header_branch
      %19 = sbr.rel (%p17) target = $region8
    $region5: #{resblock_forward.1} parent=1 // loop_body
      %s21 = ssub.s32 %s16, 1
      %s22 = ssub.s32 %s16, 2
      %s23 = sadd.s32 %s16, 1
      %s24 = ssub.s32 %s16, %s23
      %p25 = scmp.eq.s32.totalorder %s24, 0
      %s27 = sadd.s32 %s26, 1
      %s28 = scalar_select %p25, %s26, %s27
      %p31 = pneg %p25
      %p32 = scmp.eq.s32.totalorder %s16, 1
      %p33 = por %p31, %p32
      %p34 = scmp.ne.s32.totalorder %s26, %s29
      %p35 = scmp.eq.s32.totalorder %s16, 0
      %p36 = por %p34, %p35
      %p37 = scmp.ne.s32.totalorder %s26, %s29
      %p38 = scmp.eq.s32.totalorder %s21, 1
      %p39 = por %p37, %p38
      %p40 = scmp.ne.s32.totalorder %s29, %s30
      %p41 = scmp.eq.s32.totalorder %s21, 0
      %p42 = por %p40, %p41
      %p43 = scmp.ne.s32.totalorder %s29, %s30
      %p44 = scmp.eq.s32.totalorder %s22, 1
      %p45 = por %p43, %p44
      %p47 = scmp.ne.s32.totalorder %s30, %s46
      %p48 = scmp.eq.s32.totalorder %s22, 0
      %p49 = por %p47, %p48
      %s51 = sadd.s32 %s50, 1
      %p54 = scmp.eq.s32.totalorder %s16, 1
      %p55 = scmp.ne.s32.totalorder %s50, %s52
      %p56 = scmp.eq.s32.totalorder %s16, 0
      %p57 = por %p55, %p56
      %p58 = scmp.ne.s32.totalorder %s50, %s52
      %p59 = scmp.eq.s32.totalorder %s21, 1
      %p60 = por %p58, %p59
      %p61 = scmp.ne.s32.totalorder %s52, %s53
      %p62 = scmp.eq.s32.totalorder %s21, 0
      %p63 = por %p61, %p62
      %p64 = scmp.ne.s32.totalorder %s52, %s53
      %p65 = scmp.eq.s32.totalorder %s22, 1
      %p66 = por %p64, %p65
      %p68 = scmp.ne.s32.totalorder %s53, %s67
      %p69 = scmp.eq.s32.totalorder %s22, 0
      %p70 = por %p68, %p69
      %s72 = sadd.s32 %s71, 1
      %p75 = scmp.eq.s32.totalorder %s16, 1
      %p76 = scmp.ne.s32.totalorder %s71, %s73
      %p77 = scmp.eq.s32.totalorder %s16, 0
      %p78 = por %p76, %p77
      %p79 = scmp.ne.s32.totalorder %s71, %s73
      %p80 = scmp.eq.s32.totalorder %s21, 1
      %p81 = por %p79, %p80
      %p82 = scmp.ne.s32.totalorder %s73, %s74
      %p83 = scmp.eq.s32.totalorder %s21, 0
      %p84 = por %p82, %p83
      %p85 = scmp.ne.s32.totalorder %s73, %s74
      %p86 = scmp.eq.s32.totalorder %s22, 1
      %p87 = por %p85, %p86
      %p89 = scmp.ne.s32.totalorder %s74, %s88
      %p90 = scmp.eq.s32.totalorder %s22, 0
      %p91 = por %p89, %p90
      %s93 = sadd.s32 %s92, 1
      %p96 = scmp.eq.s32.totalorder %s16, 1
      %p97 = scmp.ne.s32.totalorder %s92, %s94
      %p98 = scmp.eq.s32.totalorder %s16, 0
      %p99 = por %p97, %p98
      %p100 = scmp.ne.s32.totalorder %s92, %s94
      %p101 = scmp.eq.s32.totalorder %s21, 1
      %p102 = por %p100, %p101
      %p103 = scmp.ne.s32.totalorder %s94, %s95
      %p104 = scmp.eq.s32.totalorder %s21, 0
      %p105 = por %p103, %p104
      %p106 = scmp.ne.s32.totalorder %s94, %s95
      %p107 = scmp.eq.s32.totalorder %s22, 1
      %p108 = por %p106, %p107
      %p110 = scmp.ne.s32.totalorder %s95, %s109
      %p111 = scmp.eq.s32.totalorder %s22, 0
      %p112 = por %p110, %p111
      %s114 = sadd.s32 %s113, 1
      %p117 = scmp.eq.s32.totalorder %s16, 1
      %p118 = scmp.ne.s32.totalorder %s113, %s115
      %p119 = scmp.eq.s32.totalorder %s16, 0
      %p120 = por %p118, %p119
      %p121 = scmp.ne.s32.totalorder %s113, %s115
      %p122 = scmp.eq.s32.totalorder %s21, 1
      %p123 = por %p121, %p122
      %p124 = scmp.ne.s32.totalorder %s115, %s116
      %p125 = scmp.eq.s32.totalorder %s21, 0
      %p126 = por %p124, %p125
      %p127 = scmp.ne.s32.totalorder %s115, %s116
      %p128 = scmp.eq.s32.totalorder %s22, 1
      %p129 = por %p127, %p128
      %p131 = scmp.ne.s32.totalorder %s116, %s130
      %p132 = scmp.eq.s32.totalorder %s22, 0
      %p133 = por %p131, %p132
      %s134 = ssub.s32 %s16, %s23
      %p135 = scmp.eq.s32.totalorder %s134, 0
      %s137 = sadd.s32 %s136, 1
      %s138 = scalar_select %p135, %s136, %s137
      %p141 = pneg %p135
      %p142 = scmp.eq.s32.totalorder %s16, 1
      %p143 = por %p141, %p142
      %p144 = scmp.ne.s32.totalorder %s136, %s139
      %p145 = scmp.eq.s32.totalorder %s16, 0
      %p146 = por %p144, %p145
      %p147 = scmp.ne.s32.totalorder %s136, %s139
      %p148 = scmp.eq.s32.totalorder %s21, 1
      %p149 = por %p147, %p148
      %p150 = scmp.ne.s32.totalorder %s139, %s140
      %p151 = scmp.eq.s32.totalorder %s21, 0
      %p152 = por %p150, %p151
      %p153 = scmp.ne.s32.totalorder %s139, %s140
      %p154 = scmp.eq.s32.totalorder %s22, 1
      %p155 = por %p153, %p154
      %p157 = scmp.ne.s32.totalorder %s140, %s156
      %p158 = scmp.eq.s32.totalorder %s22, 0
      %p159 = por %p157, %p158
      %p160 = scmp.le.s32.totalorder 1, %s16
      %p161 = scmp.lt.s32.totalorder %s16, 3
      %p162 = pnand %p160, %p161
      %p163 = pneg %p162
      // Predicated region
      $region9: #{resblock_forward.1} parent=5 // pred_check
        _
      $region10: #{resblock_forward.1} parent=5 // pred_check_branch
        %165 = sbr.rel (%p162) target = $region12
      $region11: #{resblock_forward.1} parent=5 // pred_region
        %s166 = ssub.s32 %s16, 1
        // Predicated region
        $region13: #{resblock_forward.1} parent=11 // pred_check
          %p167 = pneg %p63
        $region14: #{resblock_forward.1} parent=11 // pred_check_branch
          %169 = sbr.rel (%p167) target = $region16
        $region15: #{resblock_forward.1} parent=11 // pred_region
          _
        $region16: #{resblock_forward.1} parent=11 // pred_fallthru
          _
        // Predicated region
        $region17: #{resblock_forward.1} parent=11 // pred_check
          %p170 = pneg %p84
        $region18: #{resblock_forward.1} parent=11 // pred_check_branch
          %172 = sbr.rel (%p170) target = $region20
        $region19: #{resblock_forward.1} parent=11 // pred_region
          _
        $region20: #{resblock_forward.1} parent=11 // pred_fallthru
          _
        // Predicated region
        $region21: #{resblock_forward.1} parent=11 // pred_check
          %p173 = pneg %p105
        $region22: #{resblock_forward.1} parent=11 // pred_check_branch
          %175 = sbr.rel (%p173) target = $region24
        $region23: #{resblock_forward.1} parent=11 // pred_region
          _
        $region24: #{resblock_forward.1} parent=11 // pred_fallthru
          _
        // Predicated region
        $region25: #{resblock_forward.1} parent=11 // pred_check
          %p176 = pneg %p126
        $region26: #{resblock_forward.1} parent=11 // pred_check_branch
          %178 = sbr.rel (%p176) target = $region28
        $region27: #{resblock_forward.1} parent=11 // pred_region
          _
        $region28: #{resblock_forward.1} parent=11 // pred_fallthru
          _
      $region12: #{resblock_forward.1} parent=5 // pred_fallthru
        _
      %p179 = scmp.lt.s32.totalorder %s16, 2
      // Predicated region
      $region29: #{resblock_forward.1} parent=5 // pred_check
        %p180 = pneg %p179
      $region30: #{resblock_forward.1} parent=5 // pred_check_branch
        %182 = sbr.rel (%p180) target = $region32
      $region31: #{resblock_forward.1} parent=5 // pred_region
        // Predicated region
        $region33: #{resblock_forward.1} parent=31 // pred_check
          %p183 = pneg %p36
        $region34: #{resblock_forward.1} parent=31 // pred_check_branch
          %185 = sbr.rel (%p183) target = $region36
        $region35: #{resblock_forward.1} parent=31 // pred_region
          %p186 = scmp.lt.s32.totalorder %s16, 1
          %s187 = scalar_select %p186, %s16, 1
          %s188 = smul.addr %s187, 54
          %s189 = smul.addr %s188, 8
          %s190 = scalar_lea.vmem %s0, %s189
        $region36: #{resblock_forward.1} parent=31 // pred_fallthru
          _
      $region32: #{resblock_forward.1} parent=5 // pred_fallthru
        _
      %p191 = scmp.le.s32.totalorder 1, %s16
      %p192 = scmp.lt.s32.totalorder %s16, 3
      %p193 = pnand %p191, %p192
      %p194 = pneg %p193
      // Predicated region
      $region37: #{resblock_forward.1} parent=5 // pred_check
        _
      $region38: #{resblock_forward.1} parent=5 // pred_check_branch
        %196 = sbr.rel (%p193) target = $region40
      $region39: #{resblock_forward.1} parent=5 // pred_region
        %s197 = ssub.s32 %s16, 1
        %p198 = scmp.lt.s32.totalorder %s21, 1
        %s199 = scalar_select %p198, %s21, 1
        %s200 = smul.addr %s199, 54
        %s201 = smul.addr %s200, 8
        %s202 = scalar_lea.vmem %s0, %s201
        %p203 = pneg %p42
        %p204 = pneg %p39
        %p205 = pneg %p63
        %p206 = pneg %p60
        %p207 = pneg %p84
        %p208 = pneg %p81
        %p209 = pneg %p105
        %p210 = pneg %p102
        %p211 = pneg %p126
        %p212 = pneg %p123
        %p213 = pneg %p152
        %p214 = pneg %p149
        %s215 = sand.u32 %s139, 1
        %s216 = scalar_lea.sflag [#allocation5], %s215
        %s217 = sand.u32 %s139, 1
        %s218 = smul.addr %s217, 256
        %s219 = scalar_lea.vmem [#allocation4], %s218
        %p220 = scmp.lt.s32.totalorder %s21, 1
        %s221 = scalar_select %p220, %s21, 1
        %s222 = smul.addr %s221, 54
        %s223 = smul.addr %s222, 8
        %s224 = scalar_lea.vmem %s0, %s223
        %v226 = vld [vmem:[%s2] sm:$0x1]
        %v227 = vld [vmem:[%s3] sm:$0x1]
        %v228 = vld [vmem:[#allocation3] sm:$0x1]
        %v229 = vld [vmem:[%s224] sm:$0xff]
        %v230 = vld [vmem:[%s224 + $0x8] sm:$0xff]
        %v231 = vld [vmem:[%s224 + $0x18] sm:$0xff]
        %v232 = vld [vmem:[%s224 + $0x20] sm:$0xff]
        %v233 = vld [vmem:[%s224 + $0x30] sm:$0xff]
        %v234 = vld [vmem:[%s224 + $0x38] sm:$0xff]
        %v235 = vld [vmem:[%s224 + $0x48] sm:$0xff]
        %v236 = vld [vmem:[%s224 + $0x50] sm:$0xff]
        %v237 = vld [vmem:[%s224 + $0x60] sm:$0xff]
        %v238 = vld [vmem:[%s224 + $0x68] sm:$0xff]
        %v239 = vld [vmem:[%s224 + $0x78] sm:$0xff]
        %v240 = vld [vmem:[%s224 + $0x80] sm:$0xff]
        %v241 = vld [vmem:[%s224 + $0x90] sm:$0xff]
        %v242 = vld [vmem:[%s224 + $0x98] sm:$0xff]
        %v243 = vld [vmem:[%s224 + $0xa8] sm:$0xff]
        %v244 = vld [vmem:[%s224 + $0xb0] sm:$0xff]
        %v245 = vld [vmem:[%s224 + $0xc0] sm:$0xff]
        %v246 = vld [vmem:[%s224 + $0xc8] sm:$0xff]
        %v247 = vld [vmem:[%s224 + $0xd8] sm:$0xff]
        %v248 = vld [vmem:[%s224 + $0xe0] sm:$0xff]
        %v249 = vld [vmem:[%s224 + $0xf0] sm:$0xff]
        %v250 = vld [vmem:[%s224 + $0xf8] sm:$0xff]
        %v251 = vld [vmem:[%s224 + $0x108] sm:$0xff]
        %v252 = vld [vmem:[%s224 + $0x110] sm:$0xff]
        %v253 = vld [vmem:[%s224 + $0x120] sm:$0xff]
        %v254 = vld [vmem:[%s224 + $0x128] sm:$0xff]
        %v255 = vld [vmem:[%s224 + $0x138] sm:$0xff]
        %v256 = vld [vmem:[%s224 + $0x140] sm:$0xff]
        %v257 = vld [vmem:[%s224 + $0x150] sm:$0xff]
        %v258 = vld [vmem:[%s224 + $0x158] sm:$0xff]
        %v259 = vld [vmem:[%s224 + $0x168] sm:$0xff]
        %v260 = vld [vmem:[%s224 + $0x170] sm:$0xff]
        %v261 = vpack.c.bf16 %v230, %v229
        %v262 = vpack.c.bf16 %v232, %v231
        %v263 = vpack.c.bf16 %v234, %v233
        %v264 = vpack.c.bf16 %v236, %v235
        %v265 = vpack.c.bf16 %v238, %v237
        %v266 = vpack.c.bf16 %v240, %v239
        %v267 = vpack.c.bf16 %v242, %v241
        %v268 = vpack.c.bf16 %v244, %v243
        %v269 = vpack.c.bf16 %v246, %v245
        %v270 = vpack.c.bf16 %v248, %v247
        %v271 = vpack.c.bf16 %v250, %v249
        %v272 = vpack.c.bf16 %v252, %v251
        %v273 = vpack.c.bf16 %v254, %v253
        %v274 = vpack.c.bf16 %v256, %v255
        %v275 = vpack.c.bf16 %v258, %v257
        %v276 = vpack.c.bf16 %v260, %v259
        %v277 = vld [vmem:[%s1] sm:$0xf]
        %v278 = vld [vmem:[%s1 + $0x4] sm:$0xf]
        %v279 = vld [vmem:[%s1 + $0x8] sm:$0xf]
        %v280 = vld [vmem:[%s1 + $0xc] sm:$0xf]
        %v281 = vld [vmem:[%s1 + $0x10] sm:$0xf]
        %v282 = vld [vmem:[%s1 + $0x14] sm:$0xf]
        %v283 = vld [vmem:[%s1 + $0x18] sm:$0xf]
        %v284 = vld [vmem:[%s1 + $0x1c] sm:$0xf]
        %v285 = vld [vmem:[%s1 + $0x20] sm:$0xf]
        %v286 = vld [vmem:[%s1 + $0x24] sm:$0xf]
        %v287 = vld [vmem:[%s1 + $0x28] sm:$0xf]
        %v288 = vld [vmem:[%s1 + $0x2c] sm:$0xf]
        %v289 = vld [vmem:[%s1 + $0x30] sm:$0xf]
        %v290 = vld [vmem:[%s1 + $0x34] sm:$0xf]
        %v291 = vld [vmem:[%s1 + $0x38] sm:$0xf]
        %v292 = vld [vmem:[%s1 + $0x3c] sm:$0xf]
        %v293 = vld [vmem:[%s224 + $0x1] sm:$0xff]
        %v294 = vld [vmem:[%s224 + $0x9] sm:$0xff]
        %v295 = vld [vmem:[%s224 + $0x19] sm:$0xff]
        %v296 = vld [vmem:[%s224 + $0x21] sm:$0xff]
        %v297 = vld [vmem:[%s224 + $0x31] sm:$0xff]
        %v298 = vld [vmem:[%s224 + $0x39] sm:$0xff]
        %v299 = vld [vmem:[%s224 + $0x49] sm:$0xff]
        %v300 = vld [vmem:[%s224 + $0x51] sm:$0xff]
        %v301 = vld [vmem:[%s224 + $0x61] sm:$0xff]
        %v302 = vld [vmem:[%s224 + $0x69] sm:$0xff]
        %v303 = vld [vmem:[%s224 + $0x79] sm:$0xff]
        %v304 = vld [vmem:[%s224 + $0x81] sm:$0xff]
        %v305 = vld [vmem:[%s224 + $0x91] sm:$0xff]
        %v306 = vld [vmem:[%s224 + $0x99] sm:$0xff]
        %v307 = vld [vmem:[%s224 + $0xa9] sm:$0xff]
        %v308 = vld [vmem:[%s224 + $0xb1] sm:$0xff]
        %v309 = vld [vmem:[%s224 + $0xc1] sm:$0xff]
        %v310 = vld [vmem:[%s224 + $0xc9] sm:$0xff]
        %v311 = vld [vmem:[%s224 + $0xd9] sm:$0xff]
        %v312 = vld [vmem:[%s224 + $0xe1] sm:$0xff]
        %v313 = vld [vmem:[%s224 + $0xf1] sm:$0xff]
        %v314 = vld [vmem:[%s224 + $0xf9] sm:$0xff]
        %v315 = vld [vmem:[%s224 + $0x109] sm:$0xff]
        %v316 = vld [vmem:[%s224 + $0x111] sm:$0xff]
        %v317 = vld [vmem:[%s224 + $0x121] sm:$0xff]
        %v318 = vld [vmem:[%s224 + $0x129] sm:$0xff]
        %v319 = vld [vmem:[%s224 + $0x139] sm:$0xff]
        %v320 = vld [vmem:[%s224 + $0x141] sm:$0xff]
        %v321 = vld [vmem:[%s224 + $0x151] sm:$0xff]
        %v322 = vld [vmem:[%s224 + $0x159] sm:$0xff]
        %v323 = vld [vmem:[%s224 + $0x169] sm:$0xff]
        %v324 = vld [vmem:[%s224 + $0x171] sm:$0xff]
        %v325 = vpack.c.bf16 %v294, %v293
        %v326 = vpack.c.bf16 %v296, %v295
        %v327 = vpack.c.bf16 %v298, %v297
        %v328 = vpack.c.bf16 %v300, %v299
        %v329 = vpack.c.bf16 %v302, %v301
        %v330 = vpack.c.bf16 %v304, %v303
        %v331 = vpack.c.bf16 %v306, %v305
        %v332 = vpack.c.bf16 %v308, %v307
        %v333 = vpack.c.bf16 %v310, %v309
        %v334 = vpack.c.bf16 %v312, %v311
        %v335 = vpack.c.bf16 %v314, %v313
        %v336 = vpack.c.bf16 %v316, %v315
        %v337 = vpack.c.bf16 %v318, %v317
        %v338 = vpack.c.bf16 %v320, %v319
        %v339 = vpack.c.bf16 %v322, %v321
        %v340 = vpack.c.bf16 %v324, %v323
        %s341 = scalar_lea.vmem %s1, 64
        %v342 = vld [vmem:[%s341] sm:$0xf]
        %v343 = vld [vmem:[%s341 + $0x4] sm:$0xf]
        %v344 = vld [vmem:[%s341 + $0x8] sm:$0xf]
        %v345 = vld [vmem:[%s341 + $0xc] sm:$0xf]
        %v346 = vld [vmem:[%s341 + $0x10] sm:$0xf]
        %v347 = vld [vmem:[%s341 + $0x14] sm:$0xf]
        %v348 = vld [vmem:[%s341 + $0x18] sm:$0xf]
        %v349 = vld [vmem:[%s341 + $0x1c] sm:$0xf]
        %v350 = vld [vmem:[%s341 + $0x20] sm:$0xf]
        %v351 = vld [vmem:[%s341 + $0x24] sm:$0xf]
        %v352 = vld [vmem:[%s341 + $0x28] sm:$0xf]
        %v353 = vld [vmem:[%s341 + $0x2c] sm:$0xf]
        %v354 = vld [vmem:[%s341 + $0x30] sm:$0xf]
        %v355 = vld [vmem:[%s341 + $0x34] sm:$0xf]
        %v356 = vld [vmem:[%s341 + $0x38] sm:$0xf]
        %v357 = vld [vmem:[%s341 + $0x3c] sm:$0xf]
        %v374 = vunpack.c.l.b16 %v342
        %v375 = vunpack.c.l.b16 %v343
        %v376 = vunpack.c.l.b16 %v344
        %v377 = vunpack.c.l.b16 %v345
        %v378 = vunpack.c.l.b16 %v346
        %v379 = vunpack.c.l.b16 %v347
        %v380 = vunpack.c.l.b16 %v348
        %v381 = vunpack.c.l.b16 %v349
        %v382 = vunpack.c.l.b16 %v350
        %v383 = vunpack.c.l.b16 %v351
        %v384 = vunpack.c.l.b16 %v352
        %v385 = vunpack.c.l.b16 %v353
        %v386 = vunpack.c.l.b16 %v354
        %v387 = vunpack.c.l.b16 %v355
        %v388 = vunpack.c.l.b16 %v356
        %v389 = vunpack.c.l.b16 %v357
        %v390 = vpack.c.b16 %v375, %v374
        %v391 = vpack.c.b16 %v377, %v376
        %v392 = vpack.c.b16 %v379, %v378
        %v393 = vpack.c.b16 %v381, %v380
        %v394 = vpack.c.b16 %v383, %v382
        %v395 = vpack.c.b16 %v385, %v384
        %v396 = vpack.c.b16 %v387, %v386
        %v397 = vpack.c.b16 %v389, %v388
        %406 = vmatprep.subr.bf16.mxu0 0
        %407 = vmatpush1.bf16.msra.mxu0 %v397
        %408 = vmatprep.subr.bf16.mxu0 0
        %409 = vmatpush1.bf16.msra.mxu0 %v396
        %410 = vmatprep.subr.bf16.mxu0 0
        %411 = vmatpush1.bf16.msra.mxu0 %v395
        %412 = vmatprep.subr.bf16.mxu0 0
        %413 = vmatpush1.bf16.msra.mxu0 %v394
        %414 = vmatprep.subr.bf16.mxu0 0
        %415 = vmatpush1.bf16.msra.mxu0 %v393
        %416 = vmatprep.subr.bf16.mxu0 0
        %417 = vmatpush1.bf16.msra.mxu0 %v392
        %418 = vmatprep.subr.bf16.mxu0 0
        %419 = vmatpush1.bf16.msra.mxu0 %v391
        %420 = vmatprep.subr.bf16.mxu0 0
        %421 = vmatpush1.bf16.msra.mxu0 %v390
        %422 = vmatprep.subr.bf16.mxu0 0
        %423 = vmatpush2.bf16.msra.mxu0 0
        %424 = vmatprep.subr.bf16.mxu0 0
        %425 = vmatpush2.bf16.msra.mxu0 0
        %426 = vmatprep.subr.bf16.mxu0 0
        %427 = vmatpush2.bf16.msra.mxu0 0
        %428 = vmatprep.subr.bf16.mxu0 0
        %429 = vmatpush2.bf16.msra.mxu0 0
        %430 = vmatprep.subr.bf16.mxu0 0
        %431 = vmatpush2.bf16.msra.mxu0 0
        %432 = vmatprep.subr.bf16.mxu0 0
        %433 = vmatpush2.bf16.msra.mxu0 0
        %434 = vmatprep.subr.bf16.mxu0 0
        %435 = vmatpush2.bf16.msra.mxu0 0
        %436 = vmatprep.subr.bf16.mxu0 0
        %437 = vmatpush2.bf16.msra.mxu0 0
        %438 = vmatprep.mubr.bf16.mxu0 0
        %439 = vmatmul.mubr.bf16.gmra.mxu0 %v325
        %v440 = vpop.f32.mrf.mxu0
        %v441 = vadd.f32 0.0, %v440
        %v442 = vpop.f32.mrf.mxu0
        %v443 = vpop.f32.mrf.mxu0
        %v444 = vadd.f32 0.0, %v443
        %v445 = vpop.f32.mrf.mxu0
        %446 = vmatprep.mubr.bf16.mxu0 0
        %447 = vmatmul.mubr.bf16.gmra.mxu0 %v326
        %v448 = vpop.f32.mrf.mxu0
        %v449 = vadd.f32 0.0, %v448
        %v450 = vpop.f32.mrf.mxu0
        %v451 = vpop.f32.mrf.mxu0
        %v452 = vadd.f32 0.0, %v451
        %v453 = vpop.f32.mrf.mxu0
        %454 = vmatprep.mubr.bf16.mxu0 0
        %455 = vmatmul.mubr.bf16.gmra.mxu0 %v327
        %v456 = vpop.f32.mrf.mxu0
        %v457 = vadd.f32 0.0, %v456
        %v458 = vpop.f32.mrf.mxu0
        %v459 = vpop.f32.mrf.mxu0
        %v460 = vadd.f32 0.0, %v459
        %v461 = vpop.f32.mrf.mxu0
        %462 = vmatprep.mubr.bf16.mxu0 0
        %463 = vmatmul.mubr.bf16.gmra.mxu0 %v328
        %v464 = vpop.f32.mrf.mxu0
        %v465 = vadd.f32 0.0, %v464
        %v466 = vpop.f32.mrf.mxu0
        %v467 = vpop.f32.mrf.mxu0
        %v468 = vadd.f32 0.0, %v467
        %v469 = vpop.f32.mrf.mxu0
        %470 = vmatprep.mubr.bf16.mxu0 0
        %471 = vmatmul.mubr.bf16.gmra.mxu0 %v329
        %v472 = vpop.f32.mrf.mxu0
        %v473 = vadd.f32 0.0, %v472
        %v474 = vpop.f32.mrf.mxu0
        %v475 = vpop.f32.mrf.mxu0
        %v476 = vadd.f32 0.0, %v475
        %v477 = vpop.f32.mrf.mxu0
        %478 = vmatprep.mubr.bf16.mxu0 0
        %479 = vmatmul.mubr.bf16.gmra.mxu0 %v330
        %v480 = vpop.f32.mrf.mxu0
        %v481 = vadd.f32 0.0, %v480
        %v482 = vpop.f32.mrf.mxu0
        %v483 = vpop.f32.mrf.mxu0
        %v484 = vadd.f32 0.0, %v483
        %v485 = vpop.f32.mrf.mxu0
        %486 = vmatprep.mubr.bf16.mxu0 0
        %487 = vmatmul.mubr.bf16.gmra.mxu0 %v331
        %v488 = vpop.f32.mrf.mxu0
        %v489 = vadd.f32 0.0, %v488
        %v490 = vpop.f32.mrf.mxu0
        %v491 = vpop.f32.mrf.mxu0
        %v492 = vadd.f32 0.0, %v491
        %v493 = vpop.f32.mrf.mxu0
        %494 = vmatprep.mubr.bf16.mxu0 0
        %495 = vmatmul.mubr.bf16.gmra.mxu0 %v332
        %v496 = vpop.f32.mrf.mxu0
        %v497 = vadd.f32 0.0, %v496
        %v498 = vpop.f32.mrf.mxu0
        %v499 = vpop.f32.mrf.mxu0
        %v500 = vadd.f32 0.0, %v499
        %v501 = vpop.f32.mrf.mxu0
        %502 = vmatprep.mubr.bf16.mxu0 0
        %503 = vmatmul.mubr.bf16.gmra.mxu0 %v333
        %v504 = vpop.f32.mrf.mxu0
        %v505 = vadd.f32 0.0, %v504
        %v506 = vpop.f32.mrf.mxu0
        %v507 = vpop.f32.mrf.mxu0
        %v508 = vadd.f32 0.0, %v507
        %v509 = vpop.f32.mrf.mxu0
        %510 = vmatprep.mubr.bf16.mxu0 0
        %511 = vmatmul.mubr.bf16.gmra.mxu0 %v334
        %v512 = vpop.f32.mrf.mxu0
        %v513 = vadd.f32 0.0, %v512
        %v514 = vpop.f32.mrf.mxu0
        %v515 = vpop.f32.mrf.mxu0
        %v516 = vadd.f32 0.0, %v515
        %v517 = vpop.f32.mrf.mxu0
        %518 = vmatprep.mubr.bf16.mxu0 0
        %519 = vmatmul.mubr.bf16.gmra.mxu0 %v335
        %v520 = vpop.f32.mrf.mxu0
        %v521 = vadd.f32 0.0, %v520
        %v522 = vpop.f32.mrf.mxu0
        %v523 = vpop.f32.mrf.mxu0
        %v524 = vadd.f32 0.0, %v523
        %v525 = vpop.f32.mrf.mxu0
        %526 = vmatprep.mubr.bf16.mxu0 0
        %527 = vmatmul.mubr.bf16.gmra.mxu0 %v336
        %v528 = vpop.f32.mrf.mxu0
        %v529 = vadd.f32 0.0, %v528
        %v530 = vpop.f32.mrf.mxu0
        %v531 = vpop.f32.mrf.mxu0
        %v532 = vadd.f32 0.0, %v531
        %v533 = vpop.f32.mrf.mxu0
        %534 = vmatprep.mubr.bf16.mxu0 0
        %535 = vmatmul.mubr.bf16.gmra.mxu0 %v337
        %v536 = vpop.f32.mrf.mxu0
        %v537 = vadd.f32 0.0, %v536
        %v538 = vpop.f32.mrf.mxu0
        %v539 = vpop.f32.mrf.mxu0
        %v540 = vadd.f32 0.0, %v539
        %v541 = vpop.f32.mrf.mxu0
        %542 = vmatprep.mubr.bf16.mxu0 0
        %543 = vmatmul.mubr.bf16.gmra.mxu0 %v338
        %v544 = vpop.f32.mrf.mxu0
        %v545 = vadd.f32 0.0, %v544
        %v546 = vpop.f32.mrf.mxu0
        %v547 = vpop.f32.mrf.mxu0
        %v548 = vadd.f32 0.0, %v547
        %v549 = vpop.f32.mrf.mxu0
        %550 = vmatprep.mubr.bf16.mxu0 0
        %551 = vmatmul.mubr.bf16.gmra.mxu0 %v339
        %v552 = vpop.f32.mrf.mxu0
        %v553 = vadd.f32 0.0, %v552
        %v554 = vpop.f32.mrf.mxu0
        %v555 = vpop.f32.mrf.mxu0
        %v556 = vadd.f32 0.0, %v555
        %v557 = vpop.f32.mrf.mxu0
        %558 = vmatprep.mubr.bf16.mxu0 0
        %559 = vmatmul.mubr.bf16.gmra.mxu0 %v340
        %v560 = vpop.f32.mrf.mxu0
        %v561 = vadd.f32 0.0, %v560
        %v562 = vpop.f32.mrf.mxu0
        %v563 = vpop.f32.mrf.mxu0
        %v564 = vadd.f32 0.0, %v563
        %v565 = vpop.f32.mrf.mxu0
        %566 = vdwg.mxu0
        %v583 = vunpack.c.l.b16 %v277
        %v584 = vunpack.c.l.b16 %v278
        %v585 = vunpack.c.l.b16 %v279
        %v586 = vunpack.c.l.b16 %v280
        %v587 = vunpack.c.l.b16 %v281
        %v588 = vunpack.c.l.b16 %v282
        %v589 = vunpack.c.l.b16 %v283
        %v590 = vunpack.c.l.b16 %v284
        %v591 = vunpack.c.l.b16 %v285
        %v592 = vunpack.c.l.b16 %v286
        %v593 = vunpack.c.l.b16 %v287
        %v594 = vunpack.c.l.b16 %v288
        %v595 = vunpack.c.l.b16 %v289
        %v596 = vunpack.c.l.b16 %v290
        %v597 = vunpack.c.l.b16 %v291
        %v598 = vunpack.c.l.b16 %v292
        %v599 = vpack.c.b16 %v584, %v583
        %v600 = vpack.c.b16 %v586, %v585
        %v601 = vpack.c.b16 %v588, %v587
        %v602 = vpack.c.b16 %v590, %v589
        %v603 = vpack.c.b16 %v592, %v591
        %v604 = vpack.c.b16 %v594, %v593
        %v605 = vpack.c.b16 %v596, %v595
        %v606 = vpack.c.b16 %v598, %v597
        %615 = vmatprep.subr.bf16.mxu0 0
        %616 = vmatpush1.bf16.msra.mxu0 %v606
        %617 = vmatprep.subr.bf16.mxu0 0
        %618 = vmatpush1.bf16.msra.mxu0 %v605
        %619 = vmatprep.subr.bf16.mxu0 0
        %620 = vmatpush1.bf16.msra.mxu0 %v604
        %621 = vmatprep.subr.bf16.mxu0 0
        %622 = vmatpush1.bf16.msra.mxu0 %v603
        %623 = vmatprep.subr.bf16.mxu0 0
        %624 = vmatpush1.bf16.msra.mxu0 %v602
        %625 = vmatprep.subr.bf16.mxu0 0
        %626 = vmatpush1.bf16.msra.mxu0 %v601
        %627 = vmatprep.subr.bf16.mxu0 0
        %628 = vmatpush1.bf16.msra.mxu0 %v600
        %629 = vmatprep.subr.bf16.mxu0 0
        %630 = vmatpush1.bf16.msra.mxu0 %v599
        %631 = vmatprep.subr.bf16.mxu0 0
        %632 = vmatpush2.bf16.msra.mxu0 0
        %633 = vmatprep.subr.bf16.mxu0 0
        %634 = vmatpush2.bf16.msra.mxu0 0
        %635 = vmatprep.subr.bf16.mxu0 0
        %636 = vmatpush2.bf16.msra.mxu0 0
        %637 = vmatprep.subr.bf16.mxu0 0
        %638 = vmatpush2.bf16.msra.mxu0 0
        %639 = vmatprep.subr.bf16.mxu0 0
        %640 = vmatpush2.bf16.msra.mxu0 0
        %641 = vmatprep.subr.bf16.mxu0 0
        %642 = vmatpush2.bf16.msra.mxu0 0
        %643 = vmatprep.subr.bf16.mxu0 0
        %644 = vmatpush2.bf16.msra.mxu0 0
        %645 = vmatprep.subr.bf16.mxu0 0
        %646 = vmatpush2.bf16.msra.mxu0 0
        %647 = vmatprep.mubr.bf16.mxu0 0
        %648 = vmatmul.mubr.bf16.gmra.mxu0 %v261
        %v649 = vpop.f32.mrf.mxu0
        %v650 = vadd.f32 %v441, %v649
        %v651 = vpop.f32.mrf.mxu0
        %v652 = vpop.f32.mrf.mxu0
        %v653 = vadd.f32 %v444, %v652
        %v654 = vpop.f32.mrf.mxu0
        %655 = vmatprep.mubr.bf16.mxu0 0
        %656 = vmatmul.mubr.bf16.gmra.mxu0 %v262
        %v657 = vpop.f32.mrf.mxu0
        %v658 = vadd.f32 %v449, %v657
        %v659 = vpop.f32.mrf.mxu0
        %v660 = vpop.f32.mrf.mxu0
        %v661 = vadd.f32 %v452, %v660
        %v662 = vpop.f32.mrf.mxu0
        %663 = vmatprep.mubr.bf16.mxu0 0
        %664 = vmatmul.mubr.bf16.gmra.mxu0 %v263
        %v665 = vpop.f32.mrf.mxu0
        %v666 = vadd.f32 %v457, %v665
        %v667 = vpop.f32.mrf.mxu0
        %v668 = vpop.f32.mrf.mxu0
        %v669 = vadd.f32 %v460, %v668
        %v670 = vpop.f32.mrf.mxu0
        %671 = vmatprep.mubr.bf16.mxu0 0
        %672 = vmatmul.mubr.bf16.gmra.mxu0 %v264
        %v673 = vpop.f32.mrf.mxu0
        %v674 = vadd.f32 %v465, %v673
        %v675 = vpop.f32.mrf.mxu0
        %v676 = vpop.f32.mrf.mxu0
        %v677 = vadd.f32 %v468, %v676
        %v678 = vpop.f32.mrf.mxu0
        %679 = vmatprep.mubr.bf16.mxu0 0
        %680 = vmatmul.mubr.bf16.gmra.mxu0 %v265
        %v681 = vpop.f32.mrf.mxu0
        %v682 = vadd.f32 %v473, %v681
        %v683 = vpop.f32.mrf.mxu0
        %v684 = vpop.f32.mrf.mxu0
        %v685 = vadd.f32 %v476, %v684
        %v686 = vpop.f32.mrf.mxu0
        %687 = vmatprep.mubr.bf16.mxu0 0
        %688 = vmatmul.mubr.bf16.gmra.mxu0 %v266
        %v689 = vpop.f32.mrf.mxu0
        %v690 = vadd.f32 %v481, %v689
        %v691 = vpop.f32.mrf.mxu0
        %v692 = vpop.f32.mrf.mxu0
        %v693 = vadd.f32 %v484, %v692
        %v694 = vpop.f32.mrf.mxu0
        %695 = vmatprep.mubr.bf16.mxu0 0
        %696 = vmatmul.mubr.bf16.gmra.mxu0 %v267
        %v697 = vpop.f32.mrf.mxu0
        %v698 = vadd.f32 %v489, %v697
        %v699 = vpop.f32.mrf.mxu0
        %v700 = vpop.f32.mrf.mxu0
        %v701 = vadd.f32 %v492, %v700
        %v702 = vpop.f32.mrf.mxu0
        %703 = vmatprep.mubr.bf16.mxu0 0
        %704 = vmatmul.mubr.bf16.gmra.mxu0 %v268
        %v705 = vpop.f32.mrf.mxu0
        %v706 = vadd.f32 %v497, %v705
        %v707 = vpop.f32.mrf.mxu0
        %v708 = vpop.f32.mrf.mxu0
        %v709 = vadd.f32 %v500, %v708
        %v710 = vpop.f32.mrf.mxu0
        %711 = vmatprep.mubr.bf16.mxu0 0
        %712 = vmatmul.mubr.bf16.gmra.mxu0 %v269
        %v713 = vpop.f32.mrf.mxu0
        %v714 = vadd.f32 %v505, %v713
        %v715 = vpop.f32.mrf.mxu0
        %v716 = vpop.f32.mrf.mxu0
        %v717 = vadd.f32 %v508, %v716
        %v718 = vpop.f32.mrf.mxu0
        %719 = vmatprep.mubr.bf16.mxu0 0
        %720 = vmatmul.mubr.bf16.gmra.mxu0 %v270
        %v721 = vpop.f32.mrf.mxu0
        %v722 = vadd.f32 %v513, %v721
        %v723 = vpop.f32.mrf.mxu0
        %v724 = vpop.f32.mrf.mxu0
        %v725 = vadd.f32 %v516, %v724
        %v726 = vpop.f32.mrf.mxu0
        %727 = vmatprep.mubr.bf16.mxu0 0
        %728 = vmatmul.mubr.bf16.gmra.mxu0 %v271
        %v729 = vpop.f32.mrf.mxu0
        %v730 = vadd.f32 %v521, %v729
        %v731 = vpop.f32.mrf.mxu0
        %v732 = vpop.f32.mrf.mxu0
        %v733 = vadd.f32 %v524, %v732
        %v734 = vpop.f32.mrf.mxu0
        %735 = vmatprep.mubr.bf16.mxu0 0
        %736 = vmatmul.mubr.bf16.gmra.mxu0 %v272
        %v737 = vpop.f32.mrf.mxu0
        %v738 = vadd.f32 %v529, %v737
        %v739 = vpop.f32.mrf.mxu0
        %v740 = vpop.f32.mrf.mxu0
        %v741 = vadd.f32 %v532, %v740
        %v742 = vpop.f32.mrf.mxu0
        %743 = vmatprep.mubr.bf16.mxu0 0
        %744 = vmatmul.mubr.bf16.gmra.mxu0 %v273
        %v745 = vpop.f32.mrf.mxu0
        %v746 = vadd.f32 %v537, %v745
        %v747 = vpop.f32.mrf.mxu0
        %v748 = vpop.f32.mrf.mxu0
        %v749 = vadd.f32 %v540, %v748
        %v750 = vpop.f32.mrf.mxu0
        %751 = vmatprep.mubr.bf16.mxu0 0
        %752 = vmatmul.mubr.bf16.gmra.mxu0 %v274
        %v753 = vpop.f32.mrf.mxu0
        %v754 = vadd.f32 %v545, %v753
        %v755 = vpop.f32.mrf.mxu0
        %v756 = vpop.f32.mrf.mxu0
        %v757 = vadd.f32 %v548, %v756
        %v758 = vpop.f32.mrf.mxu0
        %759 = vmatprep.mubr.bf16.mxu0 0
        %760 = vmatmul.mubr.bf16.gmra.mxu0 %v275
        %v761 = vpop.f32.mrf.mxu0
        %v762 = vadd.f32 %v553, %v761
        %v763 = vpop.f32.mrf.mxu0
        %v764 = vpop.f32.mrf.mxu0
        %v765 = vadd.f32 %v556, %v764
        %v766 = vpop.f32.mrf.mxu0
        %767 = vmatprep.mubr.bf16.mxu0 0
        %768 = vmatmul.mubr.bf16.gmra.mxu0 %v276
        %v769 = vpop.f32.mrf.mxu0
        %v770 = vadd.f32 %v561, %v769
        %v771 = vpop.f32.mrf.mxu0
        %v772 = vpop.f32.mrf.mxu0
        %v773 = vadd.f32 %v564, %v772
        %v774 = vpop.f32.mrf.mxu0
        %775 = vdwg.mxu0
        %v776 = vld [vmem:[%s224 + $0x2] sm:$0xff]
        %v777 = vld [vmem:[%s224 + $0xa] sm:$0xff]
        %v778 = vld [vmem:[%s224 + $0x1a] sm:$0xff]
        %v779 = vld [vmem:[%s224 + $0x22] sm:$0xff]
        %v780 = vld [vmem:[%s224 + $0x32] sm:$0xff]
        %v781 = vld [vmem:[%s224 + $0x3a] sm:$0xff]
        %v782 = vld [vmem:[%s224 + $0x4a] sm:$0xff]
        %v783 = vld [vmem:[%s224 + $0x52] sm:$0xff]
        %v784 = vld [vmem:[%s224 + $0x62] sm:$0xff]
        %v785 = vld [vmem:[%s224 + $0x6a] sm:$0xff]
        %v786 = vld [vmem:[%s224 + $0x7a] sm:$0xff]
        %v787 = vld [vmem:[%s224 + $0x82] sm:$0xff]
        %v788 = vld [vmem:[%s224 + $0x92] sm:$0xff]
        %v789 = vld [vmem:[%s224 + $0x9a] sm:$0xff]
        %v790 = vld [vmem:[%s224 + $0xaa] sm:$0xff]
        %v791 = vld [vmem:[%s224 + $0xb2] sm:$0xff]
        %v792 = vld [vmem:[%s224 + $0xc2] sm:$0xff]
        %v793 = vld [vmem:[%s224 + $0xca] sm:$0xff]
        %v794 = vld [vmem:[%s224 + $0xda] sm:$0xff]
        %v795 = vld [vmem:[%s224 + $0xe2] sm:$0xff]
        %v796 = vld [vmem:[%s224 + $0xf2] sm:$0xff]
        %v797 = vld [vmem:[%s224 + $0xfa] sm:$0xff]
        %v798 = vld [vmem:[%s224 + $0x10a] sm:$0xff]
        %v799 = vld [vmem:[%s224 + $0x112] sm:$0xff]
        %v800 = vld [vmem:[%s224 + $0x122] sm:$0xff]
        %v801 = vld [vmem:[%s224 + $0x12a] sm:$0xff]
        %v802 = vld [vmem:[%s224 + $0x13a] sm:$0xff]
        %v803 = vld [vmem:[%s224 + $0x142] sm:$0xff]
        %v804 = vld [vmem:[%s224 + $0x152] sm:$0xff]
        %v805 = vld [vmem:[%s224 + $0x15a] sm:$0xff]
        %v806 = vld [vmem:[%s224 + $0x16a] sm:$0xff]
        %v807 = vld [vmem:[%s224 + $0x172] sm:$0xff]
        %v808 = vpack.c.bf16 %v777, %v776
        %v809 = vpack.c.bf16 %v779, %v778
        %v810 = vpack.c.bf16 %v781, %v780
        %v811 = vpack.c.bf16 %v783, %v782
        %v812 = vpack.c.bf16 %v785, %v784
        %v813 = vpack.c.bf16 %v787, %v786
        %v814 = vpack.c.bf16 %v789, %v788
        %v815 = vpack.c.bf16 %v791, %v790
        %v816 = vpack.c.bf16 %v793, %v792
        %v817 = vpack.c.bf16 %v795, %v794
        %v818 = vpack.c.bf16 %v797, %v796
        %v819 = vpack.c.bf16 %v799, %v798
        %v820 = vpack.c.bf16 %v801, %v800
        %v821 = vpack.c.bf16 %v803, %v802
        %v822 = vpack.c.bf16 %v805, %v804
        %v823 = vpack.c.bf16 %v807, %v806
        %s824 = scalar_lea.vmem %s1, 128
        %v825 = vld [vmem:[%s824] sm:$0xf]
        %v826 = vld [vmem:[%s824 + $0x4] sm:$0xf]
        %v827 = vld [vmem:[%s824 + $0x8] sm:$0xf]
        %v828 = vld [vmem:[%s824 + $0xc] sm:$0xf]
        %v829 = vld [vmem:[%s824 + $0x10] sm:$0xf]
        %v830 = vld [vmem:[%s824 + $0x14] sm:$0xf]
        %v831 = vld [vmem:[%s824 + $0x18] sm:$0xf]
        %v832 = vld [vmem:[%s824 + $0x1c] sm:$0xf]
        %v833 = vld [vmem:[%s824 + $0x20] sm:$0xf]
        %v834 = vld [vmem:[%s824 + $0x24] sm:$0xf]
        %v835 = vld [vmem:[%s824 + $0x28] sm:$0xf]
        %v836 = vld [vmem:[%s824 + $0x2c] sm:$0xf]
        %v837 = vld [vmem:[%s824 + $0x30] sm:$0xf]
        %v838 = vld [vmem:[%s824 + $0x34] sm:$0xf]
        %v839 = vld [vmem:[%s824 + $0x38] sm:$0xf]
        %v840 = vld [vmem:[%s824 + $0x3c] sm:$0xf]
        %v857 = vunpack.c.l.b16 %v825
        %v858 = vunpack.c.l.b16 %v826
        %v859 = vunpack.c.l.b16 %v827
        %v860 = vunpack.c.l.b16 %v828
        %v861 = vunpack.c.l.b16 %v829
        %v862 = vunpack.c.l.b16 %v830
        %v863 = vunpack.c.l.b16 %v831
        %v864 = vunpack.c.l.b16 %v832
        %v865 = vunpack.c.l.b16 %v833
        %v866 = vunpack.c.l.b16 %v834
        %v867 = vunpack.c.l.b16 %v835
        %v868 = vunpack.c.l.b16 %v836
        %v869 = vunpack.c.l.b16 %v837
        %v870 = vunpack.c.l.b16 %v838
        %v871 = vunpack.c.l.b16 %v839
        %v872 = vunpack.c.l.b16 %v840
        %v873 = vpack.c.b16 %v858, %v857
        %v874 = vpack.c.b16 %v860, %v859
        %v875 = vpack.c.b16 %v862, %v861
        %v876 = vpack.c.b16 %v864, %v863
        %v877 = vpack.c.b16 %v866, %v865
        %v878 = vpack.c.b16 %v868, %v867
        %v879 = vpack.c.b16 %v870, %v869
        %v880 = vpack.c.b16 %v872, %v871
        %889 = vmatprep.subr.bf16.mxu0 0
        %890 = vmatpush1.bf16.msra.mxu0 %v880
        %891 = vmatprep.subr.bf16.mxu0 0
        %892 = vmatpush1.bf16.msra.mxu0 %v879
        %893 = vmatprep.subr.bf16.mxu0 0
        %894 = vmatpush1.bf16.msra.mxu0 %v878
        %895 = vmatprep.subr.bf16.mxu0 0
        %896 = vmatpush1.bf16.msra.mxu0 %v877
        %897 = vmatprep.subr.bf16.mxu0 0
        %898 = vmatpush1.bf16.msra.mxu0 %v876
        %899 = vmatprep.subr.bf16.mxu0 0
        %900 = vmatpush1.bf16.msra.mxu0 %v875
        %901 = vmatprep.subr.bf16.mxu0 0
        %902 = vmatpush1.bf16.msra.mxu0 %v874
        %903 = vmatprep.subr.bf16.mxu0 0
        %904 = vmatpush1.bf16.msra.mxu0 %v873
        %905 = vmatprep.subr.bf16.mxu0 0
        %906 = vmatpush2.bf16.msra.mxu0 0
        %907 = vmatprep.subr.bf16.mxu0 0
        %908 = vmatpush2.bf16.msra.mxu0 0
        %909 = vmatprep.subr.bf16.mxu0 0
        %910 = vmatpush2.bf16.msra.mxu0 0
        %911 = vmatprep.subr.bf16.mxu0 0
        %912 = vmatpush2.bf16.msra.mxu0 0
        %913 = vmatprep.subr.bf16.mxu0 0
        %914 = vmatpush2.bf16.msra.mxu0 0
        %915 = vmatprep.subr.bf16.mxu0 0
        %916 = vmatpush2.bf16.msra.mxu0 0
        %917 = vmatprep.subr.bf16.mxu0 0
        %918 = vmatpush2.bf16.msra.mxu0 0
        %919 = vmatprep.subr.bf16.mxu0 0
        %920 = vmatpush2.bf16.msra.mxu0 0
        %921 = vmatprep.mubr.bf16.mxu0 0
        %922 = vmatmul.mubr.bf16.gmra.mxu0 %v808
        %v923 = vpop.f32.mrf.mxu0
        %v924 = vadd.f32 0.0, %v923
        %v925 = vpop.f32.mrf.mxu0
        %v926 = vpop.f32.mrf.mxu0
        %v927 = vadd.f32 0.0, %v926
        %v928 = vpop.f32.mrf.mxu0
        %929 = vmatprep.mubr.bf16.mxu0 0
        %930 = vmatmul.mubr.bf16.gmra.mxu0 %v809
        %v931 = vpop.f32.mrf.mxu0
        %v932 = vadd.f32 0.0, %v931
        %v933 = vpop.f32.mrf.mxu0
        %v934 = vpop.f32.mrf.mxu0
        %v935 = vadd.f32 0.0, %v934
        %v936 = vpop.f32.mrf.mxu0
        %937 = vmatprep.mubr.bf16.mxu0 0
        %938 = vmatmul.mubr.bf16.gmra.mxu0 %v810
        %v939 = vpop.f32.mrf.mxu0
        %v940 = vadd.f32 0.0, %v939
        %v941 = vpop.f32.mrf.mxu0
        %v942 = vpop.f32.mrf.mxu0
        %v943 = vadd.f32 0.0, %v942
        %v944 = vpop.f32.mrf.mxu0
        %945 = vmatprep.mubr.bf16.mxu0 0
        %946 = vmatmul.mubr.bf16.gmra.mxu0 %v811
        %v947 = vpop.f32.mrf.mxu0
        %v948 = vadd.f32 0.0, %v947
        %v949 = vpop.f32.mrf.mxu0
        %v950 = vpop.f32.mrf.mxu0
        %v951 = vadd.f32 0.0, %v950
        %v952 = vpop.f32.mrf.mxu0
        %953 = vmatprep.mubr.bf16.mxu0 0
        %954 = vmatmul.mubr.bf16.gmra.mxu0 %v812
        %v955 = vpop.f32.mrf.mxu0
        %v956 = vadd.f32 0.0, %v955
        %v957 = vpop.f32.mrf.mxu0
        %v958 = vpop.f32.mrf.mxu0
        %v959 = vadd.f32 0.0, %v958
        %v960 = vpop.f32.mrf.mxu0
        %961 = vmatprep.mubr.bf16.mxu0 0
        %962 = vmatmul.mubr.bf16.gmra.mxu0 %v813
        %v963 = vpop.f32.mrf.mxu0
        %v964 = vadd.f32 0.0, %v963
        %v965 = vpop.f32.mrf.mxu0
        %v966 = vpop.f32.mrf.mxu0
        %v967 = vadd.f32 0.0, %v966
        %v968 = vpop.f32.mrf.mxu0
        %969 = vmatprep.mubr.bf16.mxu0 0
        %970 = vmatmul.mubr.bf16.gmra.mxu0 %v814
        %v971 = vpop.f32.mrf.mxu0
        %v972 = vadd.f32 0.0, %v971
        %v973 = vpop.f32.mrf.mxu0
        %v974 = vpop.f32.mrf.mxu0
        %v975 = vadd.f32 0.0, %v974
        %v976 = vpop.f32.mrf.mxu0
        %977 = vmatprep.mubr.bf16.mxu0 0
        %978 = vmatmul.mubr.bf16.gmra.mxu0 %v815
        %v979 = vpop.f32.mrf.mxu0
        %v980 = vadd.f32 0.0, %v979
        %v981 = vpop.f32.mrf.mxu0
        %v982 = vpop.f32.mrf.mxu0
        %v983 = vadd.f32 0.0, %v982
        %v984 = vpop.f32.mrf.mxu0
        %985 = vmatprep.mubr.bf16.mxu0 0
        %986 = vmatmul.mubr.bf16.gmra.mxu0 %v816
        %v987 = vpop.f32.mrf.mxu0
        %v988 = vadd.f32 0.0, %v987
        %v989 = vpop.f32.mrf.mxu0
        %v990 = vpop.f32.mrf.mxu0
        %v991 = vadd.f32 0.0, %v990
        %v992 = vpop.f32.mrf.mxu0
        %993 = vmatprep.mubr.bf16.mxu0 0
        %994 = vmatmul.mubr.bf16.gmra.mxu0 %v817
        %v995 = vpop.f32.mrf.mxu0
        %v996 = vadd.f32 0.0, %v995
        %v997 = vpop.f32.mrf.mxu0
        %v998 = vpop.f32.mrf.mxu0
        %v999 = vadd.f32 0.0, %v998
        %v1000 = vpop.f32.mrf.mxu0
        %1001 = vmatprep.mubr.bf16.mxu0 0
        %1002 = vmatmul.mubr.bf16.gmra.mxu0 %v818
        %v1003 = vpop.f32.mrf.mxu0
        %v1004 = vadd.f32 0.0, %v1003
        %v1005 = vpop.f32.mrf.mxu0
        %v1006 = vpop.f32.mrf.mxu0
        %v1007 = vadd.f32 0.0, %v1006
        %v1008 = vpop.f32.mrf.mxu0
        %1009 = vmatprep.mubr.bf16.mxu0 0
        %1010 = vmatmul.mubr.bf16.gmra.mxu0 %v819
        %v1011 = vpop.f32.mrf.mxu0
        %v1012 = vadd.f32 0.0, %v1011
        %v1013 = vpop.f32.mrf.mxu0
        %v1014 = vpop.f32.mrf.mxu0
        %v1015 = vadd.f32 0.0, %v1014
        %v1016 = vpop.f32.mrf.mxu0
        %1017 = vmatprep.mubr.bf16.mxu0 0
        %1018 = vmatmul.mubr.bf16.gmra.mxu0 %v820
        %v1019 = vpop.f32.mrf.mxu0
        %v1020 = vadd.f32 0.0, %v1019
        %v1021 = vpop.f32.mrf.mxu0
        %v1022 = vpop.f32.mrf.mxu0
        %v1023 = vadd.f32 0.0, %v1022
        %v1024 = vpop.f32.mrf.mxu0
        %1025 = vmatprep.mubr.bf16.mxu0 0
        %1026 = vmatmul.mubr.bf16.gmra.mxu0 %v821
        %v1027 = vpop.f32.mrf.mxu0
        %v1028 = vadd.f32 0.0, %v1027
        %v1029 = vpop.f32.mrf.mxu0
        %v1030 = vpop.f32.mrf.mxu0
        %v1031 = vadd.f32 0.0, %v1030
        %v1032 = vpop.f32.mrf.mxu0
        %1033 = vmatprep.mubr.bf16.mxu0 0
        %1034 = vmatmul.mubr.bf16.gmra.mxu0 %v822
        %v1035 = vpop.f32.mrf.mxu0
        %v1036 = vadd.f32 0.0, %v1035
        %v1037 = vpop.f32.mrf.mxu0
        %v1038 = vpop.f32.mrf.mxu0
        %v1039 = vadd.f32 0.0, %v1038
        %v1040 = vpop.f32.mrf.mxu0
        %1041 = vmatprep.mubr.bf16.mxu0 0
        %1042 = vmatmul.mubr.bf16.gmra.mxu0 %v823
        %v1043 = vpop.f32.mrf.mxu0
        %v1044 = vadd.f32 0.0, %v1043
        %v1045 = vpop.f32.mrf.mxu0
        %v1046 = vpop.f32.mrf.mxu0
        %v1047 = vadd.f32 0.0, %v1046
        %v1048 = vpop.f32.mrf.mxu0
        %1049 = vdwg.mxu0
        %v1050 = vadd.f32 %v650, %v924
        %v1051 = vadd.f32 %v653, %v927
        %v1052 = vadd.f32 %v658, %v932
        %v1053 = vadd.f32 %v661, %v935
        %v1054 = vadd.f32 %v666, %v940
        %v1055 = vadd.f32 %v669, %v943
        %v1056 = vadd.f32 %v674, %v948
        %v1057 = vadd.f32 %v677, %v951
        %v1058 = vadd.f32 %v682, %v956
        %v1059 = vadd.f32 %v685, %v959
        %v1060 = vadd.f32 %v690, %v964
        %v1061 = vadd.f32 %v693, %v967
        %v1062 = vadd.f32 %v698, %v972
        %v1063 = vadd.f32 %v701, %v975
        %v1064 = vadd.f32 %v706, %v980
        %v1065 = vadd.f32 %v709, %v983
        %v1066 = vadd.f32 %v714, %v988
        %v1067 = vadd.f32 %v717, %v991
        %v1068 = vadd.f32 %v722, %v996
        %v1069 = vadd.f32 %v725, %v999
        %v1070 = vadd.f32 %v730, %v1004
        %v1071 = vadd.f32 %v733, %v1007
        %v1072 = vadd.f32 %v738, %v1012
        %v1073 = vadd.f32 %v741, %v1015
        %v1074 = vadd.f32 %v746, %v1020
        %v1075 = vadd.f32 %v749, %v1023
        %v1076 = vadd.f32 %v754, %v1028
        %v1077 = vadd.f32 %v757, %v1031
        %v1078 = vadd.f32 %v762, %v1036
        %v1079 = vadd.f32 %v765, %v1039
        %v1080 = vadd.f32 %v770, %v1044
        %v1081 = vadd.f32 %v773, %v1047
        %s1082 = scalar_lea.vmem %s224, 24
        %v1083 = vld [vmem:[%s1082] sm:$0xff]
        %v1084 = vld [vmem:[%s1082 + $0x8] sm:$0xff]
        %v1085 = vld [vmem:[%s1082 + $0x18] sm:$0xff]
        %v1086 = vld [vmem:[%s1082 + $0x20] sm:$0xff]
        %v1087 = vld [vmem:[%s1082 + $0x30] sm:$0xff]
        %v1088 = vld [vmem:[%s1082 + $0x38] sm:$0xff]
        %v1089 = vld [vmem:[%s1082 + $0x48] sm:$0xff]
        %v1090 = vld [vmem:[%s1082 + $0x50] sm:$0xff]
        %v1091 = vld [vmem:[%s1082 + $0x60] sm:$0xff]
        %v1092 = vld [vmem:[%s1082 + $0x68] sm:$0xff]
        %v1093 = vld [vmem:[%s1082 + $0x78] sm:$0xff]
        %v1094 = vld [vmem:[%s1082 + $0x80] sm:$0xff]
        %v1095 = vld [vmem:[%s1082 + $0x90] sm:$0xff]
        %v1096 = vld [vmem:[%s1082 + $0x98] sm:$0xff]
        %v1097 = vld [vmem:[%s1082 + $0xa8] sm:$0xff]
        %v1098 = vld [vmem:[%s1082 + $0xb0] sm:$0xff]
        %v1099 = vld [vmem:[%s1082 + $0xc0] sm:$0xff]
        %v1100 = vld [vmem:[%s1082 + $0xc8] sm:$0xff]
        %v1101 = vld [vmem:[%s1082 + $0xd8] sm:$0xff]
        %v1102 = vld [vmem:[%s1082 + $0xe0] sm:$0xff]
        %v1103 = vld [vmem:[%s1082 + $0xf0] sm:$0xff]
        %v1104 = vld [vmem:[%s1082 + $0xf8] sm:$0xff]
        %v1105 = vld [vmem:[%s1082 + $0x108] sm:$0xff]
        %v1106 = vld [vmem:[%s1082 + $0x110] sm:$0xff]
        %v1107 = vld [vmem:[%s1082 + $0x120] sm:$0xff]
        %v1108 = vld [vmem:[%s1082 + $0x128] sm:$0xff]
        %v1109 = vld [vmem:[%s1082 + $0x138] sm:$0xff]
        %v1110 = vld [vmem:[%s1082 + $0x140] sm:$0xff]
        %v1111 = vld [vmem:[%s1082 + $0x150] sm:$0xff]
        %v1112 = vld [vmem:[%s1082 + $0x158] sm:$0xff]
        %v1113 = vld [vmem:[%s1082 + $0x168] sm:$0xff]
        %v1114 = vld [vmem:[%s1082 + $0x170] sm:$0xff]
        %v1115 = vpack.c.bf16 %v1084, %v1083
        %v1116 = vpack.c.bf16 %v1086, %v1085
        %v1117 = vpack.c.bf16 %v1088, %v1087
        %v1118 = vpack.c.bf16 %v1090, %v1089
        %v1119 = vpack.c.bf16 %v1092, %v1091
        %v1120 = vpack.c.bf16 %v1094, %v1093
        %v1121 = vpack.c.bf16 %v1096, %v1095
        %v1122 = vpack.c.bf16 %v1098, %v1097
        %v1123 = vpack.c.bf16 %v1100, %v1099
        %v1124 = vpack.c.bf16 %v1102, %v1101
        %v1125 = vpack.c.bf16 %v1104, %v1103
        %v1126 = vpack.c.bf16 %v1106, %v1105
        %v1127 = vpack.c.bf16 %v1108, %v1107
        %v1128 = vpack.c.bf16 %v1110, %v1109
        %v1129 = vpack.c.bf16 %v1112, %v1111
        %v1130 = vpack.c.bf16 %v1114, %v1113
        %s1131 = scalar_lea.vmem %s1, 192
        %v1132 = vld [vmem:[%s1131] sm:$0xf]
        %v1133 = vld [vmem:[%s1131 + $0x4] sm:$0xf]
        %v1134 = vld [vmem:[%s1131 + $0x8] sm:$0xf]
        %v1135 = vld [vmem:[%s1131 + $0xc] sm:$0xf]
        %v1136 = vld [vmem:[%s1131 + $0x10] sm:$0xf]
        %v1137 = vld [vmem:[%s1131 + $0x14] sm:$0xf]
        %v1138 = vld [vmem:[%s1131 + $0x18] sm:$0xf]
        %v1139 = vld [vmem:[%s1131 + $0x1c] sm:$0xf]
        %v1140 = vld [vmem:[%s1131 + $0x20] sm:$0xf]
        %v1141 = vld [vmem:[%s1131 + $0x24] sm:$0xf]
        %v1142 = vld [vmem:[%s1131 + $0x28] sm:$0xf]
        %v1143 = vld [vmem:[%s1131 + $0x2c] sm:$0xf]
        %v1144 = vld [vmem:[%s1131 + $0x30] sm:$0xf]
        %v1145 = vld [vmem:[%s1131 + $0x34] sm:$0xf]
        %v1146 = vld [vmem:[%s1131 + $0x38] sm:$0xf]
        %v1147 = vld [vmem:[%s1131 + $0x3c] sm:$0xf]
        %v1164 = vunpack.c.l.b16 %v1132
        %v1165 = vunpack.c.l.b16 %v1133
        %v1166 = vunpack.c.l.b16 %v1134
        %v1167 = vunpack.c.l.b16 %v1135
        %v1168 = vunpack.c.l.b16 %v1136
        %v1169 = vunpack.c.l.b16 %v1137
        %v1170 = vunpack.c.l.b16 %v1138
        %v1171 = vunpack.c.l.b16 %v1139
        %v1172 = vunpack.c.l.b16 %v1140
        %v1173 = vunpack.c.l.b16 %v1141
        %v1174 = vunpack.c.l.b16 %v1142
        %v1175 = vunpack.c.l.b16 %v1143
        %v1176 = vunpack.c.l.b16 %v1144
        %v1177 = vunpack.c.l.b16 %v1145
        %v1178 = vunpack.c.l.b16 %v1146
        %v1179 = vunpack.c.l.b16 %v1147
        %v1180 = vpack.c.b16 %v1165, %v1164
        %v1181 = vpack.c.b16 %v1167, %v1166
        %v1182 = vpack.c.b16 %v1169, %v1168
        %v1183 = vpack.c.b16 %v1171, %v1170
        %v1184 = vpack.c.b16 %v1173, %v1172
        %v1185 = vpack.c.b16 %v1175, %v1174
        %v1186 = vpack.c.b16 %v1177, %v1176
        %v1187 = vpack.c.b16 %v1179, %v1178
        %1196 = vmatprep.subr.bf16.mxu0 0
        %1197 = vmatpush1.bf16.msra.mxu0 %v1187
        %1198 = vmatprep.subr.bf16.mxu0 0
        %1199 = vmatpush1.bf16.msra.mxu0 %v1186
        %1200 = vmatprep.subr.bf16.mxu0 0
        %1201 = vmatpush1.bf16.msra.mxu0 %v1185
        %1202 = vmatprep.subr.bf16.mxu0 0
        %1203 = vmatpush1.bf16.msra.mxu0 %v1184
        %1204 = vmatprep.subr.bf16.mxu0 0
        %1205 = vmatpush1.bf16.msra.mxu0 %v1183
        %1206 = vmatprep.subr.bf16.mxu0 0
        %1207 = vmatpush1.bf16.msra.mxu0 %v1182
        %1208 = vmatprep.subr.bf16.mxu0 0
        %1209 = vmatpush1.bf16.msra.mxu0 %v1181
        %1210 = vmatprep.subr.bf16.mxu0 0
        %1211 = vmatpush1.bf16.msra.mxu0 %v1180
        %1212 = vmatprep.subr.bf16.mxu0 0
        %1213 = vmatpush2.bf16.msra.mxu0 0
        %1214 = vmatprep.subr.bf16.mxu0 0
        %1215 = vmatpush2.bf16.msra.mxu0 0
        %1216 = vmatprep.subr.bf16.mxu0 0
        %1217 = vmatpush2.bf16.msra.mxu0 0
        %1218 = vmatprep.subr.bf16.mxu0 0
        %1219 = vmatpush2.bf16.msra.mxu0 0
        %1220 = vmatprep.subr.bf16.mxu0 0
        %1221 = vmatpush2.bf16.msra.mxu0 0
        %1222 = vmatprep.subr.bf16.mxu0 0
        %1223 = vmatpush2.bf16.msra.mxu0 0
        %1224 = vmatprep.subr.bf16.mxu0 0
        %1225 = vmatpush2.bf16.msra.mxu0 0
        %1226 = vmatprep.subr.bf16.mxu0 0
        %1227 = vmatpush2.bf16.msra.mxu0 0
        %1228 = vmatprep.mubr.bf16.mxu0 0
        %1229 = vmatmul.mubr.bf16.gmra.mxu0 %v1115
        %v1230 = vpop.f32.mrf.mxu0
        %v1231 = vadd.f32 0.0, %v1230
        %v1232 = vpop.f32.mrf.mxu0
        %v1233 = vpop.f32.mrf.mxu0
        %v1234 = vadd.f32 0.0, %v1233
        %v1235 = vpop.f32.mrf.mxu0
        %1236 = vmatprep.mubr.bf16.mxu0 0
        %1237 = vmatmul.mubr.bf16.gmra.mxu0 %v1116
        %v1238 = vpop.f32.mrf.mxu0
        %v1239 = vadd.f32 0.0, %v1238
        %v1240 = vpop.f32.mrf.mxu0
        %v1241 = vpop.f32.mrf.mxu0
        %v1242 = vadd.f32 0.0, %v1241
        %v1243 = vpop.f32.mrf.mxu0
        %1244 = vmatprep.mubr.bf16.mxu0 0
        %1245 = vmatmul.mubr.bf16.gmra.mxu0 %v1117
        %v1246 = vpop.f32.mrf.mxu0
        %v1247 = vadd.f32 0.0, %v1246
        %v1248 = vpop.f32.mrf.mxu0
        %v1249 = vpop.f32.mrf.mxu0
        %v1250 = vadd.f32 0.0, %v1249
        %v1251 = vpop.f32.mrf.mxu0
        %1252 = vmatprep.mubr.bf16.mxu0 0
        %1253 = vmatmul.mubr.bf16.gmra.mxu0 %v1118
        %v1254 = vpop.f32.mrf.mxu0
        %v1255 = vadd.f32 0.0, %v1254
        %v1256 = vpop.f32.mrf.mxu0
        %v1257 = vpop.f32.mrf.mxu0
        %v1258 = vadd.f32 0.0, %v1257
        %v1259 = vpop.f32.mrf.mxu0
        %1260 = vmatprep.mubr.bf16.mxu0 0
        %1261 = vmatmul.mubr.bf16.gmra.mxu0 %v1119
        %v1262 = vpop.f32.mrf.mxu0
        %v1263 = vadd.f32 0.0, %v1262
        %v1264 = vpop.f32.mrf.mxu0
        %v1265 = vpop.f32.mrf.mxu0
        %v1266 = vadd.f32 0.0, %v1265
        %v1267 = vpop.f32.mrf.mxu0
        %1268 = vmatprep.mubr.bf16.mxu0 0
        %1269 = vmatmul.mubr.bf16.gmra.mxu0 %v1120
        %v1270 = vpop.f32.mrf.mxu0
        %v1271 = vadd.f32 0.0, %v1270
        %v1272 = vpop.f32.mrf.mxu0
        %v1273 = vpop.f32.mrf.mxu0
        %v1274 = vadd.f32 0.0, %v1273
        %v1275 = vpop.f32.mrf.mxu0
        %1276 = vmatprep.mubr.bf16.mxu0 0
        %1277 = vmatmul.mubr.bf16.gmra.mxu0 %v1121
        %v1278 = vpop.f32.mrf.mxu0
        %v1279 = vadd.f32 0.0, %v1278
        %v1280 = vpop.f32.mrf.mxu0
        %v1281 = vpop.f32.mrf.mxu0
        %v1282 = vadd.f32 0.0, %v1281
        %v1283 = vpop.f32.mrf.mxu0
        %1284 = vmatprep.mubr.bf16.mxu0 0
        %1285 = vmatmul.mubr.bf16.gmra.mxu0 %v1122
        %v1286 = vpop.f32.mrf.mxu0
        %v1287 = vadd.f32 0.0, %v1286
        %v1288 = vpop.f32.mrf.mxu0
        %v1289 = vpop.f32.mrf.mxu0
        %v1290 = vadd.f32 0.0, %v1289
        %v1291 = vpop.f32.mrf.mxu0
        %1292 = vmatprep.mubr.bf16.mxu0 0
        %1293 = vmatmul.mubr.bf16.gmra.mxu0 %v1123
        %v1294 = vpop.f32.mrf.mxu0
        %v1295 = vadd.f32 0.0, %v1294
        %v1296 = vpop.f32.mrf.mxu0
        %v1297 = vpop.f32.mrf.mxu0
        %v1298 = vadd.f32 0.0, %v1297
        %v1299 = vpop.f32.mrf.mxu0
        %1300 = vmatprep.mubr.bf16.mxu0 0
        %1301 = vmatmul.mubr.bf16.gmra.mxu0 %v1124
        %v1302 = vpop.f32.mrf.mxu0
        %v1303 = vadd.f32 0.0, %v1302
        %v1304 = vpop.f32.mrf.mxu0
        %v1305 = vpop.f32.mrf.mxu0
        %v1306 = vadd.f32 0.0, %v1305
        %v1307 = vpop.f32.mrf.mxu0
        %1308 = vmatprep.mubr.bf16.mxu0 0
        %1309 = vmatmul.mubr.bf16.gmra.mxu0 %v1125
        %v1310 = vpop.f32.mrf.mxu0
        %v1311 = vadd.f32 0.0, %v1310
        %v1312 = vpop.f32.mrf.mxu0
        %v1313 = vpop.f32.mrf.mxu0
        %v1314 = vadd.f32 0.0, %v1313
        %v1315 = vpop.f32.mrf.mxu0
        %1316 = vmatprep.mubr.bf16.mxu0 0
        %1317 = vmatmul.mubr.bf16.gmra.mxu0 %v1126
        %v1318 = vpop.f32.mrf.mxu0
        %v1319 = vadd.f32 0.0, %v1318
        %v1320 = vpop.f32.mrf.mxu0
        %v1321 = vpop.f32.mrf.mxu0
        %v1322 = vadd.f32 0.0, %v1321
        %v1323 = vpop.f32.mrf.mxu0
        %1324 = vmatprep.mubr.bf16.mxu0 0
        %1325 = vmatmul.mubr.bf16.gmra.mxu0 %v1127
        %v1326 = vpop.f32.mrf.mxu0
        %v1327 = vadd.f32 0.0, %v1326
        %v1328 = vpop.f32.mrf.mxu0
        %v1329 = vpop.f32.mrf.mxu0
        %v1330 = vadd.f32 0.0, %v1329
        %v1331 = vpop.f32.mrf.mxu0
        %1332 = vmatprep.mubr.bf16.mxu0 0
        %1333 = vmatmul.mubr.bf16.gmra.mxu0 %v1128
        %v1334 = vpop.f32.mrf.mxu0
        %v1335 = vadd.f32 0.0, %v1334
        %v1336 = vpop.f32.mrf.mxu0
        %v1337 = vpop.f32.mrf.mxu0
        %v1338 = vadd.f32 0.0, %v1337
        %v1339 = vpop.f32.mrf.mxu0
        %1340 = vmatprep.mubr.bf16.mxu0 0
        %1341 = vmatmul.mubr.bf16.gmra.mxu0 %v1129
        %v1342 = vpop.f32.mrf.mxu0
        %v1343 = vadd.f32 0.0, %v1342
        %v1344 = vpop.f32.mrf.mxu0
        %v1345 = vpop.f32.mrf.mxu0
        %v1346 = vadd.f32 0.0, %v1345
        %v1347 = vpop.f32.mrf.mxu0
        %1348 = vmatprep.mubr.bf16.mxu0 0
        %1349 = vmatmul.mubr.bf16.gmra.mxu0 %v1130
        %v1350 = vpop.f32.mrf.mxu0
        %v1351 = vadd.f32 0.0, %v1350
        %v1352 = vpop.f32.mrf.mxu0
        %v1353 = vpop.f32.mrf.mxu0
        %v1354 = vadd.f32 0.0, %v1353
        %v1355 = vpop.f32.mrf.mxu0
        %1356 = vdwg.mxu0
        %v1357 = vadd.f32 %v1050, %v1231
        %v1358 = vadd.f32 %v1051, %v1234
        %v1359 = vadd.f32 %v1052, %v1239
        %v1360 = vadd.f32 %v1053, %v1242
        %v1361 = vadd.f32 %v1054, %v1247
        %v1362 = vadd.f32 %v1055, %v1250
        %v1363 = vadd.f32 %v1056, %v1255
        %v1364 = vadd.f32 %v1057, %v1258
        %v1365 = vadd.f32 %v1058, %v1263
        %v1366 = vadd.f32 %v1059, %v1266
        %v1367 = vadd.f32 %v1060, %v1271
        %v1368 = vadd.f32 %v1061, %v1274
        %v1369 = vadd.f32 %v1062, %v1279
        %v1370 = vadd.f32 %v1063, %v1282
        %v1371 = vadd.f32 %v1064, %v1287
        %v1372 = vadd.f32 %v1065, %v1290
        %v1373 = vadd.f32 %v1066, %v1295
        %v1374 = vadd.f32 %v1067, %v1298
        %v1375 = vadd.f32 %v1068, %v1303
        %v1376 = vadd.f32 %v1069, %v1306
        %v1377 = vadd.f32 %v1070, %v1311
        %v1378 = vadd.f32 %v1071, %v1314
        %v1379 = vadd.f32 %v1072, %v1319
        %v1380 = vadd.f32 %v1073, %v1322
        %v1381 = vadd.f32 %v1074, %v1327
        %v1382 = vadd.f32 %v1075, %v1330
        %v1383 = vadd.f32 %v1076, %v1335
        %v1384 = vadd.f32 %v1077, %v1338
        %v1385 = vadd.f32 %v1078, %v1343
        %v1386 = vadd.f32 %v1079, %v1346
        %v1387 = vadd.f32 %v1080, %v1351
        %v1388 = vadd.f32 %v1081, %v1354
        %v1389 = vld [vmem:[%s1082 + $0x1] sm:$0xff]
        %v1390 = vld [vmem:[%s1082 + $0x9] sm:$0xff]
        %v1391 = vld [vmem:[%s1082 + $0x19] sm:$0xff]
        %v1392 = vld [vmem:[%s1082 + $0x21] sm:$0xff]
        %v1393 = vld [vmem:[%s1082 + $0x31] sm:$0xff]
        %v1394 = vld [vmem:[%s1082 + $0x39] sm:$0xff]
        %v1395 = vld [vmem:[%s1082 + $0x49] sm:$0xff]
        %v1396 = vld [vmem:[%s1082 + $0x51] sm:$0xff]
        %v1397 = vld [vmem:[%s1082 + $0x61] sm:$0xff]
        %v1398 = vld [vmem:[%s1082 + $0x69] sm:$0xff]
        %v1399 = vld [vmem:[%s1082 + $0x79] sm:$0xff]
        %v1400 = vld [vmem:[%s1082 + $0x81] sm:$0xff]
        %v1401 = vld [vmem:[%s1082 + $0x91] sm:$0xff]
        %v1402 = vld [vmem:[%s1082 + $0x99] sm:$0xff]
        %v1403 = vld [vmem:[%s1082 + $0xa9] sm:$0xff]
        %v1404 = vld [vmem:[%s1082 + $0xb1] sm:$0xff]
        %v1405 = vld [vmem:[%s1082 + $0xc1] sm:$0xff]
        %v1406 = vld [vmem:[%s1082 + $0xc9] sm:$0xff]
        %v1407 = vld [vmem:[%s1082 + $0xd9] sm:$0xff]
        %v1408 = vld [vmem:[%s1082 + $0xe1] sm:$0xff]
        %v1409 = vld [vmem:[%s1082 + $0xf1] sm:$0xff]
        %v1410 = vld [vmem:[%s1082 + $0xf9] sm:$0xff]
        %v1411 = vld [vmem:[%s1082 + $0x109] sm:$0xff]
        %v1412 = vld [vmem:[%s1082 + $0x111] sm:$0xff]
        %v1413 = vld [vmem:[%s1082 + $0x121] sm:$0xff]
        %v1414 = vld [vmem:[%s1082 + $0x129] sm:$0xff]
        %v1415 = vld [vmem:[%s1082 + $0x139] sm:$0xff]
        %v1416 = vld [vmem:[%s1082 + $0x141] sm:$0xff]
        %v1417 = vld [vmem:[%s1082 + $0x151] sm:$0xff]
        %v1418 = vld [vmem:[%s1082 + $0x159] sm:$0xff]
        %v1419 = vld [vmem:[%s1082 + $0x169] sm:$0xff]
        %v1420 = vld [vmem:[%s1082 + $0x171] sm:$0xff]
        %v1421 = vpack.c.bf16 %v1390, %v1389
        %v1422 = vpack.c.bf16 %v1392, %v1391
        %v1423 = vpack.c.bf16 %v1394, %v1393
        %v1424 = vpack.c.bf16 %v1396, %v1395
        %v1425 = vpack.c.bf16 %v1398, %v1397
        %v1426 = vpack.c.bf16 %v1400, %v1399
        %v1427 = vpack.c.bf16 %v1402, %v1401
        %v1428 = vpack.c.bf16 %v1404, %v1403
        %v1429 = vpack.c.bf16 %v1406, %v1405
        %v1430 = vpack.c.bf16 %v1408, %v1407
        %v1431 = vpack.c.bf16 %v1410, %v1409
        %v1432 = vpack.c.bf16 %v1412, %v1411
        %v1433 = vpack.c.bf16 %v1414, %v1413
        %v1434 = vpack.c.bf16 %v1416, %v1415
        %v1435 = vpack.c.bf16 %v1418, %v1417
        %v1436 = vpack.c.bf16 %v1420, %v1419
        %s1437 = scalar_lea.vmem %s1, 256
        %v1438 = vld [vmem:[%s1437] sm:$0xf]
        %v1439 = vld [vmem:[%s1437 + $0x4] sm:$0xf]
        %v1440 = vld [vmem:[%s1437 + $0x8] sm:$0xf]
        %v1441 = vld [vmem:[%s1437 + $0xc] sm:$0xf]
        %v1442 = vld [vmem:[%s1437 + $0x10] sm:$0xf]
        %v1443 = vld [vmem:[%s1437 + $0x14] sm:$0xf]
        %v1444 = vld [vmem:[%s1437 + $0x18] sm:$0xf]
        %v1445 = vld [vmem:[%s1437 + $0x1c] sm:$0xf]
        %v1446 = vld [vmem:[%s1437 + $0x20] sm:$0xf]
        %v1447 = vld [vmem:[%s1437 + $0x24] sm:$0xf]
        %v1448 = vld [vmem:[%s1437 + $0x28] sm:$0xf]
        %v1449 = vld [vmem:[%s1437 + $0x2c] sm:$0xf]
        %v1450 = vld [vmem:[%s1437 + $0x30] sm:$0xf]
        %v1451 = vld [vmem:[%s1437 + $0x34] sm:$0xf]
        %v1452 = vld [vmem:[%s1437 + $0x38] sm:$0xf]
        %v1453 = vld [vmem:[%s1437 + $0x3c] sm:$0xf]
        %v1470 = vunpack.c.l.b16 %v1438
        %v1471 = vunpack.c.l.b16 %v1439
        %v1472 = vunpack.c.l.b16 %v1440
        %v1473 = vunpack.c.l.b16 %v1441
        %v1474 = vunpack.c.l.b16 %v1442
        %v1475 = vunpack.c.l.b16 %v1443
        %v1476 = vunpack.c.l.b16 %v1444
        %v1477 = vunpack.c.l.b16 %v1445
        %v1478 = vunpack.c.l.b16 %v1446
        %v1479 = vunpack.c.l.b16 %v1447
        %v1480 = vunpack.c.l.b16 %v1448
        %v1481 = vunpack.c.l.b16 %v1449
        %v1482 = vunpack.c.l.b16 %v1450
        %v1483 = vunpack.c.l.b16 %v1451
        %v1484 = vunpack.c.l.b16 %v1452
        %v1485 = vunpack.c.l.b16 %v1453
        %v1486 = vpack.c.b16 %v1471, %v1470
        %v1487 = vpack.c.b16 %v1473, %v1472
        %v1488 = vpack.c.b16 %v1475, %v1474
        %v1489 = vpack.c.b16 %v1477, %v1476
        %v1490 = vpack.c.b16 %v1479, %v1478
        %v1491 = vpack.c.b16 %v1481, %v1480
        %v1492 = vpack.c.b16 %v1483, %v1482
        %v1493 = vpack.c.b16 %v1485, %v1484
        %1502 = vmatprep.subr.bf16.mxu0 0
        %1503 = vmatpush1.bf16.msra.mxu0 %v1493
        %1504 = vmatprep.subr.bf16.mxu0 0
        %1505 = vmatpush1.bf16.msra.mxu0 %v1492
        %1506 = vmatprep.subr.bf16.mxu0 0
        %1507 = vmatpush1.bf16.msra.mxu0 %v1491
        %1508 = vmatprep.subr.bf16.mxu0 0
        %1509 = vmatpush1.bf16.msra.mxu0 %v1490
        %1510 = vmatprep.subr.bf16.mxu0 0
        %1511 = vmatpush1.bf16.msra.mxu0 %v1489
        %1512 = vmatprep.subr.bf16.mxu0 0
        %1513 = vmatpush1.bf16.msra.mxu0 %v1488
        %1514 = vmatprep.subr.bf16.mxu0 0
        %1515 = vmatpush1.bf16.msra.mxu0 %v1487
        %1516 = vmatprep.subr.bf16.mxu0 0
        %1517 = vmatpush1.bf16.msra.mxu0 %v1486
        %1518 = vmatprep.subr.bf16.mxu0 0
        %1519 = vmatpush2.bf16.msra.mxu0 0
        %1520 = vmatprep.subr.bf16.mxu0 0
        %1521 = vmatpush2.bf16.msra.mxu0 0
        %1522 = vmatprep.subr.bf16.mxu0 0
        %1523 = vmatpush2.bf16.msra.mxu0 0
        %1524 = vmatprep.subr.bf16.mxu0 0
        %1525 = vmatpush2.bf16.msra.mxu0 0
        %1526 = vmatprep.subr.bf16.mxu0 0
        %1527 = vmatpush2.bf16.msra.mxu0 0
        %1528 = vmatprep.subr.bf16.mxu0 0
        %1529 = vmatpush2.bf16.msra.mxu0 0
        %1530 = vmatprep.subr.bf16.mxu0 0
        %1531 = vmatpush2.bf16.msra.mxu0 0
        %1532 = vmatprep.subr.bf16.mxu0 0
        %1533 = vmatpush2.bf16.msra.mxu0 0
        %1534 = vmatprep.mubr.bf16.mxu0 0
        %1535 = vmatmul.mubr.bf16.gmra.mxu0 %v1421
        %v1536 = vpop.f32.mrf.mxu0
        %v1537 = vadd.f32 0.0, %v1536
        %v1538 = vpop.f32.mrf.mxu0
        %v1539 = vpop.f32.mrf.mxu0
        %v1540 = vadd.f32 0.0, %v1539
        %v1541 = vpop.f32.mrf.mxu0
        %1542 = vmatprep.mubr.bf16.mxu0 0
        %1543 = vmatmul.mubr.bf16.gmra.mxu0 %v1422
        %v1544 = vpop.f32.mrf.mxu0
        %v1545 = vadd.f32 0.0, %v1544
        %v1546 = vpop.f32.mrf.mxu0
        %v1547 = vpop.f32.mrf.mxu0
        %v1548 = vadd.f32 0.0, %v1547
        %v1549 = vpop.f32.mrf.mxu0
        %1550 = vmatprep.mubr.bf16.mxu0 0
        %1551 = vmatmul.mubr.bf16.gmra.mxu0 %v1423
        %v1552 = vpop.f32.mrf.mxu0
        %v1553 = vadd.f32 0.0, %v1552
        %v1554 = vpop.f32.mrf.mxu0
        %v1555 = vpop.f32.mrf.mxu0
        %v1556 = vadd.f32 0.0, %v1555
        %v1557 = vpop.f32.mrf.mxu0
        %1558 = vmatprep.mubr.bf16.mxu0 0
        %1559 = vmatmul.mubr.bf16.gmra.mxu0 %v1424
        %v1560 = vpop.f32.mrf.mxu0
        %v1561 = vadd.f32 0.0, %v1560
        %v1562 = vpop.f32.mrf.mxu0
        %v1563 = vpop.f32.mrf.mxu0
        %v1564 = vadd.f32 0.0, %v1563
        %v1565 = vpop.f32.mrf.mxu0
        %1566 = vmatprep.mubr.bf16.mxu0 0
        %1567 = vmatmul.mubr.bf16.gmra.mxu0 %v1425
        %v1568 = vpop.f32.mrf.mxu0
        %v1569 = vadd.f32 0.0, %v1568
        %v1570 = vpop.f32.mrf.mxu0
        %v1571 = vpop.f32.mrf.mxu0
        %v1572 = vadd.f32 0.0, %v1571
        %v1573 = vpop.f32.mrf.mxu0
        %1574 = vmatprep.mubr.bf16.mxu0 0
        %1575 = vmatmul.mubr.bf16.gmra.mxu0 %v1426
        %v1576 = vpop.f32.mrf.mxu0
        %v1577 = vadd.f32 0.0, %v1576
        %v1578 = vpop.f32.mrf.mxu0
        %v1579 = vpop.f32.mrf.mxu0
        %v1580 = vadd.f32 0.0, %v1579
        %v1581 = vpop.f32.mrf.mxu0
        %1582 = vmatprep.mubr.bf16.mxu0 0
        %1583 = vmatmul.mubr.bf16.gmra.mxu0 %v1427
        %v1584 = vpop.f32.mrf.mxu0
        %v1585 = vadd.f32 0.0, %v1584
        %v1586 = vpop.f32.mrf.mxu0
        %v1587 = vpop.f32.mrf.mxu0
        %v1588 = vadd.f32 0.0, %v1587
        %v1589 = vpop.f32.mrf.mxu0
        %1590 = vmatprep.mubr.bf16.mxu0 0
        %1591 = vmatmul.mubr.bf16.gmra.mxu0 %v1428
        %v1592 = vpop.f32.mrf.mxu0
        %v1593 = vadd.f32 0.0, %v1592
        %v1594 = vpop.f32.mrf.mxu0
        %v1595 = vpop.f32.mrf.mxu0
        %v1596 = vadd.f32 0.0, %v1595
        %v1597 = vpop.f32.mrf.mxu0
        %1598 = vmatprep.mubr.bf16.mxu0 0
        %1599 = vmatmul.mubr.bf16.gmra.mxu0 %v1429
        %v1600 = vpop.f32.mrf.mxu0
        %v1601 = vadd.f32 0.0, %v1600
        %v1602 = vpop.f32.mrf.mxu0
        %v1603 = vpop.f32.mrf.mxu0
        %v1604 = vadd.f32 0.0, %v1603
        %v1605 = vpop.f32.mrf.mxu0
        %1606 = vmatprep.mubr.bf16.mxu0 0
        %1607 = vmatmul.mubr.bf16.gmra.mxu0 %v1430
        %v1608 = vpop.f32.mrf.mxu0
        %v1609 = vadd.f32 0.0, %v1608
        %v1610 = vpop.f32.mrf.mxu0
        %v1611 = vpop.f32.mrf.mxu0
        %v1612 = vadd.f32 0.0, %v1611
        %v1613 = vpop.f32.mrf.mxu0
        %1614 = vmatprep.mubr.bf16.mxu0 0
        %1615 = vmatmul.mubr.bf16.gmra.mxu0 %v1431
        %v1616 = vpop.f32.mrf.mxu0
        %v1617 = vadd.f32 0.0, %v1616
        %v1618 = vpop.f32.mrf.mxu0
        %v1619 = vpop.f32.mrf.mxu0
        %v1620 = vadd.f32 0.0, %v1619
        %v1621 = vpop.f32.mrf.mxu0
        %1622 = vmatprep.mubr.bf16.mxu0 0
        %1623 = vmatmul.mubr.bf16.gmra.mxu0 %v1432
        %v1624 = vpop.f32.mrf.mxu0
        %v1625 = vadd.f32 0.0, %v1624
        %v1626 = vpop.f32.mrf.mxu0
        %v1627 = vpop.f32.mrf.mxu0
        %v1628 = vadd.f32 0.0, %v1627
        %v1629 = vpop.f32.mrf.mxu0
        %1630 = vmatprep.mubr.bf16.mxu0 0
        %1631 = vmatmul.mubr.bf16.gmra.mxu0 %v1433
        %v1632 = vpop.f32.mrf.mxu0
        %v1633 = vadd.f32 0.0, %v1632
        %v1634 = vpop.f32.mrf.mxu0
        %v1635 = vpop.f32.mrf.mxu0
        %v1636 = vadd.f32 0.0, %v1635
        %v1637 = vpop.f32.mrf.mxu0
        %1638 = vmatprep.mubr.bf16.mxu0 0
        %1639 = vmatmul.mubr.bf16.gmra.mxu0 %v1434
        %v1640 = vpop.f32.mrf.mxu0
        %v1641 = vadd.f32 0.0, %v1640
        %v1642 = vpop.f32.mrf.mxu0
        %v1643 = vpop.f32.mrf.mxu0
        %v1644 = vadd.f32 0.0, %v1643
        %v1645 = vpop.f32.mrf.mxu0
        %1646 = vmatprep.mubr.bf16.mxu0 0
        %1647 = vmatmul.mubr.bf16.gmra.mxu0 %v1435
        %v1648 = vpop.f32.mrf.mxu0
        %v1649 = vadd.f32 0.0, %v1648
        %v1650 = vpop.f32.mrf.mxu0
        %v1651 = vpop.f32.mrf.mxu0
        %v1652 = vadd.f32 0.0, %v1651
        %v1653 = vpop.f32.mrf.mxu0
        %1654 = vmatprep.mubr.bf16.mxu0 0
        %1655 = vmatmul.mubr.bf16.gmra.mxu0 %v1436
        %v1656 = vpop.f32.mrf.mxu0
        %v1657 = vadd.f32 0.0, %v1656
        %v1658 = vpop.f32.mrf.mxu0
        %v1659 = vpop.f32.mrf.mxu0
        %v1660 = vadd.f32 0.0, %v1659
        %v1661 = vpop.f32.mrf.mxu0
        %1662 = vdwg.mxu0
        %v1663 = vadd.f32 %v1357, %v1537
        %v1664 = vadd.f32 %v1358, %v1540
        %v1665 = vadd.f32 %v1359, %v1545
        %v1666 = vadd.f32 %v1360, %v1548
        %v1667 = vadd.f32 %v1361, %v1553
        %v1668 = vadd.f32 %v1362, %v1556
        %v1669 = vadd.f32 %v1363, %v1561
        %v1670 = vadd.f32 %v1364, %v1564
        %v1671 = vadd.f32 %v1365, %v1569
        %v1672 = vadd.f32 %v1366, %v1572
        %v1673 = vadd.f32 %v1367, %v1577
        %v1674 = vadd.f32 %v1368, %v1580
        %v1675 = vadd.f32 %v1369, %v1585
        %v1676 = vadd.f32 %v1370, %v1588
        %v1677 = vadd.f32 %v1371, %v1593
        %v1678 = vadd.f32 %v1372, %v1596
        %v1679 = vadd.f32 %v1373, %v1601
        %v1680 = vadd.f32 %v1374, %v1604
        %v1681 = vadd.f32 %v1375, %v1609
        %v1682 = vadd.f32 %v1376, %v1612
        %v1683 = vadd.f32 %v1377, %v1617
        %v1684 = vadd.f32 %v1378, %v1620
        %v1685 = vadd.f32 %v1379, %v1625
        %v1686 = vadd.f32 %v1380, %v1628
        %v1687 = vadd.f32 %v1381, %v1633
        %v1688 = vadd.f32 %v1382, %v1636
        %v1689 = vadd.f32 %v1383, %v1641
        %v1690 = vadd.f32 %v1384, %v1644
        %v1691 = vadd.f32 %v1385, %v1649
        %v1692 = vadd.f32 %v1386, %v1652
        %v1693 = vadd.f32 %v1387, %v1657
        %v1694 = vadd.f32 %v1388, %v1660
        %v1695 = vld [vmem:[%s1082 + $0x2] sm:$0xff]
        %v1696 = vld [vmem:[%s1082 + $0xa] sm:$0xff]
        %v1697 = vld [vmem:[%s1082 + $0x1a] sm:$0xff]
        %v1698 = vld [vmem:[%s1082 + $0x22] sm:$0xff]
        %v1699 = vld [vmem:[%s1082 + $0x32] sm:$0xff]
        %v1700 = vld [vmem:[%s1082 + $0x3a] sm:$0xff]
        %v1701 = vld [vmem:[%s1082 + $0x4a] sm:$0xff]
        %v1702 = vld [vmem:[%s1082 + $0x52] sm:$0xff]
        %v1703 = vld [vmem:[%s1082 + $0x62] sm:$0xff]
        %v1704 = vld [vmem:[%s1082 + $0x6a] sm:$0xff]
        %v1705 = vld [vmem:[%s1082 + $0x7a] sm:$0xff]
        %v1706 = vld [vmem:[%s1082 + $0x82] sm:$0xff]
        %v1707 = vld [vmem:[%s1082 + $0x92] sm:$0xff]
        %v1708 = vld [vmem:[%s1082 + $0x9a] sm:$0xff]
        %v1709 = vld [vmem:[%s1082 + $0xaa] sm:$0xff]
        %v1710 = vld [vmem:[%s1082 + $0xb2] sm:$0xff]
        %v1711 = vld [vmem:[%s1082 + $0xc2] sm:$0xff]
        %v1712 = vld [vmem:[%s1082 + $0xca] sm:$0xff]
        %v1713 = vld [vmem:[%s1082 + $0xda] sm:$0xff]
        %v1714 = vld [vmem:[%s1082 + $0xe2] sm:$0xff]
        %v1715 = vld [vmem:[%s1082 + $0xf2] sm:$0xff]
        %v1716 = vld [vmem:[%s1082 + $0xfa] sm:$0xff]
        %v1717 = vld [vmem:[%s1082 + $0x10a] sm:$0xff]
        %v1718 = vld [vmem:[%s1082 + $0x112] sm:$0xff]
        %v1719 = vld [vmem:[%s1082 + $0x122] sm:$0xff]
        %v1720 = vld [vmem:[%s1082 + $0x12a] sm:$0xff]
        %v1721 = vld [vmem:[%s1082 + $0x13a] sm:$0xff]
        %v1722 = vld [vmem:[%s1082 + $0x142] sm:$0xff]
        %v1723 = vld [vmem:[%s1082 + $0x152] sm:$0xff]
        %v1724 = vld [vmem:[%s1082 + $0x15a] sm:$0xff]
        %v1725 = vld [vmem:[%s1082 + $0x16a] sm:$0xff]
        %v1726 = vld [vmem:[%s1082 + $0x172] sm:$0xff]
        %v1727 = vpack.c.bf16 %v1696, %v1695
        %v1728 = vpack.c.bf16 %v1698, %v1697
        %v1729 = vpack.c.bf16 %v1700, %v1699
        %v1730 = vpack.c.bf16 %v1702, %v1701
        %v1731 = vpack.c.bf16 %v1704, %v1703
        %v1732 = vpack.c.bf16 %v1706, %v1705
        %v1733 = vpack.c.bf16 %v1708, %v1707
        %v1734 = vpack.c.bf16 %v1710, %v1709
        %v1735 = vpack.c.bf16 %v1712, %v1711
        %v1736 = vpack.c.bf16 %v1714, %v1713
        %v1737 = vpack.c.bf16 %v1716, %v1715
        %v1738 = vpack.c.bf16 %v1718, %v1717
        %v1739 = vpack.c.bf16 %v1720, %v1719
        %v1740 = vpack.c.bf16 %v1722, %v1721
        %v1741 = vpack.c.bf16 %v1724, %v1723
        %v1742 = vpack.c.bf16 %v1726, %v1725
        %s1743 = scalar_lea.vmem %s1, 320
        %v1744 = vld [vmem:[%s1743] sm:$0xf]
        %v1745 = vld [vmem:[%s1743 + $0x4] sm:$0xf]
        %v1746 = vld [vmem:[%s1743 + $0x8] sm:$0xf]
        %v1747 = vld [vmem:[%s1743 + $0xc] sm:$0xf]
        %v1748 = vld [vmem:[%s1743 + $0x10] sm:$0xf]
        %v1749 = vld [vmem:[%s1743 + $0x14] sm:$0xf]
        %v1750 = vld [vmem:[%s1743 + $0x18] sm:$0xf]
        %v1751 = vld [vmem:[%s1743 + $0x1c] sm:$0xf]
        %v1752 = vld [vmem:[%s1743 + $0x20] sm:$0xf]
        %v1753 = vld [vmem:[%s1743 + $0x24] sm:$0xf]
        %v1754 = vld [vmem:[%s1743 + $0x28] sm:$0xf]
        %v1755 = vld [vmem:[%s1743 + $0x2c] sm:$0xf]
        %v1756 = vld [vmem:[%s1743 + $0x30] sm:$0xf]
        %v1757 = vld [vmem:[%s1743 + $0x34] sm:$0xf]
        %v1758 = vld [vmem:[%s1743 + $0x38] sm:$0xf]
        %v1759 = vld [vmem:[%s1743 + $0x3c] sm:$0xf]
        %v1776 = vunpack.c.l.b16 %v1744
        %v1777 = vunpack.c.l.b16 %v1745
        %v1778 = vunpack.c.l.b16 %v1746
        %v1779 = vunpack.c.l.b16 %v1747
        %v1780 = vunpack.c.l.b16 %v1748
        %v1781 = vunpack.c.l.b16 %v1749
        %v1782 = vunpack.c.l.b16 %v1750
        %v1783 = vunpack.c.l.b16 %v1751
        %v1784 = vunpack.c.l.b16 %v1752
        %v1785 = vunpack.c.l.b16 %v1753
        %v1786 = vunpack.c.l.b16 %v1754
        %v1787 = vunpack.c.l.b16 %v1755
        %v1788 = vunpack.c.l.b16 %v1756
        %v1789 = vunpack.c.l.b16 %v1757
        %v1790 = vunpack.c.l.b16 %v1758
        %v1791 = vunpack.c.l.b16 %v1759
        %v1792 = vpack.c.b16 %v1777, %v1776
        %v1793 = vpack.c.b16 %v1779, %v1778
        %v1794 = vpack.c.b16 %v1781, %v1780
        %v1795 = vpack.c.b16 %v1783, %v1782
        %v1796 = vpack.c.b16 %v1785, %v1784
        %v1797 = vpack.c.b16 %v1787, %v1786
        %v1798 = vpack.c.b16 %v1789, %v1788
        %v1799 = vpack.c.b16 %v1791, %v1790
        %1808 = vmatprep.subr.bf16.mxu0 0
        %1809 = vmatpush1.bf16.msra.mxu0 %v1799
        %1810 = vmatprep.subr.bf16.mxu0 0
        %1811 = vmatpush1.bf16.msra.mxu0 %v1798
        %1812 = vmatprep.subr.bf16.mxu0 0
        %1813 = vmatpush1.bf16.msra.mxu0 %v1797
        %1814 = vmatprep.subr.bf16.mxu0 0
        %1815 = vmatpush1.bf16.msra.mxu0 %v1796
        %1816 = vmatprep.subr.bf16.mxu0 0
        %1817 = vmatpush1.bf16.msra.mxu0 %v1795
        %1818 = vmatprep.subr.bf16.mxu0 0
        %1819 = vmatpush1.bf16.msra.mxu0 %v1794
        %1820 = vmatprep.subr.bf16.mxu0 0
        %1821 = vmatpush1.bf16.msra.mxu0 %v1793
        %1822 = vmatprep.subr.bf16.mxu0 0
        %1823 = vmatpush1.bf16.msra.mxu0 %v1792
        %1824 = vmatprep.subr.bf16.mxu0 0
        %1825 = vmatpush2.bf16.msra.mxu0 0
        %1826 = vmatprep.subr.bf16.mxu0 0
        %1827 = vmatpush2.bf16.msra.mxu0 0
        %1828 = vmatprep.subr.bf16.mxu0 0
        %1829 = vmatpush2.bf16.msra.mxu0 0
        %1830 = vmatprep.subr.bf16.mxu0 0
        %1831 = vmatpush2.bf16.msra.mxu0 0
        %1832 = vmatprep.subr.bf16.mxu0 0
        %1833 = vmatpush2.bf16.msra.mxu0 0
        %1834 = vmatprep.subr.bf16.mxu0 0
        %1835 = vmatpush2.bf16.msra.mxu0 0
        %1836 = vmatprep.subr.bf16.mxu0 0
        %1837 = vmatpush2.bf16.msra.mxu0 0
        %1838 = vmatprep.subr.bf16.mxu0 0
        %1839 = vmatpush2.bf16.msra.mxu0 0
        %1840 = vmatprep.mubr.bf16.mxu0 0
        %1841 = vmatmul.mubr.bf16.gmra.mxu0 %v1727
        %v1842 = vpop.f32.mrf.mxu0
        %v1843 = vadd.f32 0.0, %v1842
        %v1844 = vpop.f32.mrf.mxu0
        %v1845 = vpop.f32.mrf.mxu0
        %v1846 = vadd.f32 0.0, %v1845
        %v1847 = vpop.f32.mrf.mxu0
        %1848 = vmatprep.mubr.bf16.mxu0 0
        %1849 = vmatmul.mubr.bf16.gmra.mxu0 %v1728
        %v1850 = vpop.f32.mrf.mxu0
        %v1851 = vadd.f32 0.0, %v1850
        %v1852 = vpop.f32.mrf.mxu0
        %v1853 = vpop.f32.mrf.mxu0
        %v1854 = vadd.f32 0.0, %v1853
        %v1855 = vpop.f32.mrf.mxu0
        %1856 = vmatprep.mubr.bf16.mxu0 0
        %1857 = vmatmul.mubr.bf16.gmra.mxu0 %v1729
        %v1858 = vpop.f32.mrf.mxu0
        %v1859 = vadd.f32 0.0, %v1858
        %v1860 = vpop.f32.mrf.mxu0
        %v1861 = vpop.f32.mrf.mxu0
        %v1862 = vadd.f32 0.0, %v1861
        %v1863 = vpop.f32.mrf.mxu0
        %1864 = vmatprep.mubr.bf16.mxu0 0
        %1865 = vmatmul.mubr.bf16.gmra.mxu0 %v1730
        %v1866 = vpop.f32.mrf.mxu0
        %v1867 = vadd.f32 0.0, %v1866
        %v1868 = vpop.f32.mrf.mxu0
        %v1869 = vpop.f32.mrf.mxu0
        %v1870 = vadd.f32 0.0, %v1869
        %v1871 = vpop.f32.mrf.mxu0
        %1872 = vmatprep.mubr.bf16.mxu0 0
        %1873 = vmatmul.mubr.bf16.gmra.mxu0 %v1731
        %v1874 = vpop.f32.mrf.mxu0
        %v1875 = vadd.f32 0.0, %v1874
        %v1876 = vpop.f32.mrf.mxu0
        %v1877 = vpop.f32.mrf.mxu0
        %v1878 = vadd.f32 0.0, %v1877
        %v1879 = vpop.f32.mrf.mxu0
        %1880 = vmatprep.mubr.bf16.mxu0 0
        %1881 = vmatmul.mubr.bf16.gmra.mxu0 %v1732
        %v1882 = vpop.f32.mrf.mxu0
        %v1883 = vadd.f32 0.0, %v1882
        %v1884 = vpop.f32.mrf.mxu0
        %v1885 = vpop.f32.mrf.mxu0
        %v1886 = vadd.f32 0.0, %v1885
        %v1887 = vpop.f32.mrf.mxu0
        %1888 = vmatprep.mubr.bf16.mxu0 0
        %1889 = vmatmul.mubr.bf16.gmra.mxu0 %v1733
        %v1890 = vpop.f32.mrf.mxu0
        %v1891 = vadd.f32 0.0, %v1890
        %v1892 = vpop.f32.mrf.mxu0
        %v1893 = vpop.f32.mrf.mxu0
        %v1894 = vadd.f32 0.0, %v1893
        %v1895 = vpop.f32.mrf.mxu0
        %1896 = vmatprep.mubr.bf16.mxu0 0
        %1897 = vmatmul.mubr.bf16.gmra.mxu0 %v1734
        %v1898 = vpop.f32.mrf.mxu0
        %v1899 = vadd.f32 0.0, %v1898
        %v1900 = vpop.f32.mrf.mxu0
        %v1901 = vpop.f32.mrf.mxu0
        %v1902 = vadd.f32 0.0, %v1901
        %v1903 = vpop.f32.mrf.mxu0
        %1904 = vmatprep.mubr.bf16.mxu0 0
        %1905 = vmatmul.mubr.bf16.gmra.mxu0 %v1735
        %v1906 = vpop.f32.mrf.mxu0
        %v1907 = vadd.f32 0.0, %v1906
        %v1908 = vpop.f32.mrf.mxu0
        %v1909 = vpop.f32.mrf.mxu0
        %v1910 = vadd.f32 0.0, %v1909
        %v1911 = vpop.f32.mrf.mxu0
        %1912 = vmatprep.mubr.bf16.mxu0 0
        %1913 = vmatmul.mubr.bf16.gmra.mxu0 %v1736
        %v1914 = vpop.f32.mrf.mxu0
        %v1915 = vadd.f32 0.0, %v1914
        %v1916 = vpop.f32.mrf.mxu0
        %v1917 = vpop.f32.mrf.mxu0
        %v1918 = vadd.f32 0.0, %v1917
        %v1919 = vpop.f32.mrf.mxu0
        %1920 = vmatprep.mubr.bf16.mxu0 0
        %1921 = vmatmul.mubr.bf16.gmra.mxu0 %v1737
        %v1922 = vpop.f32.mrf.mxu0
        %v1923 = vadd.f32 0.0, %v1922
        %v1924 = vpop.f32.mrf.mxu0
        %v1925 = vpop.f32.mrf.mxu0
        %v1926 = vadd.f32 0.0, %v1925
        %v1927 = vpop.f32.mrf.mxu0
        %1928 = vmatprep.mubr.bf16.mxu0 0
        %1929 = vmatmul.mubr.bf16.gmra.mxu0 %v1738
        %v1930 = vpop.f32.mrf.mxu0
        %v1931 = vadd.f32 0.0, %v1930
        %v1932 = vpop.f32.mrf.mxu0
        %v1933 = vpop.f32.mrf.mxu0
        %v1934 = vadd.f32 0.0, %v1933
        %v1935 = vpop.f32.mrf.mxu0
        %1936 = vmatprep.mubr.bf16.mxu0 0
        %1937 = vmatmul.mubr.bf16.gmra.mxu0 %v1739
        %v1938 = vpop.f32.mrf.mxu0
        %v1939 = vadd.f32 0.0, %v1938
        %v1940 = vpop.f32.mrf.mxu0
        %v1941 = vpop.f32.mrf.mxu0
        %v1942 = vadd.f32 0.0, %v1941
        %v1943 = vpop.f32.mrf.mxu0
        %1944 = vmatprep.mubr.bf16.mxu0 0
        %1945 = vmatmul.mubr.bf16.gmra.mxu0 %v1740
        %v1946 = vpop.f32.mrf.mxu0
        %v1947 = vadd.f32 0.0, %v1946
        %v1948 = vpop.f32.mrf.mxu0
        %v1949 = vpop.f32.mrf.mxu0
        %v1950 = vadd.f32 0.0, %v1949
        %v1951 = vpop.f32.mrf.mxu0
        %1952 = vmatprep.mubr.bf16.mxu0 0
        %1953 = vmatmul.mubr.bf16.gmra.mxu0 %v1741
        %v1954 = vpop.f32.mrf.mxu0
        %v1955 = vadd.f32 0.0, %v1954
        %v1956 = vpop.f32.mrf.mxu0
        %v1957 = vpop.f32.mrf.mxu0
        %v1958 = vadd.f32 0.0, %v1957
        %v1959 = vpop.f32.mrf.mxu0
        %1960 = vmatprep.mubr.bf16.mxu0 0
        %1961 = vmatmul.mubr.bf16.gmra.mxu0 %v1742
        %v1962 = vpop.f32.mrf.mxu0
        %v1963 = vadd.f32 0.0, %v1962
        %v1964 = vpop.f32.mrf.mxu0
        %v1965 = vpop.f32.mrf.mxu0
        %v1966 = vadd.f32 0.0, %v1965
        %v1967 = vpop.f32.mrf.mxu0
        %1968 = vdwg.mxu0
        %v1969 = vadd.f32 %v1663, %v1843
        %v1970 = vadd.f32 %v1664, %v1846
        %v1971 = vadd.f32 %v1665, %v1851
        %v1972 = vadd.f32 %v1666, %v1854
        %v1973 = vadd.f32 %v1667, %v1859
        %v1974 = vadd.f32 %v1668, %v1862
        %v1975 = vadd.f32 %v1669, %v1867
        %v1976 = vadd.f32 %v1670, %v1870
        %v1977 = vadd.f32 %v1671, %v1875
        %v1978 = vadd.f32 %v1672, %v1878
        %v1979 = vadd.f32 %v1673, %v1883
        %v1980 = vadd.f32 %v1674, %v1886
        %v1981 = vadd.f32 %v1675, %v1891
        %v1982 = vadd.f32 %v1676, %v1894
        %v1983 = vadd.f32 %v1677, %v1899
        %v1984 = vadd.f32 %v1678, %v1902
        %v1985 = vadd.f32 %v1679, %v1907
        %v1986 = vadd.f32 %v1680, %v1910
        %v1987 = vadd.f32 %v1681, %v1915
        %v1988 = vadd.f32 %v1682, %v1918
        %v1989 = vadd.f32 %v1683, %v1923
        %v1990 = vadd.f32 %v1684, %v1926
        %v1991 = vadd.f32 %v1685, %v1931
        %v1992 = vadd.f32 %v1686, %v1934
        %v1993 = vadd.f32 %v1687, %v1939
        %v1994 = vadd.f32 %v1688, %v1942
        %v1995 = vadd.f32 %v1689, %v1947
        %v1996 = vadd.f32 %v1690, %v1950
        %v1997 = vadd.f32 %v1691, %v1955
        %v1998 = vadd.f32 %v1692, %v1958
        %v1999 = vadd.f32 %v1693, %v1963
        %v2000 = vadd.f32 %v1694, %v1966
        %s2001 = scalar_lea.vmem %s224, 48
        %v2002 = vld [vmem:[%s2001] sm:$0xff]
        %v2003 = vld [vmem:[%s2001 + $0x8] sm:$0xff]
        %v2004 = vld [vmem:[%s2001 + $0x18] sm:$0xff]
        %v2005 = vld [vmem:[%s2001 + $0x20] sm:$0xff]
        %v2006 = vld [vmem:[%s2001 + $0x30] sm:$0xff]
        %v2007 = vld [vmem:[%s2001 + $0x38] sm:$0xff]
        %v2008 = vld [vmem:[%s2001 + $0x48] sm:$0xff]
        %v2009 = vld [vmem:[%s2001 + $0x50] sm:$0xff]
        %v2010 = vld [vmem:[%s2001 + $0x60] sm:$0xff]
        %v2011 = vld [vmem:[%s2001 + $0x68] sm:$0xff]
        %v2012 = vld [vmem:[%s2001 + $0x78] sm:$0xff]
        %v2013 = vld [vmem:[%s2001 + $0x80] sm:$0xff]
        %v2014 = vld [vmem:[%s2001 + $0x90] sm:$0xff]
        %v2015 = vld [vmem:[%s2001 + $0x98] sm:$0xff]
        %v2016 = vld [vmem:[%s2001 + $0xa8] sm:$0xff]
        %v2017 = vld [vmem:[%s2001 + $0xb0] sm:$0xff]
        %v2018 = vld [vmem:[%s2001 + $0xc0] sm:$0xff]
        %v2019 = vld [vmem:[%s2001 + $0xc8] sm:$0xff]
        %v2020 = vld [vmem:[%s2001 + $0xd8] sm:$0xff]
        %v2021 = vld [vmem:[%s2001 + $0xe0] sm:$0xff]
        %v2022 = vld [vmem:[%s2001 + $0xf0] sm:$0xff]
        %v2023 = vld [vmem:[%s2001 + $0xf8] sm:$0xff]
        %v2024 = vld [vmem:[%s2001 + $0x108] sm:$0xff]
        %v2025 = vld [vmem:[%s2001 + $0x110] sm:$0xff]
        %v2026 = vld [vmem:[%s2001 + $0x120] sm:$0xff]
        %v2027 = vld [vmem:[%s2001 + $0x128] sm:$0xff]
        %v2028 = vld [vmem:[%s2001 + $0x138] sm:$0xff]
        %v2029 = vld [vmem:[%s2001 + $0x140] sm:$0xff]
        %v2030 = vld [vmem:[%s2001 + $0x150] sm:$0xff]
        %v2031 = vld [vmem:[%s2001 + $0x158] sm:$0xff]
        %v2032 = vld [vmem:[%s2001 + $0x168] sm:$0xff]
        %v2033 = vld [vmem:[%s2001 + $0x170] sm:$0xff]
        %v2034 = vpack.c.bf16 %v2003, %v2002
        %v2035 = vpack.c.bf16 %v2005, %v2004
        %v2036 = vpack.c.bf16 %v2007, %v2006
        %v2037 = vpack.c.bf16 %v2009, %v2008
        %v2038 = vpack.c.bf16 %v2011, %v2010
        %v2039 = vpack.c.bf16 %v2013, %v2012
        %v2040 = vpack.c.bf16 %v2015, %v2014
        %v2041 = vpack.c.bf16 %v2017, %v2016
        %v2042 = vpack.c.bf16 %v2019, %v2018
        %v2043 = vpack.c.bf16 %v2021, %v2020
        %v2044 = vpack.c.bf16 %v2023, %v2022
        %v2045 = vpack.c.bf16 %v2025, %v2024
        %v2046 = vpack.c.bf16 %v2027, %v2026
        %v2047 = vpack.c.bf16 %v2029, %v2028
        %v2048 = vpack.c.bf16 %v2031, %v2030
        %v2049 = vpack.c.bf16 %v2033, %v2032
        %s2050 = scalar_lea.vmem %s1, 384
        %v2051 = vld [vmem:[%s2050] sm:$0xf]
        %v2052 = vld [vmem:[%s2050 + $0x4] sm:$0xf]
        %v2053 = vld [vmem:[%s2050 + $0x8] sm:$0xf]
        %v2054 = vld [vmem:[%s2050 + $0xc] sm:$0xf]
        %v2055 = vld [vmem:[%s2050 + $0x10] sm:$0xf]
        %v2056 = vld [vmem:[%s2050 + $0x14] sm:$0xf]
        %v2057 = vld [vmem:[%s2050 + $0x18] sm:$0xf]
        %v2058 = vld [vmem:[%s2050 + $0x1c] sm:$0xf]
        %v2059 = vld [vmem:[%s2050 + $0x20] sm:$0xf]
        %v2060 = vld [vmem:[%s2050 + $0x24] sm:$0xf]
        %v2061 = vld [vmem:[%s2050 + $0x28] sm:$0xf]
        %v2062 = vld [vmem:[%s2050 + $0x2c] sm:$0xf]
        %v2063 = vld [vmem:[%s2050 + $0x30] sm:$0xf]
        %v2064 = vld [vmem:[%s2050 + $0x34] sm:$0xf]
        %v2065 = vld [vmem:[%s2050 + $0x38] sm:$0xf]
        %v2066 = vld [vmem:[%s2050 + $0x3c] sm:$0xf]
        %v2083 = vunpack.c.l.b16 %v2051
        %v2084 = vunpack.c.l.b16 %v2052
        %v2085 = vunpack.c.l.b16 %v2053
        %v2086 = vunpack.c.l.b16 %v2054
        %v2087 = vunpack.c.l.b16 %v2055
        %v2088 = vunpack.c.l.b16 %v2056
        %v2089 = vunpack.c.l.b16 %v2057
        %v2090 = vunpack.c.l.b16 %v2058
        %v2091 = vunpack.c.l.b16 %v2059
        %v2092 = vunpack.c.l.b16 %v2060
        %v2093 = vunpack.c.l.b16 %v2061
        %v2094 = vunpack.c.l.b16 %v2062
        %v2095 = vunpack.c.l.b16 %v2063
        %v2096 = vunpack.c.l.b16 %v2064
        %v2097 = vunpack.c.l.b16 %v2065
        %v2098 = vunpack.c.l.b16 %v2066
        %v2099 = vpack.c.b16 %v2084, %v2083
        %v2100 = vpack.c.b16 %v2086, %v2085
        %v2101 = vpack.c.b16 %v2088, %v2087
        %v2102 = vpack.c.b16 %v2090, %v2089
        %v2103 = vpack.c.b16 %v2092, %v2091
        %v2104 = vpack.c.b16 %v2094, %v2093
        %v2105 = vpack.c.b16 %v2096, %v2095
        %v2106 = vpack.c.b16 %v2098, %v2097
        %2115 = vmatprep.subr.bf16.mxu0 0
        %2116 = vmatpush1.bf16.msra.mxu0 %v2106
        %2117 = vmatprep.subr.bf16.mxu0 0
        %2118 = vmatpush1.bf16.msra.mxu0 %v2105
        %2119 = vmatprep.subr.bf16.mxu0 0
        %2120 = vmatpush1.bf16.msra.mxu0 %v2104
        %2121 = vmatprep.subr.bf16.mxu0 0
        %2122 = vmatpush1.bf16.msra.mxu0 %v2103
        %2123 = vmatprep.subr.bf16.mxu0 0
        %2124 = vmatpush1.bf16.msra.mxu0 %v2102
        %2125 = vmatprep.subr.bf16.mxu0 0
        %2126 = vmatpush1.bf16.msra.mxu0 %v2101
        %2127 = vmatprep.subr.bf16.mxu0 0
        %2128 = vmatpush1.bf16.msra.mxu0 %v2100
        %2129 = vmatprep.subr.bf16.mxu0 0
        %2130 = vmatpush1.bf16.msra.mxu0 %v2099
        %2131 = vmatprep.subr.bf16.mxu0 0
        %2132 = vmatpush2.bf16.msra.mxu0 0
        %2133 = vmatprep.subr.bf16.mxu0 0
        %2134 = vmatpush2.bf16.msra.mxu0 0
        %2135 = vmatprep.subr.bf16.mxu0 0
        %2136 = vmatpush2.bf16.msra.mxu0 0
        %2137 = vmatprep.subr.bf16.mxu0 0
        %2138 = vmatpush2.bf16.msra.mxu0 0
        %2139 = vmatprep.subr.bf16.mxu0 0
        %2140 = vmatpush2.bf16.msra.mxu0 0
        %2141 = vmatprep.subr.bf16.mxu0 0
        %2142 = vmatpush2.bf16.msra.mxu0 0
        %2143 = vmatprep.subr.bf16.mxu0 0
        %2144 = vmatpush2.bf16.msra.mxu0 0
        %2145 = vmatprep.subr.bf16.mxu0 0
        %2146 = vmatpush2.bf16.msra.mxu0 0
        %2147 = vmatprep.mubr.bf16.mxu0 0
        %2148 = vmatmul.mubr.bf16.gmra.mxu0 %v2034
        %v2149 = vpop.f32.mrf.mxu0
        %v2150 = vadd.f32 0.0, %v2149
        %v2151 = vpop.f32.mrf.mxu0
        %v2152 = vpop.f32.mrf.mxu0
        %v2153 = vadd.f32 0.0, %v2152
        %v2154 = vpop.f32.mrf.mxu0
        %2155 = vmatprep.mubr.bf16.mxu0 0
        %2156 = vmatmul.mubr.bf16.gmra.mxu0 %v2035
        %v2157 = vpop.f32.mrf.mxu0
        %v2158 = vadd.f32 0.0, %v2157
        %v2159 = vpop.f32.mrf.mxu0
        %v2160 = vpop.f32.mrf.mxu0
        %v2161 = vadd.f32 0.0, %v2160
        %v2162 = vpop.f32.mrf.mxu0
        %2163 = vmatprep.mubr.bf16.mxu0 0
        %2164 = vmatmul.mubr.bf16.gmra.mxu0 %v2036
        %v2165 = vpop.f32.mrf.mxu0
        %v2166 = vadd.f32 0.0, %v2165
        %v2167 = vpop.f32.mrf.mxu0
        %v2168 = vpop.f32.mrf.mxu0
        %v2169 = vadd.f32 0.0, %v2168
        %v2170 = vpop.f32.mrf.mxu0
        %2171 = vmatprep.mubr.bf16.mxu0 0
        %2172 = vmatmul.mubr.bf16.gmra.mxu0 %v2037
        %v2173 = vpop.f32.mrf.mxu0
        %v2174 = vadd.f32 0.0, %v2173
        %v2175 = vpop.f32.mrf.mxu0
        %v2176 = vpop.f32.mrf.mxu0
        %v2177 = vadd.f32 0.0, %v2176
        %v2178 = vpop.f32.mrf.mxu0
        %2179 = vmatprep.mubr.bf16.mxu0 0
        %2180 = vmatmul.mubr.bf16.gmra.mxu0 %v2038
        %v2181 = vpop.f32.mrf.mxu0
        %v2182 = vadd.f32 0.0, %v2181
        %v2183 = vpop.f32.mrf.mxu0
        %v2184 = vpop.f32.mrf.mxu0
        %v2185 = vadd.f32 0.0, %v2184
        %v2186 = vpop.f32.mrf.mxu0
        %2187 = vmatprep.mubr.bf16.mxu0 0
        %2188 = vmatmul.mubr.bf16.gmra.mxu0 %v2039
        %v2189 = vpop.f32.mrf.mxu0
        %v2190 = vadd.f32 0.0, %v2189
        %v2191 = vpop.f32.mrf.mxu0
        %v2192 = vpop.f32.mrf.mxu0
        %v2193 = vadd.f32 0.0, %v2192
        %v2194 = vpop.f32.mrf.mxu0
        %2195 = vmatprep.mubr.bf16.mxu0 0
        %2196 = vmatmul.mubr.bf16.gmra.mxu0 %v2040
        %v2197 = vpop.f32.mrf.mxu0
        %v2198 = vadd.f32 0.0, %v2197
        %v2199 = vpop.f32.mrf.mxu0
        %v2200 = vpop.f32.mrf.mxu0
        %v2201 = vadd.f32 0.0, %v2200
        %v2202 = vpop.f32.mrf.mxu0
        %2203 = vmatprep.mubr.bf16.mxu0 0
        %2204 = vmatmul.mubr.bf16.gmra.mxu0 %v2041
        %v2205 = vpop.f32.mrf.mxu0
        %v2206 = vadd.f32 0.0, %v2205
        %v2207 = vpop.f32.mrf.mxu0
        %v2208 = vpop.f32.mrf.mxu0
        %v2209 = vadd.f32 0.0, %v2208
        %v2210 = vpop.f32.mrf.mxu0
        %2211 = vmatprep.mubr.bf16.mxu0 0
        %2212 = vmatmul.mubr.bf16.gmra.mxu0 %v2042
        %v2213 = vpop.f32.mrf.mxu0
        %v2214 = vadd.f32 0.0, %v2213
        %v2215 = vpop.f32.mrf.mxu0
        %v2216 = vpop.f32.mrf.mxu0
        %v2217 = vadd.f32 0.0, %v2216
        %v2218 = vpop.f32.mrf.mxu0
        %2219 = vmatprep.mubr.bf16.mxu0 0
        %2220 = vmatmul.mubr.bf16.gmra.mxu0 %v2043
        %v2221 = vpop.f32.mrf.mxu0
        %v2222 = vadd.f32 0.0, %v2221
        %v2223 = vpop.f32.mrf.mxu0
        %v2224 = vpop.f32.mrf.mxu0
        %v2225 = vadd.f32 0.0, %v2224
        %v2226 = vpop.f32.mrf.mxu0
        %2227 = vmatprep.mubr.bf16.mxu0 0
        %2228 = vmatmul.mubr.bf16.gmra.mxu0 %v2044
        %v2229 = vpop.f32.mrf.mxu0
        %v2230 = vadd.f32 0.0, %v2229
        %v2231 = vpop.f32.mrf.mxu0
        %v2232 = vpop.f32.mrf.mxu0
        %v2233 = vadd.f32 0.0, %v2232
        %v2234 = vpop.f32.mrf.mxu0
        %2235 = vmatprep.mubr.bf16.mxu0 0
        %2236 = vmatmul.mubr.bf16.gmra.mxu0 %v2045
        %v2237 = vpop.f32.mrf.mxu0
        %v2238 = vadd.f32 0.0, %v2237
        %v2239 = vpop.f32.mrf.mxu0
        %v2240 = vpop.f32.mrf.mxu0
        %v2241 = vadd.f32 0.0, %v2240
        %v2242 = vpop.f32.mrf.mxu0
        %2243 = vmatprep.mubr.bf16.mxu0 0
        %2244 = vmatmul.mubr.bf16.gmra.mxu0 %v2046
        %v2245 = vpop.f32.mrf.mxu0
        %v2246 = vadd.f32 0.0, %v2245
        %v2247 = vpop.f32.mrf.mxu0
        %v2248 = vpop.f32.mrf.mxu0
        %v2249 = vadd.f32 0.0, %v2248
        %v2250 = vpop.f32.mrf.mxu0
        %2251 = vmatprep.mubr.bf16.mxu0 0
        %2252 = vmatmul.mubr.bf16.gmra.mxu0 %v2047
        %v2253 = vpop.f32.mrf.mxu0
        %v2254 = vadd.f32 0.0, %v2253
        %v2255 = vpop.f32.mrf.mxu0
        %v2256 = vpop.f32.mrf.mxu0
        %v2257 = vadd.f32 0.0, %v2256
        %v2258 = vpop.f32.mrf.mxu0
        %2259 = vmatprep.mubr.bf16.mxu0 0
        %2260 = vmatmul.mubr.bf16.gmra.mxu0 %v2048
        %v2261 = vpop.f32.mrf.mxu0
        %v2262 = vadd.f32 0.0, %v2261
        %v2263 = vpop.f32.mrf.mxu0
        %v2264 = vpop.f32.mrf.mxu0
        %v2265 = vadd.f32 0.0, %v2264
        %v2266 = vpop.f32.mrf.mxu0
        %2267 = vmatprep.mubr.bf16.mxu0 0
        %2268 = vmatmul.mubr.bf16.gmra.mxu0 %v2049
        %v2269 = vpop.f32.mrf.mxu0
        %v2270 = vadd.f32 0.0, %v2269
        %v2271 = vpop.f32.mrf.mxu0
        %v2272 = vpop.f32.mrf.mxu0
        %v2273 = vadd.f32 0.0, %v2272
        %v2274 = vpop.f32.mrf.mxu0
        %2275 = vdwg.mxu0
        %v2276 = vadd.f32 %v1969, %v2150
        %v2277 = vadd.f32 %v1970, %v2153
        %v2278 = vadd.f32 %v1971, %v2158
        %v2279 = vadd.f32 %v1972, %v2161
        %v2280 = vadd.f32 %v1973, %v2166
        %v2281 = vadd.f32 %v1974, %v2169
        %v2282 = vadd.f32 %v1975, %v2174
        %v2283 = vadd.f32 %v1976, %v2177
        %v2284 = vadd.f32 %v1977, %v2182
        %v2285 = vadd.f32 %v1978, %v2185
        %v2286 = vadd.f32 %v1979, %v2190
        %v2287 = vadd.f32 %v1980, %v2193
        %v2288 = vadd.f32 %v1981, %v2198
        %v2289 = vadd.f32 %v1982, %v2201
        %v2290 = vadd.f32 %v1983, %v2206
        %v2291 = vadd.f32 %v1984, %v2209
        %v2292 = vadd.f32 %v1985, %v2214
        %v2293 = vadd.f32 %v1986, %v2217
        %v2294 = vadd.f32 %v1987, %v2222
        %v2295 = vadd.f32 %v1988, %v2225
        %v2296 = vadd.f32 %v1989, %v2230
        %v2297 = vadd.f32 %v1990, %v2233
        %v2298 = vadd.f32 %v1991, %v2238
        %v2299 = vadd.f32 %v1992, %v2241
        %v2300 = vadd.f32 %v1993, %v2246
        %v2301 = vadd.f32 %v1994, %v2249
        %v2302 = vadd.f32 %v1995, %v2254
        %v2303 = vadd.f32 %v1996, %v2257
        %v2304 = vadd.f32 %v1997, %v2262
        %v2305 = vadd.f32 %v1998, %v2265
        %v2306 = vadd.f32 %v1999, %v2270
        %v2307 = vadd.f32 %v2000, %v2273
        %v2308 = vld [vmem:[%s2001 + $0x1] sm:$0xff]
        %v2309 = vld [vmem:[%s2001 + $0x9] sm:$0xff]
        %v2310 = vld [vmem:[%s2001 + $0x19] sm:$0xff]
        %v2311 = vld [vmem:[%s2001 + $0x21] sm:$0xff]
        %v2312 = vld [vmem:[%s2001 + $0x31] sm:$0xff]
        %v2313 = vld [vmem:[%s2001 + $0x39] sm:$0xff]
        %v2314 = vld [vmem:[%s2001 + $0x49] sm:$0xff]
        %v2315 = vld [vmem:[%s2001 + $0x51] sm:$0xff]
        %v2316 = vld [vmem:[%s2001 + $0x61] sm:$0xff]
        %v2317 = vld [vmem:[%s2001 + $0x69] sm:$0xff]
        %v2318 = vld [vmem:[%s2001 + $0x79] sm:$0xff]
        %v2319 = vld [vmem:[%s2001 + $0x81] sm:$0xff]
        %v2320 = vld [vmem:[%s2001 + $0x91] sm:$0xff]
        %v2321 = vld [vmem:[%s2001 + $0x99] sm:$0xff]
        %v2322 = vld [vmem:[%s2001 + $0xa9] sm:$0xff]
        %v2323 = vld [vmem:[%s2001 + $0xb1] sm:$0xff]
        %v2324 = vld [vmem:[%s2001 + $0xc1] sm:$0xff]
        %v2325 = vld [vmem:[%s2001 + $0xc9] sm:$0xff]
        %v2326 = vld [vmem:[%s2001 + $0xd9] sm:$0xff]
        %v2327 = vld [vmem:[%s2001 + $0xe1] sm:$0xff]
        %v2328 = vld [vmem:[%s2001 + $0xf1] sm:$0xff]
        %v2329 = vld [vmem:[%s2001 + $0xf9] sm:$0xff]
        %v2330 = vld [vmem:[%s2001 + $0x109] sm:$0xff]
        %v2331 = vld [vmem:[%s2001 + $0x111] sm:$0xff]
        %v2332 = vld [vmem:[%s2001 + $0x121] sm:$0xff]
        %v2333 = vld [vmem:[%s2001 + $0x129] sm:$0xff]
        %v2334 = vld [vmem:[%s2001 + $0x139] sm:$0xff]
        %v2335 = vld [vmem:[%s2001 + $0x141] sm:$0xff]
        %v2336 = vld [vmem:[%s2001 + $0x151] sm:$0xff]
        %v2337 = vld [vmem:[%s2001 + $0x159] sm:$0xff]
        %v2338 = vld [vmem:[%s2001 + $0x169] sm:$0xff]
        %v2339 = vld [vmem:[%s2001 + $0x171] sm:$0xff]
        %v2340 = vpack.c.bf16 %v2309, %v2308
        %v2341 = vpack.c.bf16 %v2311, %v2310
        %v2342 = vpack.c.bf16 %v2313, %v2312
        %v2343 = vpack.c.bf16 %v2315, %v2314
        %v2344 = vpack.c.bf16 %v2317, %v2316
        %v2345 = vpack.c.bf16 %v2319, %v2318
        %v2346 = vpack.c.bf16 %v2321, %v2320
        %v2347 = vpack.c.bf16 %v2323, %v2322
        %v2348 = vpack.c.bf16 %v2325, %v2324
        %v2349 = vpack.c.bf16 %v2327, %v2326
        %v2350 = vpack.c.bf16 %v2329, %v2328
        %v2351 = vpack.c.bf16 %v2331, %v2330
        %v2352 = vpack.c.bf16 %v2333, %v2332
        %v2353 = vpack.c.bf16 %v2335, %v2334
        %v2354 = vpack.c.bf16 %v2337, %v2336
        %v2355 = vpack.c.bf16 %v2339, %v2338
        %s2356 = scalar_lea.vmem %s1, 448
        %v2357 = vld [vmem:[%s2356] sm:$0xf]
        %v2358 = vld [vmem:[%s2356 + $0x4] sm:$0xf]
        %v2359 = vld [vmem:[%s2356 + $0x8] sm:$0xf]
        %v2360 = vld [vmem:[%s2356 + $0xc] sm:$0xf]
        %v2361 = vld [vmem:[%s2356 + $0x10] sm:$0xf]
        %v2362 = vld [vmem:[%s2356 + $0x14] sm:$0xf]
        %v2363 = vld [vmem:[%s2356 + $0x18] sm:$0xf]
        %v2364 = vld [vmem:[%s2356 + $0x1c] sm:$0xf]
        %v2365 = vld [vmem:[%s2356 + $0x20] sm:$0xf]
        %v2366 = vld [vmem:[%s2356 + $0x24] sm:$0xf]
        %v2367 = vld [vmem:[%s2356 + $0x28] sm:$0xf]
        %v2368 = vld [vmem:[%s2356 + $0x2c] sm:$0xf]
        %v2369 = vld [vmem:[%s2356 + $0x30] sm:$0xf]
        %v2370 = vld [vmem:[%s2356 + $0x34] sm:$0xf]
        %v2371 = vld [vmem:[%s2356 + $0x38] sm:$0xf]
        %v2372 = vld [vmem:[%s2356 + $0x3c] sm:$0xf]
        %v2389 = vunpack.c.l.b16 %v2357
        %v2390 = vunpack.c.l.b16 %v2358
        %v2391 = vunpack.c.l.b16 %v2359
        %v2392 = vunpack.c.l.b16 %v2360
        %v2393 = vunpack.c.l.b16 %v2361
        %v2394 = vunpack.c.l.b16 %v2362
        %v2395 = vunpack.c.l.b16 %v2363
        %v2396 = vunpack.c.l.b16 %v2364
        %v2397 = vunpack.c.l.b16 %v2365
        %v2398 = vunpack.c.l.b16 %v2366
        %v2399 = vunpack.c.l.b16 %v2367
        %v2400 = vunpack.c.l.b16 %v2368
        %v2401 = vunpack.c.l.b16 %v2369
        %v2402 = vunpack.c.l.b16 %v2370
        %v2403 = vunpack.c.l.b16 %v2371
        %v2404 = vunpack.c.l.b16 %v2372
        %v2405 = vpack.c.b16 %v2390, %v2389
        %v2406 = vpack.c.b16 %v2392, %v2391
        %v2407 = vpack.c.b16 %v2394, %v2393
        %v2408 = vpack.c.b16 %v2396, %v2395
        %v2409 = vpack.c.b16 %v2398, %v2397
        %v2410 = vpack.c.b16 %v2400, %v2399
        %v2411 = vpack.c.b16 %v2402, %v2401
        %v2412 = vpack.c.b16 %v2404, %v2403
        %2421 = vmatprep.subr.bf16.mxu0 0
        %2422 = vmatpush1.bf16.msra.mxu0 %v2412
        %2423 = vmatprep.subr.bf16.mxu0 0
        %2424 = vmatpush1.bf16.msra.mxu0 %v2411
        %2425 = vmatprep.subr.bf16.mxu0 0
        %2426 = vmatpush1.bf16.msra.mxu0 %v2410
        %2427 = vmatprep.subr.bf16.mxu0 0
        %2428 = vmatpush1.bf16.msra.mxu0 %v2409
        %2429 = vmatprep.subr.bf16.mxu0 0
        %2430 = vmatpush1.bf16.msra.mxu0 %v2408
        %2431 = vmatprep.subr.bf16.mxu0 0
        %2432 = vmatpush1.bf16.msra.mxu0 %v2407
        %2433 = vmatprep.subr.bf16.mxu0 0
        %2434 = vmatpush1.bf16.msra.mxu0 %v2406
        %2435 = vmatprep.subr.bf16.mxu0 0
        %2436 = vmatpush1.bf16.msra.mxu0 %v2405
        %2437 = vmatprep.subr.bf16.mxu0 0
        %2438 = vmatpush2.bf16.msra.mxu0 0
        %2439 = vmatprep.subr.bf16.mxu0 0
        %2440 = vmatpush2.bf16.msra.mxu0 0
        %2441 = vmatprep.subr.bf16.mxu0 0
        %2442 = vmatpush2.bf16.msra.mxu0 0
        %2443 = vmatprep.subr.bf16.mxu0 0
        %2444 = vmatpush2.bf16.msra.mxu0 0
        %2445 = vmatprep.subr.bf16.mxu0 0
        %2446 = vmatpush2.bf16.msra.mxu0 0
        %2447 = vmatprep.subr.bf16.mxu0 0
        %2448 = vmatpush2.bf16.msra.mxu0 0
        %2449 = vmatprep.subr.bf16.mxu0 0
        %2450 = vmatpush2.bf16.msra.mxu0 0
        %2451 = vmatprep.subr.bf16.mxu0 0
        %2452 = vmatpush2.bf16.msra.mxu0 0
        %2453 = vmatprep.mubr.bf16.mxu0 0
        %2454 = vmatmul.mubr.bf16.gmra.mxu0 %v2340
        %v2455 = vpop.f32.mrf.mxu0
        %v2456 = vadd.f32 0.0, %v2455
        %v2457 = vpop.f32.mrf.mxu0
        %v2458 = vpop.f32.mrf.mxu0
        %v2459 = vadd.f32 0.0, %v2458
        %v2460 = vpop.f32.mrf.mxu0
        %2461 = vmatprep.mubr.bf16.mxu0 0
        %2462 = vmatmul.mubr.bf16.gmra.mxu0 %v2341
        %v2463 = vpop.f32.mrf.mxu0
        %v2464 = vadd.f32 0.0, %v2463
        %v2465 = vpop.f32.mrf.mxu0
        %v2466 = vpop.f32.mrf.mxu0
        %v2467 = vadd.f32 0.0, %v2466
        %v2468 = vpop.f32.mrf.mxu0
        %2469 = vmatprep.mubr.bf16.mxu0 0
        %2470 = vmatmul.mubr.bf16.gmra.mxu0 %v2342
        %v2471 = vpop.f32.mrf.mxu0
        %v2472 = vadd.f32 0.0, %v2471
        %v2473 = vpop.f32.mrf.mxu0
        %v2474 = vpop.f32.mrf.mxu0
        %v2475 = vadd.f32 0.0, %v2474
        %v2476 = vpop.f32.mrf.mxu0
        %2477 = vmatprep.mubr.bf16.mxu0 0
        %2478 = vmatmul.mubr.bf16.gmra.mxu0 %v2343
        %v2479 = vpop.f32.mrf.mxu0
        %v2480 = vadd.f32 0.0, %v2479
        %v2481 = vpop.f32.mrf.mxu0
        %v2482 = vpop.f32.mrf.mxu0
        %v2483 = vadd.f32 0.0, %v2482
        %v2484 = vpop.f32.mrf.mxu0
        %2485 = vmatprep.mubr.bf16.mxu0 0
        %2486 = vmatmul.mubr.bf16.gmra.mxu0 %v2344
        %v2487 = vpop.f32.mrf.mxu0
        %v2488 = vadd.f32 0.0, %v2487
        %v2489 = vpop.f32.mrf.mxu0
        %v2490 = vpop.f32.mrf.mxu0
        %v2491 = vadd.f32 0.0, %v2490
        %v2492 = vpop.f32.mrf.mxu0
        %2493 = vmatprep.mubr.bf16.mxu0 0
        %2494 = vmatmul.mubr.bf16.gmra.mxu0 %v2345
        %v2495 = vpop.f32.mrf.mxu0
        %v2496 = vadd.f32 0.0, %v2495
        %v2497 = vpop.f32.mrf.mxu0
        %v2498 = vpop.f32.mrf.mxu0
        %v2499 = vadd.f32 0.0, %v2498
        %v2500 = vpop.f32.mrf.mxu0
        %2501 = vmatprep.mubr.bf16.mxu0 0
        %2502 = vmatmul.mubr.bf16.gmra.mxu0 %v2346
        %v2503 = vpop.f32.mrf.mxu0
        %v2504 = vadd.f32 0.0, %v2503
        %v2505 = vpop.f32.mrf.mxu0
        %v2506 = vpop.f32.mrf.mxu0
        %v2507 = vadd.f32 0.0, %v2506
        %v2508 = vpop.f32.mrf.mxu0
        %2509 = vmatprep.mubr.bf16.mxu0 0
        %2510 = vmatmul.mubr.bf16.gmra.mxu0 %v2347
        %v2511 = vpop.f32.mrf.mxu0
        %v2512 = vadd.f32 0.0, %v2511
        %v2513 = vpop.f32.mrf.mxu0
        %v2514 = vpop.f32.mrf.mxu0
        %v2515 = vadd.f32 0.0, %v2514
        %v2516 = vpop.f32.mrf.mxu0
        %2517 = vmatprep.mubr.bf16.mxu0 0
        %2518 = vmatmul.mubr.bf16.gmra.mxu0 %v2348
        %v2519 = vpop.f32.mrf.mxu0
        %v2520 = vadd.f32 0.0, %v2519
        %v2521 = vpop.f32.mrf.mxu0
        %v2522 = vpop.f32.mrf.mxu0
        %v2523 = vadd.f32 0.0, %v2522
        %v2524 = vpop.f32.mrf.mxu0
        %2525 = vmatprep.mubr.bf16.mxu0 0
        %2526 = vmatmul.mubr.bf16.gmra.mxu0 %v2349
        %v2527 = vpop.f32.mrf.mxu0
        %v2528 = vadd.f32 0.0, %v2527
        %v2529 = vpop.f32.mrf.mxu0
        %v2530 = vpop.f32.mrf.mxu0
        %v2531 = vadd.f32 0.0, %v2530
        %v2532 = vpop.f32.mrf.mxu0
        %2533 = vmatprep.mubr.bf16.mxu0 0
        %2534 = vmatmul.mubr.bf16.gmra.mxu0 %v2350
        %v2535 = vpop.f32.mrf.mxu0
        %v2536 = vadd.f32 0.0, %v2535
        %v2537 = vpop.f32.mrf.mxu0
        %v2538 = vpop.f32.mrf.mxu0
        %v2539 = vadd.f32 0.0, %v2538
        %v2540 = vpop.f32.mrf.mxu0
        %2541 = vmatprep.mubr.bf16.mxu0 0
        %2542 = vmatmul.mubr.bf16.gmra.mxu0 %v2351
        %v2543 = vpop.f32.mrf.mxu0
        %v2544 = vadd.f32 0.0, %v2543
        %v2545 = vpop.f32.mrf.mxu0
        %v2546 = vpop.f32.mrf.mxu0
        %v2547 = vadd.f32 0.0, %v2546
        %v2548 = vpop.f32.mrf.mxu0
        %2549 = vmatprep.mubr.bf16.mxu0 0
        %2550 = vmatmul.mubr.bf16.gmra.mxu0 %v2352
        %v2551 = vpop.f32.mrf.mxu0
        %v2552 = vadd.f32 0.0, %v2551
        %v2553 = vpop.f32.mrf.mxu0
        %v2554 = vpop.f32.mrf.mxu0
        %v2555 = vadd.f32 0.0, %v2554
        %v2556 = vpop.f32.mrf.mxu0
        %2557 = vmatprep.mubr.bf16.mxu0 0
        %2558 = vmatmul.mubr.bf16.gmra.mxu0 %v2353
        %v2559 = vpop.f32.mrf.mxu0
        %v2560 = vadd.f32 0.0, %v2559
        %v2561 = vpop.f32.mrf.mxu0
        %v2562 = vpop.f32.mrf.mxu0
        %v2563 = vadd.f32 0.0, %v2562
        %v2564 = vpop.f32.mrf.mxu0
        %2565 = vmatprep.mubr.bf16.mxu0 0
        %2566 = vmatmul.mubr.bf16.gmra.mxu0 %v2354
        %v2567 = vpop.f32.mrf.mxu0
        %v2568 = vadd.f32 0.0, %v2567
        %v2569 = vpop.f32.mrf.mxu0
        %v2570 = vpop.f32.mrf.mxu0
        %v2571 = vadd.f32 0.0, %v2570
        %v2572 = vpop.f32.mrf.mxu0
        %2573 = vmatprep.mubr.bf16.mxu0 0
        %2574 = vmatmul.mubr.bf16.gmra.mxu0 %v2355
        %v2575 = vpop.f32.mrf.mxu0
        %v2576 = vadd.f32 0.0, %v2575
        %v2577 = vpop.f32.mrf.mxu0
        %v2578 = vpop.f32.mrf.mxu0
        %v2579 = vadd.f32 0.0, %v2578
        %v2580 = vpop.f32.mrf.mxu0
        %2581 = vdwg.mxu0
        %v2582 = vadd.f32 %v2276, %v2456
        %v2583 = vadd.f32 %v2277, %v2459
        %v2584 = vadd.f32 %v2278, %v2464
        %v2585 = vadd.f32 %v2279, %v2467
        %v2586 = vadd.f32 %v2280, %v2472
        %v2587 = vadd.f32 %v2281, %v2475
        %v2588 = vadd.f32 %v2282, %v2480
        %v2589 = vadd.f32 %v2283, %v2483
        %v2590 = vadd.f32 %v2284, %v2488
        %v2591 = vadd.f32 %v2285, %v2491
        %v2592 = vadd.f32 %v2286, %v2496
        %v2593 = vadd.f32 %v2287, %v2499
        %v2594 = vadd.f32 %v2288, %v2504
        %v2595 = vadd.f32 %v2289, %v2507
        %v2596 = vadd.f32 %v2290, %v2512
        %v2597 = vadd.f32 %v2291, %v2515
        %v2598 = vadd.f32 %v2292, %v2520
        %v2599 = vadd.f32 %v2293, %v2523
        %v2600 = vadd.f32 %v2294, %v2528
        %v2601 = vadd.f32 %v2295, %v2531
        %v2602 = vadd.f32 %v2296, %v2536
        %v2603 = vadd.f32 %v2297, %v2539
        %v2604 = vadd.f32 %v2298, %v2544
        %v2605 = vadd.f32 %v2299, %v2547
        %v2606 = vadd.f32 %v2300, %v2552
        %v2607 = vadd.f32 %v2301, %v2555
        %v2608 = vadd.f32 %v2302, %v2560
        %v2609 = vadd.f32 %v2303, %v2563
        %v2610 = vadd.f32 %v2304, %v2568
        %v2611 = vadd.f32 %v2305, %v2571
        %v2612 = vadd.f32 %v2306, %v2576
        %v2613 = vadd.f32 %v2307, %v2579
        %v2614 = vld [vmem:[%s2001 + $0x2] sm:$0xff]
        %v2615 = vld [vmem:[%s2001 + $0xa] sm:$0xff]
        %v2616 = vld [vmem:[%s2001 + $0x1a] sm:$0xff]
        %v2617 = vld [vmem:[%s2001 + $0x22] sm:$0xff]
        %v2618 = vld [vmem:[%s2001 + $0x32] sm:$0xff]
        %v2619 = vld [vmem:[%s2001 + $0x3a] sm:$0xff]
        %v2620 = vld [vmem:[%s2001 + $0x4a] sm:$0xff]
        %v2621 = vld [vmem:[%s2001 + $0x52] sm:$0xff]
        %v2622 = vld [vmem:[%s2001 + $0x62] sm:$0xff]
        %v2623 = vld [vmem:[%s2001 + $0x6a] sm:$0xff]
        %v2624 = vld [vmem:[%s2001 + $0x7a] sm:$0xff]
        %v2625 = vld [vmem:[%s2001 + $0x82] sm:$0xff]
        %v2626 = vld [vmem:[%s2001 + $0x92] sm:$0xff]
        %v2627 = vld [vmem:[%s2001 + $0x9a] sm:$0xff]
        %v2628 = vld [vmem:[%s2001 + $0xaa] sm:$0xff]
        %v2629 = vld [vmem:[%s2001 + $0xb2] sm:$0xff]
        %v2630 = vld [vmem:[%s2001 + $0xc2] sm:$0xff]
        %v2631 = vld [vmem:[%s2001 + $0xca] sm:$0xff]
        %v2632 = vld [vmem:[%s2001 + $0xda] sm:$0xff]
        %v2633 = vld [vmem:[%s2001 + $0xe2] sm:$0xff]
        %v2634 = vld [vmem:[%s2001 + $0xf2] sm:$0xff]
        %v2635 = vld [vmem:[%s2001 + $0xfa] sm:$0xff]
        %v2636 = vld [vmem:[%s2001 + $0x10a] sm:$0xff]
        %v2637 = vld [vmem:[%s2001 + $0x112] sm:$0xff]
        %v2638 = vld [vmem:[%s2001 + $0x122] sm:$0xff]
        %v2639 = vld [vmem:[%s2001 + $0x12a] sm:$0xff]
        %v2640 = vld [vmem:[%s2001 + $0x13a] sm:$0xff]
        %v2641 = vld [vmem:[%s2001 + $0x142] sm:$0xff]
        %v2642 = vld [vmem:[%s2001 + $0x152] sm:$0xff]
        %v2643 = vld [vmem:[%s2001 + $0x15a] sm:$0xff]
        %v2644 = vld [vmem:[%s2001 + $0x16a] sm:$0xff]
        %v2645 = vld [vmem:[%s2001 + $0x172] sm:$0xff]
        %v2646 = vpack.c.bf16 %v2615, %v2614
        %v2647 = vpack.c.bf16 %v2617, %v2616
        %v2648 = vpack.c.bf16 %v2619, %v2618
        %v2649 = vpack.c.bf16 %v2621, %v2620
        %v2650 = vpack.c.bf16 %v2623, %v2622
        %v2651 = vpack.c.bf16 %v2625, %v2624
        %v2652 = vpack.c.bf16 %v2627, %v2626
        %v2653 = vpack.c.bf16 %v2629, %v2628
        %v2654 = vpack.c.bf16 %v2631, %v2630
        %v2655 = vpack.c.bf16 %v2633, %v2632
        %v2656 = vpack.c.bf16 %v2635, %v2634
        %v2657 = vpack.c.bf16 %v2637, %v2636
        %v2658 = vpack.c.bf16 %v2639, %v2638
        %v2659 = vpack.c.bf16 %v2641, %v2640
        %v2660 = vpack.c.bf16 %v2643, %v2642
        %v2661 = vpack.c.bf16 %v2645, %v2644
        %s2662 = scalar_lea.vmem %s1, 512
        %v2663 = vld [vmem:[%s2662] sm:$0xf]
        %v2664 = vld [vmem:[%s2662 + $0x4] sm:$0xf]
        %v2665 = vld [vmem:[%s2662 + $0x8] sm:$0xf]
        %v2666 = vld [vmem:[%s2662 + $0xc] sm:$0xf]
        %v2667 = vld [vmem:[%s2662 + $0x10] sm:$0xf]
        %v2668 = vld [vmem:[%s2662 + $0x14] sm:$0xf]
        %v2669 = vld [vmem:[%s2662 + $0x18] sm:$0xf]
        %v2670 = vld [vmem:[%s2662 + $0x1c] sm:$0xf]
        %v2671 = vld [vmem:[%s2662 + $0x20] sm:$0xf]
        %v2672 = vld [vmem:[%s2662 + $0x24] sm:$0xf]
        %v2673 = vld [vmem:[%s2662 + $0x28] sm:$0xf]
        %v2674 = vld [vmem:[%s2662 + $0x2c] sm:$0xf]
        %v2675 = vld [vmem:[%s2662 + $0x30] sm:$0xf]
        %v2676 = vld [vmem:[%s2662 + $0x34] sm:$0xf]
        %v2677 = vld [vmem:[%s2662 + $0x38] sm:$0xf]
        %v2678 = vld [vmem:[%s2662 + $0x3c] sm:$0xf]
        %v2695 = vunpack.c.l.b16 %v2663
        %v2696 = vunpack.c.l.b16 %v2664
        %v2697 = vunpack.c.l.b16 %v2665
        %v2698 = vunpack.c.l.b16 %v2666
        %v2699 = vunpack.c.l.b16 %v2667
        %v2700 = vunpack.c.l.b16 %v2668
        %v2701 = vunpack.c.l.b16 %v2669
        %v2702 = vunpack.c.l.b16 %v2670
        %v2703 = vunpack.c.l.b16 %v2671
        %v2704 = vunpack.c.l.b16 %v2672
        %v2705 = vunpack.c.l.b16 %v2673
        %v2706 = vunpack.c.l.b16 %v2674
        %v2707 = vunpack.c.l.b16 %v2675
        %v2708 = vunpack.c.l.b16 %v2676
        %v2709 = vunpack.c.l.b16 %v2677
        %v2710 = vunpack.c.l.b16 %v2678
        %v2711 = vpack.c.b16 %v2696, %v2695
        %v2712 = vpack.c.b16 %v2698, %v2697
        %v2713 = vpack.c.b16 %v2700, %v2699
        %v2714 = vpack.c.b16 %v2702, %v2701
        %v2715 = vpack.c.b16 %v2704, %v2703
        %v2716 = vpack.c.b16 %v2706, %v2705
        %v2717 = vpack.c.b16 %v2708, %v2707
        %v2718 = vpack.c.b16 %v2710, %v2709
        %2727 = vmatprep.subr.bf16.mxu0 0
        %2728 = vmatpush1.bf16.msra.mxu0 %v2718
        %2729 = vmatprep.subr.bf16.mxu0 0
        %2730 = vmatpush1.bf16.msra.mxu0 %v2717
        %2731 = vmatprep.subr.bf16.mxu0 0
        %2732 = vmatpush1.bf16.msra.mxu0 %v2716
        %2733 = vmatprep.subr.bf16.mxu0 0
        %2734 = vmatpush1.bf16.msra.mxu0 %v2715
        %2735 = vmatprep.subr.bf16.mxu0 0
        %2736 = vmatpush1.bf16.msra.mxu0 %v2714
        %2737 = vmatprep.subr.bf16.mxu0 0
        %2738 = vmatpush1.bf16.msra.mxu0 %v2713
        %2739 = vmatprep.subr.bf16.mxu0 0
        %2740 = vmatpush1.bf16.msra.mxu0 %v2712
        %2741 = vmatprep.subr.bf16.mxu0 0
        %2742 = vmatpush1.bf16.msra.mxu0 %v2711
        %2743 = vmatprep.subr.bf16.mxu0 0
        %2744 = vmatpush2.bf16.msra.mxu0 0
        %2745 = vmatprep.subr.bf16.mxu0 0
        %2746 = vmatpush2.bf16.msra.mxu0 0
        %2747 = vmatprep.subr.bf16.mxu0 0
        %2748 = vmatpush2.bf16.msra.mxu0 0
        %2749 = vmatprep.subr.bf16.mxu0 0
        %2750 = vmatpush2.bf16.msra.mxu0 0
        %2751 = vmatprep.subr.bf16.mxu0 0
        %2752 = vmatpush2.bf16.msra.mxu0 0
        %2753 = vmatprep.subr.bf16.mxu0 0
        %2754 = vmatpush2.bf16.msra.mxu0 0
        %2755 = vmatprep.subr.bf16.mxu0 0
        %2756 = vmatpush2.bf16.msra.mxu0 0
        %2757 = vmatprep.subr.bf16.mxu0 0
        %2758 = vmatpush2.bf16.msra.mxu0 0
        %2759 = vmatprep.mubr.bf16.mxu0 0
        %2760 = vmatmul.mubr.bf16.gmra.mxu0 %v2646
        %v2761 = vpop.f32.mrf.mxu0
        %v2762 = vadd.f32 0.0, %v2761
        %v2763 = vpop.f32.mrf.mxu0
        %v2764 = vpop.f32.mrf.mxu0
        %v2765 = vadd.f32 0.0, %v2764
        %v2766 = vpop.f32.mrf.mxu0
        %2767 = vmatprep.mubr.bf16.mxu0 0
        %2768 = vmatmul.mubr.bf16.gmra.mxu0 %v2647
        %v2769 = vpop.f32.mrf.mxu0
        %v2770 = vadd.f32 0.0, %v2769
        %v2771 = vpop.f32.mrf.mxu0
        %v2772 = vpop.f32.mrf.mxu0
        %v2773 = vadd.f32 0.0, %v2772
        %v2774 = vpop.f32.mrf.mxu0
        %2775 = vmatprep.mubr.bf16.mxu0 0
        %2776 = vmatmul.mubr.bf16.gmra.mxu0 %v2648
        %v2777 = vpop.f32.mrf.mxu0
        %v2778 = vadd.f32 0.0, %v2777
        %v2779 = vpop.f32.mrf.mxu0
        %v2780 = vpop.f32.mrf.mxu0
        %v2781 = vadd.f32 0.0, %v2780
        %v2782 = vpop.f32.mrf.mxu0
        %2783 = vmatprep.mubr.bf16.mxu0 0
        %2784 = vmatmul.mubr.bf16.gmra.mxu0 %v2649
        %v2785 = vpop.f32.mrf.mxu0
        %v2786 = vadd.f32 0.0, %v2785
        %v2787 = vpop.f32.mrf.mxu0
        %v2788 = vpop.f32.mrf.mxu0
        %v2789 = vadd.f32 0.0, %v2788
        %v2790 = vpop.f32.mrf.mxu0
        %2791 = vmatprep.mubr.bf16.mxu0 0
        %2792 = vmatmul.mubr.bf16.gmra.mxu0 %v2650
        %v2793 = vpop.f32.mrf.mxu0
        %v2794 = vadd.f32 0.0, %v2793
        %v2795 = vpop.f32.mrf.mxu0
        %v2796 = vpop.f32.mrf.mxu0
        %v2797 = vadd.f32 0.0, %v2796
        %v2798 = vpop.f32.mrf.mxu0
        %2799 = vmatprep.mubr.bf16.mxu0 0
        %2800 = vmatmul.mubr.bf16.gmra.mxu0 %v2651
        %v2801 = vpop.f32.mrf.mxu0
        %v2802 = vadd.f32 0.0, %v2801
        %v2803 = vpop.f32.mrf.mxu0
        %v2804 = vpop.f32.mrf.mxu0
        %v2805 = vadd.f32 0.0, %v2804
        %v2806 = vpop.f32.mrf.mxu0
        %2807 = vmatprep.mubr.bf16.mxu0 0
        %2808 = vmatmul.mubr.bf16.gmra.mxu0 %v2652
        %v2809 = vpop.f32.mrf.mxu0
        %v2810 = vadd.f32 0.0, %v2809
        %v2811 = vpop.f32.mrf.mxu0
        %v2812 = vpop.f32.mrf.mxu0
        %v2813 = vadd.f32 0.0, %v2812
        %v2814 = vpop.f32.mrf.mxu0
        %2815 = vmatprep.mubr.bf16.mxu0 0
        %2816 = vmatmul.mubr.bf16.gmra.mxu0 %v2653
        %v2817 = vpop.f32.mrf.mxu0
        %v2818 = vadd.f32 0.0, %v2817
        %v2819 = vpop.f32.mrf.mxu0
        %v2820 = vpop.f32.mrf.mxu0
        %v2821 = vadd.f32 0.0, %v2820
        %v2822 = vpop.f32.mrf.mxu0
        %2823 = vmatprep.mubr.bf16.mxu0 0
        %2824 = vmatmul.mubr.bf16.gmra.mxu0 %v2654
        %v2825 = vpop.f32.mrf.mxu0
        %v2826 = vadd.f32 0.0, %v2825
        %v2827 = vpop.f32.mrf.mxu0
        %v2828 = vpop.f32.mrf.mxu0
        %v2829 = vadd.f32 0.0, %v2828
        %v2830 = vpop.f32.mrf.mxu0
        %2831 = vmatprep.mubr.bf16.mxu0 0
        %2832 = vmatmul.mubr.bf16.gmra.mxu0 %v2655
        %v2833 = vpop.f32.mrf.mxu0
        %v2834 = vadd.f32 0.0, %v2833
        %v2835 = vpop.f32.mrf.mxu0
        %v2836 = vpop.f32.mrf.mxu0
        %v2837 = vadd.f32 0.0, %v2836
        %v2838 = vpop.f32.mrf.mxu0
        %2839 = vmatprep.mubr.bf16.mxu0 0
        %2840 = vmatmul.mubr.bf16.gmra.mxu0 %v2656
        %v2841 = vpop.f32.mrf.mxu0
        %v2842 = vadd.f32 0.0, %v2841
        %v2843 = vpop.f32.mrf.mxu0
        %v2844 = vpop.f32.mrf.mxu0
        %v2845 = vadd.f32 0.0, %v2844
        %v2846 = vpop.f32.mrf.mxu0
        %2847 = vmatprep.mubr.bf16.mxu0 0
        %2848 = vmatmul.mubr.bf16.gmra.mxu0 %v2657
        %v2849 = vpop.f32.mrf.mxu0
        %v2850 = vadd.f32 0.0, %v2849
        %v2851 = vpop.f32.mrf.mxu0
        %v2852 = vpop.f32.mrf.mxu0
        %v2853 = vadd.f32 0.0, %v2852
        %v2854 = vpop.f32.mrf.mxu0
        %2855 = vmatprep.mubr.bf16.mxu0 0
        %2856 = vmatmul.mubr.bf16.gmra.mxu0 %v2658
        %v2857 = vpop.f32.mrf.mxu0
        %v2858 = vadd.f32 0.0, %v2857
        %v2859 = vpop.f32.mrf.mxu0
        %v2860 = vpop.f32.mrf.mxu0
        %v2861 = vadd.f32 0.0, %v2860
        %v2862 = vpop.f32.mrf.mxu0
        %2863 = vmatprep.mubr.bf16.mxu0 0
        %2864 = vmatmul.mubr.bf16.gmra.mxu0 %v2659
        %v2865 = vpop.f32.mrf.mxu0
        %v2866 = vadd.f32 0.0, %v2865
        %v2867 = vpop.f32.mrf.mxu0
        %v2868 = vpop.f32.mrf.mxu0
        %v2869 = vadd.f32 0.0, %v2868
        %v2870 = vpop.f32.mrf.mxu0
        %2871 = vmatprep.mubr.bf16.mxu0 0
        %2872 = vmatmul.mubr.bf16.gmra.mxu0 %v2660
        %v2873 = vpop.f32.mrf.mxu0
        %v2874 = vadd.f32 0.0, %v2873
        %v2875 = vpop.f32.mrf.mxu0
        %v2876 = vpop.f32.mrf.mxu0
        %v2877 = vadd.f32 0.0, %v2876
        %v2878 = vpop.f32.mrf.mxu0
        %2879 = vmatprep.mubr.bf16.mxu0 0
        %2880 = vmatmul.mubr.bf16.gmra.mxu0 %v2661
        %v2881 = vpop.f32.mrf.mxu0
        %v2882 = vadd.f32 0.0, %v2881
        %v2883 = vpop.f32.mrf.mxu0
        %v2884 = vpop.f32.mrf.mxu0
        %v2885 = vadd.f32 0.0, %v2884
        %v2886 = vpop.f32.mrf.mxu0
        %2887 = vdwg.mxu0
        %v2888 = vadd.f32 %v2582, %v2762
        %v2889 = vadd.f32 %v2583, %v2765
        %v2890 = vadd.f32 %v2584, %v2770
        %v2891 = vadd.f32 %v2585, %v2773
        %v2892 = vadd.f32 %v2586, %v2778
        %v2893 = vadd.f32 %v2587, %v2781
        %v2894 = vadd.f32 %v2588, %v2786
        %v2895 = vadd.f32 %v2589, %v2789
        %v2896 = vadd.f32 %v2590, %v2794
        %v2897 = vadd.f32 %v2591, %v2797
        %v2898 = vadd.f32 %v2592, %v2802
        %v2899 = vadd.f32 %v2593, %v2805
        %v2900 = vadd.f32 %v2594, %v2810
        %v2901 = vadd.f32 %v2595, %v2813
        %v2902 = vadd.f32 %v2596, %v2818
        %v2903 = vadd.f32 %v2597, %v2821
        %v2904 = vadd.f32 %v2598, %v2826
        %v2905 = vadd.f32 %v2599, %v2829
        %v2906 = vadd.f32 %v2600, %v2834
        %v2907 = vadd.f32 %v2601, %v2837
        %v2908 = vadd.f32 %v2602, %v2842
        %v2909 = vadd.f32 %v2603, %v2845
        %v2910 = vadd.f32 %v2604, %v2850
        %v2911 = vadd.f32 %v2605, %v2853
        %v2912 = vadd.f32 %v2606, %v2858
        %v2913 = vadd.f32 %v2607, %v2861
        %v2914 = vadd.f32 %v2608, %v2866
        %v2915 = vadd.f32 %v2609, %v2869
        %v2916 = vadd.f32 %v2610, %v2874
        %v2917 = vadd.f32 %v2611, %v2877
        %v2918 = vadd.f32 %v2612, %v2882
        %v2919 = vadd.f32 %v2613, %v2885
        %v2921 = vlaneseq
        %v2922 = vshrl.u32 %v2921, 7
        %v2923 = vsub.s32 0, %v2922
        %v2924 = vrot.slane %v226, %v2923
        %v2926 = vmul.f32 %v2888, %v2924
        %v2927 = vmul.f32 %v2889, %v2924
        %v2928 = vmul.f32 %v2890, %v2924
        %v2929 = vmul.f32 %v2891, %v2924
        %v2930 = vmul.f32 %v2892, %v2924
        %v2931 = vmul.f32 %v2893, %v2924
        %v2932 = vmul.f32 %v2894, %v2924
        %v2933 = vmul.f32 %v2895, %v2924
        %v2934 = vmul.f32 %v2896, %v2924
        %v2935 = vmul.f32 %v2897, %v2924
        %v2936 = vmul.f32 %v2898, %v2924
        %v2937 = vmul.f32 %v2899, %v2924
        %v2938 = vmul.f32 %v2900, %v2924
        %v2939 = vmul.f32 %v2901, %v2924
        %v2940 = vmul.f32 %v2902, %v2924
        %v2941 = vmul.f32 %v2903, %v2924
        %v2942 = vmul.f32 %v2904, %v2924
        %v2943 = vmul.f32 %v2905, %v2924
        %v2944 = vmul.f32 %v2906, %v2924
        %v2945 = vmul.f32 %v2907, %v2924
        %v2946 = vmul.f32 %v2908, %v2924
        %v2947 = vmul.f32 %v2909, %v2924
        %v2948 = vmul.f32 %v2910, %v2924
        %v2949 = vmul.f32 %v2911, %v2924
        %v2950 = vmul.f32 %v2912, %v2924
        %v2951 = vmul.f32 %v2913, %v2924
        %v2952 = vmul.f32 %v2914, %v2924
        %v2953 = vmul.f32 %v2915, %v2924
        %v2954 = vmul.f32 %v2916, %v2924
        %v2955 = vmul.f32 %v2917, %v2924
        %v2956 = vmul.f32 %v2918, %v2924
        %v2957 = vmul.f32 %v2919, %v2924
        %v2959 = vlaneseq
        %v2960 = vshrl.u32 %v2959, 7
        %v2961 = vsub.s32 0, %v2960
        %v2962 = vrot.slane %v227, %v2961
        %v2964 = vadd.f32 %v2926, %v2962
        %v2965 = vadd.f32 %v2927, %v2962
        %v2966 = vadd.f32 %v2928, %v2962
        %v2967 = vadd.f32 %v2929, %v2962
        %v2968 = vadd.f32 %v2930, %v2962
        %v2969 = vadd.f32 %v2931, %v2962
        %v2970 = vadd.f32 %v2932, %v2962
        %v2971 = vadd.f32 %v2933, %v2962
        %v2972 = vadd.f32 %v2934, %v2962
        %v2973 = vadd.f32 %v2935, %v2962
        %v2974 = vadd.f32 %v2936, %v2962
        %v2975 = vadd.f32 %v2937, %v2962
        %v2976 = vadd.f32 %v2938, %v2962
        %v2977 = vadd.f32 %v2939, %v2962
        %v2978 = vadd.f32 %v2940, %v2962
        %v2979 = vadd.f32 %v2941, %v2962
        %v2980 = vadd.f32 %v2942, %v2962
        %v2981 = vadd.f32 %v2943, %v2962
        %v2982 = vadd.f32 %v2944, %v2962
        %v2983 = vadd.f32 %v2945, %v2962
        %v2984 = vadd.f32 %v2946, %v2962
        %v2985 = vadd.f32 %v2947, %v2962
        %v2986 = vadd.f32 %v2948, %v2962
        %v2987 = vadd.f32 %v2949, %v2962
        %v2988 = vadd.f32 %v2950, %v2962
        %v2989 = vadd.f32 %v2951, %v2962
        %v2990 = vadd.f32 %v2952, %v2962
        %v2991 = vadd.f32 %v2953, %v2962
        %v2992 = vadd.f32 %v2954, %v2962
        %v2993 = vadd.f32 %v2955, %v2962
        %v2994 = vadd.f32 %v2956, %v2962
        %v2995 = vadd.f32 %v2957, %v2962
        %v2996 = vmax.f32 %v2964, 0.0
        %v2997 = vmax.f32 %v2965, 0.0
        %v2998 = vmax.f32 %v2966, 0.0
        %v2999 = vmax.f32 %v2967, 0.0
        %v3000 = vmax.f32 %v2968, 0.0
        %v3001 = vmax.f32 %v2969, 0.0
        %v3002 = vmax.f32 %v2970, 0.0
        %v3003 = vmax.f32 %v2971, 0.0
        %v3004 = vmax.f32 %v2972, 0.0
        %v3005 = vmax.f32 %v2973, 0.0
        %v3006 = vmax.f32 %v2974, 0.0
        %v3007 = vmax.f32 %v2975, 0.0
        %v3008 = vmax.f32 %v2976, 0.0
        %v3009 = vmax.f32 %v2977, 0.0
        %v3010 = vmax.f32 %v2978, 0.0
        %v3011 = vmax.f32 %v2979, 0.0
        %v3012 = vmax.f32 %v2980, 0.0
        %v3013 = vmax.f32 %v2981, 0.0
        %v3014 = vmax.f32 %v2982, 0.0
        %v3015 = vmax.f32 %v2983, 0.0
        %v3016 = vmax.f32 %v2984, 0.0
        %v3017 = vmax.f32 %v2985, 0.0
        %v3018 = vmax.f32 %v2986, 0.0
        %v3019 = vmax.f32 %v2987, 0.0
        %v3020 = vmax.f32 %v2988, 0.0
        %v3021 = vmax.f32 %v2989, 0.0
        %v3022 = vmax.f32 %v2990, 0.0
        %v3023 = vmax.f32 %v2991, 0.0
        %v3024 = vmax.f32 %v2992, 0.0
        %v3025 = vmax.f32 %v2993, 0.0
        %v3026 = vmax.f32 %v2994, 0.0
        %v3027 = vmax.f32 %v2995, 0.0
        %v3028 = vmin.f32 %v2964, 0.0
        %v3029 = vmin.f32 %v2965, 0.0
        %v3030 = vmin.f32 %v2966, 0.0
        %v3031 = vmin.f32 %v2967, 0.0
        %v3032 = vmin.f32 %v2968, 0.0
        %v3033 = vmin.f32 %v2969, 0.0
        %v3034 = vmin.f32 %v2970, 0.0
        %v3035 = vmin.f32 %v2971, 0.0
        %v3036 = vmin.f32 %v2972, 0.0
        %v3037 = vmin.f32 %v2973, 0.0
        %v3038 = vmin.f32 %v2974, 0.0
        %v3039 = vmin.f32 %v2975, 0.0
        %v3040 = vmin.f32 %v2976, 0.0
        %v3041 = vmin.f32 %v2977, 0.0
        %v3042 = vmin.f32 %v2978, 0.0
        %v3043 = vmin.f32 %v2979, 0.0
        %v3044 = vmin.f32 %v2980, 0.0
        %v3045 = vmin.f32 %v2981, 0.0
        %v3046 = vmin.f32 %v2982, 0.0
        %v3047 = vmin.f32 %v2983, 0.0
        %v3048 = vmin.f32 %v2984, 0.0
        %v3049 = vmin.f32 %v2985, 0.0
        %v3050 = vmin.f32 %v2986, 0.0
        %v3051 = vmin.f32 %v2987, 0.0
        %v3052 = vmin.f32 %v2988, 0.0
        %v3053 = vmin.f32 %v2989, 0.0
        %v3054 = vmin.f32 %v2990, 0.0
        %v3055 = vmin.f32 %v2991, 0.0
        %v3056 = vmin.f32 %v2992, 0.0
        %v3057 = vmin.f32 %v2993, 0.0
        %v3058 = vmin.f32 %v2994, 0.0
        %v3059 = vmin.f32 %v2995, 0.0
        %v3061 = vlaneseq
        %v3062 = vshrl.u32 %v3061, 7
        %v3063 = vsub.s32 0, %v3062
        %v3064 = vrot.slane %v228, %v3063
        %3065 = vset.pattern.permute.xlu0 0
        %3066 = vperm.xlu0 %3065, %v3064
        %v3067 = vpop.permute.xlu0 %3066
        %v3069 = vmul.f32 %v3067, %v3028
        %v3070 = vmul.f32 %v3067, %v3029
        %v3071 = vmul.f32 %v3067, %v3030
        %v3072 = vmul.f32 %v3067, %v3031
        %v3073 = vmul.f32 %v3067, %v3032
        %v3074 = vmul.f32 %v3067, %v3033
        %v3075 = vmul.f32 %v3067, %v3034
        %v3076 = vmul.f32 %v3067, %v3035
        %v3077 = vmul.f32 %v3067, %v3036
        %v3078 = vmul.f32 %v3067, %v3037
        %v3079 = vmul.f32 %v3067, %v3038
        %v3080 = vmul.f32 %v3067, %v3039
        %v3081 = vmul.f32 %v3067, %v3040
        %v3082 = vmul.f32 %v3067, %v3041
        %v3083 = vmul.f32 %v3067, %v3042
        %v3084 = vmul.f32 %v3067, %v3043
        %v3085 = vmul.f32 %v3067, %v3044
        %v3086 = vmul.f32 %v3067, %v3045
        %v3087 = vmul.f32 %v3067, %v3046
        %v3088 = vmul.f32 %v3067, %v3047
        %v3089 = vmul.f32 %v3067, %v3048
        %v3090 = vmul.f32 %v3067, %v3049
        %v3091 = vmul.f32 %v3067, %v3050
        %v3092 = vmul.f32 %v3067, %v3051
        %v3093 = vmul.f32 %v3067, %v3052
        %v3094 = vmul.f32 %v3067, %v3053
        %v3095 = vmul.f32 %v3067, %v3054
        %v3096 = vmul.f32 %v3067, %v3055
        %v3097 = vmul.f32 %v3067, %v3056
        %v3098 = vmul.f32 %v3067, %v3057
        %v3099 = vmul.f32 %v3067, %v3058
        %v3100 = vmul.f32 %v3067, %v3059
        %v3101 = vadd.f32 %v2996, %v3069
        %v3102 = vadd.f32 %v2997, %v3070
        %v3103 = vadd.f32 %v2998, %v3071
        %v3104 = vadd.f32 %v2999, %v3072
        %v3105 = vadd.f32 %v3000, %v3073
        %v3106 = vadd.f32 %v3001, %v3074
        %v3107 = vadd.f32 %v3002, %v3075
        %v3108 = vadd.f32 %v3003, %v3076
        %v3109 = vadd.f32 %v3004, %v3077
        %v3110 = vadd.f32 %v3005, %v3078
        %v3111 = vadd.f32 %v3006, %v3079
        %v3112 = vadd.f32 %v3007, %v3080
        %v3113 = vadd.f32 %v3008, %v3081
        %v3114 = vadd.f32 %v3009, %v3082
        %v3115 = vadd.f32 %v3010, %v3083
        %v3116 = vadd.f32 %v3011, %v3084
        %v3117 = vadd.f32 %v3012, %v3085
        %v3118 = vadd.f32 %v3013, %v3086
        %v3119 = vadd.f32 %v3014, %v3087
        %v3120 = vadd.f32 %v3015, %v3088
        %v3121 = vadd.f32 %v3016, %v3089
        %v3122 = vadd.f32 %v3017, %v3090
        %v3123 = vadd.f32 %v3018, %v3091
        %v3124 = vadd.f32 %v3019, %v3092
        %v3125 = vadd.f32 %v3020, %v3093
        %v3126 = vadd.f32 %v3021, %v3094
        %v3127 = vadd.f32 %v3022, %v3095
        %v3128 = vadd.f32 %v3023, %v3096
        %v3129 = vadd.f32 %v3024, %v3097
        %v3130 = vadd.f32 %v3025, %v3098
        %v3131 = vadd.f32 %v3026, %v3099
        %v3132 = vadd.f32 %v3027, %v3100
        %3133 = vst [vmem:[#allocation2] sm:$0xff] 0.0
        %3134 = vst [vmem:[#allocation2 + $0x8] sm:$0xff] 0.0
        %3135 = vst [vmem:[#allocation2 + $0x10] sm:$0x3] 0.0
        %3136 = vst [vmem:[#allocation2 + $0x18] sm:$0xff] 0.0
        %3137 = vst [vmem:[#allocation2 + $0x20] sm:$0xff] 0.0
        %3138 = vst [vmem:[#allocation2 + $0x28] sm:$0x3] 0.0
        %3139 = vst [vmem:[#allocation2 + $0x30] sm:$0xff] 0.0
        %3140 = vst [vmem:[#allocation2 + $0x38] sm:$0xff] 0.0
        %3141 = vst [vmem:[#allocation2 + $0x40] sm:$0x3] 0.0
        %3142 = vst [vmem:[#allocation2 + $0x48] sm:$0xff] 0.0
        %3143 = vst [vmem:[#allocation2 + $0x50] sm:$0xff] 0.0
        %3144 = vst [vmem:[#allocation2 + $0x58] sm:$0x3] 0.0
        %3145 = vst [vmem:[#allocation2 + $0x60] sm:$0xff] 0.0
        %3146 = vst [vmem:[#allocation2 + $0x68] sm:$0xff] 0.0
        %3147 = vst [vmem:[#allocation2 + $0x70] sm:$0x3] 0.0
        %3148 = vst [vmem:[#allocation2 + $0x78] sm:$0xff] 0.0
        %3149 = vst [vmem:[#allocation2 + $0x80] sm:$0xff] 0.0
        %3150 = vst [vmem:[#allocation2 + $0x88] sm:$0x3] 0.0
        %3151 = vst [vmem:[#allocation2 + $0x90] sm:$0xff] 0.0
        %3152 = vst [vmem:[#allocation2 + $0x98] sm:$0xff] 0.0
        %3153 = vst [vmem:[#allocation2 + $0xa0] sm:$0x3] 0.0
        %3154 = vst [vmem:[#allocation2 + $0xa8] sm:$0xff] 0.0
        %3155 = vst [vmem:[#allocation2 + $0xb0] sm:$0xff] 0.0
        %3156 = vst [vmem:[#allocation2 + $0xb8] sm:$0x3] 0.0
        %3157 = vst [vmem:[#allocation2 + $0xc0] sm:$0xff] 0.0
        %3158 = vst [vmem:[#allocation2 + $0xc8] sm:$0xff] 0.0
        %3159 = vst [vmem:[#allocation2 + $0xd0] sm:$0x3] 0.0
        %3160 = vst [vmem:[#allocation2 + $0xd8] sm:$0xff] 0.0
        %3161 = vst [vmem:[#allocation2 + $0xe0] sm:$0xff] 0.0
        %3162 = vst [vmem:[#allocation2 + $0xe8] sm:$0x3] 0.0
        %3163 = vst [vmem:[#allocation2 + $0xf0] sm:$0xff] 0.0
        %3164 = vst [vmem:[#allocation2 + $0xf8] sm:$0xff] 0.0
        %3165 = vst [vmem:[#allocation2 + $0x100] sm:$0x3] 0.0
        %3166 = vst [vmem:[#allocation2 + $0x108] sm:$0xff] 0.0
        %3167 = vst [vmem:[#allocation2 + $0x110] sm:$0xff] 0.0
        %3168 = vst [vmem:[#allocation2 + $0x118] sm:$0x3] 0.0
        %3169 = vst [vmem:[#allocation2 + $0x120] sm:$0xff] 0.0
        %3170 = vst [vmem:[#allocation2 + $0x128] sm:$0xff] 0.0
        %3171 = vst [vmem:[#allocation2 + $0x130] sm:$0x3] 0.0
        %3172 = vst [vmem:[#allocation2 + $0x138] sm:$0xff] 0.0
        %3173 = vst [vmem:[#allocation2 + $0x140] sm:$0xff] 0.0
        %3174 = vst [vmem:[#allocation2 + $0x148] sm:$0x3] 0.0
        %3175 = vst [vmem:[#allocation2 + $0x150] sm:$0xff] 0.0
        %3176 = vst [vmem:[#allocation2 + $0x158] sm:$0xff] 0.0
        %3177 = vst [vmem:[#allocation2 + $0x160] sm:$0x3] 0.0
        %3178 = vst [vmem:[#allocation2 + $0x168] sm:$0xff] 0.0
        %3179 = vst [vmem:[#allocation2 + $0x170] sm:$0xff] 0.0
        %3180 = vst [vmem:[#allocation2 + $0x178] sm:$0x3] 0.0
        %3181 = vst [vmem:[#allocation2 + $0x180] sm:$0xff] 0.0
        %3182 = vst [vmem:[#allocation2 + $0x188] sm:$0xff] 0.0
        %3183 = vst [vmem:[#allocation2 + $0x190] sm:$0x3] 0.0
        %3184 = vst [vmem:[#allocation2 + $0x198] sm:$0xff] 0.0
        %3185 = vst [vmem:[#allocation2 + $0x1a0] sm:$0xff] 0.0
        %3186 = vst [vmem:[#allocation2 + $0x1a8] sm:$0x3] 0.0
        %s3187 = scalar_lea.vmem [#allocation2], 24
        %3188 = vst [vmem:[%s3187 + $0x1] sm:$0xff] %v3101
        %3189 = vst [vmem:[%s3187 + $0x9] sm:$0xff] %v3102
        %3190 = vst [vmem:[%s3187 + $0x19] sm:$0xff] %v3103
        %3191 = vst [vmem:[%s3187 + $0x21] sm:$0xff] %v3104
        %3192 = vst [vmem:[%s3187 + $0x31] sm:$0xff] %v3105
        %3193 = vst [vmem:[%s3187 + $0x39] sm:$0xff] %v3106
        %3194 = vst [vmem:[%s3187 + $0x49] sm:$0xff] %v3107
        %3195 = vst [vmem:[%s3187 + $0x51] sm:$0xff] %v3108
        %3196 = vst [vmem:[%s3187 + $0x61] sm:$0xff] %v3109
        %3197 = vst [vmem:[%s3187 + $0x69] sm:$0xff] %v3110
        %3198 = vst [vmem:[%s3187 + $0x79] sm:$0xff] %v3111
        %3199 = vst [vmem:[%s3187 + $0x81] sm:$0xff] %v3112
        %3200 = vst [vmem:[%s3187 + $0x91] sm:$0xff] %v3113
        %3201 = vst [vmem:[%s3187 + $0x99] sm:$0xff] %v3114
        %3202 = vst [vmem:[%s3187 + $0xa9] sm:$0xff] %v3115
        %3203 = vst [vmem:[%s3187 + $0xb1] sm:$0xff] %v3116
        %3204 = vst [vmem:[%s3187 + $0xc1] sm:$0xff] %v3117
        %3205 = vst [vmem:[%s3187 + $0xc9] sm:$0xff] %v3118
        %3206 = vst [vmem:[%s3187 + $0xd9] sm:$0xff] %v3119
        %3207 = vst [vmem:[%s3187 + $0xe1] sm:$0xff] %v3120
        %3208 = vst [vmem:[%s3187 + $0xf1] sm:$0xff] %v3121
        %3209 = vst [vmem:[%s3187 + $0xf9] sm:$0xff] %v3122
        %3210 = vst [vmem:[%s3187 + $0x109] sm:$0xff] %v3123
        %3211 = vst [vmem:[%s3187 + $0x111] sm:$0xff] %v3124
        %3212 = vst [vmem:[%s3187 + $0x121] sm:$0xff] %v3125
        %3213 = vst [vmem:[%s3187 + $0x129] sm:$0xff] %v3126
        %3214 = vst [vmem:[%s3187 + $0x139] sm:$0xff] %v3127
        %3215 = vst [vmem:[%s3187 + $0x141] sm:$0xff] %v3128
        %3216 = vst [vmem:[%s3187 + $0x151] sm:$0xff] %v3129
        %3217 = vst [vmem:[%s3187 + $0x159] sm:$0xff] %v3130
        %3218 = vst [vmem:[%s3187 + $0x169] sm:$0xff] %v3131
        %3219 = vst [vmem:[%s3187 + $0x171] sm:$0xff] %v3132
        %v3220 = vld [vmem:[#allocation2] sm:$0xff]
        %v3221 = vld [vmem:[#allocation2 + $0x8] sm:$0xff]
        %v3222 = vld [vmem:[#allocation2 + $0x18] sm:$0xff]
        %v3223 = vld [vmem:[#allocation2 + $0x20] sm:$0xff]
        %v3224 = vld [vmem:[#allocation2 + $0x30] sm:$0xff]
        %v3225 = vld [vmem:[#allocation2 + $0x38] sm:$0xff]
        %v3226 = vld [vmem:[#allocation2 + $0x48] sm:$0xff]
        %v3227 = vld [vmem:[#allocation2 + $0x50] sm:$0xff]
        %v3228 = vld [vmem:[#allocation2 + $0x60] sm:$0xff]
        %v3229 = vld [vmem:[#allocation2 + $0x68] sm:$0xff]
        %v3230 = vld [vmem:[#allocation2 + $0x78] sm:$0xff]
        %v3231 = vld [vmem:[#allocation2 + $0x80] sm:$0xff]
        %v3232 = vld [vmem:[#allocation2 + $0x90] sm:$0xff]
        %v3233 = vld [vmem:[#allocation2 + $0x98] sm:$0xff]
        %v3234 = vld [vmem:[#allocation2 + $0xa8] sm:$0xff]
        %v3235 = vld [vmem:[#allocation2 + $0xb0] sm:$0xff]
        %v3236 = vld [vmem:[#allocation2 + $0xc0] sm:$0xff]
        %v3237 = vld [vmem:[#allocation2 + $0xc8] sm:$0xff]
        %v3238 = vld [vmem:[#allocation2 + $0xd8] sm:$0xff]
        %v3239 = vld [vmem:[#allocation2 + $0xe0] sm:$0xff]
        %v3240 = vld [vmem:[#allocation2 + $0xf0] sm:$0xff]
        %v3241 = vld [vmem:[#allocation2 + $0xf8] sm:$0xff]
        %v3242 = vld [vmem:[#allocation2 + $0x108] sm:$0xff]
        %v3243 = vld [vmem:[#allocation2 + $0x110] sm:$0xff]
        %v3244 = vld [vmem:[#allocation2 + $0x120] sm:$0xff]
        %v3245 = vld [vmem:[#allocation2 + $0x128] sm:$0xff]
        %v3246 = vld [vmem:[#allocation2 + $0x138] sm:$0xff]
        %v3247 = vld [vmem:[#allocation2 + $0x140] sm:$0xff]
        %v3248 = vld [vmem:[#allocation2 + $0x150] sm:$0xff]
        %v3249 = vld [vmem:[#allocation2 + $0x158] sm:$0xff]
        %v3250 = vld [vmem:[#allocation2 + $0x168] sm:$0xff]
        %v3251 = vld [vmem:[#allocation2 + $0x170] sm:$0xff]
        %v3252 = vpack.c.bf16 %v3221, %v3220
        %v3253 = vpack.c.bf16 %v3223, %v3222
        %v3254 = vpack.c.bf16 %v3225, %v3224
        %v3255 = vpack.c.bf16 %v3227, %v3226
        %v3256 = vpack.c.bf16 %v3229, %v3228
        %v3257 = vpack.c.bf16 %v3231, %v3230
        %v3258 = vpack.c.bf16 %v3233, %v3232
        %v3259 = vpack.c.bf16 %v3235, %v3234
        %v3260 = vpack.c.bf16 %v3237, %v3236
        %v3261 = vpack.c.bf16 %v3239, %v3238
        %v3262 = vpack.c.bf16 %v3241, %v3240
        %v3263 = vpack.c.bf16 %v3243, %v3242
        %v3264 = vpack.c.bf16 %v3245, %v3244
        %v3265 = vpack.c.bf16 %v3247, %v3246
        %v3266 = vpack.c.bf16 %v3249, %v3248
        %v3267 = vpack.c.bf16 %v3251, %v3250
        %v3268 = vld [vmem:[%s1] sm:$0xf]
        %v3269 = vld [vmem:[%s1 + $0x4] sm:$0xf]
        %v3270 = vld [vmem:[%s1 + $0x8] sm:$0xf]
        %v3271 = vld [vmem:[%s1 + $0xc] sm:$0xf]
        %v3272 = vld [vmem:[%s1 + $0x10] sm:$0xf]
        %v3273 = vld [vmem:[%s1 + $0x14] sm:$0xf]
        %v3274 = vld [vmem:[%s1 + $0x18] sm:$0xf]
        %v3275 = vld [vmem:[%s1 + $0x1c] sm:$0xf]
        %v3276 = vld [vmem:[%s1 + $0x20] sm:$0xf]
        %v3277 = vld [vmem:[%s1 + $0x24] sm:$0xf]
        %v3278 = vld [vmem:[%s1 + $0x28] sm:$0xf]
        %v3279 = vld [vmem:[%s1 + $0x2c] sm:$0xf]
        %v3280 = vld [vmem:[%s1 + $0x30] sm:$0xf]
        %v3281 = vld [vmem:[%s1 + $0x34] sm:$0xf]
        %v3282 = vld [vmem:[%s1 + $0x38] sm:$0xf]
        %v3283 = vld [vmem:[%s1 + $0x3c] sm:$0xf]
        %v3284 = vld [vmem:[#allocation2 + $0x1] sm:$0xff]
        %v3285 = vld [vmem:[#allocation2 + $0x9] sm:$0xff]
        %v3286 = vld [vmem:[#allocation2 + $0x19] sm:$0xff]
        %v3287 = vld [vmem:[#allocation2 + $0x21] sm:$0xff]
        %v3288 = vld [vmem:[#allocation2 + $0x31] sm:$0xff]
        %v3289 = vld [vmem:[#allocation2 + $0x39] sm:$0xff]
        %v3290 = vld [vmem:[#allocation2 + $0x49] sm:$0xff]
        %v3291 = vld [vmem:[#allocation2 + $0x51] sm:$0xff]
        %v3292 = vld [vmem:[#allocation2 + $0x61] sm:$0xff]
        %v3293 = vld [vmem:[#allocation2 + $0x69] sm:$0xff]
        %v3294 = vld [vmem:[#allocation2 + $0x79] sm:$0xff]
        %v3295 = vld [vmem:[#allocation2 + $0x81] sm:$0xff]
        %v3296 = vld [vmem:[#allocation2 + $0x91] sm:$0xff]
        %v3297 = vld [vmem:[#allocation2 + $0x99] sm:$0xff]
        %v3298 = vld [vmem:[#allocation2 + $0xa9] sm:$0xff]
        %v3299 = vld [vmem:[#allocation2 + $0xb1] sm:$0xff]
        %v3300 = vld [vmem:[#allocation2 + $0xc1] sm:$0xff]
        %v3301 = vld [vmem:[#allocation2 + $0xc9] sm:$0xff]
        %v3302 = vld [vmem:[#allocation2 + $0xd9] sm:$0xff]
        %v3303 = vld [vmem:[#allocation2 + $0xe1] sm:$0xff]
        %v3304 = vld [vmem:[#allocation2 + $0xf1] sm:$0xff]
        %v3305 = vld [vmem:[#allocation2 + $0xf9] sm:$0xff]
        %v3306 = vld [vmem:[#allocation2 + $0x109] sm:$0xff]
        %v3307 = vld [vmem:[#allocation2 + $0x111] sm:$0xff]
        %v3308 = vld [vmem:[#allocation2 + $0x121] sm:$0xff]
        %v3309 = vld [vmem:[#allocation2 + $0x129] sm:$0xff]
        %v3310 = vld [vmem:[#allocation2 + $0x139] sm:$0xff]
        %v3311 = vld [vmem:[#allocation2 + $0x141] sm:$0xff]
        %v3312 = vld [vmem:[#allocation2 + $0x151] sm:$0xff]
        %v3313 = vld [vmem:[#allocation2 + $0x159] sm:$0xff]
        %v3314 = vld [vmem:[#allocation2 + $0x169] sm:$0xff]
        %v3315 = vld [vmem:[#allocation2 + $0x171] sm:$0xff]
        %v3316 = vpack.c.bf16 %v3285, %v3284
        %v3317 = vpack.c.bf16 %v3287, %v3286
        %v3318 = vpack.c.bf16 %v3289, %v3288
        %v3319 = vpack.c.bf16 %v3291, %v3290
        %v3320 = vpack.c.bf16 %v3293, %v3292
        %v3321 = vpack.c.bf16 %v3295, %v3294
        %v3322 = vpack.c.bf16 %v3297, %v3296
        %v3323 = vpack.c.bf16 %v3299, %v3298
        %v3324 = vpack.c.bf16 %v3301, %v3300
        %v3325 = vpack.c.bf16 %v3303, %v3302
        %v3326 = vpack.c.bf16 %v3305, %v3304
        %v3327 = vpack.c.bf16 %v3307, %v3306
        %v3328 = vpack.c.bf16 %v3309, %v3308
        %v3329 = vpack.c.bf16 %v3311, %v3310
        %v3330 = vpack.c.bf16 %v3313, %v3312
        %v3331 = vpack.c.bf16 %v3315, %v3314
        %v3332 = vld [vmem:[%s341] sm:$0xf]
        %v3333 = vld [vmem:[%s341 + $0x4] sm:$0xf]
        %v3334 = vld [vmem:[%s341 + $0x8] sm:$0xf]
        %v3335 = vld [vmem:[%s341 + $0xc] sm:$0xf]
        %v3336 = vld [vmem:[%s341 + $0x10] sm:$0xf]
        %v3337 = vld [vmem:[%s341 + $0x14] sm:$0xf]
        %v3338 = vld [vmem:[%s341 + $0x18] sm:$0xf]
        %v3339 = vld [vmem:[%s341 + $0x1c] sm:$0xf]
        %v3340 = vld [vmem:[%s341 + $0x20] sm:$0xf]
        %v3341 = vld [vmem:[%s341 + $0x24] sm:$0xf]
        %v3342 = vld [vmem:[%s341 + $0x28] sm:$0xf]
        %v3343 = vld [vmem:[%s341 + $0x2c] sm:$0xf]
        %v3344 = vld [vmem:[%s341 + $0x30] sm:$0xf]
        %v3345 = vld [vmem:[%s341 + $0x34] sm:$0xf]
        %v3346 = vld [vmem:[%s341 + $0x38] sm:$0xf]
        %v3347 = vld [vmem:[%s341 + $0x3c] sm:$0xf]
        %v3364 = vunpack.c.l.b16 %v3332
        %v3365 = vunpack.c.l.b16 %v3333
        %v3366 = vunpack.c.l.b16 %v3334
        %v3367 = vunpack.c.l.b16 %v3335
        %v3368 = vunpack.c.l.b16 %v3336
        %v3369 = vunpack.c.l.b16 %v3337
        %v3370 = vunpack.c.l.b16 %v3338
        %v3371 = vunpack.c.l.b16 %v3339
        %v3372 = vunpack.c.l.b16 %v3340
        %v3373 = vunpack.c.l.b16 %v3341
        %v3374 = vunpack.c.l.b16 %v3342
        %v3375 = vunpack.c.l.b16 %v3343
        %v3376 = vunpack.c.l.b16 %v3344
        %v3377 = vunpack.c.l.b16 %v3345
        %v3378 = vunpack.c.l.b16 %v3346
        %v3379 = vunpack.c.l.b16 %v3347
        %v3380 = vpack.c.b16 %v3365, %v3364
        %v3381 = vpack.c.b16 %v3367, %v3366
        %v3382 = vpack.c.b16 %v3369, %v3368
        %v3383 = vpack.c.b16 %v3371, %v3370
        %v3384 = vpack.c.b16 %v3373, %v3372
        %v3385 = vpack.c.b16 %v3375, %v3374
        %v3386 = vpack.c.b16 %v3377, %v3376
        %v3387 = vpack.c.b16 %v3379, %v3378
        %3396 = vmatprep.subr.bf16.mxu0 0
        %3397 = vmatpush1.bf16.msra.mxu0 %v3387
        %3398 = vmatprep.subr.bf16.mxu0 0
        %3399 = vmatpush1.bf16.msra.mxu0 %v3386
        %3400 = vmatprep.subr.bf16.mxu0 0
        %3401 = vmatpush1.bf16.msra.mxu0 %v3385
        %3402 = vmatprep.subr.bf16.mxu0 0
        %3403 = vmatpush1.bf16.msra.mxu0 %v3384
        %3404 = vmatprep.subr.bf16.mxu0 0
        %3405 = vmatpush1.bf16.msra.mxu0 %v3383
        %3406 = vmatprep.subr.bf16.mxu0 0
        %3407 = vmatpush1.bf16.msra.mxu0 %v3382
        %3408 = vmatprep.subr.bf16.mxu0 0
        %3409 = vmatpush1.bf16.msra.mxu0 %v3381
        %3410 = vmatprep.subr.bf16.mxu0 0
        %3411 = vmatpush1.bf16.msra.mxu0 %v3380
        %3412 = vmatprep.subr.bf16.mxu0 0
        %3413 = vmatpush2.bf16.msra.mxu0 0
        %3414 = vmatprep.subr.bf16.mxu0 0
        %3415 = vmatpush2.bf16.msra.mxu0 0
        %3416 = vmatprep.subr.bf16.mxu0 0
        %3417 = vmatpush2.bf16.msra.mxu0 0
        %3418 = vmatprep.subr.bf16.mxu0 0
        %3419 = vmatpush2.bf16.msra.mxu0 0
        %3420 = vmatprep.subr.bf16.mxu0 0
        %3421 = vmatpush2.bf16.msra.mxu0 0
        %3422 = vmatprep.subr.bf16.mxu0 0
        %3423 = vmatpush2.bf16.msra.mxu0 0
        %3424 = vmatprep.subr.bf16.mxu0 0
        %3425 = vmatpush2.bf16.msra.mxu0 0
        %3426 = vmatprep.subr.bf16.mxu0 0
        %3427 = vmatpush2.bf16.msra.mxu0 0
        %3428 = vmatprep.mubr.bf16.mxu0 0
        %3429 = vmatmul.mubr.bf16.gmra.mxu0 %v3316
        %v3430 = vpop.f32.mrf.mxu0
        %v3431 = vadd.f32 0.0, %v3430
        %v3432 = vpop.f32.mrf.mxu0
        %v3433 = vpop.f32.mrf.mxu0
        %v3434 = vadd.f32 0.0, %v3433
        %v3435 = vpop.f32.mrf.mxu0
        %3436 = vmatprep.mubr.bf16.mxu0 0
        %3437 = vmatmul.mubr.bf16.gmra.mxu0 %v3317
        %v3438 = vpop.f32.mrf.mxu0
        %v3439 = vadd.f32 0.0, %v3438
        %v3440 = vpop.f32.mrf.mxu0
        %v3441 = vpop.f32.mrf.mxu0
        %v3442 = vadd.f32 0.0, %v3441
        %v3443 = vpop.f32.mrf.mxu0
        %3444 = vmatprep.mubr.bf16.mxu0 0
        %3445 = vmatmul.mubr.bf16.gmra.mxu0 %v3318
        %v3446 = vpop.f32.mrf.mxu0
        %v3447 = vadd.f32 0.0, %v3446
        %v3448 = vpop.f32.mrf.mxu0
        %v3449 = vpop.f32.mrf.mxu0
        %v3450 = vadd.f32 0.0, %v3449
        %v3451 = vpop.f32.mrf.mxu0
        %3452 = vmatprep.mubr.bf16.mxu0 0
        %3453 = vmatmul.mubr.bf16.gmra.mxu0 %v3319
        %v3454 = vpop.f32.mrf.mxu0
        %v3455 = vadd.f32 0.0, %v3454
        %v3456 = vpop.f32.mrf.mxu0
        %v3457 = vpop.f32.mrf.mxu0
        %v3458 = vadd.f32 0.0, %v3457
        %v3459 = vpop.f32.mrf.mxu0
        %3460 = vmatprep.mubr.bf16.mxu0 0
        %3461 = vmatmul.mubr.bf16.gmra.mxu0 %v3320
        %v3462 = vpop.f32.mrf.mxu0
        %v3463 = vadd.f32 0.0, %v3462
        %v3464 = vpop.f32.mrf.mxu0
        %v3465 = vpop.f32.mrf.mxu0
        %v3466 = vadd.f32 0.0, %v3465
        %v3467 = vpop.f32.mrf.mxu0
        %3468 = vmatprep.mubr.bf16.mxu0 0
        %3469 = vmatmul.mubr.bf16.gmra.mxu0 %v3321
        %v3470 = vpop.f32.mrf.mxu0
        %v3471 = vadd.f32 0.0, %v3470
        %v3472 = vpop.f32.mrf.mxu0
        %v3473 = vpop.f32.mrf.mxu0
        %v3474 = vadd.f32 0.0, %v3473
        %v3475 = vpop.f32.mrf.mxu0
        %3476 = vmatprep.mubr.bf16.mxu0 0
        %3477 = vmatmul.mubr.bf16.gmra.mxu0 %v3322
        %v3478 = vpop.f32.mrf.mxu0
        %v3479 = vadd.f32 0.0, %v3478
        %v3480 = vpop.f32.mrf.mxu0
        %v3481 = vpop.f32.mrf.mxu0
        %v3482 = vadd.f32 0.0, %v3481
        %v3483 = vpop.f32.mrf.mxu0
        %3484 = vmatprep.mubr.bf16.mxu0 0
        %3485 = vmatmul.mubr.bf16.gmra.mxu0 %v3323
        %v3486 = vpop.f32.mrf.mxu0
        %v3487 = vadd.f32 0.0, %v3486
        %v3488 = vpop.f32.mrf.mxu0
        %v3489 = vpop.f32.mrf.mxu0
        %v3490 = vadd.f32 0.0, %v3489
        %v3491 = vpop.f32.mrf.mxu0
        %3492 = vmatprep.mubr.bf16.mxu0 0
        %3493 = vmatmul.mubr.bf16.gmra.mxu0 %v3324
        %v3494 = vpop.f32.mrf.mxu0
        %v3495 = vadd.f32 0.0, %v3494
        %v3496 = vpop.f32.mrf.mxu0
        %v3497 = vpop.f32.mrf.mxu0
        %v3498 = vadd.f32 0.0, %v3497
        %v3499 = vpop.f32.mrf.mxu0
        %3500 = vmatprep.mubr.bf16.mxu0 0
        %3501 = vmatmul.mubr.bf16.gmra.mxu0 %v3325
        %v3502 = vpop.f32.mrf.mxu0
        %v3503 = vadd.f32 0.0, %v3502
        %v3504 = vpop.f32.mrf.mxu0
        %v3505 = vpop.f32.mrf.mxu0
        %v3506 = vadd.f32 0.0, %v3505
        %v3507 = vpop.f32.mrf.mxu0
        %3508 = vmatprep.mubr.bf16.mxu0 0
        %3509 = vmatmul.mubr.bf16.gmra.mxu0 %v3326
        %v3510 = vpop.f32.mrf.mxu0
        %v3511 = vadd.f32 0.0, %v3510
        %v3512 = vpop.f32.mrf.mxu0
        %v3513 = vpop.f32.mrf.mxu0
        %v3514 = vadd.f32 0.0, %v3513
        %v3515 = vpop.f32.mrf.mxu0
        %3516 = vmatprep.mubr.bf16.mxu0 0
        %3517 = vmatmul.mubr.bf16.gmra.mxu0 %v3327
        %v3518 = vpop.f32.mrf.mxu0
        %v3519 = vadd.f32 0.0, %v3518
        %v3520 = vpop.f32.mrf.mxu0
        %v3521 = vpop.f32.mrf.mxu0
        %v3522 = vadd.f32 0.0, %v3521
        %v3523 = vpop.f32.mrf.mxu0
        %3524 = vmatprep.mubr.bf16.mxu0 0
        %3525 = vmatmul.mubr.bf16.gmra.mxu0 %v3328
        %v3526 = vpop.f32.mrf.mxu0
        %v3527 = vadd.f32 0.0, %v3526
        %v3528 = vpop.f32.mrf.mxu0
        %v3529 = vpop.f32.mrf.mxu0
        %v3530 = vadd.f32 0.0, %v3529
        %v3531 = vpop.f32.mrf.mxu0
        %3532 = vmatprep.mubr.bf16.mxu0 0
        %3533 = vmatmul.mubr.bf16.gmra.mxu0 %v3329
        %v3534 = vpop.f32.mrf.mxu0
        %v3535 = vadd.f32 0.0, %v3534
        %v3536 = vpop.f32.mrf.mxu0
        %v3537 = vpop.f32.mrf.mxu0
        %v3538 = vadd.f32 0.0, %v3537
        %v3539 = vpop.f32.mrf.mxu0
        %3540 = vmatprep.mubr.bf16.mxu0 0
        %3541 = vmatmul.mubr.bf16.gmra.mxu0 %v3330
        %v3542 = vpop.f32.mrf.mxu0
        %v3543 = vadd.f32 0.0, %v3542
        %v3544 = vpop.f32.mrf.mxu0
        %v3545 = vpop.f32.mrf.mxu0
        %v3546 = vadd.f32 0.0, %v3545
        %v3547 = vpop.f32.mrf.mxu0
        %3548 = vmatprep.mubr.bf16.mxu0 0
        %3549 = vmatmul.mubr.bf16.gmra.mxu0 %v3331
        %v3550 = vpop.f32.mrf.mxu0
        %v3551 = vadd.f32 0.0, %v3550
        %v3552 = vpop.f32.mrf.mxu0
        %v3553 = vpop.f32.mrf.mxu0
        %v3554 = vadd.f32 0.0, %v3553
        %v3555 = vpop.f32.mrf.mxu0
        %3556 = vdwg.mxu0
        %v3573 = vunpack.c.l.b16 %v3268
        %v3574 = vunpack.c.l.b16 %v3269
        %v3575 = vunpack.c.l.b16 %v3270
        %v3576 = vunpack.c.l.b16 %v3271
        %v3577 = vunpack.c.l.b16 %v3272
        %v3578 = vunpack.c.l.b16 %v3273
        %v3579 = vunpack.c.l.b16 %v3274
        %v3580 = vunpack.c.l.b16 %v3275
        %v3581 = vunpack.c.l.b16 %v3276
        %v3582 = vunpack.c.l.b16 %v3277
        %v3583 = vunpack.c.l.b16 %v3278
        %v3584 = vunpack.c.l.b16 %v3279
        %v3585 = vunpack.c.l.b16 %v3280
        %v3586 = vunpack.c.l.b16 %v3281
        %v3587 = vunpack.c.l.b16 %v3282
        %v3588 = vunpack.c.l.b16 %v3283
        %v3589 = vpack.c.b16 %v3574, %v3573
        %v3590 = vpack.c.b16 %v3576, %v3575
        %v3591 = vpack.c.b16 %v3578, %v3577
        %v3592 = vpack.c.b16 %v3580, %v3579
        %v3593 = vpack.c.b16 %v3582, %v3581
        %v3594 = vpack.c.b16 %v3584, %v3583
        %v3595 = vpack.c.b16 %v3586, %v3585
        %v3596 = vpack.c.b16 %v3588, %v3587
        %3605 = vmatprep.subr.bf16.mxu0 0
        %3606 = vmatpush1.bf16.msra.mxu0 %v3596
        %3607 = vmatprep.subr.bf16.mxu0 0
        %3608 = vmatpush1.bf16.msra.mxu0 %v3595
        %3609 = vmatprep.subr.bf16.mxu0 0
        %3610 = vmatpush1.bf16.msra.mxu0 %v3594
        %3611 = vmatprep.subr.bf16.mxu0 0
        %3612 = vmatpush1.bf16.msra.mxu0 %v3593
        %3613 = vmatprep.subr.bf16.mxu0 0
        %3614 = vmatpush1.bf16.msra.mxu0 %v3592
        %3615 = vmatprep.subr.bf16.mxu0 0
        %3616 = vmatpush1.bf16.msra.mxu0 %v3591
        %3617 = vmatprep.subr.bf16.mxu0 0
        %3618 = vmatpush1.bf16.msra.mxu0 %v3590
        %3619 = vmatprep.subr.bf16.mxu0 0
        %3620 = vmatpush1.bf16.msra.mxu0 %v3589
        %3621 = vmatprep.subr.bf16.mxu0 0
        %3622 = vmatpush2.bf16.msra.mxu0 0
        %3623 = vmatprep.subr.bf16.mxu0 0
        %3624 = vmatpush2.bf16.msra.mxu0 0
        %3625 = vmatprep.subr.bf16.mxu0 0
        %3626 = vmatpush2.bf16.msra.mxu0 0
        %3627 = vmatprep.subr.bf16.mxu0 0
        %3628 = vmatpush2.bf16.msra.mxu0 0
        %3629 = vmatprep.subr.bf16.mxu0 0
        %3630 = vmatpush2.bf16.msra.mxu0 0
        %3631 = vmatprep.subr.bf16.mxu0 0
        %3632 = vmatpush2.bf16.msra.mxu0 0
        %3633 = vmatprep.subr.bf16.mxu0 0
        %3634 = vmatpush2.bf16.msra.mxu0 0
        %3635 = vmatprep.subr.bf16.mxu0 0
        %3636 = vmatpush2.bf16.msra.mxu0 0
        %3637 = vmatprep.mubr.bf16.mxu0 0
        %3638 = vmatmul.mubr.bf16.gmra.mxu0 %v3252
        %v3639 = vpop.f32.mrf.mxu0
        %v3640 = vadd.f32 %v3431, %v3639
        %v3641 = vpop.f32.mrf.mxu0
        %v3642 = vpop.f32.mrf.mxu0
        %v3643 = vadd.f32 %v3434, %v3642
        %v3644 = vpop.f32.mrf.mxu0
        %3645 = vmatprep.mubr.bf16.mxu0 0
        %3646 = vmatmul.mubr.bf16.gmra.mxu0 %v3253
        %v3647 = vpop.f32.mrf.mxu0
        %v3648 = vadd.f32 %v3439, %v3647
        %v3649 = vpop.f32.mrf.mxu0
        %v3650 = vpop.f32.mrf.mxu0
        %v3651 = vadd.f32 %v3442, %v3650
        %v3652 = vpop.f32.mrf.mxu0
        %3653 = vmatprep.mubr.bf16.mxu0 0
        %3654 = vmatmul.mubr.bf16.gmra.mxu0 %v3254
        %v3655 = vpop.f32.mrf.mxu0
        %v3656 = vadd.f32 %v3447, %v3655
        %v3657 = vpop.f32.mrf.mxu0
        %v3658 = vpop.f32.mrf.mxu0
        %v3659 = vadd.f32 %v3450, %v3658
        %v3660 = vpop.f32.mrf.mxu0
        %3661 = vmatprep.mubr.bf16.mxu0 0
        %3662 = vmatmul.mubr.bf16.gmra.mxu0 %v3255
        %v3663 = vpop.f32.mrf.mxu0
        %v3664 = vadd.f32 %v3455, %v3663
        %v3665 = vpop.f32.mrf.mxu0
        %v3666 = vpop.f32.mrf.mxu0
        %v3667 = vadd.f32 %v3458, %v3666
        %v3668 = vpop.f32.mrf.mxu0
        %3669 = vmatprep.mubr.bf16.mxu0 0
        %3670 = vmatmul.mubr.bf16.gmra.mxu0 %v3256
        %v3671 = vpop.f32.mrf.mxu0
        %v3672 = vadd.f32 %v3463, %v3671
        %v3673 = vpop.f32.mrf.mxu0
        %v3674 = vpop.f32.mrf.mxu0
        %v3675 = vadd.f32 %v3466, %v3674
        %v3676 = vpop.f32.mrf.mxu0
        %3677 = vmatprep.mubr.bf16.mxu0 0
        %3678 = vmatmul.mubr.bf16.gmra.mxu0 %v3257
        %v3679 = vpop.f32.mrf.mxu0
        %v3680 = vadd.f32 %v3471, %v3679
        %v3681 = vpop.f32.mrf.mxu0
        %v3682 = vpop.f32.mrf.mxu0
        %v3683 = vadd.f32 %v3474, %v3682
        %v3684 = vpop.f32.mrf.mxu0
        %3685 = vmatprep.mubr.bf16.mxu0 0
        %3686 = vmatmul.mubr.bf16.gmra.mxu0 %v3258
        %v3687 = vpop.f32.mrf.mxu0
        %v3688 = vadd.f32 %v3479, %v3687
        %v3689 = vpop.f32.mrf.mxu0
        %v3690 = vpop.f32.mrf.mxu0
        %v3691 = vadd.f32 %v3482, %v3690
        %v3692 = vpop.f32.mrf.mxu0
        %3693 = vmatprep.mubr.bf16.mxu0 0
        %3694 = vmatmul.mubr.bf16.gmra.mxu0 %v3259
        %v3695 = vpop.f32.mrf.mxu0
        %v3696 = vadd.f32 %v3487, %v3695
        %v3697 = vpop.f32.mrf.mxu0
        %v3698 = vpop.f32.mrf.mxu0
        %v3699 = vadd.f32 %v3490, %v3698
        %v3700 = vpop.f32.mrf.mxu0
        %3701 = vmatprep.mubr.bf16.mxu0 0
        %3702 = vmatmul.mubr.bf16.gmra.mxu0 %v3260
        %v3703 = vpop.f32.mrf.mxu0
        %v3704 = vadd.f32 %v3495, %v3703
        %v3705 = vpop.f32.mrf.mxu0
        %v3706 = vpop.f32.mrf.mxu0
        %v3707 = vadd.f32 %v3498, %v3706
        %v3708 = vpop.f32.mrf.mxu0
        %3709 = vmatprep.mubr.bf16.mxu0 0
        %3710 = vmatmul.mubr.bf16.gmra.mxu0 %v3261
        %v3711 = vpop.f32.mrf.mxu0
        %v3712 = vadd.f32 %v3503, %v3711
        %v3713 = vpop.f32.mrf.mxu0
        %v3714 = vpop.f32.mrf.mxu0
        %v3715 = vadd.f32 %v3506, %v3714
        %v3716 = vpop.f32.mrf.mxu0
        %3717 = vmatprep.mubr.bf16.mxu0 0
        %3718 = vmatmul.mubr.bf16.gmra.mxu0 %v3262
        %v3719 = vpop.f32.mrf.mxu0
        %v3720 = vadd.f32 %v3511, %v3719
        %v3721 = vpop.f32.mrf.mxu0
        %v3722 = vpop.f32.mrf.mxu0
        %v3723 = vadd.f32 %v3514, %v3722
        %v3724 = vpop.f32.mrf.mxu0
        %3725 = vmatprep.mubr.bf16.mxu0 0
        %3726 = vmatmul.mubr.bf16.gmra.mxu0 %v3263
        %v3727 = vpop.f32.mrf.mxu0
        %v3728 = vadd.f32 %v3519, %v3727
        %v3729 = vpop.f32.mrf.mxu0
        %v3730 = vpop.f32.mrf.mxu0
        %v3731 = vadd.f32 %v3522, %v3730
        %v3732 = vpop.f32.mrf.mxu0
        %3733 = vmatprep.mubr.bf16.mxu0 0
        %3734 = vmatmul.mubr.bf16.gmra.mxu0 %v3264
        %v3735 = vpop.f32.mrf.mxu0
        %v3736 = vadd.f32 %v3527, %v3735
        %v3737 = vpop.f32.mrf.mxu0
        %v3738 = vpop.f32.mrf.mxu0
        %v3739 = vadd.f32 %v3530, %v3738
        %v3740 = vpop.f32.mrf.mxu0
        %3741 = vmatprep.mubr.bf16.mxu0 0
        %3742 = vmatmul.mubr.bf16.gmra.mxu0 %v3265
        %v3743 = vpop.f32.mrf.mxu0
        %v3744 = vadd.f32 %v3535, %v3743
        %v3745 = vpop.f32.mrf.mxu0
        %v3746 = vpop.f32.mrf.mxu0
        %v3747 = vadd.f32 %v3538, %v3746
        %v3748 = vpop.f32.mrf.mxu0
        %3749 = vmatprep.mubr.bf16.mxu0 0
        %3750 = vmatmul.mubr.bf16.gmra.mxu0 %v3266
        %v3751 = vpop.f32.mrf.mxu0
        %v3752 = vadd.f32 %v3543, %v3751
        %v3753 = vpop.f32.mrf.mxu0
        %v3754 = vpop.f32.mrf.mxu0
        %v3755 = vadd.f32 %v3546, %v3754
        %v3756 = vpop.f32.mrf.mxu0
        %3757 = vmatprep.mubr.bf16.mxu0 0
        %3758 = vmatmul.mubr.bf16.gmra.mxu0 %v3267
        %v3759 = vpop.f32.mrf.mxu0
        %v3760 = vadd.f32 %v3551, %v3759
        %v3761 = vpop.f32.mrf.mxu0
        %v3762 = vpop.f32.mrf.mxu0
        %v3763 = vadd.f32 %v3554, %v3762
        %v3764 = vpop.f32.mrf.mxu0
        %3765 = vdwg.mxu0
        %v3766 = vld [vmem:[#allocation2 + $0x2] sm:$0xff]
        %v3767 = vld [vmem:[#allocation2 + $0xa] sm:$0xff]
        %v3768 = vld [vmem:[#allocation2 + $0x1a] sm:$0xff]
        %v3769 = vld [vmem:[#allocation2 + $0x22] sm:$0xff]
        %v3770 = vld [vmem:[#allocation2 + $0x32] sm:$0xff]
        %v3771 = vld [vmem:[#allocation2 + $0x3a] sm:$0xff]
        %v3772 = vld [vmem:[#allocation2 + $0x4a] sm:$0xff]
        %v3773 = vld [vmem:[#allocation2 + $0x52] sm:$0xff]
        %v3774 = vld [vmem:[#allocation2 + $0x62] sm:$0xff]
        %v3775 = vld [vmem:[#allocation2 + $0x6a] sm:$0xff]
        %v3776 = vld [vmem:[#allocation2 + $0x7a] sm:$0xff]
        %v3777 = vld [vmem:[#allocation2 + $0x82] sm:$0xff]
        %v3778 = vld [vmem:[#allocation2 + $0x92] sm:$0xff]
        %v3779 = vld [vmem:[#allocation2 + $0x9a] sm:$0xff]
        %v3780 = vld [vmem:[#allocation2 + $0xaa] sm:$0xff]
        %v3781 = vld [vmem:[#allocation2 + $0xb2] sm:$0xff]
        %v3782 = vld [vmem:[#allocation2 + $0xc2] sm:$0xff]
        %v3783 = vld [vmem:[#allocation2 + $0xca] sm:$0xff]
        %v3784 = vld [vmem:[#allocation2 + $0xda] sm:$0xff]
        %v3785 = vld [vmem:[#allocation2 + $0xe2] sm:$0xff]
        %v3786 = vld [vmem:[#allocation2 + $0xf2] sm:$0xff]
        %v3787 = vld [vmem:[#allocation2 + $0xfa] sm:$0xff]
        %v3788 = vld [vmem:[#allocation2 + $0x10a] sm:$0xff]
        %v3789 = vld [vmem:[#allocation2 + $0x112] sm:$0xff]
        %v3790 = vld [vmem:[#allocation2 + $0x122] sm:$0xff]
        %v3791 = vld [vmem:[#allocation2 + $0x12a] sm:$0xff]
        %v3792 = vld [vmem:[#allocation2 + $0x13a] sm:$0xff]
        %v3793 = vld [vmem:[#allocation2 + $0x142] sm:$0xff]
        %v3794 = vld [vmem:[#allocation2 + $0x152] sm:$0xff]
        %v3795 = vld [vmem:[#allocation2 + $0x15a] sm:$0xff]
        %v3796 = vld [vmem:[#allocation2 + $0x16a] sm:$0xff]
        %v3797 = vld [vmem:[#allocation2 + $0x172] sm:$0xff]
        %v3798 = vpack.c.bf16 %v3767, %v3766
        %v3799 = vpack.c.bf16 %v3769, %v3768
        %v3800 = vpack.c.bf16 %v3771, %v3770
        %v3801 = vpack.c.bf16 %v3773, %v3772
        %v3802 = vpack.c.bf16 %v3775, %v3774
        %v3803 = vpack.c.bf16 %v3777, %v3776
        %v3804 = vpack.c.bf16 %v3779, %v3778
        %v3805 = vpack.c.bf16 %v3781, %v3780
        %v3806 = vpack.c.bf16 %v3783, %v3782
        %v3807 = vpack.c.bf16 %v3785, %v3784
        %v3808 = vpack.c.bf16 %v3787, %v3786
        %v3809 = vpack.c.bf16 %v3789, %v3788
        %v3810 = vpack.c.bf16 %v3791, %v3790
        %v3811 = vpack.c.bf16 %v3793, %v3792
        %v3812 = vpack.c.bf16 %v3795, %v3794
        %v3813 = vpack.c.bf16 %v3797, %v3796
        %v3814 = vld [vmem:[%s824] sm:$0xf]
        %v3815 = vld [vmem:[%s824 + $0x4] sm:$0xf]
        %v3816 = vld [vmem:[%s824 + $0x8] sm:$0xf]
        %v3817 = vld [vmem:[%s824 + $0xc] sm:$0xf]
        %v3818 = vld [vmem:[%s824 + $0x10] sm:$0xf]
        %v3819 = vld [vmem:[%s824 + $0x14] sm:$0xf]
        %v3820 = vld [vmem:[%s824 + $0x18] sm:$0xf]
        %v3821 = vld [vmem:[%s824 + $0x1c] sm:$0xf]
        %v3822 = vld [vmem:[%s824 + $0x20] sm:$0xf]
        %v3823 = vld [vmem:[%s824 + $0x24] sm:$0xf]
        %v3824 = vld [vmem:[%s824 + $0x28] sm:$0xf]
        %v3825 = vld [vmem:[%s824 + $0x2c] sm:$0xf]
        %v3826 = vld [vmem:[%s824 + $0x30] sm:$0xf]
        %v3827 = vld [vmem:[%s824 + $0x34] sm:$0xf]
        %v3828 = vld [vmem:[%s824 + $0x38] sm:$0xf]
        %v3829 = vld [vmem:[%s824 + $0x3c] sm:$0xf]
        %v3846 = vunpack.c.l.b16 %v3814
        %v3847 = vunpack.c.l.b16 %v3815
        %v3848 = vunpack.c.l.b16 %v3816
        %v3849 = vunpack.c.l.b16 %v3817
        %v3850 = vunpack.c.l.b16 %v3818
        %v3851 = vunpack.c.l.b16 %v3819
        %v3852 = vunpack.c.l.b16 %v3820
        %v3853 = vunpack.c.l.b16 %v3821
        %v3854 = vunpack.c.l.b16 %v3822
        %v3855 = vunpack.c.l.b16 %v3823
        %v3856 = vunpack.c.l.b16 %v3824
        %v3857 = vunpack.c.l.b16 %v3825
        %v3858 = vunpack.c.l.b16 %v3826
        %v3859 = vunpack.c.l.b16 %v3827
        %v3860 = vunpack.c.l.b16 %v3828
        %v3861 = vunpack.c.l.b16 %v3829
        %v3862 = vpack.c.b16 %v3847, %v3846
        %v3863 = vpack.c.b16 %v3849, %v3848
        %v3864 = vpack.c.b16 %v3851, %v3850
        %v3865 = vpack.c.b16 %v3853, %v3852
        %v3866 = vpack.c.b16 %v3855, %v3854
        %v3867 = vpack.c.b16 %v3857, %v3856
        %v3868 = vpack.c.b16 %v3859, %v3858
        %v3869 = vpack.c.b16 %v3861, %v3860
        %3878 = vmatprep.subr.bf16.mxu0 0
        %3879 = vmatpush1.bf16.msra.mxu0 %v3869
        %3880 = vmatprep.subr.bf16.mxu0 0
        %3881 = vmatpush1.bf16.msra.mxu0 %v3868
        %3882 = vmatprep.subr.bf16.mxu0 0
        %3883 = vmatpush1.bf16.msra.mxu0 %v3867
        %3884 = vmatprep.subr.bf16.mxu0 0
        %3885 = vmatpush1.bf16.msra.mxu0 %v3866
        %3886 = vmatprep.subr.bf16.mxu0 0
        %3887 = vmatpush1.bf16.msra.mxu0 %v3865
        %3888 = vmatprep.subr.bf16.mxu0 0
        %3889 = vmatpush1.bf16.msra.mxu0 %v3864
        %3890 = vmatprep.subr.bf16.mxu0 0
        %3891 = vmatpush1.bf16.msra.mxu0 %v3863
        %3892 = vmatprep.subr.bf16.mxu0 0
        %3893 = vmatpush1.bf16.msra.mxu0 %v3862
        %3894 = vmatprep.subr.bf16.mxu0 0
        %3895 = vmatpush2.bf16.msra.mxu0 0
        %3896 = vmatprep.subr.bf16.mxu0 0
        %3897 = vmatpush2.bf16.msra.mxu0 0
        %3898 = vmatprep.subr.bf16.mxu0 0
        %3899 = vmatpush2.bf16.msra.mxu0 0
        %3900 = vmatprep.subr.bf16.mxu0 0
        %3901 = vmatpush2.bf16.msra.mxu0 0
        %3902 = vmatprep.subr.bf16.mxu0 0
        %3903 = vmatpush2.bf16.msra.mxu0 0
        %3904 = vmatprep.subr.bf16.mxu0 0
        %3905 = vmatpush2.bf16.msra.mxu0 0
        %3906 = vmatprep.subr.bf16.mxu0 0
        %3907 = vmatpush2.bf16.msra.mxu0 0
        %3908 = vmatprep.subr.bf16.mxu0 0
        %3909 = vmatpush2.bf16.msra.mxu0 0
        %3910 = vmatprep.mubr.bf16.mxu0 0
        %3911 = vmatmul.mubr.bf16.gmra.mxu0 %v3798
        %v3912 = vpop.f32.mrf.mxu0
        %v3913 = vadd.f32 0.0, %v3912
        %v3914 = vpop.f32.mrf.mxu0
        %v3915 = vpop.f32.mrf.mxu0
        %v3916 = vadd.f32 0.0, %v3915
        %v3917 = vpop.f32.mrf.mxu0
        %3918 = vmatprep.mubr.bf16.mxu0 0
        %3919 = vmatmul.mubr.bf16.gmra.mxu0 %v3799
        %v3920 = vpop.f32.mrf.mxu0
        %v3921 = vadd.f32 0.0, %v3920
        %v3922 = vpop.f32.mrf.mxu0
        %v3923 = vpop.f32.mrf.mxu0
        %v3924 = vadd.f32 0.0, %v3923
        %v3925 = vpop.f32.mrf.mxu0
        %3926 = vmatprep.mubr.bf16.mxu0 0
        %3927 = vmatmul.mubr.bf16.gmra.mxu0 %v3800
        %v3928 = vpop.f32.mrf.mxu0
        %v3929 = vadd.f32 0.0, %v3928
        %v3930 = vpop.f32.mrf.mxu0
        %v3931 = vpop.f32.mrf.mxu0
        %v3932 = vadd.f32 0.0, %v3931
        %v3933 = vpop.f32.mrf.mxu0
        %3934 = vmatprep.mubr.bf16.mxu0 0
        %3935 = vmatmul.mubr.bf16.gmra.mxu0 %v3801
        %v3936 = vpop.f32.mrf.mxu0
        %v3937 = vadd.f32 0.0, %v3936
        %v3938 = vpop.f32.mrf.mxu0
        %v3939 = vpop.f32.mrf.mxu0
        %v3940 = vadd.f32 0.0, %v3939
        %v3941 = vpop.f32.mrf.mxu0
        %3942 = vmatprep.mubr.bf16.mxu0 0
        %3943 = vmatmul.mubr.bf16.gmra.mxu0 %v3802
        %v3944 = vpop.f32.mrf.mxu0
        %v3945 = vadd.f32 0.0, %v3944
        %v3946 = vpop.f32.mrf.mxu0
        %v3947 = vpop.f32.mrf.mxu0
        %v3948 = vadd.f32 0.0, %v3947
        %v3949 = vpop.f32.mrf.mxu0
        %3950 = vmatprep.mubr.bf16.mxu0 0
        %3951 = vmatmul.mubr.bf16.gmra.mxu0 %v3803
        %v3952 = vpop.f32.mrf.mxu0
        %v3953 = vadd.f32 0.0, %v3952
        %v3954 = vpop.f32.mrf.mxu0
        %v3955 = vpop.f32.mrf.mxu0
        %v3956 = vadd.f32 0.0, %v3955
        %v3957 = vpop.f32.mrf.mxu0
        %3958 = vmatprep.mubr.bf16.mxu0 0
        %3959 = vmatmul.mubr.bf16.gmra.mxu0 %v3804
        %v3960 = vpop.f32.mrf.mxu0
        %v3961 = vadd.f32 0.0, %v3960
        %v3962 = vpop.f32.mrf.mxu0
        %v3963 = vpop.f32.mrf.mxu0
        %v3964 = vadd.f32 0.0, %v3963
        %v3965 = vpop.f32.mrf.mxu0
        %3966 = vmatprep.mubr.bf16.mxu0 0
        %3967 = vmatmul.mubr.bf16.gmra.mxu0 %v3805
        %v3968 = vpop.f32.mrf.mxu0
        %v3969 = vadd.f32 0.0, %v3968
        %v3970 = vpop.f32.mrf.mxu0
        %v3971 = vpop.f32.mrf.mxu0
        %v3972 = vadd.f32 0.0, %v3971
        %v3973 = vpop.f32.mrf.mxu0
        %3974 = vmatprep.mubr.bf16.mxu0 0
        %3975 = vmatmul.mubr.bf16.gmra.mxu0 %v3806
        %v3976 = vpop.f32.mrf.mxu0
        %v3977 = vadd.f32 0.0, %v3976
        %v3978 = vpop.f32.mrf.mxu0
        %v3979 = vpop.f32.mrf.mxu0
        %v3980 = vadd.f32 0.0, %v3979
        %v3981 = vpop.f32.mrf.mxu0
        %3982 = vmatprep.mubr.bf16.mxu0 0
        %3983 = vmatmul.mubr.bf16.gmra.mxu0 %v3807
        %v3984 = vpop.f32.mrf.mxu0
        %v3985 = vadd.f32 0.0, %v3984
        %v3986 = vpop.f32.mrf.mxu0
        %v3987 = vpop.f32.mrf.mxu0
        %v3988 = vadd.f32 0.0, %v3987
        %v3989 = vpop.f32.mrf.mxu0
        %3990 = vmatprep.mubr.bf16.mxu0 0
        %3991 = vmatmul.mubr.bf16.gmra.mxu0 %v3808
        %v3992 = vpop.f32.mrf.mxu0
        %v3993 = vadd.f32 0.0, %v3992
        %v3994 = vpop.f32.mrf.mxu0
        %v3995 = vpop.f32.mrf.mxu0
        %v3996 = vadd.f32 0.0, %v3995
        %v3997 = vpop.f32.mrf.mxu0
        %3998 = vmatprep.mubr.bf16.mxu0 0
        %3999 = vmatmul.mubr.bf16.gmra.mxu0 %v3809
        %v4000 = vpop.f32.mrf.mxu0
        %v4001 = vadd.f32 0.0, %v4000
        %v4002 = vpop.f32.mrf.mxu0
        %v4003 = vpop.f32.mrf.mxu0
        %v4004 = vadd.f32 0.0, %v4003
        %v4005 = vpop.f32.mrf.mxu0
        %4006 = vmatprep.mubr.bf16.mxu0 0
        %4007 = vmatmul.mubr.bf16.gmra.mxu0 %v3810
        %v4008 = vpop.f32.mrf.mxu0
        %v4009 = vadd.f32 0.0, %v4008
        %v4010 = vpop.f32.mrf.mxu0
        %v4011 = vpop.f32.mrf.mxu0
        %v4012 = vadd.f32 0.0, %v4011
        %v4013 = vpop.f32.mrf.mxu0
        %4014 = vmatprep.mubr.bf16.mxu0 0
        %4015 = vmatmul.mubr.bf16.gmra.mxu0 %v3811
        %v4016 = vpop.f32.mrf.mxu0
        %v4017 = vadd.f32 0.0, %v4016
        %v4018 = vpop.f32.mrf.mxu0
        %v4019 = vpop.f32.mrf.mxu0
        %v4020 = vadd.f32 0.0, %v4019
        %v4021 = vpop.f32.mrf.mxu0
        %4022 = vmatprep.mubr.bf16.mxu0 0
        %4023 = vmatmul.mubr.bf16.gmra.mxu0 %v3812
        %v4024 = vpop.f32.mrf.mxu0
        %v4025 = vadd.f32 0.0, %v4024
        %v4026 = vpop.f32.mrf.mxu0
        %v4027 = vpop.f32.mrf.mxu0
        %v4028 = vadd.f32 0.0, %v4027
        %v4029 = vpop.f32.mrf.mxu0
        %4030 = vmatprep.mubr.bf16.mxu0 0
        %4031 = vmatmul.mubr.bf16.gmra.mxu0 %v3813
        %v4032 = vpop.f32.mrf.mxu0
        %v4033 = vadd.f32 0.0, %v4032
        %v4034 = vpop.f32.mrf.mxu0
        %v4035 = vpop.f32.mrf.mxu0
        %v4036 = vadd.f32 0.0, %v4035
        %v4037 = vpop.f32.mrf.mxu0
        %4038 = vdwg.mxu0
        %v4039 = vadd.f32 %v3640, %v3913
        %v4040 = vadd.f32 %v3643, %v3916
        %v4041 = vadd.f32 %v3648, %v3921
        %v4042 = vadd.f32 %v3651, %v3924
        %v4043 = vadd.f32 %v3656, %v3929
        %v4044 = vadd.f32 %v3659, %v3932
        %v4045 = vadd.f32 %v3664, %v3937
        %v4046 = vadd.f32 %v3667, %v3940
        %v4047 = vadd.f32 %v3672, %v3945
        %v4048 = vadd.f32 %v3675, %v3948
        %v4049 = vadd.f32 %v3680, %v3953
        %v4050 = vadd.f32 %v3683, %v3956
        %v4051 = vadd.f32 %v3688, %v3961
        %v4052 = vadd.f32 %v3691, %v3964
        %v4053 = vadd.f32 %v3696, %v3969
        %v4054 = vadd.f32 %v3699, %v3972
        %v4055 = vadd.f32 %v3704, %v3977
        %v4056 = vadd.f32 %v3707, %v3980
        %v4057 = vadd.f32 %v3712, %v3985
        %v4058 = vadd.f32 %v3715, %v3988
        %v4059 = vadd.f32 %v3720, %v3993
        %v4060 = vadd.f32 %v3723, %v3996
        %v4061 = vadd.f32 %v3728, %v4001
        %v4062 = vadd.f32 %v3731, %v4004
        %v4063 = vadd.f32 %v3736, %v4009
        %v4064 = vadd.f32 %v3739, %v4012
        %v4065 = vadd.f32 %v3744, %v4017
        %v4066 = vadd.f32 %v3747, %v4020
        %v4067 = vadd.f32 %v3752, %v4025
        %v4068 = vadd.f32 %v3755, %v4028
        %v4069 = vadd.f32 %v3760, %v4033
        %v4070 = vadd.f32 %v3763, %v4036
        %v4071 = vld [vmem:[%s3187] sm:$0xff]
        %v4072 = vld [vmem:[%s3187 + $0x8] sm:$0xff]
        %v4073 = vld [vmem:[%s3187 + $0x18] sm:$0xff]
        %v4074 = vld [vmem:[%s3187 + $0x20] sm:$0xff]
        %v4075 = vld [vmem:[%s3187 + $0x30] sm:$0xff]
        %v4076 = vld [vmem:[%s3187 + $0x38] sm:$0xff]
        %v4077 = vld [vmem:[%s3187 + $0x48] sm:$0xff]
        %v4078 = vld [vmem:[%s3187 + $0x50] sm:$0xff]
        %v4079 = vld [vmem:[%s3187 + $0x60] sm:$0xff]
        %v4080 = vld [vmem:[%s3187 + $0x68] sm:$0xff]
        %v4081 = vld [vmem:[%s3187 + $0x78] sm:$0xff]
        %v4082 = vld [vmem:[%s3187 + $0x80] sm:$0xff]
        %v4083 = vld [vmem:[%s3187 + $0x90] sm:$0xff]
        %v4084 = vld [vmem:[%s3187 + $0x98] sm:$0xff]
        %v4085 = vld [vmem:[%s3187 + $0xa8] sm:$0xff]
        %v4086 = vld [vmem:[%s3187 + $0xb0] sm:$0xff]
        %v4087 = vld [vmem:[%s3187 + $0xc0] sm:$0xff]
        %v4088 = vld [vmem:[%s3187 + $0xc8] sm:$0xff]
        %v4089 = vld [vmem:[%s3187 + $0xd8] sm:$0xff]
        %v4090 = vld [vmem:[%s3187 + $0xe0] sm:$0xff]
        %v4091 = vld [vmem:[%s3187 + $0xf0] sm:$0xff]
        %v4092 = vld [vmem:[%s3187 + $0xf8] sm:$0xff]
        %v4093 = vld [vmem:[%s3187 + $0x108] sm:$0xff]
        %v4094 = vld [vmem:[%s3187 + $0x110] sm:$0xff]
        %v4095 = vld [vmem:[%s3187 + $0x120] sm:$0xff]
        %v4096 = vld [vmem:[%s3187 + $0x128] sm:$0xff]
        %v4097 = vld [vmem:[%s3187 + $0x138] sm:$0xff]
        %v4098 = vld [vmem:[%s3187 + $0x140] sm:$0xff]
        %v4099 = vld [vmem:[%s3187 + $0x150] sm:$0xff]
        %v4100 = vld [vmem:[%s3187 + $0x158] sm:$0xff]
        %v4101 = vld [vmem:[%s3187 + $0x168] sm:$0xff]
        %v4102 = vld [vmem:[%s3187 + $0x170] sm:$0xff]
        %v4103 = vpack.c.bf16 %v4072, %v4071
        %v4104 = vpack.c.bf16 %v4074, %v4073
        %v4105 = vpack.c.bf16 %v4076, %v4075
        %v4106 = vpack.c.bf16 %v4078, %v4077
        %v4107 = vpack.c.bf16 %v4080, %v4079
        %v4108 = vpack.c.bf16 %v4082, %v4081
        %v4109 = vpack.c.bf16 %v4084, %v4083
        %v4110 = vpack.c.bf16 %v4086, %v4085
        %v4111 = vpack.c.bf16 %v4088, %v4087
        %v4112 = vpack.c.bf16 %v4090, %v4089
        %v4113 = vpack.c.bf16 %v4092, %v4091
        %v4114 = vpack.c.bf16 %v4094, %v4093
        %v4115 = vpack.c.bf16 %v4096, %v4095
        %v4116 = vpack.c.bf16 %v4098, %v4097
        %v4117 = vpack.c.bf16 %v4100, %v4099
        %v4118 = vpack.c.bf16 %v4102, %v4101
        %v4119 = vld [vmem:[%s1131] sm:$0xf]
        %v4120 = vld [vmem:[%s1131 + $0x4] sm:$0xf]
        %v4121 = vld [vmem:[%s1131 + $0x8] sm:$0xf]
        %v4122 = vld [vmem:[%s1131 + $0xc] sm:$0xf]
        %v4123 = vld [vmem:[%s1131 + $0x10] sm:$0xf]
        %v4124 = vld [vmem:[%s1131 + $0x14] sm:$0xf]
        %v4125 = vld [vmem:[%s1131 + $0x18] sm:$0xf]
        %v4126 = vld [vmem:[%s1131 + $0x1c] sm:$0xf]
        %v4127 = vld [vmem:[%s1131 + $0x20] sm:$0xf]
        %v4128 = vld [vmem:[%s1131 + $0x24] sm:$0xf]
        %v4129 = vld [vmem:[%s1131 + $0x28] sm:$0xf]
        %v4130 = vld [vmem:[%s1131 + $0x2c] sm:$0xf]
        %v4131 = vld [vmem:[%s1131 + $0x30] sm:$0xf]
        %v4132 = vld [vmem:[%s1131 + $0x34] sm:$0xf]
        %v4133 = vld [vmem:[%s1131 + $0x38] sm:$0xf]
        %v4134 = vld [vmem:[%s1131 + $0x3c] sm:$0xf]
        %v4151 = vunpack.c.l.b16 %v4119
        %v4152 = vunpack.c.l.b16 %v4120
        %v4153 = vunpack.c.l.b16 %v4121
        %v4154 = vunpack.c.l.b16 %v4122
        %v4155 = vunpack.c.l.b16 %v4123
        %v4156 = vunpack.c.l.b16 %v4124
        %v4157 = vunpack.c.l.b16 %v4125
        %v4158 = vunpack.c.l.b16 %v4126
        %v4159 = vunpack.c.l.b16 %v4127
        %v4160 = vunpack.c.l.b16 %v4128
        %v4161 = vunpack.c.l.b16 %v4129
        %v4162 = vunpack.c.l.b16 %v4130
        %v4163 = vunpack.c.l.b16 %v4131
        %v4164 = vunpack.c.l.b16 %v4132
        %v4165 = vunpack.c.l.b16 %v4133
        %v4166 = vunpack.c.l.b16 %v4134
        %v4167 = vpack.c.b16 %v4152, %v4151
        %v4168 = vpack.c.b16 %v4154, %v4153
        %v4169 = vpack.c.b16 %v4156, %v4155
        %v4170 = vpack.c.b16 %v4158, %v4157
        %v4171 = vpack.c.b16 %v4160, %v4159
        %v4172 = vpack.c.b16 %v4162, %v4161
        %v4173 = vpack.c.b16 %v4164, %v4163
        %v4174 = vpack.c.b16 %v4166, %v4165
        %4183 = vmatprep.subr.bf16.mxu0 0
        %4184 = vmatpush1.bf16.msra.mxu0 %v4174
        %4185 = vmatprep.subr.bf16.mxu0 0
        %4186 = vmatpush1.bf16.msra.mxu0 %v4173
        %4187 = vmatprep.subr.bf16.mxu0 0
        %4188 = vmatpush1.bf16.msra.mxu0 %v4172
        %4189 = vmatprep.subr.bf16.mxu0 0
        %4190 = vmatpush1.bf16.msra.mxu0 %v4171
        %4191 = vmatprep.subr.bf16.mxu0 0
        %4192 = vmatpush1.bf16.msra.mxu0 %v4170
        %4193 = vmatprep.subr.bf16.mxu0 0
        %4194 = vmatpush1.bf16.msra.mxu0 %v4169
        %4195 = vmatprep.subr.bf16.mxu0 0
        %4196 = vmatpush1.bf16.msra.mxu0 %v4168
        %4197 = vmatprep.subr.bf16.mxu0 0
        %4198 = vmatpush1.bf16.msra.mxu0 %v4167
        %4199 = vmatprep.subr.bf16.mxu0 0
        %4200 = vmatpush2.bf16.msra.mxu0 0
        %4201 = vmatprep.subr.bf16.mxu0 0
        %4202 = vmatpush2.bf16.msra.mxu0 0
        %4203 = vmatprep.subr.bf16.mxu0 0
        %4204 = vmatpush2.bf16.msra.mxu0 0
        %4205 = vmatprep.subr.bf16.mxu0 0
        %4206 = vmatpush2.bf16.msra.mxu0 0
        %4207 = vmatprep.subr.bf16.mxu0 0
        %4208 = vmatpush2.bf16.msra.mxu0 0
        %4209 = vmatprep.subr.bf16.mxu0 0
        %4210 = vmatpush2.bf16.msra.mxu0 0
        %4211 = vmatprep.subr.bf16.mxu0 0
        %4212 = vmatpush2.bf16.msra.mxu0 0
        %4213 = vmatprep.subr.bf16.mxu0 0
        %4214 = vmatpush2.bf16.msra.mxu0 0
        %4215 = vmatprep.mubr.bf16.mxu0 0
        %4216 = vmatmul.mubr.bf16.gmra.mxu0 %v4103
        %v4217 = vpop.f32.mrf.mxu0
        %v4218 = vadd.f32 0.0, %v4217
        %v4219 = vpop.f32.mrf.mxu0
        %v4220 = vpop.f32.mrf.mxu0
        %v4221 = vadd.f32 0.0, %v4220
        %v4222 = vpop.f32.mrf.mxu0
        %4223 = vmatprep.mubr.bf16.mxu0 0
        %4224 = vmatmul.mubr.bf16.gmra.mxu0 %v4104
        %v4225 = vpop.f32.mrf.mxu0
        %v4226 = vadd.f32 0.0, %v4225
        %v4227 = vpop.f32.mrf.mxu0
        %v4228 = vpop.f32.mrf.mxu0
        %v4229 = vadd.f32 0.0, %v4228
        %v4230 = vpop.f32.mrf.mxu0
        %4231 = vmatprep.mubr.bf16.mxu0 0
        %4232 = vmatmul.mubr.bf16.gmra.mxu0 %v4105
        %v4233 = vpop.f32.mrf.mxu0
        %v4234 = vadd.f32 0.0, %v4233
        %v4235 = vpop.f32.mrf.mxu0
        %v4236 = vpop.f32.mrf.mxu0
        %v4237 = vadd.f32 0.0, %v4236
        %v4238 = vpop.f32.mrf.mxu0
        %4239 = vmatprep.mubr.bf16.mxu0 0
        %4240 = vmatmul.mubr.bf16.gmra.mxu0 %v4106
        %v4241 = vpop.f32.mrf.mxu0
        %v4242 = vadd.f32 0.0, %v4241
        %v4243 = vpop.f32.mrf.mxu0
        %v4244 = vpop.f32.mrf.mxu0
        %v4245 = vadd.f32 0.0, %v4244
        %v4246 = vpop.f32.mrf.mxu0
        %4247 = vmatprep.mubr.bf16.mxu0 0
        %4248 = vmatmul.mubr.bf16.gmra.mxu0 %v4107
        %v4249 = vpop.f32.mrf.mxu0
        %v4250 = vadd.f32 0.0, %v4249
        %v4251 = vpop.f32.mrf.mxu0
        %v4252 = vpop.f32.mrf.mxu0
        %v4253 = vadd.f32 0.0, %v4252
        %v4254 = vpop.f32.mrf.mxu0
        %4255 = vmatprep.mubr.bf16.mxu0 0
        %4256 = vmatmul.mubr.bf16.gmra.mxu0 %v4108
        %v4257 = vpop.f32.mrf.mxu0
        %v4258 = vadd.f32 0.0, %v4257
        %v4259 = vpop.f32.mrf.mxu0
        %v4260 = vpop.f32.mrf.mxu0
        %v4261 = vadd.f32 0.0, %v4260
        %v4262 = vpop.f32.mrf.mxu0
        %4263 = vmatprep.mubr.bf16.mxu0 0
        %4264 = vmatmul.mubr.bf16.gmra.mxu0 %v4109
        %v4265 = vpop.f32.mrf.mxu0
        %v4266 = vadd.f32 0.0, %v4265
        %v4267 = vpop.f32.mrf.mxu0
        %v4268 = vpop.f32.mrf.mxu0
        %v4269 = vadd.f32 0.0, %v4268
        %v4270 = vpop.f32.mrf.mxu0
        %4271 = vmatprep.mubr.bf16.mxu0 0
        %4272 = vmatmul.mubr.bf16.gmra.mxu0 %v4110
        %v4273 = vpop.f32.mrf.mxu0
        %v4274 = vadd.f32 0.0, %v4273
        %v4275 = vpop.f32.mrf.mxu0
        %v4276 = vpop.f32.mrf.mxu0
        %v4277 = vadd.f32 0.0, %v4276
        %v4278 = vpop.f32.mrf.mxu0
        %4279 = vmatprep.mubr.bf16.mxu0 0
        %4280 = vmatmul.mubr.bf16.gmra.mxu0 %v4111
        %v4281 = vpop.f32.mrf.mxu0
        %v4282 = vadd.f32 0.0, %v4281
        %v4283 = vpop.f32.mrf.mxu0
        %v4284 = vpop.f32.mrf.mxu0
        %v4285 = vadd.f32 0.0, %v4284
        %v4286 = vpop.f32.mrf.mxu0
        %4287 = vmatprep.mubr.bf16.mxu0 0
        %4288 = vmatmul.mubr.bf16.gmra.mxu0 %v4112
        %v4289 = vpop.f32.mrf.mxu0
        %v4290 = vadd.f32 0.0, %v4289
        %v4291 = vpop.f32.mrf.mxu0
        %v4292 = vpop.f32.mrf.mxu0
        %v4293 = vadd.f32 0.0, %v4292
        %v4294 = vpop.f32.mrf.mxu0
        %4295 = vmatprep.mubr.bf16.mxu0 0
        %4296 = vmatmul.mubr.bf16.gmra.mxu0 %v4113
        %v4297 = vpop.f32.mrf.mxu0
        %v4298 = vadd.f32 0.0, %v4297
        %v4299 = vpop.f32.mrf.mxu0
        %v4300 = vpop.f32.mrf.mxu0
        %v4301 = vadd.f32 0.0, %v4300
        %v4302 = vpop.f32.mrf.mxu0
        %4303 = vmatprep.mubr.bf16.mxu0 0
        %4304 = vmatmul.mubr.bf16.gmra.mxu0 %v4114
        %v4305 = vpop.f32.mrf.mxu0
        %v4306 = vadd.f32 0.0, %v4305
        %v4307 = vpop.f32.mrf.mxu0
        %v4308 = vpop.f32.mrf.mxu0
        %v4309 = vadd.f32 0.0, %v4308
        %v4310 = vpop.f32.mrf.mxu0
        %4311 = vmatprep.mubr.bf16.mxu0 0
        %4312 = vmatmul.mubr.bf16.gmra.mxu0 %v4115
        %v4313 = vpop.f32.mrf.mxu0
        %v4314 = vadd.f32 0.0, %v4313
        %v4315 = vpop.f32.mrf.mxu0
        %v4316 = vpop.f32.mrf.mxu0
        %v4317 = vadd.f32 0.0, %v4316
        %v4318 = vpop.f32.mrf.mxu0
        %4319 = vmatprep.mubr.bf16.mxu0 0
        %4320 = vmatmul.mubr.bf16.gmra.mxu0 %v4116
        %v4321 = vpop.f32.mrf.mxu0
        %v4322 = vadd.f32 0.0, %v4321
        %v4323 = vpop.f32.mrf.mxu0
        %v4324 = vpop.f32.mrf.mxu0
        %v4325 = vadd.f32 0.0, %v4324
        %v4326 = vpop.f32.mrf.mxu0
        %4327 = vmatprep.mubr.bf16.mxu0 0
        %4328 = vmatmul.mubr.bf16.gmra.mxu0 %v4117
        %v4329 = vpop.f32.mrf.mxu0
        %v4330 = vadd.f32 0.0, %v4329
        %v4331 = vpop.f32.mrf.mxu0
        %v4332 = vpop.f32.mrf.mxu0
        %v4333 = vadd.f32 0.0, %v4332
        %v4334 = vpop.f32.mrf.mxu0
        %4335 = vmatprep.mubr.bf16.mxu0 0
        %4336 = vmatmul.mubr.bf16.gmra.mxu0 %v4118
        %v4337 = vpop.f32.mrf.mxu0
        %v4338 = vadd.f32 0.0, %v4337
        %v4339 = vpop.f32.mrf.mxu0
        %v4340 = vpop.f32.mrf.mxu0
        %v4341 = vadd.f32 0.0, %v4340
        %v4342 = vpop.f32.mrf.mxu0
        %4343 = vdwg.mxu0
        %v4344 = vadd.f32 %v4039, %v4218
        %v4345 = vadd.f32 %v4040, %v4221
        %v4346 = vadd.f32 %v4041, %v4226
        %v4347 = vadd.f32 %v4042, %v4229
        %v4348 = vadd.f32 %v4043, %v4234
        %v4349 = vadd.f32 %v4044, %v4237
        %v4350 = vadd.f32 %v4045, %v4242
        %v4351 = vadd.f32 %v4046, %v4245
        %v4352 = vadd.f32 %v4047, %v4250
        %v4353 = vadd.f32 %v4048, %v4253
        %v4354 = vadd.f32 %v4049, %v4258
        %v4355 = vadd.f32 %v4050, %v4261
        %v4356 = vadd.f32 %v4051, %v4266
        %v4357 = vadd.f32 %v4052, %v4269
        %v4358 = vadd.f32 %v4053, %v4274
        %v4359 = vadd.f32 %v4054, %v4277
        %v4360 = vadd.f32 %v4055, %v4282
        %v4361 = vadd.f32 %v4056, %v4285
        %v4362 = vadd.f32 %v4057, %v4290
        %v4363 = vadd.f32 %v4058, %v4293
        %v4364 = vadd.f32 %v4059, %v4298
        %v4365 = vadd.f32 %v4060, %v4301
        %v4366 = vadd.f32 %v4061, %v4306
        %v4367 = vadd.f32 %v4062, %v4309
        %v4368 = vadd.f32 %v4063, %v4314
        %v4369 = vadd.f32 %v4064, %v4317
        %v4370 = vadd.f32 %v4065, %v4322
        %v4371 = vadd.f32 %v4066, %v4325
        %v4372 = vadd.f32 %v4067, %v4330
        %v4373 = vadd.f32 %v4068, %v4333
        %v4374 = vadd.f32 %v4069, %v4338
        %v4375 = vadd.f32 %v4070, %v4341
        %v4376 = vld [vmem:[%s3187 + $0x1] sm:$0xff]
        %v4377 = vld [vmem:[%s3187 + $0x9] sm:$0xff]
        %v4378 = vld [vmem:[%s3187 + $0x19] sm:$0xff]
        %v4379 = vld [vmem:[%s3187 + $0x21] sm:$0xff]
        %v4380 = vld [vmem:[%s3187 + $0x31] sm:$0xff]
        %v4381 = vld [vmem:[%s3187 + $0x39] sm:$0xff]
        %v4382 = vld [vmem:[%s3187 + $0x49] sm:$0xff]
        %v4383 = vld [vmem:[%s3187 + $0x51] sm:$0xff]
        %v4384 = vld [vmem:[%s3187 + $0x61] sm:$0xff]
        %v4385 = vld [vmem:[%s3187 + $0x69] sm:$0xff]
        %v4386 = vld [vmem:[%s3187 + $0x79] sm:$0xff]
        %v4387 = vld [vmem:[%s3187 + $0x81] sm:$0xff]
        %v4388 = vld [vmem:[%s3187 + $0x91] sm:$0xff]
        %v4389 = vld [vmem:[%s3187 + $0x99] sm:$0xff]
        %v4390 = vld [vmem:[%s3187 + $0xa9] sm:$0xff]
        %v4391 = vld [vmem:[%s3187 + $0xb1] sm:$0xff]
        %v4392 = vld [vmem:[%s3187 + $0xc1] sm:$0xff]
        %v4393 = vld [vmem:[%s3187 + $0xc9] sm:$0xff]
        %v4394 = vld [vmem:[%s3187 + $0xd9] sm:$0xff]
        %v4395 = vld [vmem:[%s3187 + $0xe1] sm:$0xff]
        %v4396 = vld [vmem:[%s3187 + $0xf1] sm:$0xff]
        %v4397 = vld [vmem:[%s3187 + $0xf9] sm:$0xff]
        %v4398 = vld [vmem:[%s3187 + $0x109] sm:$0xff]
        %v4399 = vld [vmem:[%s3187 + $0x111] sm:$0xff]
        %v4400 = vld [vmem:[%s3187 + $0x121] sm:$0xff]
        %v4401 = vld [vmem:[%s3187 + $0x129] sm:$0xff]
        %v4402 = vld [vmem:[%s3187 + $0x139] sm:$0xff]
        %v4403 = vld [vmem:[%s3187 + $0x141] sm:$0xff]
        %v4404 = vld [vmem:[%s3187 + $0x151] sm:$0xff]
        %v4405 = vld [vmem:[%s3187 + $0x159] sm:$0xff]
        %v4406 = vld [vmem:[%s3187 + $0x169] sm:$0xff]
        %v4407 = vld [vmem:[%s3187 + $0x171] sm:$0xff]
        %v4408 = vpack.c.bf16 %v4377, %v4376
        %v4409 = vpack.c.bf16 %v4379, %v4378
        %v4410 = vpack.c.bf16 %v4381, %v4380
        %v4411 = vpack.c.bf16 %v4383, %v4382
        %v4412 = vpack.c.bf16 %v4385, %v4384
        %v4413 = vpack.c.bf16 %v4387, %v4386
        %v4414 = vpack.c.bf16 %v4389, %v4388
        %v4415 = vpack.c.bf16 %v4391, %v4390
        %v4416 = vpack.c.bf16 %v4393, %v4392
        %v4417 = vpack.c.bf16 %v4395, %v4394
        %v4418 = vpack.c.bf16 %v4397, %v4396
        %v4419 = vpack.c.bf16 %v4399, %v4398
        %v4420 = vpack.c.bf16 %v4401, %v4400
        %v4421 = vpack.c.bf16 %v4403, %v4402
        %v4422 = vpack.c.bf16 %v4405, %v4404
        %v4423 = vpack.c.bf16 %v4407, %v4406
        %v4424 = vld [vmem:[%s1437] sm:$0xf]
        %v4425 = vld [vmem:[%s1437 + $0x4] sm:$0xf]
        %v4426 = vld [vmem:[%s1437 + $0x8] sm:$0xf]
        %v4427 = vld [vmem:[%s1437 + $0xc] sm:$0xf]
        %v4428 = vld [vmem:[%s1437 + $0x10] sm:$0xf]
        %v4429 = vld [vmem:[%s1437 + $0x14] sm:$0xf]
        %v4430 = vld [vmem:[%s1437 + $0x18] sm:$0xf]
        %v4431 = vld [vmem:[%s1437 + $0x1c] sm:$0xf]
        %v4432 = vld [vmem:[%s1437 + $0x20] sm:$0xf]
        %v4433 = vld [vmem:[%s1437 + $0x24] sm:$0xf]
        %v4434 = vld [vmem:[%s1437 + $0x28] sm:$0xf]
        %v4435 = vld [vmem:[%s1437 + $0x2c] sm:$0xf]
        %v4436 = vld [vmem:[%s1437 + $0x30] sm:$0xf]
        %v4437 = vld [vmem:[%s1437 + $0x34] sm:$0xf]
        %v4438 = vld [vmem:[%s1437 + $0x38] sm:$0xf]
        %v4439 = vld [vmem:[%s1437 + $0x3c] sm:$0xf]
        %v4456 = vunpack.c.l.b16 %v4424
        %v4457 = vunpack.c.l.b16 %v4425
        %v4458 = vunpack.c.l.b16 %v4426
        %v4459 = vunpack.c.l.b16 %v4427
        %v4460 = vunpack.c.l.b16 %v4428
        %v4461 = vunpack.c.l.b16 %v4429
        %v4462 = vunpack.c.l.b16 %v4430
        %v4463 = vunpack.c.l.b16 %v4431
        %v4464 = vunpack.c.l.b16 %v4432
        %v4465 = vunpack.c.l.b16 %v4433
        %v4466 = vunpack.c.l.b16 %v4434
        %v4467 = vunpack.c.l.b16 %v4435
        %v4468 = vunpack.c.l.b16 %v4436
        %v4469 = vunpack.c.l.b16 %v4437
        %v4470 = vunpack.c.l.b16 %v4438
        %v4471 = vunpack.c.l.b16 %v4439
        %v4472 = vpack.c.b16 %v4457, %v4456
        %v4473 = vpack.c.b16 %v4459, %v4458
        %v4474 = vpack.c.b16 %v4461, %v4460
        %v4475 = vpack.c.b16 %v4463, %v4462
        %v4476 = vpack.c.b16 %v4465, %v4464
        %v4477 = vpack.c.b16 %v4467, %v4466
        %v4478 = vpack.c.b16 %v4469, %v4468
        %v4479 = vpack.c.b16 %v4471, %v4470
        %4488 = vmatprep.subr.bf16.mxu0 0
        %4489 = vmatpush1.bf16.msra.mxu0 %v4479
        %4490 = vmatprep.subr.bf16.mxu0 0
        %4491 = vmatpush1.bf16.msra.mxu0 %v4478
        %4492 = vmatprep.subr.bf16.mxu0 0
        %4493 = vmatpush1.bf16.msra.mxu0 %v4477
        %4494 = vmatprep.subr.bf16.mxu0 0
        %4495 = vmatpush1.bf16.msra.mxu0 %v4476
        %4496 = vmatprep.subr.bf16.mxu0 0
        %4497 = vmatpush1.bf16.msra.mxu0 %v4475
        %4498 = vmatprep.subr.bf16.mxu0 0
        %4499 = vmatpush1.bf16.msra.mxu0 %v4474
        %4500 = vmatprep.subr.bf16.mxu0 0
        %4501 = vmatpush1.bf16.msra.mxu0 %v4473
        %4502 = vmatprep.subr.bf16.mxu0 0
        %4503 = vmatpush1.bf16.msra.mxu0 %v4472
        %4504 = vmatprep.subr.bf16.mxu0 0
        %4505 = vmatpush2.bf16.msra.mxu0 0
        %4506 = vmatprep.subr.bf16.mxu0 0
        %4507 = vmatpush2.bf16.msra.mxu0 0
        %4508 = vmatprep.subr.bf16.mxu0 0
        %4509 = vmatpush2.bf16.msra.mxu0 0
        %4510 = vmatprep.subr.bf16.mxu0 0
        %4511 = vmatpush2.bf16.msra.mxu0 0
        %4512 = vmatprep.subr.bf16.mxu0 0
        %4513 = vmatpush2.bf16.msra.mxu0 0
        %4514 = vmatprep.subr.bf16.mxu0 0
        %4515 = vmatpush2.bf16.msra.mxu0 0
        %4516 = vmatprep.subr.bf16.mxu0 0
        %4517 = vmatpush2.bf16.msra.mxu0 0
        %4518 = vmatprep.subr.bf16.mxu0 0
        %4519 = vmatpush2.bf16.msra.mxu0 0
        %4520 = vmatprep.mubr.bf16.mxu0 0
        %4521 = vmatmul.mubr.bf16.gmra.mxu0 %v4408
        %v4522 = vpop.f32.mrf.mxu0
        %v4523 = vadd.f32 0.0, %v4522
        %v4524 = vpop.f32.mrf.mxu0
        %v4525 = vpop.f32.mrf.mxu0
        %v4526 = vadd.f32 0.0, %v4525
        %v4527 = vpop.f32.mrf.mxu0
        %4528 = vmatprep.mubr.bf16.mxu0 0
        %4529 = vmatmul.mubr.bf16.gmra.mxu0 %v4409
        %v4530 = vpop.f32.mrf.mxu0
        %v4531 = vadd.f32 0.0, %v4530
        %v4532 = vpop.f32.mrf.mxu0
        %v4533 = vpop.f32.mrf.mxu0
        %v4534 = vadd.f32 0.0, %v4533
        %v4535 = vpop.f32.mrf.mxu0
        %4536 = vmatprep.mubr.bf16.mxu0 0
        %4537 = vmatmul.mubr.bf16.gmra.mxu0 %v4410
        %v4538 = vpop.f32.mrf.mxu0
        %v4539 = vadd.f32 0.0, %v4538
        %v4540 = vpop.f32.mrf.mxu0
        %v4541 = vpop.f32.mrf.mxu0
        %v4542 = vadd.f32 0.0, %v4541
        %v4543 = vpop.f32.mrf.mxu0
        %4544 = vmatprep.mubr.bf16.mxu0 0
        %4545 = vmatmul.mubr.bf16.gmra.mxu0 %v4411
        %v4546 = vpop.f32.mrf.mxu0
        %v4547 = vadd.f32 0.0, %v4546
        %v4548 = vpop.f32.mrf.mxu0
        %v4549 = vpop.f32.mrf.mxu0
        %v4550 = vadd.f32 0.0, %v4549
        %v4551 = vpop.f32.mrf.mxu0
        %4552 = vmatprep.mubr.bf16.mxu0 0
        %4553 = vmatmul.mubr.bf16.gmra.mxu0 %v4412
        %v4554 = vpop.f32.mrf.mxu0
        %v4555 = vadd.f32 0.0, %v4554
        %v4556 = vpop.f32.mrf.mxu0
        %v4557 = vpop.f32.mrf.mxu0
        %v4558 = vadd.f32 0.0, %v4557
        %v4559 = vpop.f32.mrf.mxu0
        %4560 = vmatprep.mubr.bf16.mxu0 0
        %4561 = vmatmul.mubr.bf16.gmra.mxu0 %v4413
        %v4562 = vpop.f32.mrf.mxu0
        %v4563 = vadd.f32 0.0, %v4562
        %v4564 = vpop.f32.mrf.mxu0
        %v4565 = vpop.f32.mrf.mxu0
        %v4566 = vadd.f32 0.0, %v4565
        %v4567 = vpop.f32.mrf.mxu0
        %4568 = vmatprep.mubr.bf16.mxu0 0
        %4569 = vmatmul.mubr.bf16.gmra.mxu0 %v4414
        %v4570 = vpop.f32.mrf.mxu0
        %v4571 = vadd.f32 0.0, %v4570
        %v4572 = vpop.f32.mrf.mxu0
        %v4573 = vpop.f32.mrf.mxu0
        %v4574 = vadd.f32 0.0, %v4573
        %v4575 = vpop.f32.mrf.mxu0
        %4576 = vmatprep.mubr.bf16.mxu0 0
        %4577 = vmatmul.mubr.bf16.gmra.mxu0 %v4415
        %v4578 = vpop.f32.mrf.mxu0
        %v4579 = vadd.f32 0.0, %v4578
        %v4580 = vpop.f32.mrf.mxu0
        %v4581 = vpop.f32.mrf.mxu0
        %v4582 = vadd.f32 0.0, %v4581
        %v4583 = vpop.f32.mrf.mxu0
        %4584 = vmatprep.mubr.bf16.mxu0 0
        %4585 = vmatmul.mubr.bf16.gmra.mxu0 %v4416
        %v4586 = vpop.f32.mrf.mxu0
        %v4587 = vadd.f32 0.0, %v4586
        %v4588 = vpop.f32.mrf.mxu0
        %v4589 = vpop.f32.mrf.mxu0
        %v4590 = vadd.f32 0.0, %v4589
        %v4591 = vpop.f32.mrf.mxu0
        %4592 = vmatprep.mubr.bf16.mxu0 0
        %4593 = vmatmul.mubr.bf16.gmra.mxu0 %v4417
        %v4594 = vpop.f32.mrf.mxu0
        %v4595 = vadd.f32 0.0, %v4594
        %v4596 = vpop.f32.mrf.mxu0
        %v4597 = vpop.f32.mrf.mxu0
        %v4598 = vadd.f32 0.0, %v4597
        %v4599 = vpop.f32.mrf.mxu0
        %4600 = vmatprep.mubr.bf16.mxu0 0
        %4601 = vmatmul.mubr.bf16.gmra.mxu0 %v4418
        %v4602 = vpop.f32.mrf.mxu0
        %v4603 = vadd.f32 0.0, %v4602
        %v4604 = vpop.f32.mrf.mxu0
        %v4605 = vpop.f32.mrf.mxu0
        %v4606 = vadd.f32 0.0, %v4605
        %v4607 = vpop.f32.mrf.mxu0
        %4608 = vmatprep.mubr.bf16.mxu0 0
        %4609 = vmatmul.mubr.bf16.gmra.mxu0 %v4419
        %v4610 = vpop.f32.mrf.mxu0
        %v4611 = vadd.f32 0.0, %v4610
        %v4612 = vpop.f32.mrf.mxu0
        %v4613 = vpop.f32.mrf.mxu0
        %v4614 = vadd.f32 0.0, %v4613
        %v4615 = vpop.f32.mrf.mxu0
        %4616 = vmatprep.mubr.bf16.mxu0 0
        %4617 = vmatmul.mubr.bf16.gmra.mxu0 %v4420
        %v4618 = vpop.f32.mrf.mxu0
        %v4619 = vadd.f32 0.0, %v4618
        %v4620 = vpop.f32.mrf.mxu0
        %v4621 = vpop.f32.mrf.mxu0
        %v4622 = vadd.f32 0.0, %v4621
        %v4623 = vpop.f32.mrf.mxu0
        %4624 = vmatprep.mubr.bf16.mxu0 0
        %4625 = vmatmul.mubr.bf16.gmra.mxu0 %v4421
        %v4626 = vpop.f32.mrf.mxu0
        %v4627 = vadd.f32 0.0, %v4626
        %v4628 = vpop.f32.mrf.mxu0
        %v4629 = vpop.f32.mrf.mxu0
        %v4630 = vadd.f32 0.0, %v4629
        %v4631 = vpop.f32.mrf.mxu0
        %4632 = vmatprep.mubr.bf16.mxu0 0
        %4633 = vmatmul.mubr.bf16.gmra.mxu0 %v4422
        %v4634 = vpop.f32.mrf.mxu0
        %v4635 = vadd.f32 0.0, %v4634
        %v4636 = vpop.f32.mrf.mxu0
        %v4637 = vpop.f32.mrf.mxu0
        %v4638 = vadd.f32 0.0, %v4637
        %v4639 = vpop.f32.mrf.mxu0
        %4640 = vmatprep.mubr.bf16.mxu0 0
        %4641 = vmatmul.mubr.bf16.gmra.mxu0 %v4423
        %v4642 = vpop.f32.mrf.mxu0
        %v4643 = vadd.f32 0.0, %v4642
        %v4644 = vpop.f32.mrf.mxu0
        %v4645 = vpop.f32.mrf.mxu0
        %v4646 = vadd.f32 0.0, %v4645
        %v4647 = vpop.f32.mrf.mxu0
        %4648 = vdwg.mxu0
        %v4649 = vadd.f32 %v4344, %v4523
        %v4650 = vadd.f32 %v4345, %v4526
        %v4651 = vadd.f32 %v4346, %v4531
        %v4652 = vadd.f32 %v4347, %v4534
        %v4653 = vadd.f32 %v4348, %v4539
        %v4654 = vadd.f32 %v4349, %v4542
        %v4655 = vadd.f32 %v4350, %v4547
        %v4656 = vadd.f32 %v4351, %v4550
        %v4657 = vadd.f32 %v4352, %v4555
        %v4658 = vadd.f32 %v4353, %v4558
        %v4659 = vadd.f32 %v4354, %v4563
        %v4660 = vadd.f32 %v4355, %v4566
        %v4661 = vadd.f32 %v4356, %v4571
        %v4662 = vadd.f32 %v4357, %v4574
        %v4663 = vadd.f32 %v4358, %v4579
        %v4664 = vadd.f32 %v4359, %v4582
        %v4665 = vadd.f32 %v4360, %v4587
        %v4666 = vadd.f32 %v4361, %v4590
        %v4667 = vadd.f32 %v4362, %v4595
        %v4668 = vadd.f32 %v4363, %v4598
        %v4669 = vadd.f32 %v4364, %v4603
        %v4670 = vadd.f32 %v4365, %v4606
        %v4671 = vadd.f32 %v4366, %v4611
        %v4672 = vadd.f32 %v4367, %v4614
        %v4673 = vadd.f32 %v4368, %v4619
        %v4674 = vadd.f32 %v4369, %v4622
        %v4675 = vadd.f32 %v4370, %v4627
        %v4676 = vadd.f32 %v4371, %v4630
        %v4677 = vadd.f32 %v4372, %v4635
        %v4678 = vadd.f32 %v4373, %v4638
        %v4679 = vadd.f32 %v4374, %v4643
        %v4680 = vadd.f32 %v4375, %v4646
        %v4681 = vld [vmem:[%s3187 + $0x2] sm:$0xff]
        %v4682 = vld [vmem:[%s3187 + $0xa] sm:$0xff]
        %v4683 = vld [vmem:[%s3187 + $0x1a] sm:$0xff]
        %v4684 = vld [vmem:[%s3187 + $0x22] sm:$0xff]
        %v4685 = vld [vmem:[%s3187 + $0x32] sm:$0xff]
        %v4686 = vld [vmem:[%s3187 + $0x3a] sm:$0xff]
        %v4687 = vld [vmem:[%s3187 + $0x4a] sm:$0xff]
        %v4688 = vld [vmem:[%s3187 + $0x52] sm:$0xff]
        %v4689 = vld [vmem:[%s3187 + $0x62] sm:$0xff]
        %v4690 = vld [vmem:[%s3187 + $0x6a] sm:$0xff]
        %v4691 = vld [vmem:[%s3187 + $0x7a] sm:$0xff]
        %v4692 = vld [vmem:[%s3187 + $0x82] sm:$0xff]
        %v4693 = vld [vmem:[%s3187 + $0x92] sm:$0xff]
        %v4694 = vld [vmem:[%s3187 + $0x9a] sm:$0xff]
        %v4695 = vld [vmem:[%s3187 + $0xaa] sm:$0xff]
        %v4696 = vld [vmem:[%s3187 + $0xb2] sm:$0xff]
        %v4697 = vld [vmem:[%s3187 + $0xc2] sm:$0xff]
        %v4698 = vld [vmem:[%s3187 + $0xca] sm:$0xff]
        %v4699 = vld [vmem:[%s3187 + $0xda] sm:$0xff]
        %v4700 = vld [vmem:[%s3187 + $0xe2] sm:$0xff]
        %v4701 = vld [vmem:[%s3187 + $0xf2] sm:$0xff]
        %v4702 = vld [vmem:[%s3187 + $0xfa] sm:$0xff]
        %v4703 = vld [vmem:[%s3187 + $0x10a] sm:$0xff]
        %v4704 = vld [vmem:[%s3187 + $0x112] sm:$0xff]
        %v4705 = vld [vmem:[%s3187 + $0x122] sm:$0xff]
        %v4706 = vld [vmem:[%s3187 + $0x12a] sm:$0xff]
        %v4707 = vld [vmem:[%s3187 + $0x13a] sm:$0xff]
        %v4708 = vld [vmem:[%s3187 + $0x142] sm:$0xff]
        %v4709 = vld [vmem:[%s3187 + $0x152] sm:$0xff]
        %v4710 = vld [vmem:[%s3187 + $0x15a] sm:$0xff]
        %v4711 = vld [vmem:[%s3187 + $0x16a] sm:$0xff]
        %v4712 = vld [vmem:[%s3187 + $0x172] sm:$0xff]
        %v4713 = vpack.c.bf16 %v4682, %v4681
        %v4714 = vpack.c.bf16 %v4684, %v4683
        %v4715 = vpack.c.bf16 %v4686, %v4685
        %v4716 = vpack.c.bf16 %v4688, %v4687
        %v4717 = vpack.c.bf16 %v4690, %v4689
        %v4718 = vpack.c.bf16 %v4692, %v4691
        %v4719 = vpack.c.bf16 %v4694, %v4693
        %v4720 = vpack.c.bf16 %v4696, %v4695
        %v4721 = vpack.c.bf16 %v4698, %v4697
        %v4722 = vpack.c.bf16 %v4700, %v4699
        %v4723 = vpack.c.bf16 %v4702, %v4701
        %v4724 = vpack.c.bf16 %v4704, %v4703
        %v4725 = vpack.c.bf16 %v4706, %v4705
        %v4726 = vpack.c.bf16 %v4708, %v4707
        %v4727 = vpack.c.bf16 %v4710, %v4709
        %v4728 = vpack.c.bf16 %v4712, %v4711
        %v4729 = vld [vmem:[%s1743] sm:$0xf]
        %v4730 = vld [vmem:[%s1743 + $0x4] sm:$0xf]
        %v4731 = vld [vmem:[%s1743 + $0x8] sm:$0xf]
        %v4732 = vld [vmem:[%s1743 + $0xc] sm:$0xf]
        %v4733 = vld [vmem:[%s1743 + $0x10] sm:$0xf]
        %v4734 = vld [vmem:[%s1743 + $0x14] sm:$0xf]
        %v4735 = vld [vmem:[%s1743 + $0x18] sm:$0xf]
        %v4736 = vld [vmem:[%s1743 + $0x1c] sm:$0xf]
        %v4737 = vld [vmem:[%s1743 + $0x20] sm:$0xf]
        %v4738 = vld [vmem:[%s1743 + $0x24] sm:$0xf]
        %v4739 = vld [vmem:[%s1743 + $0x28] sm:$0xf]
        %v4740 = vld [vmem:[%s1743 + $0x2c] sm:$0xf]
        %v4741 = vld [vmem:[%s1743 + $0x30] sm:$0xf]
        %v4742 = vld [vmem:[%s1743 + $0x34] sm:$0xf]
        %v4743 = vld [vmem:[%s1743 + $0x38] sm:$0xf]
        %v4744 = vld [vmem:[%s1743 + $0x3c] sm:$0xf]
        %v4761 = vunpack.c.l.b16 %v4729
        %v4762 = vunpack.c.l.b16 %v4730
        %v4763 = vunpack.c.l.b16 %v4731
        %v4764 = vunpack.c.l.b16 %v4732
        %v4765 = vunpack.c.l.b16 %v4733
        %v4766 = vunpack.c.l.b16 %v4734
        %v4767 = vunpack.c.l.b16 %v4735
        %v4768 = vunpack.c.l.b16 %v4736
        %v4769 = vunpack.c.l.b16 %v4737
        %v4770 = vunpack.c.l.b16 %v4738
        %v4771 = vunpack.c.l.b16 %v4739
        %v4772 = vunpack.c.l.b16 %v4740
        %v4773 = vunpack.c.l.b16 %v4741
        %v4774 = vunpack.c.l.b16 %v4742
        %v4775 = vunpack.c.l.b16 %v4743
        %v4776 = vunpack.c.l.b16 %v4744
        %v4777 = vpack.c.b16 %v4762, %v4761
        %v4778 = vpack.c.b16 %v4764, %v4763
        %v4779 = vpack.c.b16 %v4766, %v4765
        %v4780 = vpack.c.b16 %v4768, %v4767
        %v4781 = vpack.c.b16 %v4770, %v4769
        %v4782 = vpack.c.b16 %v4772, %v4771
        %v4783 = vpack.c.b16 %v4774, %v4773
        %v4784 = vpack.c.b16 %v4776, %v4775
        %4793 = vmatprep.subr.bf16.mxu0 0
        %4794 = vmatpush1.bf16.msra.mxu0 %v4784
        %4795 = vmatprep.subr.bf16.mxu0 0
        %4796 = vmatpush1.bf16.msra.mxu0 %v4783
        %4797 = vmatprep.subr.bf16.mxu0 0
        %4798 = vmatpush1.bf16.msra.mxu0 %v4782
        %4799 = vmatprep.subr.bf16.mxu0 0
        %4800 = vmatpush1.bf16.msra.mxu0 %v4781
        %4801 = vmatprep.subr.bf16.mxu0 0
        %4802 = vmatpush1.bf16.msra.mxu0 %v4780
        %4803 = vmatprep.subr.bf16.mxu0 0
        %4804 = vmatpush1.bf16.msra.mxu0 %v4779
        %4805 = vmatprep.subr.bf16.mxu0 0
        %4806 = vmatpush1.bf16.msra.mxu0 %v4778
        %4807 = vmatprep.subr.bf16.mxu0 0
        %4808 = vmatpush1.bf16.msra.mxu0 %v4777
        %4809 = vmatprep.subr.bf16.mxu0 0
        %4810 = vmatpush2.bf16.msra.mxu0 0
        %4811 = vmatprep.subr.bf16.mxu0 0
        %4812 = vmatpush2.bf16.msra.mxu0 0
        %4813 = vmatprep.subr.bf16.mxu0 0
        %4814 = vmatpush2.bf16.msra.mxu0 0
        %4815 = vmatprep.subr.bf16.mxu0 0
        %4816 = vmatpush2.bf16.msra.mxu0 0
        %4817 = vmatprep.subr.bf16.mxu0 0
        %4818 = vmatpush2.bf16.msra.mxu0 0
        %4819 = vmatprep.subr.bf16.mxu0 0
        %4820 = vmatpush2.bf16.msra.mxu0 0
        %4821 = vmatprep.subr.bf16.mxu0 0
        %4822 = vmatpush2.bf16.msra.mxu0 0
        %4823 = vmatprep.subr.bf16.mxu0 0
        %4824 = vmatpush2.bf16.msra.mxu0 0
        %4825 = vmatprep.mubr.bf16.mxu0 0
        %4826 = vmatmul.mubr.bf16.gmra.mxu0 %v4713
        %v4827 = vpop.f32.mrf.mxu0
        %v4828 = vadd.f32 0.0, %v4827
        %v4829 = vpop.f32.mrf.mxu0
        %v4830 = vpop.f32.mrf.mxu0
        %v4831 = vadd.f32 0.0, %v4830
        %v4832 = vpop.f32.mrf.mxu0
        %4833 = vmatprep.mubr.bf16.mxu0 0
        %4834 = vmatmul.mubr.bf16.gmra.mxu0 %v4714
        %v4835 = vpop.f32.mrf.mxu0
        %v4836 = vadd.f32 0.0, %v4835
        %v4837 = vpop.f32.mrf.mxu0
        %v4838 = vpop.f32.mrf.mxu0
        %v4839 = vadd.f32 0.0, %v4838
        %v4840 = vpop.f32.mrf.mxu0
        %4841 = vmatprep.mubr.bf16.mxu0 0
        %4842 = vmatmul.mubr.bf16.gmra.mxu0 %v4715
        %v4843 = vpop.f32.mrf.mxu0
        %v4844 = vadd.f32 0.0, %v4843
        %v4845 = vpop.f32.mrf.mxu0
        %v4846 = vpop.f32.mrf.mxu0
        %v4847 = vadd.f32 0.0, %v4846
        %v4848 = vpop.f32.mrf.mxu0
        %4849 = vmatprep.mubr.bf16.mxu0 0
        %4850 = vmatmul.mubr.bf16.gmra.mxu0 %v4716
        %v4851 = vpop.f32.mrf.mxu0
        %v4852 = vadd.f32 0.0, %v4851
        %v4853 = vpop.f32.mrf.mxu0
        %v4854 = vpop.f32.mrf.mxu0
        %v4855 = vadd.f32 0.0, %v4854
        %v4856 = vpop.f32.mrf.mxu0
        %4857 = vmatprep.mubr.bf16.mxu0 0
        %4858 = vmatmul.mubr.bf16.gmra.mxu0 %v4717
        %v4859 = vpop.f32.mrf.mxu0
        %v4860 = vadd.f32 0.0, %v4859
        %v4861 = vpop.f32.mrf.mxu0
        %v4862 = vpop.f32.mrf.mxu0
        %v4863 = vadd.f32 0.0, %v4862
        %v4864 = vpop.f32.mrf.mxu0
        %4865 = vmatprep.mubr.bf16.mxu0 0
        %4866 = vmatmul.mubr.bf16.gmra.mxu0 %v4718
        %v4867 = vpop.f32.mrf.mxu0
        %v4868 = vadd.f32 0.0, %v4867
        %v4869 = vpop.f32.mrf.mxu0
        %v4870 = vpop.f32.mrf.mxu0
        %v4871 = vadd.f32 0.0, %v4870
        %v4872 = vpop.f32.mrf.mxu0
        %4873 = vmatprep.mubr.bf16.mxu0 0
        %4874 = vmatmul.mubr.bf16.gmra.mxu0 %v4719
        %v4875 = vpop.f32.mrf.mxu0
        %v4876 = vadd.f32 0.0, %v4875
        %v4877 = vpop.f32.mrf.mxu0
        %v4878 = vpop.f32.mrf.mxu0
        %v4879 = vadd.f32 0.0, %v4878
        %v4880 = vpop.f32.mrf.mxu0
        %4881 = vmatprep.mubr.bf16.mxu0 0
        %4882 = vmatmul.mubr.bf16.gmra.mxu0 %v4720
        %v4883 = vpop.f32.mrf.mxu0
        %v4884 = vadd.f32 0.0, %v4883
        %v4885 = vpop.f32.mrf.mxu0
        %v4886 = vpop.f32.mrf.mxu0
        %v4887 = vadd.f32 0.0, %v4886
        %v4888 = vpop.f32.mrf.mxu0
        %4889 = vmatprep.mubr.bf16.mxu0 0
        %4890 = vmatmul.mubr.bf16.gmra.mxu0 %v4721
        %v4891 = vpop.f32.mrf.mxu0
        %v4892 = vadd.f32 0.0, %v4891
        %v4893 = vpop.f32.mrf.mxu0
        %v4894 = vpop.f32.mrf.mxu0
        %v4895 = vadd.f32 0.0, %v4894
        %v4896 = vpop.f32.mrf.mxu0
        %4897 = vmatprep.mubr.bf16.mxu0 0
        %4898 = vmatmul.mubr.bf16.gmra.mxu0 %v4722
        %v4899 = vpop.f32.mrf.mxu0
        %v4900 = vadd.f32 0.0, %v4899
        %v4901 = vpop.f32.mrf.mxu0
        %v4902 = vpop.f32.mrf.mxu0
        %v4903 = vadd.f32 0.0, %v4902
        %v4904 = vpop.f32.mrf.mxu0
        %4905 = vmatprep.mubr.bf16.mxu0 0
        %4906 = vmatmul.mubr.bf16.gmra.mxu0 %v4723
        %v4907 = vpop.f32.mrf.mxu0
        %v4908 = vadd.f32 0.0, %v4907
        %v4909 = vpop.f32.mrf.mxu0
        %v4910 = vpop.f32.mrf.mxu0
        %v4911 = vadd.f32 0.0, %v4910
        %v4912 = vpop.f32.mrf.mxu0
        %4913 = vmatprep.mubr.bf16.mxu0 0
        %4914 = vmatmul.mubr.bf16.gmra.mxu0 %v4724
        %v4915 = vpop.f32.mrf.mxu0
        %v4916 = vadd.f32 0.0, %v4915
        %v4917 = vpop.f32.mrf.mxu0
        %v4918 = vpop.f32.mrf.mxu0
        %v4919 = vadd.f32 0.0, %v4918
        %v4920 = vpop.f32.mrf.mxu0
        %4921 = vmatprep.mubr.bf16.mxu0 0
        %4922 = vmatmul.mubr.bf16.gmra.mxu0 %v4725
        %v4923 = vpop.f32.mrf.mxu0
        %v4924 = vadd.f32 0.0, %v4923
        %v4925 = vpop.f32.mrf.mxu0
        %v4926 = vpop.f32.mrf.mxu0
        %v4927 = vadd.f32 0.0, %v4926
        %v4928 = vpop.f32.mrf.mxu0
        %4929 = vmatprep.mubr.bf16.mxu0 0
        %4930 = vmatmul.mubr.bf16.gmra.mxu0 %v4726
        %v4931 = vpop.f32.mrf.mxu0
        %v4932 = vadd.f32 0.0, %v4931
        %v4933 = vpop.f32.mrf.mxu0
        %v4934 = vpop.f32.mrf.mxu0
        %v4935 = vadd.f32 0.0, %v4934
        %v4936 = vpop.f32.mrf.mxu0
        %4937 = vmatprep.mubr.bf16.mxu0 0
        %4938 = vmatmul.mubr.bf16.gmra.mxu0 %v4727
        %v4939 = vpop.f32.mrf.mxu0
        %v4940 = vadd.f32 0.0, %v4939
        %v4941 = vpop.f32.mrf.mxu0
        %v4942 = vpop.f32.mrf.mxu0
        %v4943 = vadd.f32 0.0, %v4942
        %v4944 = vpop.f32.mrf.mxu0
        %4945 = vmatprep.mubr.bf16.mxu0 0
        %4946 = vmatmul.mubr.bf16.gmra.mxu0 %v4728
        %v4947 = vpop.f32.mrf.mxu0
        %v4948 = vadd.f32 0.0, %v4947
        %v4949 = vpop.f32.mrf.mxu0
        %v4950 = vpop.f32.mrf.mxu0
        %v4951 = vadd.f32 0.0, %v4950
        %v4952 = vpop.f32.mrf.mxu0
        %4953 = vdwg.mxu0
        %v4954 = vadd.f32 %v4649, %v4828
        %v4955 = vadd.f32 %v4650, %v4831
        %v4956 = vadd.f32 %v4651, %v4836
        %v4957 = vadd.f32 %v4652, %v4839
        %v4958 = vadd.f32 %v4653, %v4844
        %v4959 = vadd.f32 %v4654, %v4847
        %v4960 = vadd.f32 %v4655, %v4852
        %v4961 = vadd.f32 %v4656, %v4855
        %v4962 = vadd.f32 %v4657, %v4860
        %v4963 = vadd.f32 %v4658, %v4863
        %v4964 = vadd.f32 %v4659, %v4868
        %v4965 = vadd.f32 %v4660, %v4871
        %v4966 = vadd.f32 %v4661, %v4876
        %v4967 = vadd.f32 %v4662, %v4879
        %v4968 = vadd.f32 %v4663, %v4884
        %v4969 = vadd.f32 %v4664, %v4887
        %v4970 = vadd.f32 %v4665, %v4892
        %v4971 = vadd.f32 %v4666, %v4895
        %v4972 = vadd.f32 %v4667, %v4900
        %v4973 = vadd.f32 %v4668, %v4903
        %v4974 = vadd.f32 %v4669, %v4908
        %v4975 = vadd.f32 %v4670, %v4911
        %v4976 = vadd.f32 %v4671, %v4916
        %v4977 = vadd.f32 %v4672, %v4919
        %v4978 = vadd.f32 %v4673, %v4924
        %v4979 = vadd.f32 %v4674, %v4927
        %v4980 = vadd.f32 %v4675, %v4932
        %v4981 = vadd.f32 %v4676, %v4935
        %v4982 = vadd.f32 %v4677, %v4940
        %v4983 = vadd.f32 %v4678, %v4943
        %v4984 = vadd.f32 %v4679, %v4948
        %v4985 = vadd.f32 %v4680, %v4951
        %s4986 = scalar_lea.vmem [#allocation2], 48
        %v4987 = vld [vmem:[%s4986] sm:$0xff]
        %v4988 = vld [vmem:[%s4986 + $0x8] sm:$0xff]
        %v4989 = vld [vmem:[%s4986 + $0x18] sm:$0xff]
        %v4990 = vld [vmem:[%s4986 + $0x20] sm:$0xff]
        %v4991 = vld [vmem:[%s4986 + $0x30] sm:$0xff]
        %v4992 = vld [vmem:[%s4986 + $0x38] sm:$0xff]
        %v4993 = vld [vmem:[%s4986 + $0x48] sm:$0xff]
        %v4994 = vld [vmem:[%s4986 + $0x50] sm:$0xff]
        %v4995 = vld [vmem:[%s4986 + $0x60] sm:$0xff]
        %v4996 = vld [vmem:[%s4986 + $0x68] sm:$0xff]
        %v4997 = vld [vmem:[%s4986 + $0x78] sm:$0xff]
        %v4998 = vld [vmem:[%s4986 + $0x80] sm:$0xff]
        %v4999 = vld [vmem:[%s4986 + $0x90] sm:$0xff]
        %v5000 = vld [vmem:[%s4986 + $0x98] sm:$0xff]
        %v5001 = vld [vmem:[%s4986 + $0xa8] sm:$0xff]
        %v5002 = vld [vmem:[%s4986 + $0xb0] sm:$0xff]
        %v5003 = vld [vmem:[%s4986 + $0xc0] sm:$0xff]
        %v5004 = vld [vmem:[%s4986 + $0xc8] sm:$0xff]
        %v5005 = vld [vmem:[%s4986 + $0xd8] sm:$0xff]
        %v5006 = vld [vmem:[%s4986 + $0xe0] sm:$0xff]
        %v5007 = vld [vmem:[%s4986 + $0xf0] sm:$0xff]
        %v5008 = vld [vmem:[%s4986 + $0xf8] sm:$0xff]
        %v5009 = vld [vmem:[%s4986 + $0x108] sm:$0xff]
        %v5010 = vld [vmem:[%s4986 + $0x110] sm:$0xff]
        %v5011 = vld [vmem:[%s4986 + $0x120] sm:$0xff]
        %v5012 = vld [vmem:[%s4986 + $0x128] sm:$0xff]
        %v5013 = vld [vmem:[%s4986 + $0x138] sm:$0xff]
        %v5014 = vld [vmem:[%s4986 + $0x140] sm:$0xff]
        %v5015 = vld [vmem:[%s4986 + $0x150] sm:$0xff]
        %v5016 = vld [vmem:[%s4986 + $0x158] sm:$0xff]
        %v5017 = vld [vmem:[%s4986 + $0x168] sm:$0xff]
        %v5018 = vld [vmem:[%s4986 + $0x170] sm:$0xff]
        %v5019 = vpack.c.bf16 %v4988, %v4987
        %v5020 = vpack.c.bf16 %v4990, %v4989
        %v5021 = vpack.c.bf16 %v4992, %v4991
        %v5022 = vpack.c.bf16 %v4994, %v4993
        %v5023 = vpack.c.bf16 %v4996, %v4995
        %v5024 = vpack.c.bf16 %v4998, %v4997
        %v5025 = vpack.c.bf16 %v5000, %v4999
        %v5026 = vpack.c.bf16 %v5002, %v5001
        %v5027 = vpack.c.bf16 %v5004, %v5003
        %v5028 = vpack.c.bf16 %v5006, %v5005
        %v5029 = vpack.c.bf16 %v5008, %v5007
        %v5030 = vpack.c.bf16 %v5010, %v5009
        %v5031 = vpack.c.bf16 %v5012, %v5011
        %v5032 = vpack.c.bf16 %v5014, %v5013
        %v5033 = vpack.c.bf16 %v5016, %v5015
        %v5034 = vpack.c.bf16 %v5018, %v5017
        %v5035 = vld [vmem:[%s2050] sm:$0xf]
        %v5036 = vld [vmem:[%s2050 + $0x4] sm:$0xf]
        %v5037 = vld [vmem:[%s2050 + $0x8] sm:$0xf]
        %v5038 = vld [vmem:[%s2050 + $0xc] sm:$0xf]
        %v5039 = vld [vmem:[%s2050 + $0x10] sm:$0xf]
        %v5040 = vld [vmem:[%s2050 + $0x14] sm:$0xf]
        %v5041 = vld [vmem:[%s2050 + $0x18] sm:$0xf]
        %v5042 = vld [vmem:[%s2050 + $0x1c] sm:$0xf]
        %v5043 = vld [vmem:[%s2050 + $0x20] sm:$0xf]
        %v5044 = vld [vmem:[%s2050 + $0x24] sm:$0xf]
        %v5045 = vld [vmem:[%s2050 + $0x28] sm:$0xf]
        %v5046 = vld [vmem:[%s2050 + $0x2c] sm:$0xf]
        %v5047 = vld [vmem:[%s2050 + $0x30] sm:$0xf]
        %v5048 = vld [vmem:[%s2050 + $0x34] sm:$0xf]
        %v5049 = vld [vmem:[%s2050 + $0x38] sm:$0xf]
        %v5050 = vld [vmem:[%s2050 + $0x3c] sm:$0xf]
        %v5067 = vunpack.c.l.b16 %v5035
        %v5068 = vunpack.c.l.b16 %v5036
        %v5069 = vunpack.c.l.b16 %v5037
        %v5070 = vunpack.c.l.b16 %v5038
        %v5071 = vunpack.c.l.b16 %v5039
        %v5072 = vunpack.c.l.b16 %v5040
        %v5073 = vunpack.c.l.b16 %v5041
        %v5074 = vunpack.c.l.b16 %v5042
        %v5075 = vunpack.c.l.b16 %v5043
        %v5076 = vunpack.c.l.b16 %v5044
        %v5077 = vunpack.c.l.b16 %v5045
        %v5078 = vunpack.c.l.b16 %v5046
        %v5079 = vunpack.c.l.b16 %v5047
        %v5080 = vunpack.c.l.b16 %v5048
        %v5081 = vunpack.c.l.b16 %v5049
        %v5082 = vunpack.c.l.b16 %v5050
        %v5083 = vpack.c.b16 %v5068, %v5067
        %v5084 = vpack.c.b16 %v5070, %v5069
        %v5085 = vpack.c.b16 %v5072, %v5071
        %v5086 = vpack.c.b16 %v5074, %v5073
        %v5087 = vpack.c.b16 %v5076, %v5075
        %v5088 = vpack.c.b16 %v5078, %v5077
        %v5089 = vpack.c.b16 %v5080, %v5079
        %v5090 = vpack.c.b16 %v5082, %v5081
        %5099 = vmatprep.subr.bf16.mxu0 0
        %5100 = vmatpush1.bf16.msra.mxu0 %v5090
        %5101 = vmatprep.subr.bf16.mxu0 0
        %5102 = vmatpush1.bf16.msra.mxu0 %v5089
        %5103 = vmatprep.subr.bf16.mxu0 0
        %5104 = vmatpush1.bf16.msra.mxu0 %v5088
        %5105 = vmatprep.subr.bf16.mxu0 0
        %5106 = vmatpush1.bf16.msra.mxu0 %v5087
        %5107 = vmatprep.subr.bf16.mxu0 0
        %5108 = vmatpush1.bf16.msra.mxu0 %v5086
        %5109 = vmatprep.subr.bf16.mxu0 0
        %5110 = vmatpush1.bf16.msra.mxu0 %v5085
        %5111 = vmatprep.subr.bf16.mxu0 0
        %5112 = vmatpush1.bf16.msra.mxu0 %v5084
        %5113 = vmatprep.subr.bf16.mxu0 0
        %5114 = vmatpush1.bf16.msra.mxu0 %v5083
        %5115 = vmatprep.subr.bf16.mxu0 0
        %5116 = vmatpush2.bf16.msra.mxu0 0
        %5117 = vmatprep.subr.bf16.mxu0 0
        %5118 = vmatpush2.bf16.msra.mxu0 0
        %5119 = vmatprep.subr.bf16.mxu0 0
        %5120 = vmatpush2.bf16.msra.mxu0 0
        %5121 = vmatprep.subr.bf16.mxu0 0
        %5122 = vmatpush2.bf16.msra.mxu0 0
        %5123 = vmatprep.subr.bf16.mxu0 0
        %5124 = vmatpush2.bf16.msra.mxu0 0
        %5125 = vmatprep.subr.bf16.mxu0 0
        %5126 = vmatpush2.bf16.msra.mxu0 0
        %5127 = vmatprep.subr.bf16.mxu0 0
        %5128 = vmatpush2.bf16.msra.mxu0 0
        %5129 = vmatprep.subr.bf16.mxu0 0
        %5130 = vmatpush2.bf16.msra.mxu0 0
        %5131 = vmatprep.mubr.bf16.mxu0 0
        %5132 = vmatmul.mubr.bf16.gmra.mxu0 %v5019
        %v5133 = vpop.f32.mrf.mxu0
        %v5134 = vadd.f32 0.0, %v5133
        %v5135 = vpop.f32.mrf.mxu0
        %v5136 = vpop.f32.mrf.mxu0
        %v5137 = vadd.f32 0.0, %v5136
        %v5138 = vpop.f32.mrf.mxu0
        %5139 = vmatprep.mubr.bf16.mxu0 0
        %5140 = vmatmul.mubr.bf16.gmra.mxu0 %v5020
        %v5141 = vpop.f32.mrf.mxu0
        %v5142 = vadd.f32 0.0, %v5141
        %v5143 = vpop.f32.mrf.mxu0
        %v5144 = vpop.f32.mrf.mxu0
        %v5145 = vadd.f32 0.0, %v5144
        %v5146 = vpop.f32.mrf.mxu0
        %5147 = vmatprep.mubr.bf16.mxu0 0
        %5148 = vmatmul.mubr.bf16.gmra.mxu0 %v5021
        %v5149 = vpop.f32.mrf.mxu0
        %v5150 = vadd.f32 0.0, %v5149
        %v5151 = vpop.f32.mrf.mxu0
        %v5152 = vpop.f32.mrf.mxu0
        %v5153 = vadd.f32 0.0, %v5152
        %v5154 = vpop.f32.mrf.mxu0
        %5155 = vmatprep.mubr.bf16.mxu0 0
        %5156 = vmatmul.mubr.bf16.gmra.mxu0 %v5022
        %v5157 = vpop.f32.mrf.mxu0
        %v5158 = vadd.f32 0.0, %v5157
        %v5159 = vpop.f32.mrf.mxu0
        %v5160 = vpop.f32.mrf.mxu0
        %v5161 = vadd.f32 0.0, %v5160
        %v5162 = vpop.f32.mrf.mxu0
        %5163 = vmatprep.mubr.bf16.mxu0 0
        %5164 = vmatmul.mubr.bf16.gmra.mxu0 %v5023
        %v5165 = vpop.f32.mrf.mxu0
        %v5166 = vadd.f32 0.0, %v5165
        %v5167 = vpop.f32.mrf.mxu0
        %v5168 = vpop.f32.mrf.mxu0
        %v5169 = vadd.f32 0.0, %v5168
        %v5170 = vpop.f32.mrf.mxu0
        %5171 = vmatprep.mubr.bf16.mxu0 0
        %5172 = vmatmul.mubr.bf16.gmra.mxu0 %v5024
        %v5173 = vpop.f32.mrf.mxu0
        %v5174 = vadd.f32 0.0, %v5173
        %v5175 = vpop.f32.mrf.mxu0
        %v5176 = vpop.f32.mrf.mxu0
        %v5177 = vadd.f32 0.0, %v5176
        %v5178 = vpop.f32.mrf.mxu0
        %5179 = vmatprep.mubr.bf16.mxu0 0
        %5180 = vmatmul.mubr.bf16.gmra.mxu0 %v5025
        %v5181 = vpop.f32.mrf.mxu0
        %v5182 = vadd.f32 0.0, %v5181
        %v5183 = vpop.f32.mrf.mxu0
        %v5184 = vpop.f32.mrf.mxu0
        %v5185 = vadd.f32 0.0, %v5184
        %v5186 = vpop.f32.mrf.mxu0
        %5187 = vmatprep.mubr.bf16.mxu0 0
        %5188 = vmatmul.mubr.bf16.gmra.mxu0 %v5026
        %v5189 = vpop.f32.mrf.mxu0
        %v5190 = vadd.f32 0.0, %v5189
        %v5191 = vpop.f32.mrf.mxu0
        %v5192 = vpop.f32.mrf.mxu0
        %v5193 = vadd.f32 0.0, %v5192
        %v5194 = vpop.f32.mrf.mxu0
        %5195 = vmatprep.mubr.bf16.mxu0 0
        %5196 = vmatmul.mubr.bf16.gmra.mxu0 %v5027
        %v5197 = vpop.f32.mrf.mxu0
        %v5198 = vadd.f32 0.0, %v5197
        %v5199 = vpop.f32.mrf.mxu0
        %v5200 = vpop.f32.mrf.mxu0
        %v5201 = vadd.f32 0.0, %v5200
        %v5202 = vpop.f32.mrf.mxu0
        %5203 = vmatprep.mubr.bf16.mxu0 0
        %5204 = vmatmul.mubr.bf16.gmra.mxu0 %v5028
        %v5205 = vpop.f32.mrf.mxu0
        %v5206 = vadd.f32 0.0, %v5205
        %v5207 = vpop.f32.mrf.mxu0
        %v5208 = vpop.f32.mrf.mxu0
        %v5209 = vadd.f32 0.0, %v5208
        %v5210 = vpop.f32.mrf.mxu0
        %5211 = vmatprep.mubr.bf16.mxu0 0
        %5212 = vmatmul.mubr.bf16.gmra.mxu0 %v5029
        %v5213 = vpop.f32.mrf.mxu0
        %v5214 = vadd.f32 0.0, %v5213
        %v5215 = vpop.f32.mrf.mxu0
        %v5216 = vpop.f32.mrf.mxu0
        %v5217 = vadd.f32 0.0, %v5216
        %v5218 = vpop.f32.mrf.mxu0
        %5219 = vmatprep.mubr.bf16.mxu0 0
        %5220 = vmatmul.mubr.bf16.gmra.mxu0 %v5030
        %v5221 = vpop.f32.mrf.mxu0
        %v5222 = vadd.f32 0.0, %v5221
        %v5223 = vpop.f32.mrf.mxu0
        %v5224 = vpop.f32.mrf.mxu0
        %v5225 = vadd.f32 0.0, %v5224
        %v5226 = vpop.f32.mrf.mxu0
        %5227 = vmatprep.mubr.bf16.mxu0 0
        %5228 = vmatmul.mubr.bf16.gmra.mxu0 %v5031
        %v5229 = vpop.f32.mrf.mxu0
        %v5230 = vadd.f32 0.0, %v5229
        %v5231 = vpop.f32.mrf.mxu0
        %v5232 = vpop.f32.mrf.mxu0
        %v5233 = vadd.f32 0.0, %v5232
        %v5234 = vpop.f32.mrf.mxu0
        %5235 = vmatprep.mubr.bf16.mxu0 0
        %5236 = vmatmul.mubr.bf16.gmra.mxu0 %v5032
        %v5237 = vpop.f32.mrf.mxu0
        %v5238 = vadd.f32 0.0, %v5237
        %v5239 = vpop.f32.mrf.mxu0
        %v5240 = vpop.f32.mrf.mxu0
        %v5241 = vadd.f32 0.0, %v5240
        %v5242 = vpop.f32.mrf.mxu0
        %5243 = vmatprep.mubr.bf16.mxu0 0
        %5244 = vmatmul.mubr.bf16.gmra.mxu0 %v5033
        %v5245 = vpop.f32.mrf.mxu0
        %v5246 = vadd.f32 0.0, %v5245
        %v5247 = vpop.f32.mrf.mxu0
        %v5248 = vpop.f32.mrf.mxu0
        %v5249 = vadd.f32 0.0, %v5248
        %v5250 = vpop.f32.mrf.mxu0
        %5251 = vmatprep.mubr.bf16.mxu0 0
        %5252 = vmatmul.mubr.bf16.gmra.mxu0 %v5034
        %v5253 = vpop.f32.mrf.mxu0
        %v5254 = vadd.f32 0.0, %v5253
        %v5255 = vpop.f32.mrf.mxu0
        %v5256 = vpop.f32.mrf.mxu0
        %v5257 = vadd.f32 0.0, %v5256
        %v5258 = vpop.f32.mrf.mxu0
        %5259 = vdwg.mxu0
        %v5260 = vadd.f32 %v4954, %v5134
        %v5261 = vadd.f32 %v4955, %v5137
        %v5262 = vadd.f32 %v4956, %v5142
        %v5263 = vadd.f32 %v4957, %v5145
        %v5264 = vadd.f32 %v4958, %v5150
        %v5265 = vadd.f32 %v4959, %v5153
        %v5266 = vadd.f32 %v4960, %v5158
        %v5267 = vadd.f32 %v4961, %v5161
        %v5268 = vadd.f32 %v4962, %v5166
        %v5269 = vadd.f32 %v4963, %v5169
        %v5270 = vadd.f32 %v4964, %v5174
        %v5271 = vadd.f32 %v4965, %v5177
        %v5272 = vadd.f32 %v4966, %v5182
        %v5273 = vadd.f32 %v4967, %v5185
        %v5274 = vadd.f32 %v4968, %v5190
        %v5275 = vadd.f32 %v4969, %v5193
        %v5276 = vadd.f32 %v4970, %v5198
        %v5277 = vadd.f32 %v4971, %v5201
        %v5278 = vadd.f32 %v4972, %v5206
        %v5279 = vadd.f32 %v4973, %v5209
        %v5280 = vadd.f32 %v4974, %v5214
        %v5281 = vadd.f32 %v4975, %v5217
        %v5282 = vadd.f32 %v4976, %v5222
        %v5283 = vadd.f32 %v4977, %v5225
        %v5284 = vadd.f32 %v4978, %v5230
        %v5285 = vadd.f32 %v4979, %v5233
        %v5286 = vadd.f32 %v4980, %v5238
        %v5287 = vadd.f32 %v4981, %v5241
        %v5288 = vadd.f32 %v4982, %v5246
        %v5289 = vadd.f32 %v4983, %v5249
        %v5290 = vadd.f32 %v4984, %v5254
        %v5291 = vadd.f32 %v4985, %v5257
        %v5292 = vld [vmem:[%s4986 + $0x1] sm:$0xff]
        %v5293 = vld [vmem:[%s4986 + $0x9] sm:$0xff]
        %v5294 = vld [vmem:[%s4986 + $0x19] sm:$0xff]
        %v5295 = vld [vmem:[%s4986 + $0x21] sm:$0xff]
        %v5296 = vld [vmem:[%s4986 + $0x31] sm:$0xff]
        %v5297 = vld [vmem:[%s4986 + $0x39] sm:$0xff]
        %v5298 = vld [vmem:[%s4986 + $0x49] sm:$0xff]
        %v5299 = vld [vmem:[%s4986 + $0x51] sm:$0xff]
        %v5300 = vld [vmem:[%s4986 + $0x61] sm:$0xff]
        %v5301 = vld [vmem:[%s4986 + $0x69] sm:$0xff]
        %v5302 = vld [vmem:[%s4986 + $0x79] sm:$0xff]
        %v5303 = vld [vmem:[%s4986 + $0x81] sm:$0xff]
        %v5304 = vld [vmem:[%s4986 + $0x91] sm:$0xff]
        %v5305 = vld [vmem:[%s4986 + $0x99] sm:$0xff]
        %v5306 = vld [vmem:[%s4986 + $0xa9] sm:$0xff]
        %v5307 = vld [vmem:[%s4986 + $0xb1] sm:$0xff]
        %v5308 = vld [vmem:[%s4986 + $0xc1] sm:$0xff]
        %v5309 = vld [vmem:[%s4986 + $0xc9] sm:$0xff]
        %v5310 = vld [vmem:[%s4986 + $0xd9] sm:$0xff]
        %v5311 = vld [vmem:[%s4986 + $0xe1] sm:$0xff]
        %v5312 = vld [vmem:[%s4986 + $0xf1] sm:$0xff]
        %v5313 = vld [vmem:[%s4986 + $0xf9] sm:$0xff]
        %v5314 = vld [vmem:[%s4986 + $0x109] sm:$0xff]
        %v5315 = vld [vmem:[%s4986 + $0x111] sm:$0xff]
        %v5316 = vld [vmem:[%s4986 + $0x121] sm:$0xff]
        %v5317 = vld [vmem:[%s4986 + $0x129] sm:$0xff]
        %v5318 = vld [vmem:[%s4986 + $0x139] sm:$0xff]
        %v5319 = vld [vmem:[%s4986 + $0x141] sm:$0xff]
        %v5320 = vld [vmem:[%s4986 + $0x151] sm:$0xff]
        %v5321 = vld [vmem:[%s4986 + $0x159] sm:$0xff]
        %v5322 = vld [vmem:[%s4986 + $0x169] sm:$0xff]
        %v5323 = vld [vmem:[%s4986 + $0x171] sm:$0xff]
        %v5324 = vpack.c.bf16 %v5293, %v5292
        %v5325 = vpack.c.bf16 %v5295, %v5294
        %v5326 = vpack.c.bf16 %v5297, %v5296
        %v5327 = vpack.c.bf16 %v5299, %v5298
        %v5328 = vpack.c.bf16 %v5301, %v5300
        %v5329 = vpack.c.bf16 %v5303, %v5302
        %v5330 = vpack.c.bf16 %v5305, %v5304
        %v5331 = vpack.c.bf16 %v5307, %v5306
        %v5332 = vpack.c.bf16 %v5309, %v5308
        %v5333 = vpack.c.bf16 %v5311, %v5310
        %v5334 = vpack.c.bf16 %v5313, %v5312
        %v5335 = vpack.c.bf16 %v5315, %v5314
        %v5336 = vpack.c.bf16 %v5317, %v5316
        %v5337 = vpack.c.bf16 %v5319, %v5318
        %v5338 = vpack.c.bf16 %v5321, %v5320
        %v5339 = vpack.c.bf16 %v5323, %v5322
        %v5340 = vld [vmem:[%s2356] sm:$0xf]
        %v5341 = vld [vmem:[%s2356 + $0x4] sm:$0xf]
        %v5342 = vld [vmem:[%s2356 + $0x8] sm:$0xf]
        %v5343 = vld [vmem:[%s2356 + $0xc] sm:$0xf]
        %v5344 = vld [vmem:[%s2356 + $0x10] sm:$0xf]
        %v5345 = vld [vmem:[%s2356 + $0x14] sm:$0xf]
        %v5346 = vld [vmem:[%s2356 + $0x18] sm:$0xf]
        %v5347 = vld [vmem:[%s2356 + $0x1c] sm:$0xf]
        %v5348 = vld [vmem:[%s2356 + $0x20] sm:$0xf]
        %v5349 = vld [vmem:[%s2356 + $0x24] sm:$0xf]
        %v5350 = vld [vmem:[%s2356 + $0x28] sm:$0xf]
        %v5351 = vld [vmem:[%s2356 + $0x2c] sm:$0xf]
        %v5352 = vld [vmem:[%s2356 + $0x30] sm:$0xf]
        %v5353 = vld [vmem:[%s2356 + $0x34] sm:$0xf]
        %v5354 = vld [vmem:[%s2356 + $0x38] sm:$0xf]
        %v5355 = vld [vmem:[%s2356 + $0x3c] sm:$0xf]
        %v5372 = vunpack.c.l.b16 %v5340
        %v5373 = vunpack.c.l.b16 %v5341
        %v5374 = vunpack.c.l.b16 %v5342
        %v5375 = vunpack.c.l.b16 %v5343
        %v5376 = vunpack.c.l.b16 %v5344
        %v5377 = vunpack.c.l.b16 %v5345
        %v5378 = vunpack.c.l.b16 %v5346
        %v5379 = vunpack.c.l.b16 %v5347
        %v5380 = vunpack.c.l.b16 %v5348
        %v5381 = vunpack.c.l.b16 %v5349
        %v5382 = vunpack.c.l.b16 %v5350
        %v5383 = vunpack.c.l.b16 %v5351
        %v5384 = vunpack.c.l.b16 %v5352
        %v5385 = vunpack.c.l.b16 %v5353
        %v5386 = vunpack.c.l.b16 %v5354
        %v5387 = vunpack.c.l.b16 %v5355
        %v5388 = vpack.c.b16 %v5373, %v5372
        %v5389 = vpack.c.b16 %v5375, %v5374
        %v5390 = vpack.c.b16 %v5377, %v5376
        %v5391 = vpack.c.b16 %v5379, %v5378
        %v5392 = vpack.c.b16 %v5381, %v5380
        %v5393 = vpack.c.b16 %v5383, %v5382
        %v5394 = vpack.c.b16 %v5385, %v5384
        %v5395 = vpack.c.b16 %v5387, %v5386
        %5404 = vmatprep.subr.bf16.mxu0 0
        %5405 = vmatpush1.bf16.msra.mxu0 %v5395
        %5406 = vmatprep.subr.bf16.mxu0 0
        %5407 = vmatpush1.bf16.msra.mxu0 %v5394
        %5408 = vmatprep.subr.bf16.mxu0 0
        %5409 = vmatpush1.bf16.msra.mxu0 %v5393
        %5410 = vmatprep.subr.bf16.mxu0 0
        %5411 = vmatpush1.bf16.msra.mxu0 %v5392
        %5412 = vmatprep.subr.bf16.mxu0 0
        %5413 = vmatpush1.bf16.msra.mxu0 %v5391
        %5414 = vmatprep.subr.bf16.mxu0 0
        %5415 = vmatpush1.bf16.msra.mxu0 %v5390
        %5416 = vmatprep.subr.bf16.mxu0 0
        %5417 = vmatpush1.bf16.msra.mxu0 %v5389
        %5418 = vmatprep.subr.bf16.mxu0 0
        %5419 = vmatpush1.bf16.msra.mxu0 %v5388
        %5420 = vmatprep.subr.bf16.mxu0 0
        %5421 = vmatpush2.bf16.msra.mxu0 0
        %5422 = vmatprep.subr.bf16.mxu0 0
        %5423 = vmatpush2.bf16.msra.mxu0 0
        %5424 = vmatprep.subr.bf16.mxu0 0
        %5425 = vmatpush2.bf16.msra.mxu0 0
        %5426 = vmatprep.subr.bf16.mxu0 0
        %5427 = vmatpush2.bf16.msra.mxu0 0
        %5428 = vmatprep.subr.bf16.mxu0 0
        %5429 = vmatpush2.bf16.msra.mxu0 0
        %5430 = vmatprep.subr.bf16.mxu0 0
        %5431 = vmatpush2.bf16.msra.mxu0 0
        %5432 = vmatprep.subr.bf16.mxu0 0
        %5433 = vmatpush2.bf16.msra.mxu0 0
        %5434 = vmatprep.subr.bf16.mxu0 0
        %5435 = vmatpush2.bf16.msra.mxu0 0
        %5436 = vmatprep.mubr.bf16.mxu0 0
        %5437 = vmatmul.mubr.bf16.gmra.mxu0 %v5324
        %v5438 = vpop.f32.mrf.mxu0
        %v5439 = vadd.f32 0.0, %v5438
        %v5440 = vpop.f32.mrf.mxu0
        %v5441 = vpop.f32.mrf.mxu0
        %v5442 = vadd.f32 0.0, %v5441
        %v5443 = vpop.f32.mrf.mxu0
        %5444 = vmatprep.mubr.bf16.mxu0 0
        %5445 = vmatmul.mubr.bf16.gmra.mxu0 %v5325
        %v5446 = vpop.f32.mrf.mxu0
        %v5447 = vadd.f32 0.0, %v5446
        %v5448 = vpop.f32.mrf.mxu0
        %v5449 = vpop.f32.mrf.mxu0
        %v5450 = vadd.f32 0.0, %v5449
        %v5451 = vpop.f32.mrf.mxu0
        %5452 = vmatprep.mubr.bf16.mxu0 0
        %5453 = vmatmul.mubr.bf16.gmra.mxu0 %v5326
        %v5454 = vpop.f32.mrf.mxu0
        %v5455 = vadd.f32 0.0, %v5454
        %v5456 = vpop.f32.mrf.mxu0
        %v5457 = vpop.f32.mrf.mxu0
        %v5458 = vadd.f32 0.0, %v5457
        %v5459 = vpop.f32.mrf.mxu0
        %5460 = vmatprep.mubr.bf16.mxu0 0
        %5461 = vmatmul.mubr.bf16.gmra.mxu0 %v5327
        %v5462 = vpop.f32.mrf.mxu0
        %v5463 = vadd.f32 0.0, %v5462
        %v5464 = vpop.f32.mrf.mxu0
        %v5465 = vpop.f32.mrf.mxu0
        %v5466 = vadd.f32 0.0, %v5465
        %v5467 = vpop.f32.mrf.mxu0
        %5468 = vmatprep.mubr.bf16.mxu0 0
        %5469 = vmatmul.mubr.bf16.gmra.mxu0 %v5328
        %v5470 = vpop.f32.mrf.mxu0
        %v5471 = vadd.f32 0.0, %v5470
        %v5472 = vpop.f32.mrf.mxu0
        %v5473 = vpop.f32.mrf.mxu0
        %v5474 = vadd.f32 0.0, %v5473
        %v5475 = vpop.f32.mrf.mxu0
        %5476 = vmatprep.mubr.bf16.mxu0 0
        %5477 = vmatmul.mubr.bf16.gmra.mxu0 %v5329
        %v5478 = vpop.f32.mrf.mxu0
        %v5479 = vadd.f32 0.0, %v5478
        %v5480 = vpop.f32.mrf.mxu0
        %v5481 = vpop.f32.mrf.mxu0
        %v5482 = vadd.f32 0.0, %v5481
        %v5483 = vpop.f32.mrf.mxu0
        %5484 = vmatprep.mubr.bf16.mxu0 0
        %5485 = vmatmul.mubr.bf16.gmra.mxu0 %v5330
        %v5486 = vpop.f32.mrf.mxu0
        %v5487 = vadd.f32 0.0, %v5486
        %v5488 = vpop.f32.mrf.mxu0
        %v5489 = vpop.f32.mrf.mxu0
        %v5490 = vadd.f32 0.0, %v5489
        %v5491 = vpop.f32.mrf.mxu0
        %5492 = vmatprep.mubr.bf16.mxu0 0
        %5493 = vmatmul.mubr.bf16.gmra.mxu0 %v5331
        %v5494 = vpop.f32.mrf.mxu0
        %v5495 = vadd.f32 0.0, %v5494
        %v5496 = vpop.f32.mrf.mxu0
        %v5497 = vpop.f32.mrf.mxu0
        %v5498 = vadd.f32 0.0, %v5497
        %v5499 = vpop.f32.mrf.mxu0
        %5500 = vmatprep.mubr.bf16.mxu0 0
        %5501 = vmatmul.mubr.bf16.gmra.mxu0 %v5332
        %v5502 = vpop.f32.mrf.mxu0
        %v5503 = vadd.f32 0.0, %v5502
        %v5504 = vpop.f32.mrf.mxu0
        %v5505 = vpop.f32.mrf.mxu0
        %v5506 = vadd.f32 0.0, %v5505
        %v5507 = vpop.f32.mrf.mxu0
        %5508 = vmatprep.mubr.bf16.mxu0 0
        %5509 = vmatmul.mubr.bf16.gmra.mxu0 %v5333
        %v5510 = vpop.f32.mrf.mxu0
        %v5511 = vadd.f32 0.0, %v5510
        %v5512 = vpop.f32.mrf.mxu0
        %v5513 = vpop.f32.mrf.mxu0
        %v5514 = vadd.f32 0.0, %v5513
        %v5515 = vpop.f32.mrf.mxu0
        %5516 = vmatprep.mubr.bf16.mxu0 0
        %5517 = vmatmul.mubr.bf16.gmra.mxu0 %v5334
        %v5518 = vpop.f32.mrf.mxu0
        %v5519 = vadd.f32 0.0, %v5518
        %v5520 = vpop.f32.mrf.mxu0
        %v5521 = vpop.f32.mrf.mxu0
        %v5522 = vadd.f32 0.0, %v5521
        %v5523 = vpop.f32.mrf.mxu0
        %5524 = vmatprep.mubr.bf16.mxu0 0
        %5525 = vmatmul.mubr.bf16.gmra.mxu0 %v5335
        %v5526 = vpop.f32.mrf.mxu0
        %v5527 = vadd.f32 0.0, %v5526
        %v5528 = vpop.f32.mrf.mxu0
        %v5529 = vpop.f32.mrf.mxu0
        %v5530 = vadd.f32 0.0, %v5529
        %v5531 = vpop.f32.mrf.mxu0
        %5532 = vmatprep.mubr.bf16.mxu0 0
        %5533 = vmatmul.mubr.bf16.gmra.mxu0 %v5336
        %v5534 = vpop.f32.mrf.mxu0
        %v5535 = vadd.f32 0.0, %v5534
        %v5536 = vpop.f32.mrf.mxu0
        %v5537 = vpop.f32.mrf.mxu0
        %v5538 = vadd.f32 0.0, %v5537
        %v5539 = vpop.f32.mrf.mxu0
        %5540 = vmatprep.mubr.bf16.mxu0 0
        %5541 = vmatmul.mubr.bf16.gmra.mxu0 %v5337
        %v5542 = vpop.f32.mrf.mxu0
        %v5543 = vadd.f32 0.0, %v5542
        %v5544 = vpop.f32.mrf.mxu0
        %v5545 = vpop.f32.mrf.mxu0
        %v5546 = vadd.f32 0.0, %v5545
        %v5547 = vpop.f32.mrf.mxu0
        %5548 = vmatprep.mubr.bf16.mxu0 0
        %5549 = vmatmul.mubr.bf16.gmra.mxu0 %v5338
        %v5550 = vpop.f32.mrf.mxu0
        %v5551 = vadd.f32 0.0, %v5550
        %v5552 = vpop.f32.mrf.mxu0
        %v5553 = vpop.f32.mrf.mxu0
        %v5554 = vadd.f32 0.0, %v5553
        %v5555 = vpop.f32.mrf.mxu0
        %5556 = vmatprep.mubr.bf16.mxu0 0
        %5557 = vmatmul.mubr.bf16.gmra.mxu0 %v5339
        %v5558 = vpop.f32.mrf.mxu0
        %v5559 = vadd.f32 0.0, %v5558
        %v5560 = vpop.f32.mrf.mxu0
        %v5561 = vpop.f32.mrf.mxu0
        %v5562 = vadd.f32 0.0, %v5561
        %v5563 = vpop.f32.mrf.mxu0
        %5564 = vdwg.mxu0
        %v5565 = vadd.f32 %v5260, %v5439
        %v5566 = vadd.f32 %v5261, %v5442
        %v5567 = vadd.f32 %v5262, %v5447
        %v5568 = vadd.f32 %v5263, %v5450
        %v5569 = vadd.f32 %v5264, %v5455
        %v5570 = vadd.f32 %v5265, %v5458
        %v5571 = vadd.f32 %v5266, %v5463
        %v5572 = vadd.f32 %v5267, %v5466
        %v5573 = vadd.f32 %v5268, %v5471
        %v5574 = vadd.f32 %v5269, %v5474
        %v5575 = vadd.f32 %v5270, %v5479
        %v5576 = vadd.f32 %v5271, %v5482
        %v5577 = vadd.f32 %v5272, %v5487
        %v5578 = vadd.f32 %v5273, %v5490
        %v5579 = vadd.f32 %v5274, %v5495
        %v5580 = vadd.f32 %v5275, %v5498
        %v5581 = vadd.f32 %v5276, %v5503
        %v5582 = vadd.f32 %v5277, %v5506
        %v5583 = vadd.f32 %v5278, %v5511
        %v5584 = vadd.f32 %v5279, %v5514
        %v5585 = vadd.f32 %v5280, %v5519
        %v5586 = vadd.f32 %v5281, %v5522
        %v5587 = vadd.f32 %v5282, %v5527
        %v5588 = vadd.f32 %v5283, %v5530
        %v5589 = vadd.f32 %v5284, %v5535
        %v5590 = vadd.f32 %v5285, %v5538
        %v5591 = vadd.f32 %v5286, %v5543
        %v5592 = vadd.f32 %v5287, %v5546
        %v5593 = vadd.f32 %v5288, %v5551
        %v5594 = vadd.f32 %v5289, %v5554
        %v5595 = vadd.f32 %v5290, %v5559
        %v5596 = vadd.f32 %v5291, %v5562
        %v5597 = vld [vmem:[%s4986 + $0x2] sm:$0xff]
        %v5598 = vld [vmem:[%s4986 + $0xa] sm:$0xff]
        %v5599 = vld [vmem:[%s4986 + $0x1a] sm:$0xff]
        %v5600 = vld [vmem:[%s4986 + $0x22] sm:$0xff]
        %v5601 = vld [vmem:[%s4986 + $0x32] sm:$0xff]
        %v5602 = vld [vmem:[%s4986 + $0x3a] sm:$0xff]
        %v5603 = vld [vmem:[%s4986 + $0x4a] sm:$0xff]
        %v5604 = vld [vmem:[%s4986 + $0x52] sm:$0xff]
        %v5605 = vld [vmem:[%s4986 + $0x62] sm:$0xff]
        %v5606 = vld [vmem:[%s4986 + $0x6a] sm:$0xff]
        %v5607 = vld [vmem:[%s4986 + $0x7a] sm:$0xff]
        %v5608 = vld [vmem:[%s4986 + $0x82] sm:$0xff]
        %v5609 = vld [vmem:[%s4986 + $0x92] sm:$0xff]
        %v5610 = vld [vmem:[%s4986 + $0x9a] sm:$0xff]
        %v5611 = vld [vmem:[%s4986 + $0xaa] sm:$0xff]
        %v5612 = vld [vmem:[%s4986 + $0xb2] sm:$0xff]
        %v5613 = vld [vmem:[%s4986 + $0xc2] sm:$0xff]
        %v5614 = vld [vmem:[%s4986 + $0xca] sm:$0xff]
        %v5615 = vld [vmem:[%s4986 + $0xda] sm:$0xff]
        %v5616 = vld [vmem:[%s4986 + $0xe2] sm:$0xff]
        %v5617 = vld [vmem:[%s4986 + $0xf2] sm:$0xff]
        %v5618 = vld [vmem:[%s4986 + $0xfa] sm:$0xff]
        %v5619 = vld [vmem:[%s4986 + $0x10a] sm:$0xff]
        %v5620 = vld [vmem:[%s4986 + $0x112] sm:$0xff]
        %v5621 = vld [vmem:[%s4986 + $0x122] sm:$0xff]
        %v5622 = vld [vmem:[%s4986 + $0x12a] sm:$0xff]
        %v5623 = vld [vmem:[%s4986 + $0x13a] sm:$0xff]
        %v5624 = vld [vmem:[%s4986 + $0x142] sm:$0xff]
        %v5625 = vld [vmem:[%s4986 + $0x152] sm:$0xff]
        %v5626 = vld [vmem:[%s4986 + $0x15a] sm:$0xff]
        %v5627 = vld [vmem:[%s4986 + $0x16a] sm:$0xff]
        %v5628 = vld [vmem:[%s4986 + $0x172] sm:$0xff]
        %v5629 = vpack.c.bf16 %v5598, %v5597
        %v5630 = vpack.c.bf16 %v5600, %v5599
        %v5631 = vpack.c.bf16 %v5602, %v5601
        %v5632 = vpack.c.bf16 %v5604, %v5603
        %v5633 = vpack.c.bf16 %v5606, %v5605
        %v5634 = vpack.c.bf16 %v5608, %v5607
        %v5635 = vpack.c.bf16 %v5610, %v5609
        %v5636 = vpack.c.bf16 %v5612, %v5611
        %v5637 = vpack.c.bf16 %v5614, %v5613
        %v5638 = vpack.c.bf16 %v5616, %v5615
        %v5639 = vpack.c.bf16 %v5618, %v5617
        %v5640 = vpack.c.bf16 %v5620, %v5619
        %v5641 = vpack.c.bf16 %v5622, %v5621
        %v5642 = vpack.c.bf16 %v5624, %v5623
        %v5643 = vpack.c.bf16 %v5626, %v5625
        %v5644 = vpack.c.bf16 %v5628, %v5627
        %v5645 = vld [vmem:[%s2662] sm:$0xf]
        %v5646 = vld [vmem:[%s2662 + $0x4] sm:$0xf]
        %v5647 = vld [vmem:[%s2662 + $0x8] sm:$0xf]
        %v5648 = vld [vmem:[%s2662 + $0xc] sm:$0xf]
        %v5649 = vld [vmem:[%s2662 + $0x10] sm:$0xf]
        %v5650 = vld [vmem:[%s2662 + $0x14] sm:$0xf]
        %v5651 = vld [vmem:[%s2662 + $0x18] sm:$0xf]
        %v5652 = vld [vmem:[%s2662 + $0x1c] sm:$0xf]
        %v5653 = vld [vmem:[%s2662 + $0x20] sm:$0xf]
        %v5654 = vld [vmem:[%s2662 + $0x24] sm:$0xf]
        %v5655 = vld [vmem:[%s2662 + $0x28] sm:$0xf]
        %v5656 = vld [vmem:[%s2662 + $0x2c] sm:$0xf]
        %v5657 = vld [vmem:[%s2662 + $0x30] sm:$0xf]
        %v5658 = vld [vmem:[%s2662 + $0x34] sm:$0xf]
        %v5659 = vld [vmem:[%s2662 + $0x38] sm:$0xf]
        %v5660 = vld [vmem:[%s2662 + $0x3c] sm:$0xf]
        %v5677 = vunpack.c.l.b16 %v5645
        %v5678 = vunpack.c.l.b16 %v5646
        %v5679 = vunpack.c.l.b16 %v5647
        %v5680 = vunpack.c.l.b16 %v5648
        %v5681 = vunpack.c.l.b16 %v5649
        %v5682 = vunpack.c.l.b16 %v5650
        %v5683 = vunpack.c.l.b16 %v5651
        %v5684 = vunpack.c.l.b16 %v5652
        %v5685 = vunpack.c.l.b16 %v5653
        %v5686 = vunpack.c.l.b16 %v5654
        %v5687 = vunpack.c.l.b16 %v5655
        %v5688 = vunpack.c.l.b16 %v5656
        %v5689 = vunpack.c.l.b16 %v5657
        %v5690 = vunpack.c.l.b16 %v5658
        %v5691 = vunpack.c.l.b16 %v5659
        %v5692 = vunpack.c.l.b16 %v5660
        %v5693 = vpack.c.b16 %v5678, %v5677
        %v5694 = vpack.c.b16 %v5680, %v5679
        %v5695 = vpack.c.b16 %v5682, %v5681
        %v5696 = vpack.c.b16 %v5684, %v5683
        %v5697 = vpack.c.b16 %v5686, %v5685
        %v5698 = vpack.c.b16 %v5688, %v5687
        %v5699 = vpack.c.b16 %v5690, %v5689
        %v5700 = vpack.c.b16 %v5692, %v5691
        %5709 = vmatprep.subr.bf16.mxu0 0
        %5710 = vmatpush1.bf16.msra.mxu0 %v5700
        %5711 = vmatprep.subr.bf16.mxu0 0
        %5712 = vmatpush1.bf16.msra.mxu0 %v5699
        %5713 = vmatprep.subr.bf16.mxu0 0
        %5714 = vmatpush1.bf16.msra.mxu0 %v5698
        %5715 = vmatprep.subr.bf16.mxu0 0
        %5716 = vmatpush1.bf16.msra.mxu0 %v5697
        %5717 = vmatprep.subr.bf16.mxu0 0
        %5718 = vmatpush1.bf16.msra.mxu0 %v5696
        %5719 = vmatprep.subr.bf16.mxu0 0
        %5720 = vmatpush1.bf16.msra.mxu0 %v5695
        %5721 = vmatprep.subr.bf16.mxu0 0
        %5722 = vmatpush1.bf16.msra.mxu0 %v5694
        %5723 = vmatprep.subr.bf16.mxu0 0
        %5724 = vmatpush1.bf16.msra.mxu0 %v5693
        %5725 = vmatprep.subr.bf16.mxu0 0
        %5726 = vmatpush2.bf16.msra.mxu0 0
        %5727 = vmatprep.subr.bf16.mxu0 0
        %5728 = vmatpush2.bf16.msra.mxu0 0
        %5729 = vmatprep.subr.bf16.mxu0 0
        %5730 = vmatpush2.bf16.msra.mxu0 0
        %5731 = vmatprep.subr.bf16.mxu0 0
        %5732 = vmatpush2.bf16.msra.mxu0 0
        %5733 = vmatprep.subr.bf16.mxu0 0
        %5734 = vmatpush2.bf16.msra.mxu0 0
        %5735 = vmatprep.subr.bf16.mxu0 0
        %5736 = vmatpush2.bf16.msra.mxu0 0
        %5737 = vmatprep.subr.bf16.mxu0 0
        %5738 = vmatpush2.bf16.msra.mxu0 0
        %5739 = vmatprep.subr.bf16.mxu0 0
        %5740 = vmatpush2.bf16.msra.mxu0 0
        %5741 = vmatprep.mubr.bf16.mxu0 0
        %5742 = vmatmul.mubr.bf16.gmra.mxu0 %v5629
        %v5743 = vpop.f32.mrf.mxu0
        %v5744 = vadd.f32 0.0, %v5743
        %v5745 = vpop.f32.mrf.mxu0
        %v5746 = vpop.f32.mrf.mxu0
        %v5747 = vadd.f32 0.0, %v5746
        %v5748 = vpop.f32.mrf.mxu0
        %5749 = vmatprep.mubr.bf16.mxu0 0
        %5750 = vmatmul.mubr.bf16.gmra.mxu0 %v5630
        %v5751 = vpop.f32.mrf.mxu0
        %v5752 = vadd.f32 0.0, %v5751
        %v5753 = vpop.f32.mrf.mxu0
        %v5754 = vpop.f32.mrf.mxu0
        %v5755 = vadd.f32 0.0, %v5754
        %v5756 = vpop.f32.mrf.mxu0
        %5757 = vmatprep.mubr.bf16.mxu0 0
        %5758 = vmatmul.mubr.bf16.gmra.mxu0 %v5631
        %v5759 = vpop.f32.mrf.mxu0
        %v5760 = vadd.f32 0.0, %v5759
        %v5761 = vpop.f32.mrf.mxu0
        %v5762 = vpop.f32.mrf.mxu0
        %v5763 = vadd.f32 0.0, %v5762
        %v5764 = vpop.f32.mrf.mxu0
        %5765 = vmatprep.mubr.bf16.mxu0 0
        %5766 = vmatmul.mubr.bf16.gmra.mxu0 %v5632
        %v5767 = vpop.f32.mrf.mxu0
        %v5768 = vadd.f32 0.0, %v5767
        %v5769 = vpop.f32.mrf.mxu0
        %v5770 = vpop.f32.mrf.mxu0
        %v5771 = vadd.f32 0.0, %v5770
        %v5772 = vpop.f32.mrf.mxu0
        %5773 = vmatprep.mubr.bf16.mxu0 0
        %5774 = vmatmul.mubr.bf16.gmra.mxu0 %v5633
        %v5775 = vpop.f32.mrf.mxu0
        %v5776 = vadd.f32 0.0, %v5775
        %v5777 = vpop.f32.mrf.mxu0
        %v5778 = vpop.f32.mrf.mxu0
        %v5779 = vadd.f32 0.0, %v5778
        %v5780 = vpop.f32.mrf.mxu0
        %5781 = vmatprep.mubr.bf16.mxu0 0
        %5782 = vmatmul.mubr.bf16.gmra.mxu0 %v5634
        %v5783 = vpop.f32.mrf.mxu0
        %v5784 = vadd.f32 0.0, %v5783
        %v5785 = vpop.f32.mrf.mxu0
        %v5786 = vpop.f32.mrf.mxu0
        %v5787 = vadd.f32 0.0, %v5786
        %v5788 = vpop.f32.mrf.mxu0
        %5789 = vmatprep.mubr.bf16.mxu0 0
        %5790 = vmatmul.mubr.bf16.gmra.mxu0 %v5635
        %v5791 = vpop.f32.mrf.mxu0
        %v5792 = vadd.f32 0.0, %v5791
        %v5793 = vpop.f32.mrf.mxu0
        %v5794 = vpop.f32.mrf.mxu0
        %v5795 = vadd.f32 0.0, %v5794
        %v5796 = vpop.f32.mrf.mxu0
        %5797 = vmatprep.mubr.bf16.mxu0 0
        %5798 = vmatmul.mubr.bf16.gmra.mxu0 %v5636
        %v5799 = vpop.f32.mrf.mxu0
        %v5800 = vadd.f32 0.0, %v5799
        %v5801 = vpop.f32.mrf.mxu0
        %v5802 = vpop.f32.mrf.mxu0
        %v5803 = vadd.f32 0.0, %v5802
        %v5804 = vpop.f32.mrf.mxu0
        %5805 = vmatprep.mubr.bf16.mxu0 0
        %5806 = vmatmul.mubr.bf16.gmra.mxu0 %v5637
        %v5807 = vpop.f32.mrf.mxu0
        %v5808 = vadd.f32 0.0, %v5807
        %v5809 = vpop.f32.mrf.mxu0
        %v5810 = vpop.f32.mrf.mxu0
        %v5811 = vadd.f32 0.0, %v5810
        %v5812 = vpop.f32.mrf.mxu0
        %5813 = vmatprep.mubr.bf16.mxu0 0
        %5814 = vmatmul.mubr.bf16.gmra.mxu0 %v5638
        %v5815 = vpop.f32.mrf.mxu0
        %v5816 = vadd.f32 0.0, %v5815
        %v5817 = vpop.f32.mrf.mxu0
        %v5818 = vpop.f32.mrf.mxu0
        %v5819 = vadd.f32 0.0, %v5818
        %v5820 = vpop.f32.mrf.mxu0
        %5821 = vmatprep.mubr.bf16.mxu0 0
        %5822 = vmatmul.mubr.bf16.gmra.mxu0 %v5639
        %v5823 = vpop.f32.mrf.mxu0
        %v5824 = vadd.f32 0.0, %v5823
        %v5825 = vpop.f32.mrf.mxu0
        %v5826 = vpop.f32.mrf.mxu0
        %v5827 = vadd.f32 0.0, %v5826
        %v5828 = vpop.f32.mrf.mxu0
        %5829 = vmatprep.mubr.bf16.mxu0 0
        %5830 = vmatmul.mubr.bf16.gmra.mxu0 %v5640
        %v5831 = vpop.f32.mrf.mxu0
        %v5832 = vadd.f32 0.0, %v5831
        %v5833 = vpop.f32.mrf.mxu0
        %v5834 = vpop.f32.mrf.mxu0
        %v5835 = vadd.f32 0.0, %v5834
        %v5836 = vpop.f32.mrf.mxu0
        %5837 = vmatprep.mubr.bf16.mxu0 0
        %5838 = vmatmul.mubr.bf16.gmra.mxu0 %v5641
        %v5839 = vpop.f32.mrf.mxu0
        %v5840 = vadd.f32 0.0, %v5839
        %v5841 = vpop.f32.mrf.mxu0
        %v5842 = vpop.f32.mrf.mxu0
        %v5843 = vadd.f32 0.0, %v5842
        %v5844 = vpop.f32.mrf.mxu0
        %5845 = vmatprep.mubr.bf16.mxu0 0
        %5846 = vmatmul.mubr.bf16.gmra.mxu0 %v5642
        %v5847 = vpop.f32.mrf.mxu0
        %v5848 = vadd.f32 0.0, %v5847
        %v5849 = vpop.f32.mrf.mxu0
        %v5850 = vpop.f32.mrf.mxu0
        %v5851 = vadd.f32 0.0, %v5850
        %v5852 = vpop.f32.mrf.mxu0
        %5853 = vmatprep.mubr.bf16.mxu0 0
        %5854 = vmatmul.mubr.bf16.gmra.mxu0 %v5643
        %v5855 = vpop.f32.mrf.mxu0
        %v5856 = vadd.f32 0.0, %v5855
        %v5857 = vpop.f32.mrf.mxu0
        %v5858 = vpop.f32.mrf.mxu0
        %v5859 = vadd.f32 0.0, %v5858
        %v5860 = vpop.f32.mrf.mxu0
        %5861 = vmatprep.mubr.bf16.mxu0 0
        %5862 = vmatmul.mubr.bf16.gmra.mxu0 %v5644
        %v5863 = vpop.f32.mrf.mxu0
        %v5864 = vadd.f32 0.0, %v5863
        %v5865 = vpop.f32.mrf.mxu0
        %v5866 = vpop.f32.mrf.mxu0
        %v5867 = vadd.f32 0.0, %v5866
        %v5868 = vpop.f32.mrf.mxu0
        %5869 = vdwg.mxu0
        %v5870 = vadd.f32 %v5565, %v5744
        %v5871 = vadd.f32 %v5566, %v5747
        %v5872 = vadd.f32 %v5567, %v5752
        %v5873 = vadd.f32 %v5568, %v5755
        %v5874 = vadd.f32 %v5569, %v5760
        %v5875 = vadd.f32 %v5570, %v5763
        %v5876 = vadd.f32 %v5571, %v5768
        %v5877 = vadd.f32 %v5572, %v5771
        %v5878 = vadd.f32 %v5573, %v5776
        %v5879 = vadd.f32 %v5574, %v5779
        %v5880 = vadd.f32 %v5575, %v5784
        %v5881 = vadd.f32 %v5576, %v5787
        %v5882 = vadd.f32 %v5577, %v5792
        %v5883 = vadd.f32 %v5578, %v5795
        %v5884 = vadd.f32 %v5579, %v5800
        %v5885 = vadd.f32 %v5580, %v5803
        %v5886 = vadd.f32 %v5581, %v5808
        %v5887 = vadd.f32 %v5582, %v5811
        %v5888 = vadd.f32 %v5583, %v5816
        %v5889 = vadd.f32 %v5584, %v5819
        %v5890 = vadd.f32 %v5585, %v5824
        %v5891 = vadd.f32 %v5586, %v5827
        %v5892 = vadd.f32 %v5587, %v5832
        %v5893 = vadd.f32 %v5588, %v5835
        %v5894 = vadd.f32 %v5589, %v5840
        %v5895 = vadd.f32 %v5590, %v5843
        %v5896 = vadd.f32 %v5591, %v5848
        %v5897 = vadd.f32 %v5592, %v5851
        %v5898 = vadd.f32 %v5593, %v5856
        %v5899 = vadd.f32 %v5594, %v5859
        %v5900 = vadd.f32 %v5595, %v5864
        %v5901 = vadd.f32 %v5596, %v5867
        %v5902 = vmul.f32 %v5870, %v2924
        %v5903 = vmul.f32 %v5871, %v2924
        %v5904 = vmul.f32 %v5872, %v2924
        %v5905 = vmul.f32 %v5873, %v2924
        %v5906 = vmul.f32 %v5874, %v2924
        %v5907 = vmul.f32 %v5875, %v2924
        %v5908 = vmul.f32 %v5876, %v2924
        %v5909 = vmul.f32 %v5877, %v2924
        %v5910 = vmul.f32 %v5878, %v2924
        %v5911 = vmul.f32 %v5879, %v2924
        %v5912 = vmul.f32 %v5880, %v2924
        %v5913 = vmul.f32 %v5881, %v2924
        %v5914 = vmul.f32 %v5882, %v2924
        %v5915 = vmul.f32 %v5883, %v2924
        %v5916 = vmul.f32 %v5884, %v2924
        %v5917 = vmul.f32 %v5885, %v2924
        %v5918 = vmul.f32 %v5886, %v2924
        %v5919 = vmul.f32 %v5887, %v2924
        %v5920 = vmul.f32 %v5888, %v2924
        %v5921 = vmul.f32 %v5889, %v2924
        %v5922 = vmul.f32 %v5890, %v2924
        %v5923 = vmul.f32 %v5891, %v2924
        %v5924 = vmul.f32 %v5892, %v2924
        %v5925 = vmul.f32 %v5893, %v2924
        %v5926 = vmul.f32 %v5894, %v2924
        %v5927 = vmul.f32 %v5895, %v2924
        %v5928 = vmul.f32 %v5896, %v2924
        %v5929 = vmul.f32 %v5897, %v2924
        %v5930 = vmul.f32 %v5898, %v2924
        %v5931 = vmul.f32 %v5899, %v2924
        %v5932 = vmul.f32 %v5900, %v2924
        %v5933 = vmul.f32 %v5901, %v2924
        %v5934 = vadd.f32 %v5902, %v2962
        %v5935 = vadd.f32 %v5903, %v2962
        %v5936 = vadd.f32 %v5904, %v2962
        %v5937 = vadd.f32 %v5905, %v2962
        %v5938 = vadd.f32 %v5906, %v2962
        %v5939 = vadd.f32 %v5907, %v2962
        %v5940 = vadd.f32 %v5908, %v2962
        %v5941 = vadd.f32 %v5909, %v2962
        %v5942 = vadd.f32 %v5910, %v2962
        %v5943 = vadd.f32 %v5911, %v2962
        %v5944 = vadd.f32 %v5912, %v2962
        %v5945 = vadd.f32 %v5913, %v2962
        %v5946 = vadd.f32 %v5914, %v2962
        %v5947 = vadd.f32 %v5915, %v2962
        %v5948 = vadd.f32 %v5916, %v2962
        %v5949 = vadd.f32 %v5917, %v2962
        %v5950 = vadd.f32 %v5918, %v2962
        %v5951 = vadd.f32 %v5919, %v2962
        %v5952 = vadd.f32 %v5920, %v2962
        %v5953 = vadd.f32 %v5921, %v2962
        %v5954 = vadd.f32 %v5922, %v2962
        %v5955 = vadd.f32 %v5923, %v2962
        %v5956 = vadd.f32 %v5924, %v2962
        %v5957 = vadd.f32 %v5925, %v2962
        %v5958 = vadd.f32 %v5926, %v2962
        %v5959 = vadd.f32 %v5927, %v2962
        %v5960 = vadd.f32 %v5928, %v2962
        %v5961 = vadd.f32 %v5929, %v2962
        %v5962 = vadd.f32 %v5930, %v2962
        %v5963 = vadd.f32 %v5931, %v2962
        %v5964 = vadd.f32 %v5932, %v2962
        %v5965 = vadd.f32 %v5933, %v2962
        %v5966 = vld [vmem:[%s1082 + $0x1] sm:$0xff]
        %v5967 = vld [vmem:[%s1082 + $0x9] sm:$0xff]
        %v5968 = vld [vmem:[%s1082 + $0x19] sm:$0xff]
        %v5969 = vld [vmem:[%s1082 + $0x21] sm:$0xff]
        %v5970 = vld [vmem:[%s1082 + $0x31] sm:$0xff]
        %v5971 = vld [vmem:[%s1082 + $0x39] sm:$0xff]
        %v5972 = vld [vmem:[%s1082 + $0x49] sm:$0xff]
        %v5973 = vld [vmem:[%s1082 + $0x51] sm:$0xff]
        %v5974 = vld [vmem:[%s1082 + $0x61] sm:$0xff]
        %v5975 = vld [vmem:[%s1082 + $0x69] sm:$0xff]
        %v5976 = vld [vmem:[%s1082 + $0x79] sm:$0xff]
        %v5977 = vld [vmem:[%s1082 + $0x81] sm:$0xff]
        %v5978 = vld [vmem:[%s1082 + $0x91] sm:$0xff]
        %v5979 = vld [vmem:[%s1082 + $0x99] sm:$0xff]
        %v5980 = vld [vmem:[%s1082 + $0xa9] sm:$0xff]
        %v5981 = vld [vmem:[%s1082 + $0xb1] sm:$0xff]
        %v5982 = vld [vmem:[%s1082 + $0xc1] sm:$0xff]
        %v5983 = vld [vmem:[%s1082 + $0xc9] sm:$0xff]
        %v5984 = vld [vmem:[%s1082 + $0xd9] sm:$0xff]
        %v5985 = vld [vmem:[%s1082 + $0xe1] sm:$0xff]
        %v5986 = vld [vmem:[%s1082 + $0xf1] sm:$0xff]
        %v5987 = vld [vmem:[%s1082 + $0xf9] sm:$0xff]
        %v5988 = vld [vmem:[%s1082 + $0x109] sm:$0xff]
        %v5989 = vld [vmem:[%s1082 + $0x111] sm:$0xff]
        %v5990 = vld [vmem:[%s1082 + $0x121] sm:$0xff]
        %v5991 = vld [vmem:[%s1082 + $0x129] sm:$0xff]
        %v5992 = vld [vmem:[%s1082 + $0x139] sm:$0xff]
        %v5993 = vld [vmem:[%s1082 + $0x141] sm:$0xff]
        %v5994 = vld [vmem:[%s1082 + $0x151] sm:$0xff]
        %v5995 = vld [vmem:[%s1082 + $0x159] sm:$0xff]
        %v5996 = vld [vmem:[%s1082 + $0x169] sm:$0xff]
        %v5997 = vld [vmem:[%s1082 + $0x171] sm:$0xff]
        %v5998 = vadd.f32 %v5934, %v5966
        %v5999 = vadd.f32 %v5935, %v5967
        %v6000 = vadd.f32 %v5936, %v5968
        %v6001 = vadd.f32 %v5937, %v5969
        %v6002 = vadd.f32 %v5938, %v5970
        %v6003 = vadd.f32 %v5939, %v5971
        %v6004 = vadd.f32 %v5940, %v5972
        %v6005 = vadd.f32 %v5941, %v5973
        %v6006 = vadd.f32 %v5942, %v5974
        %v6007 = vadd.f32 %v5943, %v5975
        %v6008 = vadd.f32 %v5944, %v5976
        %v6009 = vadd.f32 %v5945, %v5977
        %v6010 = vadd.f32 %v5946, %v5978
        %v6011 = vadd.f32 %v5947, %v5979
        %v6012 = vadd.f32 %v5948, %v5980
        %v6013 = vadd.f32 %v5949, %v5981
        %v6014 = vadd.f32 %v5950, %v5982
        %v6015 = vadd.f32 %v5951, %v5983
        %v6016 = vadd.f32 %v5952, %v5984
        %v6017 = vadd.f32 %v5953, %v5985
        %v6018 = vadd.f32 %v5954, %v5986
        %v6019 = vadd.f32 %v5955, %v5987
        %v6020 = vadd.f32 %v5956, %v5988
        %v6021 = vadd.f32 %v5957, %v5989
        %v6022 = vadd.f32 %v5958, %v5990
        %v6023 = vadd.f32 %v5959, %v5991
        %v6024 = vadd.f32 %v5960, %v5992
        %v6025 = vadd.f32 %v5961, %v5993
        %v6026 = vadd.f32 %v5962, %v5994
        %v6027 = vadd.f32 %v5963, %v5995
        %v6028 = vadd.f32 %v5964, %v5996
        %v6029 = vadd.f32 %v5965, %v5997
        %6030 = vst [vmem:[%s219] sm:$0xff] %v5998
        %6031 = vst [vmem:[%s219 + $0x8] sm:$0xff] %v5999
        %6032 = vst [vmem:[%s219 + $0x10] sm:$0xff] %v6000
        %6033 = vst [vmem:[%s219 + $0x18] sm:$0xff] %v6001
        %6034 = vst [vmem:[%s219 + $0x20] sm:$0xff] %v6002
        %6035 = vst [vmem:[%s219 + $0x28] sm:$0xff] %v6003
        %6036 = vst [vmem:[%s219 + $0x30] sm:$0xff] %v6004
        %6037 = vst [vmem:[%s219 + $0x38] sm:$0xff] %v6005
        %6038 = vst [vmem:[%s219 + $0x40] sm:$0xff] %v6006
        %6039 = vst [vmem:[%s219 + $0x48] sm:$0xff] %v6007
        %6040 = vst [vmem:[%s219 + $0x50] sm:$0xff] %v6008
        %6041 = vst [vmem:[%s219 + $0x58] sm:$0xff] %v6009
        %6042 = vst [vmem:[%s219 + $0x60] sm:$0xff] %v6010
        %6043 = vst [vmem:[%s219 + $0x68] sm:$0xff] %v6011
        %6044 = vst [vmem:[%s219 + $0x70] sm:$0xff] %v6012
        %6045 = vst [vmem:[%s219 + $0x78] sm:$0xff] %v6013
        %6046 = vst [vmem:[%s219 + $0x80] sm:$0xff] %v6014
        %6047 = vst [vmem:[%s219 + $0x88] sm:$0xff] %v6015
        %6048 = vst [vmem:[%s219 + $0x90] sm:$0xff] %v6016
        %6049 = vst [vmem:[%s219 + $0x98] sm:$0xff] %v6017
        %6050 = vst [vmem:[%s219 + $0xa0] sm:$0xff] %v6018
        %6051 = vst [vmem:[%s219 + $0xa8] sm:$0xff] %v6019
        %6052 = vst [vmem:[%s219 + $0xb0] sm:$0xff] %v6020
        %6053 = vst [vmem:[%s219 + $0xb8] sm:$0xff] %v6021
        %6054 = vst [vmem:[%s219 + $0xc0] sm:$0xff] %v6022
        %6055 = vst [vmem:[%s219 + $0xc8] sm:$0xff] %v6023
        %6056 = vst [vmem:[%s219 + $0xd0] sm:$0xff] %v6024
        %6057 = vst [vmem:[%s219 + $0xd8] sm:$0xff] %v6025
        %6058 = vst [vmem:[%s219 + $0xe0] sm:$0xff] %v6026
        %6059 = vst [vmem:[%s219 + $0xe8] sm:$0xff] %v6027
        %6060 = vst [vmem:[%s219 + $0xf0] sm:$0xff] %v6028
        %6061 = vst [vmem:[%s219 + $0xf8] sm:$0xff] %v6029
        %s6062 = sand.u32 %s139, 1
        %s6063 = scalar_lea.sflag [#allocation5], %s6062
        %s6064 = sand.u32 %s139, 1
        %s6065 = smul.addr %s6064, 256
        %s6066 = scalar_lea.vmem [#allocation4], %s6065
        // Predicated region
        $region41: #{resblock_forward.1} parent=39 // pred_check
          %p6067 = pneg %p149
        $region42: #{resblock_forward.1} parent=39 // pred_check_branch
          %6069 = sbr.rel (%p6067) target = $region44
        $region43: #{resblock_forward.1} parent=39 // pred_region
          %s6071 = ssub.s32 4096, 4096
          %6072 = vsyncadd %s6063, %s6071
          %s6073 = smul.addr %s21, 32
          %s6074 = smul.addr %s6073, 128
          %s6075 = scalar_lea.hbm %s5, %s6074
          %s6076 = sshll.u32 %s6066, 4
          %s6077 = int_to_ptr.vmem [resolvable:$true] %s6076
          %6082 = dma.vmem_to_hbm [thread:$0]  %s6077, 4096, %s6075, %s6063, 128, 128, 8
        $region44: #{resblock_forward.1} parent=39 // pred_fallthru
          _
      $region40: #{resblock_forward.1} parent=5 // pred_fallthru
        _
      %p6083 = scmp.le.s32.totalorder 2, %s16
      // Predicated region
      $region45: #{resblock_forward.1} parent=5 // pred_check
        %p6084 = pneg %p6083
      $region46: #{resblock_forward.1} parent=5 // pred_check_branch
        %6086 = sbr.rel (%p6084) target = $region48
      $region47: #{resblock_forward.1} parent=5 // pred_region
        %s6087 = ssub.s32 %s16, 2
        // Predicated region
        $region49: #{resblock_forward.1} parent=47 // pred_check
          %p6088 = pneg %p155
        $region50: #{resblock_forward.1} parent=47 // pred_check_branch
          %6090 = sbr.rel (%p6088) target = $region52
        $region51: #{resblock_forward.1} parent=47 // pred_region
          %s6091 = sand.u32 %s140, 1
          %s6092 = scalar_lea.sflag [#allocation5], %s6091
          %s6093 = sand.u32 %s140, 1
          %s6094 = smul.addr %s6093, 256
          %s6095 = scalar_lea.vmem [#allocation4], %s6094
          %6096 = dma.done %s6092, 4096
        $region52: #{resblock_forward.1} parent=47 // pred_fallthru
          _
      $region48: #{resblock_forward.1} parent=5 // pred_fallthru
        _
    $region6: #{resblock_forward.1} parent=1 // loop_footer
      %s20 = sadd.s32 1, %s16
    $region7: #{resblock_forward.1} parent=1 // loop_footer_branch
      %15 = sbr.rel target = $region3
    $region8: #{resblock_forward.1} parent=1 // loop_exit
      _
    %6097 = vsyncpa [#allocation5], 1
    %s6098 = scalar_lea.sflag [#allocation5], 1
    %6099 = vsyncpa %s6098, 1

</llo_original>
